<compile_context>
chip_gen: v6e
topology: v6e:2x2x1
jax: 0.10.0
libtpu: 0.0.40
codegen_flags: <defaults>
</compile_context>

<pallas_src>
import functools
import math

import jax
import jax.numpy as jnp
from jax.experimental import pallas as pl
from jax.experimental.pallas import tpu as pltpu

# ---------------------------------------------------------------- static config
VOCAB_SIZE = 256     # lane-aligned toy vocab (spec uses SentencePiece size)
D_MODEL = 128        # n_embed in the reference -> one full 128-lane vreg row
N_HEAD = 8           # head_size = 16
N_LAYER = 2          # reference uses 6; kept small for the demo run
MAX_LEN = 64         # block_size / positional-table length (small demo)
EPS = 1e-5           # nn.LayerNorm default

_CP_PARALLEL = pltpu.CompilerParams(
    dimension_semantics=("parallel",),
    vmem_limit_bytes=32 * 1024 * 1024,   # comfortable on v7x's 64 MiB per TC
)


def _resident(shape):
    """Whole-array block mapped to the same tile every grid step (stays in VMEM)."""
    return pl.BlockSpec(shape, lambda *_: (0,) * len(shape))


def _row_tile(rows):
    """Largest row tile (multiple of 8) that still gives >= 2 grid steps."""
    for cand in (512, 256, 128, 64, 32, 16, 8):
        if rows % cand == 0 and rows // cand >= 2:
            return cand
    return rows


# ---------------------------------------------------------------- kernels

def _attn_block_kernel(x_ref, wqkv_ref, wo_ref, bo_ref, g_ref, b_ref, o_ref, *, n_head):
    """One batch element: LayerNorm1(x + proj(concat_h causal_attn_h(x)))."""
    x = x_ref[...]                                    # (T, D) f32
    T, D = x.shape
    hs = D // n_head
    scale = 1.0 / math.sqrt(hs)

    # fused QKV projection: bf16 MXU operands, f32 accumulation
    qkv = jnp.dot(x.astype(jnp.bfloat16), wqkv_ref[...],
                  preferred_element_type=jnp.float32)          # (T, 3D)

    row = jax.lax.broadcasted_iota(jnp.int32, (T, T), 0)
    col = jax.lax.broadcasted_iota(jnp.int32, (T, T), 1)
    causal = col <= row

    wo = wo_ref[...]                                   # (D, D) bf16, resident
    sa = jnp.zeros((T, D), jnp.float32)
    for h in range(n_head):                            # static unroll over heads
        q = qkv[:, h * hs:(h + 1) * hs]
        k = qkv[:, D + h * hs:D + (h + 1) * hs]
        v = qkv[:, 2 * D + h * hs:2 * D + (h + 1) * hs]
        # q @ k^T without an explicit transpose (contract last dims)
        s = jax.lax.dot_general(
            q.astype(jnp.bfloat16), k.astype(jnp.bfloat16),
            (((1,), (1,)), ((), ())),
            preferred_element_type=jnp.float32) * scale        # (T, T) f32
        s = jnp.where(causal, s, -jnp.inf)
        s = s - jnp.max(s, axis=-1, keepdims=True)
        p = jnp.exp(s)                                          # f32 (EUP)
        p = p * pl.reciprocal(jnp.sum(p, axis=-1, keepdims=True), approx=True)
        oh = jnp.dot(p.astype(jnp.bfloat16), v.astype(jnp.bfloat16),
                     preferred_element_type=jnp.float32)        # (T, hs)
        # head h's slice of the output projection, accumulated in f32
        sa = sa + jnp.dot(oh.astype(jnp.bfloat16), wo[h * hs:(h + 1) * hs, :],
                          preferred_element_type=jnp.float32)
    sa = sa + bo_ref[...]

    y = x + sa                                          # residual (f32)
    mu = jnp.mean(y, axis=-1, keepdims=True)
    var = jnp.mean((y - mu) ** 2, axis=-1, keepdims=True)
    o_ref[...] = (y - mu) * jax.lax.rsqrt(var + EPS) * g_ref[...] + b_ref[...]


def _ffn_block_kernel(x_ref, w1_ref, b1_ref, w2_ref, b2_ref, g_ref, b_ref, o_ref):
    """Row tile: LayerNorm2(x + Linear2(relu(Linear1(x)))); hidden stays in VMEM."""
    x = x_ref[...]                                               # (R, D) f32
    h = jnp.dot(x.astype(jnp.bfloat16), w1_ref[...],
                preferred_element_type=jnp.float32) + b1_ref[...]   # (R, 4D)
    h = jnp.maximum(h, 0.0)
    ff = jnp.dot(h.astype(jnp.bfloat16), w2_ref[...],
                 preferred_element_type=jnp.float32) + b2_ref[...]  # (R, D)
    y = x + ff
    mu = jnp.mean(y, axis=-1, keepdims=True)
    var = jnp.mean((y - mu) ** 2, axis=-1, keepdims=True)
    o_ref[...] = (y - mu) * jax.lax.rsqrt(var + EPS) * g_ref[...] + b_ref[...]


def _lnf_lmhead_kernel(x_ref, g_ref, b_ref, w_ref, bias_ref, o_ref):
    """Row tile: lm_head(LayerNorm_f(x)) — decoder final LN fused into logits matmul."""
    x = x_ref[...]                                               # (R, D) f32
    mu = jnp.mean(x, axis=-1, keepdims=True)
    var = jnp.mean((x - mu) ** 2, axis=-1, keepdims=True)
    xn = (x - mu) * jax.lax.rsqrt(var + EPS) * g_ref[...] + b_ref[...]
    o_ref[...] = jnp.dot(xn.astype(jnp.bfloat16), w_ref[...],
                         preferred_element_type=jnp.float32) + bias_ref[...]


def _lstm_kernel(x_ref, wih_ref, whh_ref, bias_ref, o_ref):
    """Single-layer LSTM (gate order i,f,g,o), zero initial state, time-major.
    # TODO(synk): switch to lax.fori_loop + VMEM carry scratch for long sequences.
    """
    T, B, _ = x_ref.shape
    H = whh_ref.shape[0]
    wih = wih_ref[...]                     # (D, 4H) bf16, resident
    whh = whh_ref[...]                     # (H, 4H) bf16
    bias = bias_ref[...]                   # (1, 4H) f32 (= b_ih + b_hh)
    h = jnp.zeros((B, H), jnp.float32)
    c = jnp.zeros((B, H), jnp.float32)
    for t in range(T):                     # static unroll (T is small here)
        xt = x_ref[t]                      # (B, D)
        gates = (jnp.dot(xt.astype(jnp.bfloat16), wih,
                         preferred_element_type=jnp.float32)
                 + jnp.dot(h.astype(jnp.bfloat16), whh,
                           preferred_element_type=jnp.float32)
                 + bias)                   # (B, 4H) f32
        i_g = jax.nn.sigmoid(gates[:, 0:H])
        f_g = jax.nn.sigmoid(gates[:, H:2 * H])
        g_g = jnp.tanh(gates[:, 2 * H:3 * H])
        o_g = jax.nn.sigmoid(gates[:, 3 * H:4 * H])
        c = f_g * c + i_g * g_g
        h = o_g * jnp.tanh(c)
        o_ref[t] = h


# ---------------------------------------------------------------- pallas wrappers

def attention_block(x, blk, n_head):
    B, T, D = x.shape
    return pl.pallas_call(
        functools.partial(_attn_block_kernel, n_head=n_head),
        grid=(B,),
        in_specs=[
            pl.BlockSpec((None, T, D), lambda b: (b, 0, 0)),   # x: one batch row
            _resident((D, 3 * D)),                             # wqkv
            _resident((D, D)),                                 # wo
            _resident((1, D)),                                 # bo
            _resident((1, D)),                                 # gamma1
            _resident((1, D)),                                 # beta1
        ],
        out_specs=pl.BlockSpec((None, T, D), lambda b: (b, 0, 0)),
        out_shape=jax.ShapeDtypeStruct((B, T, D), jnp.float32),
        compiler_params=_CP_PARALLEL,
    )(x, blk["wqkv"], blk["wo"], blk["bo"], blk["g1"], blk["b1"])


def ffn_block(x, blk):
    B, T, D = x.shape
    rows = B * T
    r = _row_tile(rows)
    xf = x.reshape(rows, D)
    y = pl.pallas_call(
        _ffn_block_kernel,
        grid=(rows // r,),
        in_specs=[
            pl.BlockSpec((r, D), lambda i: (i, 0)),
            _resident((D, 4 * D)), _resident((1, 4 * D)),
            _resident((4 * D, D)), _resident((1, D)),
            _resident((1, D)), _resident((1, D)),
        ],
        out_specs=pl.BlockSpec((r, D), lambda i: (i, 0)),
        out_shape=jax.ShapeDtypeStruct((rows, D), jnp.float32),
        compiler_params=_CP_PARALLEL,
    )(xf, blk["w_ff1"], blk["b_ff1"], blk["w_ff2"], blk["b_ff2"], blk["g2"], blk["b2"])
    return y.reshape(B, T, D)


def transformer_block(x, blk, n_head):
    x = attention_block(x, blk, n_head)
    return ffn_block(x, blk)


def lstm_forward(x, mem):
    """MemoryModule: single-layer LSTM over the encoder output, zero init state."""
    B, T, _ = x.shape
    H = mem["whh"].shape[0]
    xt = jnp.transpose(x, (1, 0, 2))                   # time-major (T, B, D)
    y = pl.pallas_call(
        _lstm_kernel,
        out_shape=jax.ShapeDtypeStruct((T, B, H), jnp.float32),
    )(xt, mem["wih"], mem["whh"], mem["bias"])
    return jnp.transpose(y, (1, 0, 2))                 # (B, T, H)


def lnf_lmhead(x, dec):
    B, T, D = x.shape
    V = dec["lm_w"].shape[1]
    rows = B * T
    r = _row_tile(rows)
    xf = x.reshape(rows, D)
    logits = pl.pallas_call(
        _lnf_lmhead_kernel,
        grid=(rows // r,),
        in_specs=[
            pl.BlockSpec((r, D), lambda i: (i, 0)),
            _resident((1, D)), _resident((1, D)),
            _resident((D, V)), _resident((1, V)),
        ],
        out_specs=pl.BlockSpec((r, V), lambda i: (i, 0)),
        out_shape=jax.ShapeDtypeStruct((rows, V), jnp.float32),
        compiler_params=_CP_PARALLEL,
    )(xf, dec["g_f"], dec["b_f"], dec["lm_w"], dec["lm_b"])
    return logits.reshape(B, T, V)


# ---------------------------------------------------------------- params / glue

def make_positional_encoding(max_length, d_model):
    position = jnp.arange(max_length, dtype=jnp.float32)[:, None]
    div_term = jnp.exp(jnp.arange(0, d_model, 2, dtype=jnp.float32)
                       * -(jnp.log(10000.0) / d_model))
    pe = jnp.zeros((max_length, d_model), dtype=jnp.float32)
    pe = pe.at[:, 0::2].set(jnp.sin(position * div_term))
    pe = pe.at[:, 1::2].set(jnp.cos(position * div_term))
    return pe


def _dense(key, shape, scale=0.02, dtype=jnp.bfloat16):
    return (scale * jax.random.normal(key, shape, dtype=jnp.float32)).astype(dtype)


def init_block(key, d_model):
    k = jax.random.split(key, 4)
    return {
        "wqkv": _dense(k[0], (d_model, 3 * d_model)),          # [Q | K | V], head-major cols
        "wo": _dense(k[1], (d_model, d_model)),
        "bo": jnp.zeros((1, d_model), jnp.float32),
        "w_ff1": _dense(k[2], (d_model, 4 * d_model)),
        "b_ff1": jnp.zeros((1, 4 * d_model), jnp.float32),
        "w_ff2": _dense(k[3], (4 * d_model, d_model)),
        "b_ff2": jnp.zeros((1, d_model), jnp.float32),
        "g1": jnp.ones((1, d_model), jnp.float32),
        "b1": jnp.zeros((1, d_model), jnp.float32),
        "g2": jnp.ones((1, d_model), jnp.float32),
        "b2": jnp.zeros((1, d_model), jnp.float32),
    }


def init_params(key, vocab_size, d_model, n_layer, max_length):
    ks = jax.random.split(key, 6 + 2 * n_layer)
    return {
        "encoder": {
            "embedding": _dense(ks[0], (vocab_size, d_model), scale=1.0, dtype=jnp.float32),
            "pos_enc": make_positional_encoding(max_length, d_model),
            "blocks": [init_block(ks[6 + i], d_model) for i in range(n_layer)],
        },
        "memory": {   # LSTM weights pre-transposed to (in, 4H); gate order (i, f, g, o)
            "wih": _dense(ks[1], (d_model, 4 * d_model)),
            "whh": _dense(ks[2], (d_model, 4 * d_model)),
            "bias": jnp.zeros((1, 4 * d_model), jnp.float32),
        },
        "decoder": {
            "tok_emb": _dense(ks[3], (vocab_size, d_model), scale=1.0, dtype=jnp.float32),
            "pos_emb": _dense(ks[4], (max_length, d_model), scale=0.02, dtype=jnp.float32),
            "blocks": [init_block(ks[6 + n_layer + i], d_model) for i in range(n_layer)],
            "g_f": jnp.ones((1, d_model), jnp.float32),
            "b_f": jnp.zeros((1, d_model), jnp.float32),
            "lm_w": _dense(ks[5], (d_model, vocab_size)),
            "lm_b": jnp.zeros((1, vocab_size), jnp.float32),
        },
    }


def encoder_forward(tokens, enc, n_head):
    _, T = tokens.shape
    x = jnp.take(enc["embedding"], tokens, axis=0) + enc["pos_enc"][None, :T, :]
    for blk in enc["blocks"]:
        x = transformer_block(x, blk, n_head)
    return x


def decoder_forward(tokens, memory_out, dec, n_head):
    _, T = tokens.shape
    x = (jnp.take(dec["tok_emb"], tokens, axis=0)
         + dec["pos_emb"][None, :T, :]
         + memory_out[:, -T:, :])
    for blk in dec["blocks"]:
        x = transformer_block(x, blk, n_head)
    return lnf_lmhead(x, dec)


def bigram_lm_forward(tokens, params, *, n_head):
    """BigramLanguageModel.forward(idx, targets=None) -> (logits, loss=None)."""
    enc_out = encoder_forward(tokens, params["encoder"], n_head)
    mem_out = lstm_forward(enc_out, params["memory"])
    logits = decoder_forward(tokens, mem_out, params["decoder"], n_head)
    return logits, None   # TODO(synk): cross-entropy loss path (targets) not implemented


# ---------------------------------------------------------------- main

if __name__ == "__main__":
    B, T = 2, 16
    key = jax.random.PRNGKey(0)
    k_param, k_tok = jax.random.split(key)
    params = init_params(k_param, VOCAB_SIZE, D_MODEL, N_LAYER, MAX_LEN)
    tokens = jax.random.randint(k_tok, (B, T), 0, VOCAB_SIZE, dtype=jnp.int32)

    forward = jax.jit(functools.partial(bigram_lm_forward, n_head=N_HEAD))
    logits, loss = forward(tokens, params)
    logits = jax.block_until_ready(logits)

    assert logits.shape == (B, T, VOCAB_SIZE), logits.shape
    assert loss is None
    assert bool(jnp.all(jnp.isfinite(logits)))
    print("KERNEL_OK")
</pallas_src>

<mosaic_0001>
module attributes {stable_mosaic.version = 11 : i64} {
  func.func @_attn_block_kernel(%arg0: i32, %arg1: memref<1x16x128xf32, #tpu.memory_space<vmem>>, %arg2: memref<128x384xbf16, #tpu.memory_space<vmem>>, %arg3: memref<128x128xbf16, #tpu.memory_space<vmem>>, %arg4: memref<1x128xf32, #tpu.memory_space<vmem>>, %arg5: memref<1x128xf32, #tpu.memory_space<vmem>>, %arg6: memref<1x128xf32, #tpu.memory_space<vmem>>, %arg7: memref<1x16x128xf32, #tpu.memory_space<vmem>>) attributes {dimension_semantics = [#tpu.dimension_semantics<parallel>], iteration_bounds = array<i64: 2>, scalar_prefetch = 0 : i64, scratch_operands = 0 : i64, tpu.core_type = #tpu.core_type<tc>, window_params = [{transform_indices = @transform_0, window_bounds = array<i64: 1, 16, 128>}, {pipeline_mode = #tpu.pipeline_mode<synchronous>, transform_indices = @transform_1, window_bounds = array<i64: 128, 384>}, {pipeline_mode = #tpu.pipeline_mode<synchronous>, transform_indices = @transform_2, window_bounds = array<i64: 128, 128>}, {pipeline_mode = #tpu.pipeline_mode<synchronous>, transform_indices = @transform_3, window_bounds = array<i64: 1, 128>}, {pipeline_mode = #tpu.pipeline_mode<synchronous>, transform_indices = @transform_4, window_bounds = array<i64: 1, 128>}, {pipeline_mode = #tpu.pipeline_mode<synchronous>, transform_indices = @transform_5, window_bounds = array<i64: 1, 128>}, {transform_indices = @transform_6, window_bounds = array<i64: 1, 16, 128>}]} {
    %c0 = arith.constant 0 : index
    %c0_0 = arith.constant 0 : index
    %c0_1 = arith.constant 0 : index
    %0 = vector.load %arg1[%c0, %c0_0, %c0_1] : memref<1x16x128xf32, #tpu.memory_space<vmem>>, vector<1x16x128xf32>
    %1 = vector.shape_cast %0 : vector<1x16x128xf32> to vector<16x128xf32>
    %2 = arith.truncf %1 : vector<16x128xf32> to vector<16x128xbf16>
    %c0_2 = arith.constant 0 : index
    %c0_3 = arith.constant 0 : index
    %3 = vector.load %arg2[%c0_2, %c0_3] : memref<128x384xbf16, #tpu.memory_space<vmem>>, vector<128x384xbf16>
    %cst = arith.constant dense<0.000000e+00> : vector<16x384xf32>
    %4 = tpu.matmul %2, %3, %cst {dimension_numbers = #tpu.dot_dimension_numbers<[1], [0], [0], [1], [0, 0, 1, 1], [], []>} : vector<16x128xbf16>, vector<128x384xbf16>, vector<16x384xf32> -> vector<16x384xf32>
    %5 = tpu.iota {dimensions = array<i32: 0>} : vector<16x16xi32>
    %6 = tpu.iota {dimensions = array<i32: 1>} : vector<16x16xi32>
    %7 = arith.cmpi sle, %6, %5 : vector<16x16xi32>
    %c0_4 = arith.constant 0 : index
    %c0_5 = arith.constant 0 : index
    %8 = vector.load %arg3[%c0_4, %c0_5] : memref<128x128xbf16, #tpu.memory_space<vmem>>, vector<128x128xbf16>
    %cst_6 = arith.constant 0.000000e+00 : f32
    %9 = vector.broadcast %cst_6 : f32 to vector<16x128xf32>
    %10 = vector.extract_strided_slice %4 {offsets = [0, 0], sizes = [16, 16], strides = [1, 1]} : vector<16x384xf32> to vector<16x16xf32>
    %11 = vector.extract_strided_slice %4 {offsets = [0, 128], sizes = [16, 16], strides = [1, 1]} : vector<16x384xf32> to vector<16x16xf32>
    %12 = vector.extract_strided_slice %4 {offsets = [0, 256], sizes = [16, 16], strides = [1, 1]} : vector<16x384xf32> to vector<16x16xf32>
    %13 = arith.truncf %10 : vector<16x16xf32> to vector<16x16xbf16>
    %14 = arith.truncf %11 : vector<16x16xf32> to vector<16x16xbf16>
    %cst_7 = arith.constant dense<0.000000e+00> : vector<16x16xf32>
    %15 = tpu.matmul %13, %14, %cst_7 {dimension_numbers = #tpu.dot_dimension_numbers<[1], [1], [0], [0], [0, 0, 1, 0], [], []>} : vector<16x16xbf16>, vector<16x16xbf16>, vector<16x16xf32> -> vector<16x16xf32>
    %cst_8 = arith.constant 2.500000e-01 : f32
    %16 = vector.broadcast %cst_8 : f32 to vector<16x16xf32>
    %17 = arith.mulf %15, %16 : vector<16x16xf32>
    %cst_9 = arith.constant 0xFF800000 : f32
    %18 = vector.broadcast %cst_9 : f32 to vector<16x16xf32>
    %19 = arith.select %7, %17, %18 : vector<16x16xi1>, vector<16x16xf32>
    %cst_10 = arith.constant dense<0xFF800000> : vector<16xf32>
    %20 = vector.multi_reduction <maximumf>, %19, %cst_10 [1] : vector<16x16xf32> to vector<16xf32>
    %21 = vector.shape_cast %20 : vector<16xf32> to vector<16x1xf32>
    %22 = vector.broadcast %21 : vector<16x1xf32> to vector<16x16xf32>
    %23 = arith.subf %19, %22 : vector<16x16xf32>
    %24 = math.exp %23 : vector<16x16xf32>
    %cst_11 = arith.constant dense<0.000000e+00> : vector<16xf32>
    %25 = vector.multi_reduction <add>, %24, %cst_11 [1] : vector<16x16xf32> to vector<16xf32>
    %26 = vector.shape_cast %25 : vector<16xf32> to vector<16x1xf32>
    %27 = tpu.reciprocal %26 {approx = true} : vector<16x1xf32> -> vector<16x1xf32>
    %28 = vector.broadcast %27 : vector<16x1xf32> to vector<16x16xf32>
    %29 = arith.mulf %24, %28 : vector<16x16xf32>
    %30 = arith.truncf %29 : vector<16x16xf32> to vector<16x16xbf16>
    %31 = arith.truncf %12 : vector<16x16xf32> to vector<16x16xbf16>
    %cst_12 = arith.constant dense<0.000000e+00> : vector<16x16xf32>
    %32 = tpu.matmul %30, %31, %cst_12 {dimension_numbers = #tpu.dot_dimension_numbers<[1], [0], [0], [1], [0, 0, 1, 1], [], []>} : vector<16x16xbf16>, vector<16x16xbf16>, vector<16x16xf32> -> vector<16x16xf32>
    %33 = arith.truncf %32 : vector<16x16xf32> to vector<16x16xbf16>
    %34 = vector.extract_strided_slice %8 {offsets = [0, 0], sizes = [16, 128], strides = [1, 1]} : vector<128x128xbf16> to vector<16x128xbf16>
    %cst_13 = arith.constant dense<0.000000e+00> : vector<16x128xf32>
    %35 = tpu.matmul %33, %34, %cst_13 {dimension_numbers = #tpu.dot_dimension_numbers<[1], [0], [0], [1], [0, 0, 1, 1], [], []>} : vector<16x16xbf16>, vector<16x128xbf16>, vector<16x128xf32> -> vector<16x128xf32>
    %36 = arith.addf %9, %35 : vector<16x128xf32>
    %37 = vector.extract_strided_slice %4 {offsets = [0, 16], sizes = [16, 16], strides = [1, 1]} : vector<16x384xf32> to vector<16x16xf32>
    %38 = vector.extract_strided_slice %4 {offsets = [0, 144], sizes = [16, 16], strides = [1, 1]} : vector<16x384xf32> to vector<16x16xf32>
    %39 = vector.extract_strided_slice %4 {offsets = [0, 272], sizes = [16, 16], strides = [1, 1]} : vector<16x384xf32> to vector<16x16xf32>
    %40 = arith.truncf %37 : vector<16x16xf32> to vector<16x16xbf16>
    %41 = arith.truncf %38 : vector<16x16xf32> to vector<16x16xbf16>
    %cst_14 = arith.constant dense<0.000000e+00> : vector<16x16xf32>
    %42 = tpu.matmul %40, %41, %cst_14 {dimension_numbers = #tpu.dot_dimension_numbers<[1], [1], [0], [0], [0, 0, 1, 0], [], []>} : vector<16x16xbf16>, vector<16x16xbf16>, vector<16x16xf32> -> vector<16x16xf32>
    %cst_15 = arith.constant 2.500000e-01 : f32
    %43 = vector.broadcast %cst_15 : f32 to vector<16x16xf32>
    %44 = arith.mulf %42, %43 : vector<16x16xf32>
    %cst_16 = arith.constant 0xFF800000 : f32
    %45 = vector.broadcast %cst_16 : f32 to vector<16x16xf32>
    %46 = arith.select %7, %44, %45 : vector<16x16xi1>, vector<16x16xf32>
    %cst_17 = arith.constant dense<0xFF800000> : vector<16xf32>
    %47 = vector.multi_reduction <maximumf>, %46, %cst_17 [1] : vector<16x16xf32> to vector<16xf32>
    %48 = vector.shape_cast %47 : vector<16xf32> to vector<16x1xf32>
    %49 = vector.broadcast %48 : vector<16x1xf32> to vector<16x16xf32>
    %50 = arith.subf %46, %49 : vector<16x16xf32>
    %51 = math.exp %50 : vector<16x16xf32>
    %cst_18 = arith.constant dense<0.000000e+00> : vector<16xf32>
    %52 = vector.multi_reduction <add>, %51, %cst_18 [1] : vector<16x16xf32> to vector<16xf32>
    %53 = vector.shape_cast %52 : vector<16xf32> to vector<16x1xf32>
    %54 = tpu.reciprocal %53 {approx = true} : vector<16x1xf32> -> vector<16x1xf32>
    %55 = vector.broadcast %54 : vector<16x1xf32> to vector<16x16xf32>
    %56 = arith.mulf %51, %55 : vector<16x16xf32>
    %57 = arith.truncf %56 : vector<16x16xf32> to vector<16x16xbf16>
    %58 = arith.truncf %39 : vector<16x16xf32> to vector<16x16xbf16>
    %cst_19 = arith.constant dense<0.000000e+00> : vector<16x16xf32>
    %59 = tpu.matmul %57, %58, %cst_19 {dimension_numbers = #tpu.dot_dimension_numbers<[1], [0], [0], [1], [0, 0, 1, 1], [], []>} : vector<16x16xbf16>, vector<16x16xbf16>, vector<16x16xf32> -> vector<16x16xf32>
    %60 = arith.truncf %59 : vector<16x16xf32> to vector<16x16xbf16>
    %61 = vector.extract_strided_slice %8 {offsets = [16, 0], sizes = [16, 128], strides = [1, 1]} : vector<128x128xbf16> to vector<16x128xbf16>
    %cst_20 = arith.constant dense<0.000000e+00> : vector<16x128xf32>
    %62 = tpu.matmul %60, %61, %cst_20 {dimension_numbers = #tpu.dot_dimension_numbers<[1], [0], [0], [1], [0, 0, 1, 1], [], []>} : vector<16x16xbf16>, vector<16x128xbf16>, vector<16x128xf32> -> vector<16x128xf32>
    %63 = arith.addf %36, %62 : vector<16x128xf32>
    %64 = vector.extract_strided_slice %4 {offsets = [0, 32], sizes = [16, 16], strides = [1, 1]} : vector<16x384xf32> to vector<16x16xf32>
    %65 = vector.extract_strided_slice %4 {offsets = [0, 160], sizes = [16, 16], strides = [1, 1]} : vector<16x384xf32> to vector<16x16xf32>
    %66 = vector.extract_strided_slice %4 {offsets = [0, 288], sizes = [16, 16], strides = [1, 1]} : vector<16x384xf32> to vector<16x16xf32>
    %67 = arith.truncf %64 : vector<16x16xf32> to vector<16x16xbf16>
    %68 = arith.truncf %65 : vector<16x16xf32> to vector<16x16xbf16>
    %cst_21 = arith.constant dense<0.000000e+00> : vector<16x16xf32>
    %69 = tpu.matmul %67, %68, %cst_21 {dimension_numbers = #tpu.dot_dimension_numbers<[1], [1], [0], [0], [0, 0, 1, 0], [], []>} : vector<16x16xbf16>, vector<16x16xbf16>, vector<16x16xf32> -> vector<16x16xf32>
    %cst_22 = arith.constant 2.500000e-01 : f32
    %70 = vector.broadcast %cst_22 : f32 to vector<16x16xf32>
    %71 = arith.mulf %69, %70 : vector<16x16xf32>
    %cst_23 = arith.constant 0xFF800000 : f32
    %72 = vector.broadcast %cst_23 : f32 to vector<16x16xf32>
    %73 = arith.select %7, %71, %72 : vector<16x16xi1>, vector<16x16xf32>
    %cst_24 = arith.constant dense<0xFF800000> : vector<16xf32>
    %74 = vector.multi_reduction <maximumf>, %73, %cst_24 [1] : vector<16x16xf32> to vector<16xf32>
    %75 = vector.shape_cast %74 : vector<16xf32> to vector<16x1xf32>
    %76 = vector.broadcast %75 : vector<16x1xf32> to vector<16x16xf32>
    %77 = arith.subf %73, %76 : vector<16x16xf32>
    %78 = math.exp %77 : vector<16x16xf32>
    %cst_25 = arith.constant dense<0.000000e+00> : vector<16xf32>
    %79 = vector.multi_reduction <add>, %78, %cst_25 [1] : vector<16x16xf32> to vector<16xf32>
    %80 = vector.shape_cast %79 : vector<16xf32> to vector<16x1xf32>
    %81 = tpu.reciprocal %80 {approx = true} : vector<16x1xf32> -> vector<16x1xf32>
    %82 = vector.broadcast %81 : vector<16x1xf32> to vector<16x16xf32>
    %83 = arith.mulf %78, %82 : vector<16x16xf32>
    %84 = arith.truncf %83 : vector<16x16xf32> to vector<16x16xbf16>
    %85 = arith.truncf %66 : vector<16x16xf32> to vector<16x16xbf16>
    %cst_26 = arith.constant dense<0.000000e+00> : vector<16x16xf32>
    %86 = tpu.matmul %84, %85, %cst_26 {dimension_numbers = #tpu.dot_dimension_numbers<[1], [0], [0], [1], [0, 0, 1, 1], [], []>} : vector<16x16xbf16>, vector<16x16xbf16>, vector<16x16xf32> -> vector<16x16xf32>
    %87 = arith.truncf %86 : vector<16x16xf32> to vector<16x16xbf16>
    %88 = vector.extract_strided_slice %8 {offsets = [32, 0], sizes = [16, 128], strides = [1, 1]} : vector<128x128xbf16> to vector<16x128xbf16>
    %cst_27 = arith.constant dense<0.000000e+00> : vector<16x128xf32>
    %89 = tpu.matmul %87, %88, %cst_27 {dimension_numbers = #tpu.dot_dimension_numbers<[1], [0], [0], [1], [0, 0, 1, 1], [], []>} : vector<16x16xbf16>, vector<16x128xbf16>, vector<16x128xf32> -> vector<16x128xf32>
    %90 = arith.addf %63, %89 : vector<16x128xf32>
    %91 = vector.extract_strided_slice %4 {offsets = [0, 48], sizes = [16, 16], strides = [1, 1]} : vector<16x384xf32> to vector<16x16xf32>
    %92 = vector.extract_strided_slice %4 {offsets = [0, 176], sizes = [16, 16], strides = [1, 1]} : vector<16x384xf32> to vector<16x16xf32>
    %93 = vector.extract_strided_slice %4 {offsets = [0, 304], sizes = [16, 16], strides = [1, 1]} : vector<16x384xf32> to vector<16x16xf32>
    %94 = arith.truncf %91 : vector<16x16xf32> to vector<16x16xbf16>
    %95 = arith.truncf %92 : vector<16x16xf32> to vector<16x16xbf16>
    %cst_28 = arith.constant dense<0.000000e+00> : vector<16x16xf32>
    %96 = tpu.matmul %94, %95, %cst_28 {dimension_numbers = #tpu.dot_dimension_numbers<[1], [1], [0], [0], [0, 0, 1, 0], [], []>} : vector<16x16xbf16>, vector<16x16xbf16>, vector<16x16xf32> -> vector<16x16xf32>
    %cst_29 = arith.constant 2.500000e-01 : f32
    %97 = vector.broadcast %cst_29 : f32 to vector<16x16xf32>
    %98 = arith.mulf %96, %97 : vector<16x16xf32>
    %cst_30 = arith.constant 0xFF800000 : f32
    %99 = vector.broadcast %cst_30 : f32 to vector<16x16xf32>
    %100 = arith.select %7, %98, %99 : vector<16x16xi1>, vector<16x16xf32>
    %cst_31 = arith.constant dense<0xFF800000> : vector<16xf32>
    %101 = vector.multi_reduction <maximumf>, %100, %cst_31 [1] : vector<16x16xf32> to vector<16xf32>
    %102 = vector.shape_cast %101 : vector<16xf32> to vector<16x1xf32>
    %103 = vector.broadcast %102 : vector<16x1xf32> to vector<16x16xf32>
    %104 = arith.subf %100, %103 : vector<16x16xf32>
    %105 = math.exp %104 : vector<16x16xf32>
    %cst_32 = arith.constant dense<0.000000e+00> : vector<16xf32>
    %106 = vector.multi_reduction <add>, %105, %cst_32 [1] : vector<16x16xf32> to vector<16xf32>
    %107 = vector.shape_cast %106 : vector<16xf32> to vector<16x1xf32>
    %108 = tpu.reciprocal %107 {approx = true} : vector<16x1xf32> -> vector<16x1xf32>
    %109 = vector.broadcast %108 : vector<16x1xf32> to vector<16x16xf32>
    %110 = arith.mulf %105, %109 : vector<16x16xf32>
    %111 = arith.truncf %110 : vector<16x16xf32> to vector<16x16xbf16>
    %112 = arith.truncf %93 : vector<16x16xf32> to vector<16x16xbf16>
    %cst_33 = arith.constant dense<0.000000e+00> : vector<16x16xf32>
    %113 = tpu.matmul %111, %112, %cst_33 {dimension_numbers = #tpu.dot_dimension_numbers<[1], [0], [0], [1], [0, 0, 1, 1], [], []>} : vector<16x16xbf16>, vector<16x16xbf16>, vector<16x16xf32> -> vector<16x16xf32>
    %114 = arith.truncf %113 : vector<16x16xf32> to vector<16x16xbf16>
    %115 = vector.extract_strided_slice %8 {offsets = [48, 0], sizes = [16, 128], strides = [1, 1]} : vector<128x128xbf16> to vector<16x128xbf16>
    %cst_34 = arith.constant dense<0.000000e+00> : vector<16x128xf32>
    %116 = tpu.matmul %114, %115, %cst_34 {dimension_numbers = #tpu.dot_dimension_numbers<[1], [0], [0], [1], [0, 0, 1, 1], [], []>} : vector<16x16xbf16>, vector<16x128xbf16>, vector<16x128xf32> -> vector<16x128xf32>
    %117 = arith.addf %90, %116 : vector<16x128xf32>
    %118 = vector.extract_strided_slice %4 {offsets = [0, 64], sizes = [16, 16], strides = [1, 1]} : vector<16x384xf32> to vector<16x16xf32>
    %119 = vector.extract_strided_slice %4 {offsets = [0, 192], sizes = [16, 16], strides = [1, 1]} : vector<16x384xf32> to vector<16x16xf32>
    %120 = vector.extract_strided_slice %4 {offsets = [0, 320], sizes = [16, 16], strides = [1, 1]} : vector<16x384xf32> to vector<16x16xf32>
    %121 = arith.truncf %118 : vector<16x16xf32> to vector<16x16xbf16>
    %122 = arith.truncf %119 : vector<16x16xf32> to vector<16x16xbf16>
    %cst_35 = arith.constant dense<0.000000e+00> : vector<16x16xf32>
    %123 = tpu.matmul %121, %122, %cst_35 {dimension_numbers = #tpu.dot_dimension_numbers<[1], [1], [0], [0], [0, 0, 1, 0], [], []>} : vector<16x16xbf16>, vector<16x16xbf16>, vector<16x16xf32> -> vector<16x16xf32>
    %cst_36 = arith.constant 2.500000e-01 : f32
    %124 = vector.broadcast %cst_36 : f32 to vector<16x16xf32>
    %125 = arith.mulf %123, %124 : vector<16x16xf32>
    %cst_37 = arith.constant 0xFF800000 : f32
    %126 = vector.broadcast %cst_37 : f32 to vector<16x16xf32>
    %127 = arith.select %7, %125, %126 : vector<16x16xi1>, vector<16x16xf32>
    %cst_38 = arith.constant dense<0xFF800000> : vector<16xf32>
    %128 = vector.multi_reduction <maximumf>, %127, %cst_38 [1] : vector<16x16xf32> to vector<16xf32>
    %129 = vector.shape_cast %128 : vector<16xf32> to vector<16x1xf32>
    %130 = vector.broadcast %129 : vector<16x1xf32> to vector<16x16xf32>
    %131 = arith.subf %127, %130 : vector<16x16xf32>
    %132 = math.exp %131 : vector<16x16xf32>
    %cst_39 = arith.constant dense<0.000000e+00> : vector<16xf32>
    %133 = vector.multi_reduction <add>, %132, %cst_39 [1] : vector<16x16xf32> to vector<16xf32>
    %134 = vector.shape_cast %133 : vector<16xf32> to vector<16x1xf32>
    %135 = tpu.reciprocal %134 {approx = true} : vector<16x1xf32> -> vector<16x1xf32>
    %136 = vector.broadcast %135 : vector<16x1xf32> to vector<16x16xf32>
    %137 = arith.mulf %132, %136 : vector<16x16xf32>
    %138 = arith.truncf %137 : vector<16x16xf32> to vector<16x16xbf16>
    %139 = arith.truncf %120 : vector<16x16xf32> to vector<16x16xbf16>
    %cst_40 = arith.constant dense<0.000000e+00> : vector<16x16xf32>
    %140 = tpu.matmul %138, %139, %cst_40 {dimension_numbers = #tpu.dot_dimension_numbers<[1], [0], [0], [1], [0, 0, 1, 1], [], []>} : vector<16x16xbf16>, vector<16x16xbf16>, vector<16x16xf32> -> vector<16x16xf32>
    %141 = arith.truncf %140 : vector<16x16xf32> to vector<16x16xbf16>
    %142 = vector.extract_strided_slice %8 {offsets = [64, 0], sizes = [16, 128], strides = [1, 1]} : vector<128x128xbf16> to vector<16x128xbf16>
    %cst_41 = arith.constant dense<0.000000e+00> : vector<16x128xf32>
    %143 = tpu.matmul %141, %142, %cst_41 {dimension_numbers = #tpu.dot_dimension_numbers<[1], [0], [0], [1], [0, 0, 1, 1], [], []>} : vector<16x16xbf16>, vector<16x128xbf16>, vector<16x128xf32> -> vector<16x128xf32>
    %144 = arith.addf %117, %143 : vector<16x128xf32>
    %145 = vector.extract_strided_slice %4 {offsets = [0, 80], sizes = [16, 16], strides = [1, 1]} : vector<16x384xf32> to vector<16x16xf32>
    %146 = vector.extract_strided_slice %4 {offsets = [0, 208], sizes = [16, 16], strides = [1, 1]} : vector<16x384xf32> to vector<16x16xf32>
    %147 = vector.extract_strided_slice %4 {offsets = [0, 336], sizes = [16, 16], strides = [1, 1]} : vector<16x384xf32> to vector<16x16xf32>
    %148 = arith.truncf %145 : vector<16x16xf32> to vector<16x16xbf16>
    %149 = arith.truncf %146 : vector<16x16xf32> to vector<16x16xbf16>
    %cst_42 = arith.constant dense<0.000000e+00> : vector<16x16xf32>
    %150 = tpu.matmul %148, %149, %cst_42 {dimension_numbers = #tpu.dot_dimension_numbers<[1], [1], [0], [0], [0, 0, 1, 0], [], []>} : vector<16x16xbf16>, vector<16x16xbf16>, vector<16x16xf32> -> vector<16x16xf32>
    %cst_43 = arith.constant 2.500000e-01 : f32
    %151 = vector.broadcast %cst_43 : f32 to vector<16x16xf32>
    %152 = arith.mulf %150, %151 : vector<16x16xf32>
    %cst_44 = arith.constant 0xFF800000 : f32
    %153 = vector.broadcast %cst_44 : f32 to vector<16x16xf32>
    %154 = arith.select %7, %152, %153 : vector<16x16xi1>, vector<16x16xf32>
    %cst_45 = arith.constant dense<0xFF800000> : vector<16xf32>
    %155 = vector.multi_reduction <maximumf>, %154, %cst_45 [1] : vector<16x16xf32> to vector<16xf32>
    %156 = vector.shape_cast %155 : vector<16xf32> to vector<16x1xf32>
    %157 = vector.broadcast %156 : vector<16x1xf32> to vector<16x16xf32>
    %158 = arith.subf %154, %157 : vector<16x16xf32>
    %159 = math.exp %158 : vector<16x16xf32>
    %cst_46 = arith.constant dense<0.000000e+00> : vector<16xf32>
    %160 = vector.multi_reduction <add>, %159, %cst_46 [1] : vector<16x16xf32> to vector<16xf32>
    %161 = vector.shape_cast %160 : vector<16xf32> to vector<16x1xf32>
    %162 = tpu.reciprocal %161 {approx = true} : vector<16x1xf32> -> vector<16x1xf32>
    %163 = vector.broadcast %162 : vector<16x1xf32> to vector<16x16xf32>
    %164 = arith.mulf %159, %163 : vector<16x16xf32>
    %165 = arith.truncf %164 : vector<16x16xf32> to vector<16x16xbf16>
    %166 = arith.truncf %147 : vector<16x16xf32> to vector<16x16xbf16>
    %cst_47 = arith.constant dense<0.000000e+00> : vector<16x16xf32>
    %167 = tpu.matmul %165, %166, %cst_47 {dimension_numbers = #tpu.dot_dimension_numbers<[1], [0], [0], [1], [0, 0, 1, 1], [], []>} : vector<16x16xbf16>, vector<16x16xbf16>, vector<16x16xf32> -> vector<16x16xf32>
    %168 = arith.truncf %167 : vector<16x16xf32> to vector<16x16xbf16>
    %169 = vector.extract_strided_slice %8 {offsets = [80, 0], sizes = [16, 128], strides = [1, 1]} : vector<128x128xbf16> to vector<16x128xbf16>
    %cst_48 = arith.constant dense<0.000000e+00> : vector<16x128xf32>
    %170 = tpu.matmul %168, %169, %cst_48 {dimension_numbers = #tpu.dot_dimension_numbers<[1], [0], [0], [1], [0, 0, 1, 1], [], []>} : vector<16x16xbf16>, vector<16x128xbf16>, vector<16x128xf32> -> vector<16x128xf32>
    %171 = arith.addf %144, %170 : vector<16x128xf32>
    %172 = vector.extract_strided_slice %4 {offsets = [0, 96], sizes = [16, 16], strides = [1, 1]} : vector<16x384xf32> to vector<16x16xf32>
    %173 = vector.extract_strided_slice %4 {offsets = [0, 224], sizes = [16, 16], strides = [1, 1]} : vector<16x384xf32> to vector<16x16xf32>
    %174 = vector.extract_strided_slice %4 {offsets = [0, 352], sizes = [16, 16], strides = [1, 1]} : vector<16x384xf32> to vector<16x16xf32>
    %175 = arith.truncf %172 : vector<16x16xf32> to vector<16x16xbf16>
    %176 = arith.truncf %173 : vector<16x16xf32> to vector<16x16xbf16>
    %cst_49 = arith.constant dense<0.000000e+00> : vector<16x16xf32>
    %177 = tpu.matmul %175, %176, %cst_49 {dimension_numbers = #tpu.dot_dimension_numbers<[1], [1], [0], [0], [0, 0, 1, 0], [], []>} : vector<16x16xbf16>, vector<16x16xbf16>, vector<16x16xf32> -> vector<16x16xf32>
    %cst_50 = arith.constant 2.500000e-01 : f32
    %178 = vector.broadcast %cst_50 : f32 to vector<16x16xf32>
    %179 = arith.mulf %177, %178 : vector<16x16xf32>
    %cst_51 = arith.constant 0xFF800000 : f32
    %180 = vector.broadcast %cst_51 : f32 to vector<16x16xf32>
    %181 = arith.select %7, %179, %180 : vector<16x16xi1>, vector<16x16xf32>
    %cst_52 = arith.constant dense<0xFF800000> : vector<16xf32>
    %182 = vector.multi_reduction <maximumf>, %181, %cst_52 [1] : vector<16x16xf32> to vector<16xf32>
    %183 = vector.shape_cast %182 : vector<16xf32> to vector<16x1xf32>
    %184 = vector.broadcast %183 : vector<16x1xf32> to vector<16x16xf32>
    %185 = arith.subf %181, %184 : vector<16x16xf32>
    %186 = math.exp %185 : vector<16x16xf32>
    %cst_53 = arith.constant dense<0.000000e+00> : vector<16xf32>
    %187 = vector.multi_reduction <add>, %186, %cst_53 [1] : vector<16x16xf32> to vector<16xf32>
    %188 = vector.shape_cast %187 : vector<16xf32> to vector<16x1xf32>
    %189 = tpu.reciprocal %188 {approx = true} : vector<16x1xf32> -> vector<16x1xf32>
    %190 = vector.broadcast %189 : vector<16x1xf32> to vector<16x16xf32>
    %191 = arith.mulf %186, %190 : vector<16x16xf32>
    %192 = arith.truncf %191 : vector<16x16xf32> to vector<16x16xbf16>
    %193 = arith.truncf %174 : vector<16x16xf32> to vector<16x16xbf16>
    %cst_54 = arith.constant dense<0.000000e+00> : vector<16x16xf32>
    %194 = tpu.matmul %192, %193, %cst_54 {dimension_numbers = #tpu.dot_dimension_numbers<[1], [0], [0], [1], [0, 0, 1, 1], [], []>} : vector<16x16xbf16>, vector<16x16xbf16>, vector<16x16xf32> -> vector<16x16xf32>
    %195 = arith.truncf %194 : vector<16x16xf32> to vector<16x16xbf16>
    %196 = vector.extract_strided_slice %8 {offsets = [96, 0], sizes = [16, 128], strides = [1, 1]} : vector<128x128xbf16> to vector<16x128xbf16>
    %cst_55 = arith.constant dense<0.000000e+00> : vector<16x128xf32>
    %197 = tpu.matmul %195, %196, %cst_55 {dimension_numbers = #tpu.dot_dimension_numbers<[1], [0], [0], [1], [0, 0, 1, 1], [], []>} : vector<16x16xbf16>, vector<16x128xbf16>, vector<16x128xf32> -> vector<16x128xf32>
    %198 = arith.addf %171, %197 : vector<16x128xf32>
    %199 = vector.extract_strided_slice %4 {offsets = [0, 112], sizes = [16, 16], strides = [1, 1]} : vector<16x384xf32> to vector<16x16xf32>
    %200 = vector.extract_strided_slice %4 {offsets = [0, 240], sizes = [16, 16], strides = [1, 1]} : vector<16x384xf32> to vector<16x16xf32>
    %201 = vector.extract_strided_slice %4 {offsets = [0, 368], sizes = [16, 16], strides = [1, 1]} : vector<16x384xf32> to vector<16x16xf32>
    %202 = arith.truncf %199 : vector<16x16xf32> to vector<16x16xbf16>
    %203 = arith.truncf %200 : vector<16x16xf32> to vector<16x16xbf16>
    %cst_56 = arith.constant dense<0.000000e+00> : vector<16x16xf32>
    %204 = tpu.matmul %202, %203, %cst_56 {dimension_numbers = #tpu.dot_dimension_numbers<[1], [1], [0], [0], [0, 0, 1, 0], [], []>} : vector<16x16xbf16>, vector<16x16xbf16>, vector<16x16xf32> -> vector<16x16xf32>
    %cst_57 = arith.constant 2.500000e-01 : f32
    %205 = vector.broadcast %cst_57 : f32 to vector<16x16xf32>
    %206 = arith.mulf %204, %205 : vector<16x16xf32>
    %cst_58 = arith.constant 0xFF800000 : f32
    %207 = vector.broadcast %cst_58 : f32 to vector<16x16xf32>
    %208 = arith.select %7, %206, %207 : vector<16x16xi1>, vector<16x16xf32>
    %cst_59 = arith.constant dense<0xFF800000> : vector<16xf32>
    %209 = vector.multi_reduction <maximumf>, %208, %cst_59 [1] : vector<16x16xf32> to vector<16xf32>
    %210 = vector.shape_cast %209 : vector<16xf32> to vector<16x1xf32>
    %211 = vector.broadcast %210 : vector<16x1xf32> to vector<16x16xf32>
    %212 = arith.subf %208, %211 : vector<16x16xf32>
    %213 = math.exp %212 : vector<16x16xf32>
    %cst_60 = arith.constant dense<0.000000e+00> : vector<16xf32>
    %214 = vector.multi_reduction <add>, %213, %cst_60 [1] : vector<16x16xf32> to vector<16xf32>
    %215 = vector.shape_cast %214 : vector<16xf32> to vector<16x1xf32>
    %216 = tpu.reciprocal %215 {approx = true} : vector<16x1xf32> -> vector<16x1xf32>
    %217 = vector.broadcast %216 : vector<16x1xf32> to vector<16x16xf32>
    %218 = arith.mulf %213, %217 : vector<16x16xf32>
    %219 = arith.truncf %218 : vector<16x16xf32> to vector<16x16xbf16>
    %220 = arith.truncf %201 : vector<16x16xf32> to vector<16x16xbf16>
    %cst_61 = arith.constant dense<0.000000e+00> : vector<16x16xf32>
    %221 = tpu.matmul %219, %220, %cst_61 {dimension_numbers = #tpu.dot_dimension_numbers<[1], [0], [0], [1], [0, 0, 1, 1], [], []>} : vector<16x16xbf16>, vector<16x16xbf16>, vector<16x16xf32> -> vector<16x16xf32>
    %222 = arith.truncf %221 : vector<16x16xf32> to vector<16x16xbf16>
    %223 = vector.extract_strided_slice %8 {offsets = [112, 0], sizes = [16, 128], strides = [1, 1]} : vector<128x128xbf16> to vector<16x128xbf16>
    %cst_62 = arith.constant dense<0.000000e+00> : vector<16x128xf32>
    %224 = tpu.matmul %222, %223, %cst_62 {dimension_numbers = #tpu.dot_dimension_numbers<[1], [0], [0], [1], [0, 0, 1, 1], [], []>} : vector<16x16xbf16>, vector<16x128xbf16>, vector<16x128xf32> -> vector<16x128xf32>
    %225 = arith.addf %198, %224 : vector<16x128xf32>
    %c0_63 = arith.constant 0 : index
    %c0_64 = arith.constant 0 : index
    %226 = vector.load %arg4[%c0_63, %c0_64] : memref<1x128xf32, #tpu.memory_space<vmem>>, vector<1x128xf32>
    %227 = vector.broadcast %226 : vector<1x128xf32> to vector<16x128xf32>
    %228 = arith.addf %225, %227 : vector<16x128xf32>
    %229 = arith.addf %1, %228 : vector<16x128xf32>
    %cst_65 = arith.constant dense<0.000000e+00> : vector<16xf32>
    %230 = vector.multi_reduction <add>, %229, %cst_65 [1] : vector<16x128xf32> to vector<16xf32>
    %231 = vector.shape_cast %230 : vector<16xf32> to vector<16x1xf32>
    %cst_66 = arith.constant 1.280000e+02 : f32
    %232 = vector.broadcast %cst_66 : f32 to vector<16x1xf32>
    %233 = arith.divf %231, %232 : vector<16x1xf32>
    %234 = vector.broadcast %233 : vector<16x1xf32> to vector<16x128xf32>
    %235 = arith.subf %229, %234 : vector<16x128xf32>
    %236 = arith.mulf %235, %235 : vector<16x128xf32>
    %cst_67 = arith.constant dense<0.000000e+00> : vector<16xf32>
    %237 = vector.multi_reduction <add>, %236, %cst_67 [1] : vector<16x128xf32> to vector<16xf32>
    %238 = vector.shape_cast %237 : vector<16xf32> to vector<16x1xf32>
    %cst_68 = arith.constant 1.280000e+02 : f32
    %239 = vector.broadcast %cst_68 : f32 to vector<16x1xf32>
    %240 = arith.divf %238, %239 : vector<16x1xf32>
    %241 = vector.broadcast %233 : vector<16x1xf32> to vector<16x128xf32>
    %242 = arith.subf %229, %241 : vector<16x128xf32>
    %cst_69 = arith.constant 9.99999974E-6 : f32
    %243 = vector.broadcast %cst_69 : f32 to vector<16x1xf32>
    %244 = arith.addf %240, %243 : vector<16x1xf32>
    %245 = math.rsqrt %244 : vector<16x1xf32>
    %246 = vector.broadcast %245 : vector<16x1xf32> to vector<16x128xf32>
    %247 = arith.mulf %242, %246 : vector<16x128xf32>
    %c0_70 = arith.constant 0 : index
    %c0_71 = arith.constant 0 : index
    %248 = vector.load %arg5[%c0_70, %c0_71] : memref<1x128xf32, #tpu.memory_space<vmem>>, vector<1x128xf32>
    %249 = vector.broadcast %248 : vector<1x128xf32> to vector<16x128xf32>
    %250 = arith.mulf %247, %249 : vector<16x128xf32>
    %c0_72 = arith.constant 0 : index
    %c0_73 = arith.constant 0 : index
    %251 = vector.load %arg6[%c0_72, %c0_73] : memref<1x128xf32, #tpu.memory_space<vmem>>, vector<1x128xf32>
    %252 = vector.broadcast %251 : vector<1x128xf32> to vector<16x128xf32>
    %253 = arith.addf %250, %252 : vector<16x128xf32>
    %c0_74 = arith.constant 0 : index
    %c0_75 = arith.constant 0 : index
    %c0_76 = arith.constant 0 : index
    %254 = vector.load %arg7[%c0_74, %c0_75, %c0_76] : memref<1x16x128xf32, #tpu.memory_space<vmem>>, vector<1x16x128xf32>
    %255 = vector.shape_cast %254 : vector<1x16x128xf32> to vector<16x128xf32>
    %256 = vector.shape_cast %253 : vector<16x128xf32> to vector<1x16x128xf32>
    tpu.vector_store %arg7[%c0_74, %c0_75, %c0_76], %256 {strides = array<i32>} : memref<1x16x128xf32, #tpu.memory_space<vmem>>, vector<1x16x128xf32>,
    return
  }
  func.func @transform_0(%arg0: i32) -> (i32, i32, i32) {
    %c0_i32 = arith.constant 0 : i32
    %c0_i32_0 = arith.constant 0 : i32
    %c0_i32_1 = arith.constant 0 : i32
    return %arg0, %c0_i32, %c0_i32_0 : i32, i32, i32
  }
  func.func @transform_1(%arg0: i32) -> (i32, i32) {
    %c0_i32 = arith.constant 0 : i32
    %c0_i32_0 = arith.constant 0 : i32
    %c0_i32_1 = arith.constant 0 : i32
    return %c0_i32, %c0_i32_0 : i32, i32
  }
  func.func @transform_2(%arg0: i32) -> (i32, i32) {
    %c0_i32 = arith.constant 0 : i32
    %c0_i32_0 = arith.constant 0 : i32
    %c0_i32_1 = arith.constant 0 : i32
    return %c0_i32, %c0_i32_0 : i32, i32
  }
  func.func @transform_3(%arg0: i32) -> (i32, i32) {
    %c0_i32 = arith.constant 0 : i32
    %c0_i32_0 = arith.constant 0 : i32
    %c0_i32_1 = arith.constant 0 : i32
    return %c0_i32, %c0_i32_0 : i32, i32
  }
  func.func @transform_4(%arg0: i32) -> (i32, i32) {
    %c0_i32 = arith.constant 0 : i32
    %c0_i32_0 = arith.constant 0 : i32
    %c0_i32_1 = arith.constant 0 : i32
    return %c0_i32, %c0_i32_0 : i32, i32
  }
  func.func @transform_5(%arg0: i32) -> (i32, i32) {
    %c0_i32 = arith.constant 0 : i32
    %c0_i32_0 = arith.constant 0 : i32
    %c0_i32_1 = arith.constant 0 : i32
    return %c0_i32, %c0_i32_0 : i32, i32
  }
  func.func @transform_6(%arg0: i32) -> (i32, i32, i32) {
    %c0_i32 = arith.constant 0 : i32
    %c0_i32_0 = arith.constant 0 : i32
    %c0_i32_1 = arith.constant 0 : i32
    return %arg0, %c0_i32, %c0_i32_0 : i32, i32, i32
  }
}

module attributes {stable_mosaic.version = 11 : i64} {
  func.func @_ffn_block_kernel(%arg0: i32, %arg1: memref<16x128xf32, #tpu.memory_space<vmem>>, %arg2: memref<128x512xbf16, #tpu.memory_space<vmem>>, %arg3: memref<1x512xf32, #tpu.memory_space<vmem>>, %arg4: memref<512x128xbf16, #tpu.memory_space<vmem>>, %arg5: memref<1x128xf32, #tpu.memory_space<vmem>>, %arg6: memref<1x128xf32, #tpu.memory_space<vmem>>, %arg7: memref<1x128xf32, #tpu.memory_space<vmem>>, %arg8: memref<16x128xf32, #tpu.memory_space<vmem>>) attributes {dimension_semantics = [#tpu.dimension_semantics<parallel>], iteration_bounds = array<i64: 2>, scalar_prefetch = 0 : i64, scratch_operands = 0 : i64, tpu.core_type = #tpu.core_type<tc>, window_params = [{transform_indices = @transform_0, window_bounds = array<i64: 16, 128>}, {pipeline_mode = #tpu.pipeline_mode<synchronous>, transform_indices = @transform_1, window_bounds = array<i64: 128, 512>}, {pipeline_mode = #tpu.pipeline_mode<synchronous>, transform_indices = @transform_2, window_bounds = array<i64: 1, 512>}, {pipeline_mode = #tpu.pipeline_mode<synchronous>, transform_indices = @transform_3, window_bounds = array<i64: 512, 128>}, {pipeline_mode = #tpu.pipeline_mode<synchronous>, transform_indices = @transform_4, window_bounds = array<i64: 1, 128>}, {pipeline_mode = #tpu.pipeline_mode<synchronous>, transform_indices = @transform_5, window_bounds = array<i64: 1, 128>}, {pipeline_mode = #tpu.pipeline_mode<synchronous>, transform_indices = @transform_6, window_bounds = array<i64: 1, 128>}, {transform_indices = @transform_7, window_bounds = array<i64: 16, 128>}]} {
    %c0 = arith.constant 0 : index
    %c0_0 = arith.constant 0 : index
    %0 = vector.load %arg1[%c0, %c0_0] : memref<16x128xf32, #tpu.memory_space<vmem>>, vector<16x128xf32>
    %1 = arith.truncf %0 : vector<16x128xf32> to vector<16x128xbf16>
    %c0_1 = arith.constant 0 : index
    %c0_2 = arith.constant 0 : index
    %2 = vector.load %arg2[%c0_1, %c0_2] : memref<128x512xbf16, #tpu.memory_space<vmem>>, vector<128x512xbf16>
    %cst = arith.constant dense<0.000000e+00> : vector<16x512xf32>
    %3 = tpu.matmul %1, %2, %cst {dimension_numbers = #tpu.dot_dimension_numbers<[1], [0], [0], [1], [0, 0, 1, 1], [], []>} : vector<16x128xbf16>, vector<128x512xbf16>, vector<16x512xf32> -> vector<16x512xf32>
    %c0_3 = arith.constant 0 : index
    %c0_4 = arith.constant 0 : index
    %4 = vector.load %arg3[%c0_3, %c0_4] : memref<1x512xf32, #tpu.memory_space<vmem>>, vector<1x512xf32>
    %5 = vector.broadcast %4 : vector<1x512xf32> to vector<16x512xf32>
    %6 = arith.addf %3, %5 : vector<16x512xf32>
    %cst_5 = arith.constant 0.000000e+00 : f32
    %7 = vector.broadcast %cst_5 : f32 to vector<16x512xf32>
    %8 = arith.maximumf %6, %7 : vector<16x512xf32>
    %9 = arith.truncf %8 : vector<16x512xf32> to vector<16x512xbf16>
    %c0_6 = arith.constant 0 : index
    %c0_7 = arith.constant 0 : index
    %10 = vector.load %arg4[%c0_6, %c0_7] : memref<512x128xbf16, #tpu.memory_space<vmem>>, vector<512x128xbf16>
    %cst_8 = arith.constant dense<0.000000e+00> : vector<16x128xf32>
    %11 = tpu.matmul %9, %10, %cst_8 {dimension_numbers = #tpu.dot_dimension_numbers<[1], [0], [0], [1], [0, 0, 1, 1], [], []>} : vector<16x512xbf16>, vector<512x128xbf16>, vector<16x128xf32> -> vector<16x128xf32>
    %c0_9 = arith.constant 0 : index
    %c0_10 = arith.constant 0 : index
    %12 = vector.load %arg5[%c0_9, %c0_10] : memref<1x128xf32, #tpu.memory_space<vmem>>, vector<1x128xf32>
    %13 = vector.broadcast %12 : vector<1x128xf32> to vector<16x128xf32>
    %14 = arith.addf %11, %13 : vector<16x128xf32>
    %15 = arith.addf %0, %14 : vector<16x128xf32>
    %cst_11 = arith.constant dense<0.000000e+00> : vector<16xf32>
    %16 = vector.multi_reduction <add>, %15, %cst_11 [1] : vector<16x128xf32> to vector<16xf32>
    %17 = vector.shape_cast %16 : vector<16xf32> to vector<16x1xf32>
    %cst_12 = arith.constant 1.280000e+02 : f32
    %18 = vector.broadcast %cst_12 : f32 to vector<16x1xf32>
    %19 = arith.divf %17, %18 : vector<16x1xf32>
    %20 = vector.broadcast %19 : vector<16x1xf32> to vector<16x128xf32>
    %21 = arith.subf %15, %20 : vector<16x128xf32>
    %22 = arith.mulf %21, %21 : vector<16x128xf32>
    %cst_13 = arith.constant dense<0.000000e+00> : vector<16xf32>
    %23 = vector.multi_reduction <add>, %22, %cst_13 [1] : vector<16x128xf32> to vector<16xf32>
    %24 = vector.shape_cast %23 : vector<16xf32> to vector<16x1xf32>
    %cst_14 = arith.constant 1.280000e+02 : f32
    %25 = vector.broadcast %cst_14 : f32 to vector<16x1xf32>
    %26 = arith.divf %24, %25 : vector<16x1xf32>
    %27 = vector.broadcast %19 : vector<16x1xf32> to vector<16x128xf32>
    %28 = arith.subf %15, %27 : vector<16x128xf32>
    %cst_15 = arith.constant 9.99999974E-6 : f32
    %29 = vector.broadcast %cst_15 : f32 to vector<16x1xf32>
    %30 = arith.addf %26, %29 : vector<16x1xf32>
    %31 = math.rsqrt %30 : vector<16x1xf32>
    %32 = vector.broadcast %31 : vector<16x1xf32> to vector<16x128xf32>
    %33 = arith.mulf %28, %32 : vector<16x128xf32>
    %c0_16 = arith.constant 0 : index
    %c0_17 = arith.constant 0 : index
    %34 = vector.load %arg6[%c0_16, %c0_17] : memref<1x128xf32, #tpu.memory_space<vmem>>, vector<1x128xf32>
    %35 = vector.broadcast %34 : vector<1x128xf32> to vector<16x128xf32>
    %36 = arith.mulf %33, %35 : vector<16x128xf32>
    %c0_18 = arith.constant 0 : index
    %c0_19 = arith.constant 0 : index
    %37 = vector.load %arg7[%c0_18, %c0_19] : memref<1x128xf32, #tpu.memory_space<vmem>>, vector<1x128xf32>
    %38 = vector.broadcast %37 : vector<1x128xf32> to vector<16x128xf32>
    %39 = arith.addf %36, %38 : vector<16x128xf32>
    %c0_20 = arith.constant 0 : index
    %c0_21 = arith.constant 0 : index
    %40 = vector.load %arg8[%c0_20, %c0_21] : memref<16x128xf32, #tpu.memory_space<vmem>>, vector<16x128xf32>
    tpu.vector_store %arg8[%c0_20, %c0_21], %39 {strides = array<i32>} : memref<16x128xf32, #tpu.memory_space<vmem>>, vector<16x128xf32>,
    return
  }
  func.func @transform_0(%arg0: i32) -> (i32, i32) {
    %c0_i32 = arith.constant 0 : i32
    %c0_i32_0 = arith.constant 0 : i32
    return %arg0, %c0_i32 : i32, i32
  }
  func.func @transform_1(%arg0: i32) -> (i32, i32) {
    %c0_i32 = arith.constant 0 : i32
    %c0_i32_0 = arith.constant 0 : i32
    %c0_i32_1 = arith.constant 0 : i32
    return %c0_i32, %c0_i32_0 : i32, i32
  }
  func.func @transform_2(%arg0: i32) -> (i32, i32) {
    %c0_i32 = arith.constant 0 : i32
    %c0_i32_0 = arith.constant 0 : i32
    %c0_i32_1 = arith.constant 0 : i32
    return %c0_i32, %c0_i32_0 : i32, i32
  }
  func.func @transform_3(%arg0: i32) -> (i32, i32) {
    %c0_i32 = arith.constant 0 : i32
    %c0_i32_0 = arith.constant 0 : i32
    %c0_i32_1 = arith.constant 0 : i32
    return %c0_i32, %c0_i32_0 : i32, i32
  }
  func.func @transform_4(%arg0: i32) -> (i32, i32) {
    %c0_i32 = arith.constant 0 : i32
    %c0_i32_0 = arith.constant 0 : i32
    %c0_i32_1 = arith.constant 0 : i32
    return %c0_i32, %c0_i32_0 : i32, i32
  }
  func.func @transform_5(%arg0: i32) -> (i32, i32) {
    %c0_i32 = arith.constant 0 : i32
    %c0_i32_0 = arith.constant 0 : i32
    %c0_i32_1 = arith.constant 0 : i32
    return %c0_i32, %c0_i32_0 : i32, i32
  }
  func.func @transform_6(%arg0: i32) -> (i32, i32) {
    %c0_i32 = arith.constant 0 : i32
    %c0_i32_0 = arith.constant 0 : i32
    %c0_i32_1 = arith.constant 0 : i32
    return %c0_i32, %c0_i32_0 : i32, i32
  }
  func.func @transform_7(%arg0: i32) -> (i32, i32) {
    %c0_i32 = arith.constant 0 : i32
    %c0_i32_0 = arith.constant 0 : i32
    return %arg0, %c0_i32 : i32, i32
  }
}

module attributes {stable_mosaic.version = 11 : i64} {
  func.func @_lnf_lmhead_kernel(%arg0: i32, %arg1: memref<16x128xf32, #tpu.memory_space<vmem>>, %arg2: memref<1x128xf32, #tpu.memory_space<vmem>>, %arg3: memref<1x128xf32, #tpu.memory_space<vmem>>, %arg4: memref<128x256xbf16, #tpu.memory_space<vmem>>, %arg5: memref<1x256xf32, #tpu.memory_space<vmem>>, %arg6: memref<16x256xf32, #tpu.memory_space<vmem>>) attributes {dimension_semantics = [#tpu.dimension_semantics<parallel>], iteration_bounds = array<i64: 2>, scalar_prefetch = 0 : i64, scratch_operands = 0 : i64, tpu.core_type = #tpu.core_type<tc>, window_params = [{transform_indices = @transform_0, window_bounds = array<i64: 16, 128>}, {pipeline_mode = #tpu.pipeline_mode<synchronous>, transform_indices = @transform_1, window_bounds = array<i64: 1, 128>}, {pipeline_mode = #tpu.pipeline_mode<synchronous>, transform_indices = @transform_2, window_bounds = array<i64: 1, 128>}, {pipeline_mode = #tpu.pipeline_mode<synchronous>, transform_indices = @transform_3, window_bounds = array<i64: 128, 256>}, {pipeline_mode = #tpu.pipeline_mode<synchronous>, transform_indices = @transform_4, window_bounds = array<i64: 1, 256>}, {transform_indices = @transform_5, window_bounds = array<i64: 16, 256>}]} {
    %c0 = arith.constant 0 : index
    %c0_0 = arith.constant 0 : index
    %0 = vector.load %arg1[%c0, %c0_0] : memref<16x128xf32, #tpu.memory_space<vmem>>, vector<16x128xf32>
    %cst = arith.constant dense<0.000000e+00> : vector<16xf32>
    %1 = vector.multi_reduction <add>, %0, %cst [1] : vector<16x128xf32> to vector<16xf32>
    %2 = vector.shape_cast %1 : vector<16xf32> to vector<16x1xf32>
    %cst_1 = arith.constant 1.280000e+02 : f32
    %3 = vector.broadcast %cst_1 : f32 to vector<16x1xf32>
    %4 = arith.divf %2, %3 : vector<16x1xf32>
    %5 = vector.broadcast %4 : vector<16x1xf32> to vector<16x128xf32>
    %6 = arith.subf %0, %5 : vector<16x128xf32>
    %7 = arith.mulf %6, %6 : vector<16x128xf32>
    %cst_2 = arith.constant dense<0.000000e+00> : vector<16xf32>
    %8 = vector.multi_reduction <add>, %7, %cst_2 [1] : vector<16x128xf32> to vector<16xf32>
    %9 = vector.shape_cast %8 : vector<16xf32> to vector<16x1xf32>
    %cst_3 = arith.constant 1.280000e+02 : f32
    %10 = vector.broadcast %cst_3 : f32 to vector<16x1xf32>
    %11 = arith.divf %9, %10 : vector<16x1xf32>
    %12 = vector.broadcast %4 : vector<16x1xf32> to vector<16x128xf32>
    %13 = arith.subf %0, %12 : vector<16x128xf32>
    %cst_4 = arith.constant 9.99999974E-6 : f32
    %14 = vector.broadcast %cst_4 : f32 to vector<16x1xf32>
    %15 = arith.addf %11, %14 : vector<16x1xf32>
    %16 = math.rsqrt %15 : vector<16x1xf32>
    %17 = vector.broadcast %16 : vector<16x1xf32> to vector<16x128xf32>
    %18 = arith.mulf %13, %17 : vector<16x128xf32>
    %c0_5 = arith.constant 0 : index
    %c0_6 = arith.constant 0 : index
    %19 = vector.load %arg2[%c0_5, %c0_6] : memref<1x128xf32, #tpu.memory_space<vmem>>, vector<1x128xf32>
    %20 = vector.broadcast %19 : vector<1x128xf32> to vector<16x128xf32>
    %21 = arith.mulf %18, %20 : vector<16x128xf32>
    %c0_7 = arith.constant 0 : index
    %c0_8 = arith.constant 0 : index
    %22 = vector.load %arg3[%c0_7, %c0_8] : memref<1x128xf32, #tpu.memory_space<vmem>>, vector<1x128xf32>
    %23 = vector.broadcast %22 : vector<1x128xf32> to vector<16x128xf32>
    %24 = arith.addf %21, %23 : vector<16x128xf32>
    %25 = arith.truncf %24 : vector<16x128xf32> to vector<16x128xbf16>
    %c0_9 = arith.constant 0 : index
    %c0_10 = arith.constant 0 : index
    %26 = vector.load %arg4[%c0_9, %c0_10] : memref<128x256xbf16, #tpu.memory_space<vmem>>, vector<128x256xbf16>
    %cst_11 = arith.constant dense<0.000000e+00> : vector<16x256xf32>
    %27 = tpu.matmul %25, %26, %cst_11 {dimension_numbers = #tpu.dot_dimension_numbers<[1], [0], [0], [1], [0, 0, 1, 1], [], []>} : vector<16x128xbf16>, vector<128x256xbf16>, vector<16x256xf32> -> vector<16x256xf32>
    %c0_12 = arith.constant 0 : index
    %c0_13 = arith.constant 0 : index
    %28 = vector.load %arg5[%c0_12, %c0_13] : memref<1x256xf32, #tpu.memory_space<vmem>>, vector<1x256xf32>
    %29 = vector.broadcast %28 : vector<1x256xf32> to vector<16x256xf32>
    %30 = arith.addf %27, %29 : vector<16x256xf32>
    %c0_14 = arith.constant 0 : index
    %c0_15 = arith.constant 0 : index
    %31 = vector.load %arg6[%c0_14, %c0_15] : memref<16x256xf32, #tpu.memory_space<vmem>>, vector<16x256xf32>
    tpu.vector_store %arg6[%c0_14, %c0_15], %30 {strides = array<i32>} : memref<16x256xf32, #tpu.memory_space<vmem>>, vector<16x256xf32>,
    return
  }
  func.func @transform_0(%arg0: i32) -> (i32, i32) {
    %c0_i32 = arith.constant 0 : i32
    %c0_i32_0 = arith.constant 0 : i32
    return %arg0, %c0_i32 : i32, i32
  }
  func.func @transform_1(%arg0: i32) -> (i32, i32) {
    %c0_i32 = arith.constant 0 : i32
    %c0_i32_0 = arith.constant 0 : i32
    %c0_i32_1 = arith.constant 0 : i32
    return %c0_i32, %c0_i32_0 : i32, i32
  }
  func.func @transform_2(%arg0: i32) -> (i32, i32) {
    %c0_i32 = arith.constant 0 : i32
    %c0_i32_0 = arith.constant 0 : i32
    %c0_i32_1 = arith.constant 0 : i32
    return %c0_i32, %c0_i32_0 : i32, i32
  }
  func.func @transform_3(%arg0: i32) -> (i32, i32) {
    %c0_i32 = arith.constant 0 : i32
    %c0_i32_0 = arith.constant 0 : i32
    %c0_i32_1 = arith.constant 0 : i32
    return %c0_i32, %c0_i32_0 : i32, i32
  }
  func.func @transform_4(%arg0: i32) -> (i32, i32) {
    %c0_i32 = arith.constant 0 : i32
    %c0_i32_0 = arith.constant 0 : i32
    %c0_i32_1 = arith.constant 0 : i32
    return %c0_i32, %c0_i32_0 : i32, i32
  }
  func.func @transform_5(%arg0: i32) -> (i32, i32) {
    %c0_i32 = arith.constant 0 : i32
    %c0_i32_0 = arith.constant 0 : i32
    return %arg0, %c0_i32 : i32, i32
  }
}

module attributes {stable_mosaic.version = 11 : i64} {
  func.func @_lstm_kernel(%arg0: memref<16x2x128xf32, #tpu.memory_space<vmem>>, %arg1: memref<128x512xbf16, #tpu.memory_space<vmem>>, %arg2: memref<128x512xbf16, #tpu.memory_space<vmem>>, %arg3: memref<1x512xf32, #tpu.memory_space<vmem>>, %arg4: memref<16x2x128xf32, #tpu.memory_space<vmem>>) attributes {dimension_semantics = [], scalar_prefetch = 0 : i64, scratch_operands = 0 : i64, tpu.core_type = #tpu.core_type<tc>} {
    %c0 = arith.constant 0 : index
    %c0_0 = arith.constant 0 : index
    %0 = vector.load %arg1[%c0, %c0_0] : memref<128x512xbf16, #tpu.memory_space<vmem>>, vector<128x512xbf16>
    %c0_1 = arith.constant 0 : index
    %c0_2 = arith.constant 0 : index
    %1 = vector.load %arg2[%c0_1, %c0_2] : memref<128x512xbf16, #tpu.memory_space<vmem>>, vector<128x512xbf16>
    %c0_3 = arith.constant 0 : index
    %c0_4 = arith.constant 0 : index
    %2 = vector.load %arg3[%c0_3, %c0_4] : memref<1x512xf32, #tpu.memory_space<vmem>>, vector<1x512xf32>
    %cst = arith.constant 0.000000e+00 : f32
    %3 = vector.broadcast %cst : f32 to vector<2x128xf32>
    %cst_5 = arith.constant 0.000000e+00 : f32
    %4 = vector.broadcast %cst_5 : f32 to vector<2x128xf32>
    %c0_6 = arith.constant 0 : index
    %c0_7 = arith.constant 0 : index
    %c0_8 = arith.constant 0 : index
    %5 = vector.load %arg0[%c0_6, %c0_7, %c0_8] : memref<16x2x128xf32, #tpu.memory_space<vmem>>, vector<1x2x128xf32>
    %6 = vector.shape_cast %5 : vector<1x2x128xf32> to vector<2x128xf32>
    %7 = arith.truncf %6 : vector<2x128xf32> to vector<2x128xbf16>
    %cst_9 = arith.constant dense<0.000000e+00> : vector<2x512xf32>
    %8 = tpu.matmul %7, %0, %cst_9 {dimension_numbers = #tpu.dot_dimension_numbers<[1], [0], [0], [1], [0, 0, 1, 1], [], []>} : vector<2x128xbf16>, vector<128x512xbf16>, vector<2x512xf32> -> vector<2x512xf32>
    %9 = arith.truncf %3 : vector<2x128xf32> to vector<2x128xbf16>
    %cst_10 = arith.constant dense<0.000000e+00> : vector<2x512xf32>
    %10 = tpu.matmul %9, %1, %cst_10 {dimension_numbers = #tpu.dot_dimension_numbers<[1], [0], [0], [1], [0, 0, 1, 1], [], []>} : vector<2x128xbf16>, vector<128x512xbf16>, vector<2x512xf32> -> vector<2x512xf32>
    %11 = arith.addf %8, %10 : vector<2x512xf32>
    %12 = vector.broadcast %2 : vector<1x512xf32> to vector<2x512xf32>
    %13 = arith.addf %11, %12 : vector<2x512xf32>
    %14 = vector.extract_strided_slice %13 {offsets = [0, 0], sizes = [2, 128], strides = [1, 1]} : vector<2x512xf32> to vector<2x128xf32>
    %15 = arith.negf %14 : vector<2x128xf32>
    %16 = math.exp %15 : vector<2x128xf32>
    %cst_11 = arith.constant 1.000000e+00 : f32
    %17 = vector.broadcast %cst_11 : f32 to vector<2x128xf32>
    %18 = arith.addf %17, %16 : vector<2x128xf32>
    %19 = arith.divf %17, %18 : vector<2x128xf32>
    %20 = vector.extract_strided_slice %13 {offsets = [0, 128], sizes = [2, 128], strides = [1, 1]} : vector<2x512xf32> to vector<2x128xf32>
    %21 = arith.negf %20 : vector<2x128xf32>
    %22 = math.exp %21 : vector<2x128xf32>
    %cst_12 = arith.constant 1.000000e+00 : f32
    %23 = vector.broadcast %cst_12 : f32 to vector<2x128xf32>
    %24 = arith.addf %23, %22 : vector<2x128xf32>
    %25 = arith.divf %23, %24 : vector<2x128xf32>
    %26 = vector.extract_strided_slice %13 {offsets = [0, 256], sizes = [2, 128], strides = [1, 1]} : vector<2x512xf32> to vector<2x128xf32>
    %27 = math.tanh %26 : vector<2x128xf32>
    %28 = vector.extract_strided_slice %13 {offsets = [0, 384], sizes = [2, 128], strides = [1, 1]} : vector<2x512xf32> to vector<2x128xf32>
    %29 = arith.negf %28 : vector<2x128xf32>
    %30 = math.exp %29 : vector<2x128xf32>
    %cst_13 = arith.constant 1.000000e+00 : f32
    %31 = vector.broadcast %cst_13 : f32 to vector<2x128xf32>
    %32 = arith.addf %31, %30 : vector<2x128xf32>
    %33 = arith.divf %31, %32 : vector<2x128xf32>
    %34 = arith.mulf %25, %4 : vector<2x128xf32>
    %35 = arith.mulf %19, %27 : vector<2x128xf32>
    %36 = arith.addf %34, %35 : vector<2x128xf32>
    %37 = math.tanh %36 : vector<2x128xf32>
    %38 = arith.mulf %33, %37 : vector<2x128xf32>
    %c0_14 = arith.constant 0 : index
    %c0_15 = arith.constant 0 : index
    %c0_16 = arith.constant 0 : index
    %39 = vector.load %arg4[%c0_14, %c0_15, %c0_16] : memref<16x2x128xf32, #tpu.memory_space<vmem>>, vector<1x2x128xf32>
    %40 = vector.shape_cast %39 : vector<1x2x128xf32> to vector<2x128xf32>
    %41 = vector.shape_cast %38 : vector<2x128xf32> to vector<1x2x128xf32>
    tpu.vector_store %arg4[%c0_14, %c0_15, %c0_16], %41 {strides = array<i32>} : memref<16x2x128xf32, #tpu.memory_space<vmem>>, vector<1x2x128xf32>,
    %c1 = arith.constant 1 : index
    %c0_17 = arith.constant 0 : index
    %c0_18 = arith.constant 0 : index
    %42 = vector.load %arg0[%c1, %c0_17, %c0_18] : memref<16x2x128xf32, #tpu.memory_space<vmem>>, vector<1x2x128xf32>
    %43 = vector.shape_cast %42 : vector<1x2x128xf32> to vector<2x128xf32>
    %44 = arith.truncf %43 : vector<2x128xf32> to vector<2x128xbf16>
    %cst_19 = arith.constant dense<0.000000e+00> : vector<2x512xf32>
    %45 = tpu.matmul %44, %0, %cst_19 {dimension_numbers = #tpu.dot_dimension_numbers<[1], [0], [0], [1], [0, 0, 1, 1], [], []>} : vector<2x128xbf16>, vector<128x512xbf16>, vector<2x512xf32> -> vector<2x512xf32>
    %46 = arith.truncf %38 : vector<2x128xf32> to vector<2x128xbf16>
    %cst_20 = arith.constant dense<0.000000e+00> : vector<2x512xf32>
    %47 = tpu.matmul %46, %1, %cst_20 {dimension_numbers = #tpu.dot_dimension_numbers<[1], [0], [0], [1], [0, 0, 1, 1], [], []>} : vector<2x128xbf16>, vector<128x512xbf16>, vector<2x512xf32> -> vector<2x512xf32>
    %48 = arith.addf %45, %47 : vector<2x512xf32>
    %49 = vector.broadcast %2 : vector<1x512xf32> to vector<2x512xf32>
    %50 = arith.addf %48, %49 : vector<2x512xf32>
    %51 = vector.extract_strided_slice %50 {offsets = [0, 0], sizes = [2, 128], strides = [1, 1]} : vector<2x512xf32> to vector<2x128xf32>
    %52 = arith.negf %51 : vector<2x128xf32>
    %53 = math.exp %52 : vector<2x128xf32>
    %cst_21 = arith.constant 1.000000e+00 : f32
    %54 = vector.broadcast %cst_21 : f32 to vector<2x128xf32>
    %55 = arith.addf %54, %53 : vector<2x128xf32>
    %56 = arith.divf %54, %55 : vector<2x128xf32>
    %57 = vector.extract_strided_slice %50 {offsets = [0, 128], sizes = [2, 128], strides = [1, 1]} : vector<2x512xf32> to vector<2x128xf32>
    %58 = arith.negf %57 : vector<2x128xf32>
    %59 = math.exp %58 : vector<2x128xf32>
    %cst_22 = arith.constant 1.000000e+00 : f32
    %60 = vector.broadcast %cst_22 : f32 to vector<2x128xf32>
    %61 = arith.addf %60, %59 : vector<2x128xf32>
    %62 = arith.divf %60, %61 : vector<2x128xf32>
    %63 = vector.extract_strided_slice %50 {offsets = [0, 256], sizes = [2, 128], strides = [1, 1]} : vector<2x512xf32> to vector<2x128xf32>
    %64 = math.tanh %63 : vector<2x128xf32>
    %65 = vector.extract_strided_slice %50 {offsets = [0, 384], sizes = [2, 128], strides = [1, 1]} : vector<2x512xf32> to vector<2x128xf32>
    %66 = arith.negf %65 : vector<2x128xf32>
    %67 = math.exp %66 : vector<2x128xf32>
    %cst_23 = arith.constant 1.000000e+00 : f32
    %68 = vector.broadcast %cst_23 : f32 to vector<2x128xf32>
    %69 = arith.addf %68, %67 : vector<2x128xf32>
    %70 = arith.divf %68, %69 : vector<2x128xf32>
    %71 = arith.mulf %62, %36 : vector<2x128xf32>
    %72 = arith.mulf %56, %64 : vector<2x128xf32>
    %73 = arith.addf %71, %72 : vector<2x128xf32>
    %74 = math.tanh %73 : vector<2x128xf32>
    %75 = arith.mulf %70, %74 : vector<2x128xf32>
    %c1_24 = arith.constant 1 : index
    %c0_25 = arith.constant 0 : index
    %c0_26 = arith.constant 0 : index
    %76 = vector.load %arg4[%c1_24, %c0_25, %c0_26] : memref<16x2x128xf32, #tpu.memory_space<vmem>>, vector<1x2x128xf32>
    %77 = vector.shape_cast %76 : vector<1x2x128xf32> to vector<2x128xf32>
    %78 = vector.shape_cast %75 : vector<2x128xf32> to vector<1x2x128xf32>
    tpu.vector_store %arg4[%c1_24, %c0_25, %c0_26], %78 {strides = array<i32>} : memref<16x2x128xf32, #tpu.memory_space<vmem>>, vector<1x2x128xf32>,
    %c2 = arith.constant 2 : index
    %c0_27 = arith.constant 0 : index
    %c0_28 = arith.constant 0 : index
    %79 = vector.load %arg0[%c2, %c0_27, %c0_28] : memref<16x2x128xf32, #tpu.memory_space<vmem>>, vector<1x2x128xf32>
    %80 = vector.shape_cast %79 : vector<1x2x128xf32> to vector<2x128xf32>
    %81 = arith.truncf %80 : vector<2x128xf32> to vector<2x128xbf16>
    %cst_29 = arith.constant dense<0.000000e+00> : vector<2x512xf32>
    %82 = tpu.matmul %81, %0, %cst_29 {dimension_numbers = #tpu.dot_dimension_numbers<[1], [0], [0], [1], [0, 0, 1, 1], [], []>} : vector<2x128xbf16>, vector<128x512xbf16>, vector<2x512xf32> -> vector<2x512xf32>
    %83 = arith.truncf %75 : vector<2x128xf32> to vector<2x128xbf16>
    %cst_30 = arith.constant dense<0.000000e+00> : vector<2x512xf32>
    %84 = tpu.matmul %83, %1, %cst_30 {dimension_numbers = #tpu.dot_dimension_numbers<[1], [0], [0], [1], [0, 0, 1, 1], [], []>} : vector<2x128xbf16>, vector<128x512xbf16>, vector<2x512xf32> -> vector<2x512xf32>
    %85 = arith.addf %82, %84 : vector<2x512xf32>
    %86 = vector.broadcast %2 : vector<1x512xf32> to vector<2x512xf32>
    %87 = arith.addf %85, %86 : vector<2x512xf32>
    %88 = vector.extract_strided_slice %87 {offsets = [0, 0], sizes = [2, 128], strides = [1, 1]} : vector<2x512xf32> to vector<2x128xf32>
    %89 = arith.negf %88 : vector<2x128xf32>
    %90 = math.exp %89 : vector<2x128xf32>
    %cst_31 = arith.constant 1.000000e+00 : f32
    %91 = vector.broadcast %cst_31 : f32 to vector<2x128xf32>
    %92 = arith.addf %91, %90 : vector<2x128xf32>
    %93 = arith.divf %91, %92 : vector<2x128xf32>
    %94 = vector.extract_strided_slice %87 {offsets = [0, 128], sizes = [2, 128], strides = [1, 1]} : vector<2x512xf32> to vector<2x128xf32>
    %95 = arith.negf %94 : vector<2x128xf32>
    %96 = math.exp %95 : vector<2x128xf32>
    %cst_32 = arith.constant 1.000000e+00 : f32
    %97 = vector.broadcast %cst_32 : f32 to vector<2x128xf32>
    %98 = arith.addf %97, %96 : vector<2x128xf32>
    %99 = arith.divf %97, %98 : vector<2x128xf32>
    %100 = vector.extract_strided_slice %87 {offsets = [0, 256], sizes = [2, 128], strides = [1, 1]} : vector<2x512xf32> to vector<2x128xf32>
    %101 = math.tanh %100 : vector<2x128xf32>
    %102 = vector.extract_strided_slice %87 {offsets = [0, 384], sizes = [2, 128], strides = [1, 1]} : vector<2x512xf32> to vector<2x128xf32>
    %103 = arith.negf %102 : vector<2x128xf32>
    %104 = math.exp %103 : vector<2x128xf32>
    %cst_33 = arith.constant 1.000000e+00 : f32
    %105 = vector.broadcast %cst_33 : f32 to vector<2x128xf32>
    %106 = arith.addf %105, %104 : vector<2x128xf32>
    %107 = arith.divf %105, %106 : vector<2x128xf32>
    %108 = arith.mulf %99, %73 : vector<2x128xf32>
    %109 = arith.mulf %93, %101 : vector<2x128xf32>
    %110 = arith.addf %108, %109 : vector<2x128xf32>
    %111 = math.tanh %110 : vector<2x128xf32>
    %112 = arith.mulf %107, %111 : vector<2x128xf32>
    %c2_34 = arith.constant 2 : index
    %c0_35 = arith.constant 0 : index
    %c0_36 = arith.constant 0 : index
    %113 = vector.load %arg4[%c2_34, %c0_35, %c0_36] : memref<16x2x128xf32, #tpu.memory_space<vmem>>, vector<1x2x128xf32>
    %114 = vector.shape_cast %113 : vector<1x2x128xf32> to vector<2x128xf32>
    %115 = vector.shape_cast %112 : vector<2x128xf32> to vector<1x2x128xf32>
    tpu.vector_store %arg4[%c2_34, %c0_35, %c0_36], %115 {strides = array<i32>} : memref<16x2x128xf32, #tpu.memory_space<vmem>>, vector<1x2x128xf32>,
    %c3 = arith.constant 3 : index
    %c0_37 = arith.constant 0 : index
    %c0_38 = arith.constant 0 : index
    %116 = vector.load %arg0[%c3, %c0_37, %c0_38] : memref<16x2x128xf32, #tpu.memory_space<vmem>>, vector<1x2x128xf32>
    %117 = vector.shape_cast %116 : vector<1x2x128xf32> to vector<2x128xf32>
    %118 = arith.truncf %117 : vector<2x128xf32> to vector<2x128xbf16>
    %cst_39 = arith.constant dense<0.000000e+00> : vector<2x512xf32>
    %119 = tpu.matmul %118, %0, %cst_39 {dimension_numbers = #tpu.dot_dimension_numbers<[1], [0], [0], [1], [0, 0, 1, 1], [], []>} : vector<2x128xbf16>, vector<128x512xbf16>, vector<2x512xf32> -> vector<2x512xf32>
    %120 = arith.truncf %112 : vector<2x128xf32> to vector<2x128xbf16>
    %cst_40 = arith.constant dense<0.000000e+00> : vector<2x512xf32>
    %121 = tpu.matmul %120, %1, %cst_40 {dimension_numbers = #tpu.dot_dimension_numbers<[1], [0], [0], [1], [0, 0, 1, 1], [], []>} : vector<2x128xbf16>, vector<128x512xbf16>, vector<2x512xf32> -> vector<2x512xf32>
    %122 = arith.addf %119, %121 : vector<2x512xf32>
    %123 = vector.broadcast %2 : vector<1x512xf32> to vector<2x512xf32>
    %124 = arith.addf %122, %123 : vector<2x512xf32>
    %125 = vector.extract_strided_slice %124 {offsets = [0, 0], sizes = [2, 128], strides = [1, 1]} : vector<2x512xf32> to vector<2x128xf32>
    %126 = arith.negf %125 : vector<2x128xf32>
    %127 = math.exp %126 : vector<2x128xf32>
    %cst_41 = arith.constant 1.000000e+00 : f32
    %128 = vector.broadcast %cst_41 : f32 to vector<2x128xf32>
    %129 = arith.addf %128, %127 : vector<2x128xf32>
    %130 = arith.divf %128, %129 : vector<2x128xf32>
    %131 = vector.extract_strided_slice %124 {offsets = [0, 128], sizes = [2, 128], strides = [1, 1]} : vector<2x512xf32> to vector<2x128xf32>
    %132 = arith.negf %131 : vector<2x128xf32>
    %133 = math.exp %132 : vector<2x128xf32>
    %cst_42 = arith.constant 1.000000e+00 : f32
    %134 = vector.broadcast %cst_42 : f32 to vector<2x128xf32>
    %135 = arith.addf %134, %133 : vector<2x128xf32>
    %136 = arith.divf %134, %135 : vector<2x128xf32>
    %137 = vector.extract_strided_slice %124 {offsets = [0, 256], sizes = [2, 128], strides = [1, 1]} : vector<2x512xf32> to vector<2x128xf32>
    %138 = math.tanh %137 : vector<2x128xf32>
    %139 = vector.extract_strided_slice %124 {offsets = [0, 384], sizes = [2, 128], strides = [1, 1]} : vector<2x512xf32> to vector<2x128xf32>
    %140 = arith.negf %139 : vector<2x128xf32>
    %141 = math.exp %140 : vector<2x128xf32>
    %cst_43 = arith.constant 1.000000e+00 : f32
    %142 = vector.broadcast %cst_43 : f32 to vector<2x128xf32>
    %143 = arith.addf %142, %141 : vector<2x128xf32>
    %144 = arith.divf %142, %143 : vector<2x128xf32>
    %145 = arith.mulf %136, %110 : vector<2x128xf32>
    %146 = arith.mulf %130, %138 : vector<2x128xf32>
    %147 = arith.addf %145, %146 : vector<2x128xf32>
    %148 = math.tanh %147 : vector<2x128xf32>
    %149 = arith.mulf %144, %148 : vector<2x128xf32>
    %c3_44 = arith.constant 3 : index
    %c0_45 = arith.constant 0 : index
    %c0_46 = arith.constant 0 : index
    %150 = vector.load %arg4[%c3_44, %c0_45, %c0_46] : memref<16x2x128xf32, #tpu.memory_space<vmem>>, vector<1x2x128xf32>
    %151 = vector.shape_cast %150 : vector<1x2x128xf32> to vector<2x128xf32>
    %152 = vector.shape_cast %149 : vector<2x128xf32> to vector<1x2x128xf32>
    tpu.vector_store %arg4[%c3_44, %c0_45, %c0_46], %152 {strides = array<i32>} : memref<16x2x128xf32, #tpu.memory_space<vmem>>, vector<1x2x128xf32>,
    %c4 = arith.constant 4 : index
    %c0_47 = arith.constant 0 : index
    %c0_48 = arith.constant 0 : index
    %153 = vector.load %arg0[%c4, %c0_47, %c0_48] : memref<16x2x128xf32, #tpu.memory_space<vmem>>, vector<1x2x128xf32>
    %154 = vector.shape_cast %153 : vector<1x2x128xf32> to vector<2x128xf32>
    %155 = arith.truncf %154 : vector<2x128xf32> to vector<2x128xbf16>
    %cst_49 = arith.constant dense<0.000000e+00> : vector<2x512xf32>
    %156 = tpu.matmul %155, %0, %cst_49 {dimension_numbers = #tpu.dot_dimension_numbers<[1], [0], [0], [1], [0, 0, 1, 1], [], []>} : vector<2x128xbf16>, vector<128x512xbf16>, vector<2x512xf32> -> vector<2x512xf32>
    %157 = arith.truncf %149 : vector<2x128xf32> to vector<2x128xbf16>
    %cst_50 = arith.constant dense<0.000000e+00> : vector<2x512xf32>
    %158 = tpu.matmul %157, %1, %cst_50 {dimension_numbers = #tpu.dot_dimension_numbers<[1], [0], [0], [1], [0, 0, 1, 1], [], []>} : vector<2x128xbf16>, vector<128x512xbf16>, vector<2x512xf32> -> vector<2x512xf32>
    %159 = arith.addf %156, %158 : vector<2x512xf32>
    %160 = vector.broadcast %2 : vector<1x512xf32> to vector<2x512xf32>
    %161 = arith.addf %159, %160 : vector<2x512xf32>
    %162 = vector.extract_strided_slice %161 {offsets = [0, 0], sizes = [2, 128], strides = [1, 1]} : vector<2x512xf32> to vector<2x128xf32>
    %163 = arith.negf %162 : vector<2x128xf32>
    %164 = math.exp %163 : vector<2x128xf32>
    %cst_51 = arith.constant 1.000000e+00 : f32
    %165 = vector.broadcast %cst_51 : f32 to vector<2x128xf32>
    %166 = arith.addf %165, %164 : vector<2x128xf32>
    %167 = arith.divf %165, %166 : vector<2x128xf32>
    %168 = vector.extract_strided_slice %161 {offsets = [0, 128], sizes = [2, 128], strides = [1, 1]} : vector<2x512xf32> to vector<2x128xf32>
    %169 = arith.negf %168 : vector<2x128xf32>
    %170 = math.exp %169 : vector<2x128xf32>
    %cst_52 = arith.constant 1.000000e+00 : f32
    %171 = vector.broadcast %cst_52 : f32 to vector<2x128xf32>
    %172 = arith.addf %171, %170 : vector<2x128xf32>
    %173 = arith.divf %171, %172 : vector<2x128xf32>
    %174 = vector.extract_strided_slice %161 {offsets = [0, 256], sizes = [2, 128], strides = [1, 1]} : vector<2x512xf32> to vector<2x128xf32>
    %175 = math.tanh %174 : vector<2x128xf32>
    %176 = vector.extract_strided_slice %161 {offsets = [0, 384], sizes = [2, 128], strides = [1, 1]} : vector<2x512xf32> to vector<2x128xf32>
    %177 = arith.negf %176 : vector<2x128xf32>
    %178 = math.exp %177 : vector<2x128xf32>
    %cst_53 = arith.constant 1.000000e+00 : f32
    %179 = vector.broadcast %cst_53 : f32 to vector<2x128xf32>
    %180 = arith.addf %179, %178 : vector<2x128xf32>
    %181 = arith.divf %179, %180 : vector<2x128xf32>
    %182 = arith.mulf %173, %147 : vector<2x128xf32>
    %183 = arith.mulf %167, %175 : vector<2x128xf32>
    %184 = arith.addf %182, %183 : vector<2x128xf32>
    %185 = math.tanh %184 : vector<2x128xf32>
    %186 = arith.mulf %181, %185 : vector<2x128xf32>
    %c4_54 = arith.constant 4 : index
    %c0_55 = arith.constant 0 : index
    %c0_56 = arith.constant 0 : index
    %187 = vector.load %arg4[%c4_54, %c0_55, %c0_56] : memref<16x2x128xf32, #tpu.memory_space<vmem>>, vector<1x2x128xf32>
    %188 = vector.shape_cast %187 : vector<1x2x128xf32> to vector<2x128xf32>
    %189 = vector.shape_cast %186 : vector<2x128xf32> to vector<1x2x128xf32>
    tpu.vector_store %arg4[%c4_54, %c0_55, %c0_56], %189 {strides = array<i32>} : memref<16x2x128xf32, #tpu.memory_space<vmem>>, vector<1x2x128xf32>,
    %c5 = arith.constant 5 : index
    %c0_57 = arith.constant 0 : index
    %c0_58 = arith.constant 0 : index
    %190 = vector.load %arg0[%c5, %c0_57, %c0_58] : memref<16x2x128xf32, #tpu.memory_space<vmem>>, vector<1x2x128xf32>
    %191 = vector.shape_cast %190 : vector<1x2x128xf32> to vector<2x128xf32>
    %192 = arith.truncf %191 : vector<2x128xf32> to vector<2x128xbf16>
    %cst_59 = arith.constant dense<0.000000e+00> : vector<2x512xf32>
    %193 = tpu.matmul %192, %0, %cst_59 {dimension_numbers = #tpu.dot_dimension_numbers<[1], [0], [0], [1], [0, 0, 1, 1], [], []>} : vector<2x128xbf16>, vector<128x512xbf16>, vector<2x512xf32> -> vector<2x512xf32>
    %194 = arith.truncf %186 : vector<2x128xf32> to vector<2x128xbf16>
    %cst_60 = arith.constant dense<0.000000e+00> : vector<2x512xf32>
    %195 = tpu.matmul %194, %1, %cst_60 {dimension_numbers = #tpu.dot_dimension_numbers<[1], [0], [0], [1], [0, 0, 1, 1], [], []>} : vector<2x128xbf16>, vector<128x512xbf16>, vector<2x512xf32> -> vector<2x512xf32>
    %196 = arith.addf %193, %195 : vector<2x512xf32>
    %197 = vector.broadcast %2 : vector<1x512xf32> to vector<2x512xf32>
    %198 = arith.addf %196, %197 : vector<2x512xf32>
    %199 = vector.extract_strided_slice %198 {offsets = [0, 0], sizes = [2, 128], strides = [1, 1]} : vector<2x512xf32> to vector<2x128xf32>
    %200 = arith.negf %199 : vector<2x128xf32>
    %201 = math.exp %200 : vector<2x128xf32>
    %cst_61 = arith.constant 1.000000e+00 : f32
    %202 = vector.broadcast %cst_61 : f32 to vector<2x128xf32>
    %203 = arith.addf %202, %201 : vector<2x128xf32>
    %204 = arith.divf %202, %203 : vector<2x128xf32>
    %205 = vector.extract_strided_slice %198 {offsets = [0, 128], sizes = [2, 128], strides = [1, 1]} : vector<2x512xf32> to vector<2x128xf32>
    %206 = arith.negf %205 : vector<2x128xf32>
    %207 = math.exp %206 : vector<2x128xf32>
    %cst_62 = arith.constant 1.000000e+00 : f32
    %208 = vector.broadcast %cst_62 : f32 to vector<2x128xf32>
    %209 = arith.addf %208, %207 : vector<2x128xf32>
    %210 = arith.divf %208, %209 : vector<2x128xf32>
    %211 = vector.extract_strided_slice %198 {offsets = [0, 256], sizes = [2, 128], strides = [1, 1]} : vector<2x512xf32> to vector<2x128xf32>
    %212 = math.tanh %211 : vector<2x128xf32>
    %213 = vector.extract_strided_slice %198 {offsets = [0, 384], sizes = [2, 128], strides = [1, 1]} : vector<2x512xf32> to vector<2x128xf32>
    %214 = arith.negf %213 : vector<2x128xf32>
    %215 = math.exp %214 : vector<2x128xf32>
    %cst_63 = arith.constant 1.000000e+00 : f32
    %216 = vector.broadcast %cst_63 : f32 to vector<2x128xf32>
    %217 = arith.addf %216, %215 : vector<2x128xf32>
    %218 = arith.divf %216, %217 : vector<2x128xf32>
    %219 = arith.mulf %210, %184 : vector<2x128xf32>
    %220 = arith.mulf %204, %212 : vector<2x128xf32>
    %221 = arith.addf %219, %220 : vector<2x128xf32>
    %222 = math.tanh %221 : vector<2x128xf32>
    %223 = arith.mulf %218, %222 : vector<2x128xf32>
    %c5_64 = arith.constant 5 : index
    %c0_65 = arith.constant 0 : index
    %c0_66 = arith.constant 0 : index
    %224 = vector.load %arg4[%c5_64, %c0_65, %c0_66] : memref<16x2x128xf32, #tpu.memory_space<vmem>>, vector<1x2x128xf32>
    %225 = vector.shape_cast %224 : vector<1x2x128xf32> to vector<2x128xf32>
    %226 = vector.shape_cast %223 : vector<2x128xf32> to vector<1x2x128xf32>
    tpu.vector_store %arg4[%c5_64, %c0_65, %c0_66], %226 {strides = array<i32>} : memref<16x2x128xf32, #tpu.memory_space<vmem>>, vector<1x2x128xf32>,
    %c6 = arith.constant 6 : index
    %c0_67 = arith.constant 0 : index
    %c0_68 = arith.constant 0 : index
    %227 = vector.load %arg0[%c6, %c0_67, %c0_68] : memref<16x2x128xf32, #tpu.memory_space<vmem>>, vector<1x2x128xf32>
    %228 = vector.shape_cast %227 : vector<1x2x128xf32> to vector<2x128xf32>
    %229 = arith.truncf %228 : vector<2x128xf32> to vector<2x128xbf16>
    %cst_69 = arith.constant dense<0.000000e+00> : vector<2x512xf32>
    %230 = tpu.matmul %229, %0, %cst_69 {dimension_numbers = #tpu.dot_dimension_numbers<[1], [0], [0], [1], [0, 0, 1, 1], [], []>} : vector<2x128xbf16>, vector<128x512xbf16>, vector<2x512xf32> -> vector<2x512xf32>
    %231 = arith.truncf %223 : vector<2x128xf32> to vector<2x128xbf16>
    %cst_70 = arith.constant dense<0.000000e+00> : vector<2x512xf32>
    %232 = tpu.matmul %231, %1, %cst_70 {dimension_numbers = #tpu.dot_dimension_numbers<[1], [0], [0], [1], [0, 0, 1, 1], [], []>} : vector<2x128xbf16>, vector<128x512xbf16>, vector<2x512xf32> -> vector<2x512xf32>
    %233 = arith.addf %230, %232 : vector<2x512xf32>
    %234 = vector.broadcast %2 : vector<1x512xf32> to vector<2x512xf32>
    %235 = arith.addf %233, %234 : vector<2x512xf32>
    %236 = vector.extract_strided_slice %235 {offsets = [0, 0], sizes = [2, 128], strides = [1, 1]} : vector<2x512xf32> to vector<2x128xf32>
    %237 = arith.negf %236 : vector<2x128xf32>
    %238 = math.exp %237 : vector<2x128xf32>
    %cst_71 = arith.constant 1.000000e+00 : f32
    %239 = vector.broadcast %cst_71 : f32 to vector<2x128xf32>
    %240 = arith.addf %239, %238 : vector<2x128xf32>
    %241 = arith.divf %239, %240 : vector<2x128xf32>
    %242 = vector.extract_strided_slice %235 {offsets = [0, 128], sizes = [2, 128], strides = [1, 1]} : vector<2x512xf32> to vector<2x128xf32>
    %243 = arith.negf %242 : vector<2x128xf32>
    %244 = math.exp %243 : vector<2x128xf32>
    %cst_72 = arith.constant 1.000000e+00 : f32
    %245 = vector.broadcast %cst_72 : f32 to vector<2x128xf32>
    %246 = arith.addf %245, %244 : vector<2x128xf32>
    %247 = arith.divf %245, %246 : vector<2x128xf32>
    %248 = vector.extract_strided_slice %235 {offsets = [0, 256], sizes = [2, 128], strides = [1, 1]} : vector<2x512xf32> to vector<2x128xf32>
    %249 = math.tanh %248 : vector<2x128xf32>
    %250 = vector.extract_strided_slice %235 {offsets = [0, 384], sizes = [2, 128], strides = [1, 1]} : vector<2x512xf32> to vector<2x128xf32>
    %251 = arith.negf %250 : vector<2x128xf32>
    %252 = math.exp %251 : vector<2x128xf32>
    %cst_73 = arith.constant 1.000000e+00 : f32
    %253 = vector.broadcast %cst_73 : f32 to vector<2x128xf32>
    %254 = arith.addf %253, %252 : vector<2x128xf32>
    %255 = arith.divf %253, %254 : vector<2x128xf32>
    %256 = arith.mulf %247, %221 : vector<2x128xf32>
    %257 = arith.mulf %241, %249 : vector<2x128xf32>
    %258 = arith.addf %256, %257 : vector<2x128xf32>
    %259 = math.tanh %258 : vector<2x128xf32>
    %260 = arith.mulf %255, %259 : vector<2x128xf32>
    %c6_74 = arith.constant 6 : index
    %c0_75 = arith.constant 0 : index
    %c0_76 = arith.constant 0 : index
    %261 = vector.load %arg4[%c6_74, %c0_75, %c0_76] : memref<16x2x128xf32, #tpu.memory_space<vmem>>, vector<1x2x128xf32>
    %262 = vector.shape_cast %261 : vector<1x2x128xf32> to vector<2x128xf32>
    %263 = vector.shape_cast %260 : vector<2x128xf32> to vector<1x2x128xf32>
    tpu.vector_store %arg4[%c6_74, %c0_75, %c0_76], %263 {strides = array<i32>} : memref<16x2x128xf32, #tpu.memory_space<vmem>>, vector<1x2x128xf32>,
    %c7 = arith.constant 7 : index
    %c0_77 = arith.constant 0 : index
    %c0_78 = arith.constant 0 : index
    %264 = vector.load %arg0[%c7, %c0_77, %c0_78] : memref<16x2x128xf32, #tpu.memory_space<vmem>>, vector<1x2x128xf32>
    %265 = vector.shape_cast %264 : vector<1x2x128xf32> to vector<2x128xf32>
    %266 = arith.truncf %265 : vector<2x128xf32> to vector<2x128xbf16>
    %cst_79 = arith.constant dense<0.000000e+00> : vector<2x512xf32>
    %267 = tpu.matmul %266, %0, %cst_79 {dimension_numbers = #tpu.dot_dimension_numbers<[1], [0], [0], [1], [0, 0, 1, 1], [], []>} : vector<2x128xbf16>, vector<128x512xbf16>, vector<2x512xf32> -> vector<2x512xf32>
    %268 = arith.truncf %260 : vector<2x128xf32> to vector<2x128xbf16>
    %cst_80 = arith.constant dense<0.000000e+00> : vector<2x512xf32>
    %269 = tpu.matmul %268, %1, %cst_80 {dimension_numbers = #tpu.dot_dimension_numbers<[1], [0], [0], [1], [0, 0, 1, 1], [], []>} : vector<2x128xbf16>, vector<128x512xbf16>, vector<2x512xf32> -> vector<2x512xf32>
    %270 = arith.addf %267, %269 : vector<2x512xf32>
    %271 = vector.broadcast %2 : vector<1x512xf32> to vector<2x512xf32>
    %272 = arith.addf %270, %271 : vector<2x512xf32>
    %273 = vector.extract_strided_slice %272 {offsets = [0, 0], sizes = [2, 128], strides = [1, 1]} : vector<2x512xf32> to vector<2x128xf32>
    %274 = arith.negf %273 : vector<2x128xf32>
    %275 = math.exp %274 : vector<2x128xf32>
    %cst_81 = arith.constant 1.000000e+00 : f32
    %276 = vector.broadcast %cst_81 : f32 to vector<2x128xf32>
    %277 = arith.addf %276, %275 : vector<2x128xf32>
    %278 = arith.divf %276, %277 : vector<2x128xf32>
    %279 = vector.extract_strided_slice %272 {offsets = [0, 128], sizes = [2, 128], strides = [1, 1]} : vector<2x512xf32> to vector<2x128xf32>
    %280 = arith.negf %279 : vector<2x128xf32>
    %281 = math.exp %280 : vector<2x128xf32>
    %cst_82 = arith.constant 1.000000e+00 : f32
    %282 = vector.broadcast %cst_82 : f32 to vector<2x128xf32>
    %283 = arith.addf %282, %281 : vector<2x128xf32>
    %284 = arith.divf %282, %283 : vector<2x128xf32>
    %285 = vector.extract_strided_slice %272 {offsets = [0, 256], sizes = [2, 128], strides = [1, 1]} : vector<2x512xf32> to vector<2x128xf32>
    %286 = math.tanh %285 : vector<2x128xf32>
    %287 = vector.extract_strided_slice %272 {offsets = [0, 384], sizes = [2, 128], strides = [1, 1]} : vector<2x512xf32> to vector<2x128xf32>
    %288 = arith.negf %287 : vector<2x128xf32>
    %289 = math.exp %288 : vector<2x128xf32>
    %cst_83 = arith.constant 1.000000e+00 : f32
    %290 = vector.broadcast %cst_83 : f32 to vector<2x128xf32>
    %291 = arith.addf %290, %289 : vector<2x128xf32>
    %292 = arith.divf %290, %291 : vector<2x128xf32>
    %293 = arith.mulf %284, %258 : vector<2x128xf32>
    %294 = arith.mulf %278, %286 : vector<2x128xf32>
    %295 = arith.addf %293, %294 : vector<2x128xf32>
    %296 = math.tanh %295 : vector<2x128xf32>
    %297 = arith.mulf %292, %296 : vector<2x128xf32>
    %c7_84 = arith.constant 7 : index
    %c0_85 = arith.constant 0 : index
    %c0_86 = arith.constant 0 : index
    %298 = vector.load %arg4[%c7_84, %c0_85, %c0_86] : memref<16x2x128xf32, #tpu.memory_space<vmem>>, vector<1x2x128xf32>
    %299 = vector.shape_cast %298 : vector<1x2x128xf32> to vector<2x128xf32>
    %300 = vector.shape_cast %297 : vector<2x128xf32> to vector<1x2x128xf32>
    tpu.vector_store %arg4[%c7_84, %c0_85, %c0_86], %300 {strides = array<i32>} : memref<16x2x128xf32, #tpu.memory_space<vmem>>, vector<1x2x128xf32>,
    %c8 = arith.constant 8 : index
    %c0_87 = arith.constant 0 : index
    %c0_88 = arith.constant 0 : index
    %301 = vector.load %arg0[%c8, %c0_87, %c0_88] : memref<16x2x128xf32, #tpu.memory_space<vmem>>, vector<1x2x128xf32>
    %302 = vector.shape_cast %301 : vector<1x2x128xf32> to vector<2x128xf32>
    %303 = arith.truncf %302 : vector<2x128xf32> to vector<2x128xbf16>
    %cst_89 = arith.constant dense<0.000000e+00> : vector<2x512xf32>
    %304 = tpu.matmul %303, %0, %cst_89 {dimension_numbers = #tpu.dot_dimension_numbers<[1], [0], [0], [1], [0, 0, 1, 1], [], []>} : vector<2x128xbf16>, vector<128x512xbf16>, vector<2x512xf32> -> vector<2x512xf32>
    %305 = arith.truncf %297 : vector<2x128xf32> to vector<2x128xbf16>
    %cst_90 = arith.constant dense<0.000000e+00> : vector<2x512xf32>
    %306 = tpu.matmul %305, %1, %cst_90 {dimension_numbers = #tpu.dot_dimension_numbers<[1], [0], [0], [1], [0, 0, 1, 1], [], []>} : vector<2x128xbf16>, vector<128x512xbf16>, vector<2x512xf32> -> vector<2x512xf32>
    %307 = arith.addf %304, %306 : vector<2x512xf32>
    %308 = vector.broadcast %2 : vector<1x512xf32> to vector<2x512xf32>
    %309 = arith.addf %307, %308 : vector<2x512xf32>
    %310 = vector.extract_strided_slice %309 {offsets = [0, 0], sizes = [2, 128], strides = [1, 1]} : vector<2x512xf32> to vector<2x128xf32>
    %311 = arith.negf %310 : vector<2x128xf32>
    %312 = math.exp %311 : vector<2x128xf32>
    %cst_91 = arith.constant 1.000000e+00 : f32
    %313 = vector.broadcast %cst_91 : f32 to vector<2x128xf32>
    %314 = arith.addf %313, %312 : vector<2x128xf32>
    %315 = arith.divf %313, %314 : vector<2x128xf32>
    %316 = vector.extract_strided_slice %309 {offsets = [0, 128], sizes = [2, 128], strides = [1, 1]} : vector<2x512xf32> to vector<2x128xf32>
    %317 = arith.negf %316 : vector<2x128xf32>
    %318 = math.exp %317 : vector<2x128xf32>
    %cst_92 = arith.constant 1.000000e+00 : f32
    %319 = vector.broadcast %cst_92 : f32 to vector<2x128xf32>
    %320 = arith.addf %319, %318 : vector<2x128xf32>
    %321 = arith.divf %319, %320 : vector<2x128xf32>
    %322 = vector.extract_strided_slice %309 {offsets = [0, 256], sizes = [2, 128], strides = [1, 1]} : vector<2x512xf32> to vector<2x128xf32>
    %323 = math.tanh %322 : vector<2x128xf32>
    %324 = vector.extract_strided_slice %309 {offsets = [0, 384], sizes = [2, 128], strides = [1, 1]} : vector<2x512xf32> to vector<2x128xf32>
    %325 = arith.negf %324 : vector<2x128xf32>
    %326 = math.exp %325 : vector<2x128xf32>
    %cst_93 = arith.constant 1.000000e+00 : f32
    %327 = vector.broadcast %cst_93 : f32 to vector<2x128xf32>
    %328 = arith.addf %327, %326 : vector<2x128xf32>
    %329 = arith.divf %327, %328 : vector<2x128xf32>
    %330 = arith.mulf %321, %295 : vector<2x128xf32>
    %331 = arith.mulf %315, %323 : vector<2x128xf32>
    %332 = arith.addf %330, %331 : vector<2x128xf32>
    %333 = math.tanh %332 : vector<2x128xf32>
    %334 = arith.mulf %329, %333 : vector<2x128xf32>
    %c8_94 = arith.constant 8 : index
    %c0_95 = arith.constant 0 : index
    %c0_96 = arith.constant 0 : index
    %335 = vector.load %arg4[%c8_94, %c0_95, %c0_96] : memref<16x2x128xf32, #tpu.memory_space<vmem>>, vector<1x2x128xf32>
    %336 = vector.shape_cast %335 : vector<1x2x128xf32> to vector<2x128xf32>
    %337 = vector.shape_cast %334 : vector<2x128xf32> to vector<1x2x128xf32>
    tpu.vector_store %arg4[%c8_94, %c0_95, %c0_96], %337 {strides = array<i32>} : memref<16x2x128xf32, #tpu.memory_space<vmem>>, vector<1x2x128xf32>,
    %c9 = arith.constant 9 : index
    %c0_97 = arith.constant 0 : index
    %c0_98 = arith.constant 0 : index
    %338 = vector.load %arg0[%c9, %c0_97, %c0_98] : memref<16x2x128xf32, #tpu.memory_space<vmem>>, vector<1x2x128xf32>
    %339 = vector.shape_cast %338 : vector<1x2x128xf32> to vector<2x128xf32>
    %340 = arith.truncf %339 : vector<2x128xf32> to vector<2x128xbf16>
    %cst_99 = arith.constant dense<0.000000e+00> : vector<2x512xf32>
    %341 = tpu.matmul %340, %0, %cst_99 {dimension_numbers = #tpu.dot_dimension_numbers<[1], [0], [0], [1], [0, 0, 1, 1], [], []>} : vector<2x128xbf16>, vector<128x512xbf16>, vector<2x512xf32> -> vector<2x512xf32>
    %342 = arith.truncf %334 : vector<2x128xf32> to vector<2x128xbf16>
    %cst_100 = arith.constant dense<0.000000e+00> : vector<2x512xf32>
    %343 = tpu.matmul %342, %1, %cst_100 {dimension_numbers = #tpu.dot_dimension_numbers<[1], [0], [0], [1], [0, 0, 1, 1], [], []>} : vector<2x128xbf16>, vector<128x512xbf16>, vector<2x512xf32> -> vector<2x512xf32>
    %344 = arith.addf %341, %343 : vector<2x512xf32>
    %345 = vector.broadcast %2 : vector<1x512xf32> to vector<2x512xf32>
    %346 = arith.addf %344, %345 : vector<2x512xf32>
    %347 = vector.extract_strided_slice %346 {offsets = [0, 0], sizes = [2, 128], strides = [1, 1]} : vector<2x512xf32> to vector<2x128xf32>
    %348 = arith.negf %347 : vector<2x128xf32>
    %349 = math.exp %348 : vector<2x128xf32>
    %cst_101 = arith.constant 1.000000e+00 : f32
    %350 = vector.broadcast %cst_101 : f32 to vector<2x128xf32>
    %351 = arith.addf %350, %349 : vector<2x128xf32>
    %352 = arith.divf %350, %351 : vector<2x128xf32>
    %353 = vector.extract_strided_slice %346 {offsets = [0, 128], sizes = [2, 128], strides = [1, 1]} : vector<2x512xf32> to vector<2x128xf32>
    %354 = arith.negf %353 : vector<2x128xf32>
    %355 = math.exp %354 : vector<2x128xf32>
    %cst_102 = arith.constant 1.000000e+00 : f32
    %356 = vector.broadcast %cst_102 : f32 to vector<2x128xf32>
    %357 = arith.addf %356, %355 : vector<2x128xf32>
    %358 = arith.divf %356, %357 : vector<2x128xf32>
    %359 = vector.extract_strided_slice %346 {offsets = [0, 256], sizes = [2, 128], strides = [1, 1]} : vector<2x512xf32> to vector<2x128xf32>
    %360 = math.tanh %359 : vector<2x128xf32>
    %361 = vector.extract_strided_slice %346 {offsets = [0, 384], sizes = [2, 128], strides = [1, 1]} : vector<2x512xf32> to vector<2x128xf32>
    %362 = arith.negf %361 : vector<2x128xf32>
    %363 = math.exp %362 : vector<2x128xf32>
    %cst_103 = arith.constant 1.000000e+00 : f32
    %364 = vector.broadcast %cst_103 : f32 to vector<2x128xf32>
    %365 = arith.addf %364, %363 : vector<2x128xf32>
    %366 = arith.divf %364, %365 : vector<2x128xf32>
    %367 = arith.mulf %358, %332 : vector<2x128xf32>
    %368 = arith.mulf %352, %360 : vector<2x128xf32>
    %369 = arith.addf %367, %368 : vector<2x128xf32>
    %370 = math.tanh %369 : vector<2x128xf32>
    %371 = arith.mulf %366, %370 : vector<2x128xf32>
    %c9_104 = arith.constant 9 : index
    %c0_105 = arith.constant 0 : index
    %c0_106 = arith.constant 0 : index
    %372 = vector.load %arg4[%c9_104, %c0_105, %c0_106] : memref<16x2x128xf32, #tpu.memory_space<vmem>>, vector<1x2x128xf32>
    %373 = vector.shape_cast %372 : vector<1x2x128xf32> to vector<2x128xf32>
    %374 = vector.shape_cast %371 : vector<2x128xf32> to vector<1x2x128xf32>
    tpu.vector_store %arg4[%c9_104, %c0_105, %c0_106], %374 {strides = array<i32>} : memref<16x2x128xf32, #tpu.memory_space<vmem>>, vector<1x2x128xf32>,
    %c10 = arith.constant 10 : index
    %c0_107 = arith.constant 0 : index
    %c0_108 = arith.constant 0 : index
    %375 = vector.load %arg0[%c10, %c0_107, %c0_108] : memref<16x2x128xf32, #tpu.memory_space<vmem>>, vector<1x2x128xf32>
    %376 = vector.shape_cast %375 : vector<1x2x128xf32> to vector<2x128xf32>
    %377 = arith.truncf %376 : vector<2x128xf32> to vector<2x128xbf16>
    %cst_109 = arith.constant dense<0.000000e+00> : vector<2x512xf32>
    %378 = tpu.matmul %377, %0, %cst_109 {dimension_numbers = #tpu.dot_dimension_numbers<[1], [0], [0], [1], [0, 0, 1, 1], [], []>} : vector<2x128xbf16>, vector<128x512xbf16>, vector<2x512xf32> -> vector<2x512xf32>
    %379 = arith.truncf %371 : vector<2x128xf32> to vector<2x128xbf16>
    %cst_110 = arith.constant dense<0.000000e+00> : vector<2x512xf32>
    %380 = tpu.matmul %379, %1, %cst_110 {dimension_numbers = #tpu.dot_dimension_numbers<[1], [0], [0], [1], [0, 0, 1, 1], [], []>} : vector<2x128xbf16>, vector<128x512xbf16>, vector<2x512xf32> -> vector<2x512xf32>
    %381 = arith.addf %378, %380 : vector<2x512xf32>
    %382 = vector.broadcast %2 : vector<1x512xf32> to vector<2x512xf32>
    %383 = arith.addf %381, %382 : vector<2x512xf32>
    %384 = vector.extract_strided_slice %383 {offsets = [0, 0], sizes = [2, 128], strides = [1, 1]} : vector<2x512xf32> to vector<2x128xf32>
    %385 = arith.negf %384 : vector<2x128xf32>
    %386 = math.exp %385 : vector<2x128xf32>
    %cst_111 = arith.constant 1.000000e+00 : f32
    %387 = vector.broadcast %cst_111 : f32 to vector<2x128xf32>
    %388 = arith.addf %387, %386 : vector<2x128xf32>
    %389 = arith.divf %387, %388 : vector<2x128xf32>
    %390 = vector.extract_strided_slice %383 {offsets = [0, 128], sizes = [2, 128], strides = [1, 1]} : vector<2x512xf32> to vector<2x128xf32>
    %391 = arith.negf %390 : vector<2x128xf32>
    %392 = math.exp %391 : vector<2x128xf32>
    %cst_112 = arith.constant 1.000000e+00 : f32
    %393 = vector.broadcast %cst_112 : f32 to vector<2x128xf32>
    %394 = arith.addf %393, %392 : vector<2x128xf32>
    %395 = arith.divf %393, %394 : vector<2x128xf32>
    %396 = vector.extract_strided_slice %383 {offsets = [0, 256], sizes = [2, 128], strides = [1, 1]} : vector<2x512xf32> to vector<2x128xf32>
    %397 = math.tanh %396 : vector<2x128xf32>
    %398 = vector.extract_strided_slice %383 {offsets = [0, 384], sizes = [2, 128], strides = [1, 1]} : vector<2x512xf32> to vector<2x128xf32>
    %399 = arith.negf %398 : vector<2x128xf32>
    %400 = math.exp %399 : vector<2x128xf32>
    %cst_113 = arith.constant 1.000000e+00 : f32
    %401 = vector.broadcast %cst_113 : f32 to vector<2x128xf32>
    %402 = arith.addf %401, %400 : vector<2x128xf32>
    %403 = arith.divf %401, %402 : vector<2x128xf32>
    %404 = arith.mulf %395, %369 : vector<2x128xf32>
    %405 = arith.mulf %389, %397 : vector<2x128xf32>
    %406 = arith.addf %404, %405 : vector<2x128xf32>
    %407 = math.tanh %406 : vector<2x128xf32>
    %408 = arith.mulf %403, %407 : vector<2x128xf32>
    %c10_114 = arith.constant 10 : index
    %c0_115 = arith.constant 0 : index
    %c0_116 = arith.constant 0 : index
    %409 = vector.load %arg4[%c10_114, %c0_115, %c0_116] : memref<16x2x128xf32, #tpu.memory_space<vmem>>, vector<1x2x128xf32>
    %410 = vector.shape_cast %409 : vector<1x2x128xf32> to vector<2x128xf32>
    %411 = vector.shape_cast %408 : vector<2x128xf32> to vector<1x2x128xf32>
    tpu.vector_store %arg4[%c10_114, %c0_115, %c0_116], %411 {strides = array<i32>} : memref<16x2x128xf32, #tpu.memory_space<vmem>>, vector<1x2x128xf32>,
    %c11 = arith.constant 11 : index
    %c0_117 = arith.constant 0 : index
    %c0_118 = arith.constant 0 : index
    %412 = vector.load %arg0[%c11, %c0_117, %c0_118] : memref<16x2x128xf32, #tpu.memory_space<vmem>>, vector<1x2x128xf32>
    %413 = vector.shape_cast %412 : vector<1x2x128xf32> to vector<2x128xf32>
    %414 = arith.truncf %413 : vector<2x128xf32> to vector<2x128xbf16>
    %cst_119 = arith.constant dense<0.000000e+00> : vector<2x512xf32>
    %415 = tpu.matmul %414, %0, %cst_119 {dimension_numbers = #tpu.dot_dimension_numbers<[1], [0], [0], [1], [0, 0, 1, 1], [], []>} : vector<2x128xbf16>, vector<128x512xbf16>, vector<2x512xf32> -> vector<2x512xf32>
    %416 = arith.truncf %408 : vector<2x128xf32> to vector<2x128xbf16>
    %cst_120 = arith.constant dense<0.000000e+00> : vector<2x512xf32>
    %417 = tpu.matmul %416, %1, %cst_120 {dimension_numbers = #tpu.dot_dimension_numbers<[1], [0], [0], [1], [0, 0, 1, 1], [], []>} : vector<2x128xbf16>, vector<128x512xbf16>, vector<2x512xf32> -> vector<2x512xf32>
    %418 = arith.addf %415, %417 : vector<2x512xf32>
    %419 = vector.broadcast %2 : vector<1x512xf32> to vector<2x512xf32>
    %420 = arith.addf %418, %419 : vector<2x512xf32>
    %421 = vector.extract_strided_slice %420 {offsets = [0, 0], sizes = [2, 128], strides = [1, 1]} : vector<2x512xf32> to vector<2x128xf32>
    %422 = arith.negf %421 : vector<2x128xf32>
    %423 = math.exp %422 : vector<2x128xf32>
    %cst_121 = arith.constant 1.000000e+00 : f32
    %424 = vector.broadcast %cst_121 : f32 to vector<2x128xf32>
    %425 = arith.addf %424, %423 : vector<2x128xf32>
    %426 = arith.divf %424, %425 : vector<2x128xf32>
    %427 = vector.extract_strided_slice %420 {offsets = [0, 128], sizes = [2, 128], strides = [1, 1]} : vector<2x512xf32> to vector<2x128xf32>
    %428 = arith.negf %427 : vector<2x128xf32>
    %429 = math.exp %428 : vector<2x128xf32>
    %cst_122 = arith.constant 1.000000e+00 : f32
    %430 = vector.broadcast %cst_122 : f32 to vector<2x128xf32>
    %431 = arith.addf %430, %429 : vector<2x128xf32>
    %432 = arith.divf %430, %431 : vector<2x128xf32>
    %433 = vector.extract_strided_slice %420 {offsets = [0, 256], sizes = [2, 128], strides = [1, 1]} : vector<2x512xf32> to vector<2x128xf32>
    %434 = math.tanh %433 : vector<2x128xf32>
    %435 = vector.extract_strided_slice %420 {offsets = [0, 384], sizes = [2, 128], strides = [1, 1]} : vector<2x512xf32> to vector<2x128xf32>
    %436 = arith.negf %435 : vector<2x128xf32>
    %437 = math.exp %436 : vector<2x128xf32>
    %cst_123 = arith.constant 1.000000e+00 : f32
    %438 = vector.broadcast %cst_123 : f32 to vector<2x128xf32>
    %439 = arith.addf %438, %437 : vector<2x128xf32>
    %440 = arith.divf %438, %439 : vector<2x128xf32>
    %441 = arith.mulf %432, %406 : vector<2x128xf32>
    %442 = arith.mulf %426, %434 : vector<2x128xf32>
    %443 = arith.addf %441, %442 : vector<2x128xf32>
    %444 = math.tanh %443 : vector<2x128xf32>
    %445 = arith.mulf %440, %444 : vector<2x128xf32>
    %c11_124 = arith.constant 11 : index
    %c0_125 = arith.constant 0 : index
    %c0_126 = arith.constant 0 : index
    %446 = vector.load %arg4[%c11_124, %c0_125, %c0_126] : memref<16x2x128xf32, #tpu.memory_space<vmem>>, vector<1x2x128xf32>
    %447 = vector.shape_cast %446 : vector<1x2x128xf32> to vector<2x128xf32>
    %448 = vector.shape_cast %445 : vector<2x128xf32> to vector<1x2x128xf32>
    tpu.vector_store %arg4[%c11_124, %c0_125, %c0_126], %448 {strides = array<i32>} : memref<16x2x128xf32, #tpu.memory_space<vmem>>, vector<1x2x128xf32>,
    %c12 = arith.constant 12 : index
    %c0_127 = arith.constant 0 : index
    %c0_128 = arith.constant 0 : index
    %449 = vector.load %arg0[%c12, %c0_127, %c0_128] : memref<16x2x128xf32, #tpu.memory_space<vmem>>, vector<1x2x128xf32>
    %450 = vector.shape_cast %449 : vector<1x2x128xf32> to vector<2x128xf32>
    %451 = arith.truncf %450 : vector<2x128xf32> to vector<2x128xbf16>
    %cst_129 = arith.constant dense<0.000000e+00> : vector<2x512xf32>
    %452 = tpu.matmul %451, %0, %cst_129 {dimension_numbers = #tpu.dot_dimension_numbers<[1], [0], [0], [1], [0, 0, 1, 1], [], []>} : vector<2x128xbf16>, vector<128x512xbf16>, vector<2x512xf32> -> vector<2x512xf32>
    %453 = arith.truncf %445 : vector<2x128xf32> to vector<2x128xbf16>
    %cst_130 = arith.constant dense<0.000000e+00> : vector<2x512xf32>
    %454 = tpu.matmul %453, %1, %cst_130 {dimension_numbers = #tpu.dot_dimension_numbers<[1], [0], [0], [1], [0, 0, 1, 1], [], []>} : vector<2x128xbf16>, vector<128x512xbf16>, vector<2x512xf32> -> vector<2x512xf32>
    %455 = arith.addf %452, %454 : vector<2x512xf32>
    %456 = vector.broadcast %2 : vector<1x512xf32> to vector<2x512xf32>
    %457 = arith.addf %455, %456 : vector<2x512xf32>
    %458 = vector.extract_strided_slice %457 {offsets = [0, 0], sizes = [2, 128], strides = [1, 1]} : vector<2x512xf32> to vector<2x128xf32>
    %459 = arith.negf %458 : vector<2x128xf32>
    %460 = math.exp %459 : vector<2x128xf32>
    %cst_131 = arith.constant 1.000000e+00 : f32
    %461 = vector.broadcast %cst_131 : f32 to vector<2x128xf32>
    %462 = arith.addf %461, %460 : vector<2x128xf32>
    %463 = arith.divf %461, %462 : vector<2x128xf32>
    %464 = vector.extract_strided_slice %457 {offsets = [0, 128], sizes = [2, 128], strides = [1, 1]} : vector<2x512xf32> to vector<2x128xf32>
    %465 = arith.negf %464 : vector<2x128xf32>
    %466 = math.exp %465 : vector<2x128xf32>
    %cst_132 = arith.constant 1.000000e+00 : f32
    %467 = vector.broadcast %cst_132 : f32 to vector<2x128xf32>
    %468 = arith.addf %467, %466 : vector<2x128xf32>
    %469 = arith.divf %467, %468 : vector<2x128xf32>
    %470 = vector.extract_strided_slice %457 {offsets = [0, 256], sizes = [2, 128], strides = [1, 1]} : vector<2x512xf32> to vector<2x128xf32>
    %471 = math.tanh %470 : vector<2x128xf32>
    %472 = vector.extract_strided_slice %457 {offsets = [0, 384], sizes = [2, 128], strides = [1, 1]} : vector<2x512xf32> to vector<2x128xf32>
    %473 = arith.negf %472 : vector<2x128xf32>
    %474 = math.exp %473 : vector<2x128xf32>
    %cst_133 = arith.constant 1.000000e+00 : f32
    %475 = vector.broadcast %cst_133 : f32 to vector<2x128xf32>
    %476 = arith.addf %475, %474 : vector<2x128xf32>
    %477 = arith.divf %475, %476 : vector<2x128xf32>
    %478 = arith.mulf %469, %443 : vector<2x128xf32>
    %479 = arith.mulf %463, %471 : vector<2x128xf32>
    %480 = arith.addf %478, %479 : vector<2x128xf32>
    %481 = math.tanh %480 : vector<2x128xf32>
    %482 = arith.mulf %477, %481 : vector<2x128xf32>
    %c12_134 = arith.constant 12 : index
    %c0_135 = arith.constant 0 : index
    %c0_136 = arith.constant 0 : index
    %483 = vector.load %arg4[%c12_134, %c0_135, %c0_136] : memref<16x2x128xf32, #tpu.memory_space<vmem>>, vector<1x2x128xf32>
    %484 = vector.shape_cast %483 : vector<1x2x128xf32> to vector<2x128xf32>
    %485 = vector.shape_cast %482 : vector<2x128xf32> to vector<1x2x128xf32>
    tpu.vector_store %arg4[%c12_134, %c0_135, %c0_136], %485 {strides = array<i32>} : memref<16x2x128xf32, #tpu.memory_space<vmem>>, vector<1x2x128xf32>,
    %c13 = arith.constant 13 : index
    %c0_137 = arith.constant 0 : index
    %c0_138 = arith.constant 0 : index
    %486 = vector.load %arg0[%c13, %c0_137, %c0_138] : memref<16x2x128xf32, #tpu.memory_space<vmem>>, vector<1x2x128xf32>
    %487 = vector.shape_cast %486 : vector<1x2x128xf32> to vector<2x128xf32>
    %488 = arith.truncf %487 : vector<2x128xf32> to vector<2x128xbf16>
    %cst_139 = arith.constant dense<0.000000e+00> : vector<2x512xf32>
    %489 = tpu.matmul %488, %0, %cst_139 {dimension_numbers = #tpu.dot_dimension_numbers<[1], [0], [0], [1], [0, 0, 1, 1], [], []>} : vector<2x128xbf16>, vector<128x512xbf16>, vector<2x512xf32> -> vector<2x512xf32>
    %490 = arith.truncf %482 : vector<2x128xf32> to vector<2x128xbf16>
    %cst_140 = arith.constant dense<0.000000e+00> : vector<2x512xf32>
    %491 = tpu.matmul %490, %1, %cst_140 {dimension_numbers = #tpu.dot_dimension_numbers<[1], [0], [0], [1], [0, 0, 1, 1], [], []>} : vector<2x128xbf16>, vector<128x512xbf16>, vector<2x512xf32> -> vector<2x512xf32>
    %492 = arith.addf %489, %491 : vector<2x512xf32>
    %493 = vector.broadcast %2 : vector<1x512xf32> to vector<2x512xf32>
    %494 = arith.addf %492, %493 : vector<2x512xf32>
    %495 = vector.extract_strided_slice %494 {offsets = [0, 0], sizes = [2, 128], strides = [1, 1]} : vector<2x512xf32> to vector<2x128xf32>
    %496 = arith.negf %495 : vector<2x128xf32>
    %497 = math.exp %496 : vector<2x128xf32>
    %cst_141 = arith.constant 1.000000e+00 : f32
    %498 = vector.broadcast %cst_141 : f32 to vector<2x128xf32>
    %499 = arith.addf %498, %497 : vector<2x128xf32>
    %500 = arith.divf %498, %499 : vector<2x128xf32>
    %501 = vector.extract_strided_slice %494 {offsets = [0, 128], sizes = [2, 128], strides = [1, 1]} : vector<2x512xf32> to vector<2x128xf32>
    %502 = arith.negf %501 : vector<2x128xf32>
    %503 = math.exp %502 : vector<2x128xf32>
    %cst_142 = arith.constant 1.000000e+00 : f32
    %504 = vector.broadcast %cst_142 : f32 to vector<2x128xf32>
    %505 = arith.addf %504, %503 : vector<2x128xf32>
    %506 = arith.divf %504, %505 : vector<2x128xf32>
    %507 = vector.extract_strided_slice %494 {offsets = [0, 256], sizes = [2, 128], strides = [1, 1]} : vector<2x512xf32> to vector<2x128xf32>
    %508 = math.tanh %507 : vector<2x128xf32>
    %509 = vector.extract_strided_slice %494 {offsets = [0, 384], sizes = [2, 128], strides = [1, 1]} : vector<2x512xf32> to vector<2x128xf32>
    %510 = arith.negf %509 : vector<2x128xf32>
    %511 = math.exp %510 : vector<2x128xf32>
    %cst_143 = arith.constant 1.000000e+00 : f32
    %512 = vector.broadcast %cst_143 : f32 to vector<2x128xf32>
    %513 = arith.addf %512, %511 : vector<2x128xf32>
    %514 = arith.divf %512, %513 : vector<2x128xf32>
    %515 = arith.mulf %506, %480 : vector<2x128xf32>
    %516 = arith.mulf %500, %508 : vector<2x128xf32>
    %517 = arith.addf %515, %516 : vector<2x128xf32>
    %518 = math.tanh %517 : vector<2x128xf32>
    %519 = arith.mulf %514, %518 : vector<2x128xf32>
    %c13_144 = arith.constant 13 : index
    %c0_145 = arith.constant 0 : index
    %c0_146 = arith.constant 0 : index
    %520 = vector.load %arg4[%c13_144, %c0_145, %c0_146] : memref<16x2x128xf32, #tpu.memory_space<vmem>>, vector<1x2x128xf32>
    %521 = vector.shape_cast %520 : vector<1x2x128xf32> to vector<2x128xf32>
    %522 = vector.shape_cast %519 : vector<2x128xf32> to vector<1x2x128xf32>
    tpu.vector_store %arg4[%c13_144, %c0_145, %c0_146], %522 {strides = array<i32>} : memref<16x2x128xf32, #tpu.memory_space<vmem>>, vector<1x2x128xf32>,
    %c14 = arith.constant 14 : index
    %c0_147 = arith.constant 0 : index
    %c0_148 = arith.constant 0 : index
    %523 = vector.load %arg0[%c14, %c0_147, %c0_148] : memref<16x2x128xf32, #tpu.memory_space<vmem>>, vector<1x2x128xf32>
    %524 = vector.shape_cast %523 : vector<1x2x128xf32> to vector<2x128xf32>
    %525 = arith.truncf %524 : vector<2x128xf32> to vector<2x128xbf16>
    %cst_149 = arith.constant dense<0.000000e+00> : vector<2x512xf32>
    %526 = tpu.matmul %525, %0, %cst_149 {dimension_numbers = #tpu.dot_dimension_numbers<[1], [0], [0], [1], [0, 0, 1, 1], [], []>} : vector<2x128xbf16>, vector<128x512xbf16>, vector<2x512xf32> -> vector<2x512xf32>
    %527 = arith.truncf %519 : vector<2x128xf32> to vector<2x128xbf16>
    %cst_150 = arith.constant dense<0.000000e+00> : vector<2x512xf32>
    %528 = tpu.matmul %527, %1, %cst_150 {dimension_numbers = #tpu.dot_dimension_numbers<[1], [0], [0], [1], [0, 0, 1, 1], [], []>} : vector<2x128xbf16>, vector<128x512xbf16>, vector<2x512xf32> -> vector<2x512xf32>
    %529 = arith.addf %526, %528 : vector<2x512xf32>
    %530 = vector.broadcast %2 : vector<1x512xf32> to vector<2x512xf32>
    %531 = arith.addf %529, %530 : vector<2x512xf32>
    %532 = vector.extract_strided_slice %531 {offsets = [0, 0], sizes = [2, 128], strides = [1, 1]} : vector<2x512xf32> to vector<2x128xf32>
    %533 = arith.negf %532 : vector<2x128xf32>
    %534 = math.exp %533 : vector<2x128xf32>
    %cst_151 = arith.constant 1.000000e+00 : f32
    %535 = vector.broadcast %cst_151 : f32 to vector<2x128xf32>
    %536 = arith.addf %535, %534 : vector<2x128xf32>
    %537 = arith.divf %535, %536 : vector<2x128xf32>
    %538 = vector.extract_strided_slice %531 {offsets = [0, 128], sizes = [2, 128], strides = [1, 1]} : vector<2x512xf32> to vector<2x128xf32>
    %539 = arith.negf %538 : vector<2x128xf32>
    %540 = math.exp %539 : vector<2x128xf32>
    %cst_152 = arith.constant 1.000000e+00 : f32
    %541 = vector.broadcast %cst_152 : f32 to vector<2x128xf32>
    %542 = arith.addf %541, %540 : vector<2x128xf32>
    %543 = arith.divf %541, %542 : vector<2x128xf32>
    %544 = vector.extract_strided_slice %531 {offsets = [0, 256], sizes = [2, 128], strides = [1, 1]} : vector<2x512xf32> to vector<2x128xf32>
    %545 = math.tanh %544 : vector<2x128xf32>
    %546 = vector.extract_strided_slice %531 {offsets = [0, 384], sizes = [2, 128], strides = [1, 1]} : vector<2x512xf32> to vector<2x128xf32>
    %547 = arith.negf %546 : vector<2x128xf32>
    %548 = math.exp %547 : vector<2x128xf32>
    %cst_153 = arith.constant 1.000000e+00 : f32
    %549 = vector.broadcast %cst_153 : f32 to vector<2x128xf32>
    %550 = arith.addf %549, %548 : vector<2x128xf32>
    %551 = arith.divf %549, %550 : vector<2x128xf32>
    %552 = arith.mulf %543, %517 : vector<2x128xf32>
    %553 = arith.mulf %537, %545 : vector<2x128xf32>
    %554 = arith.addf %552, %553 : vector<2x128xf32>
    %555 = math.tanh %554 : vector<2x128xf32>
    %556 = arith.mulf %551, %555 : vector<2x128xf32>
    %c14_154 = arith.constant 14 : index
    %c0_155 = arith.constant 0 : index
    %c0_156 = arith.constant 0 : index
    %557 = vector.load %arg4[%c14_154, %c0_155, %c0_156] : memref<16x2x128xf32, #tpu.memory_space<vmem>>, vector<1x2x128xf32>
    %558 = vector.shape_cast %557 : vector<1x2x128xf32> to vector<2x128xf32>
    %559 = vector.shape_cast %556 : vector<2x128xf32> to vector<1x2x128xf32>
    tpu.vector_store %arg4[%c14_154, %c0_155, %c0_156], %559 {strides = array<i32>} : memref<16x2x128xf32, #tpu.memory_space<vmem>>, vector<1x2x128xf32>,
    %c15 = arith.constant 15 : index
    %c0_157 = arith.constant 0 : index
    %c0_158 = arith.constant 0 : index
    %560 = vector.load %arg0[%c15, %c0_157, %c0_158] : memref<16x2x128xf32, #tpu.memory_space<vmem>>, vector<1x2x128xf32>
    %561 = vector.shape_cast %560 : vector<1x2x128xf32> to vector<2x128xf32>
    %562 = arith.truncf %561 : vector<2x128xf32> to vector<2x128xbf16>
    %cst_159 = arith.constant dense<0.000000e+00> : vector<2x512xf32>
    %563 = tpu.matmul %562, %0, %cst_159 {dimension_numbers = #tpu.dot_dimension_numbers<[1], [0], [0], [1], [0, 0, 1, 1], [], []>} : vector<2x128xbf16>, vector<128x512xbf16>, vector<2x512xf32> -> vector<2x512xf32>
    %564 = arith.truncf %556 : vector<2x128xf32> to vector<2x128xbf16>
    %cst_160 = arith.constant dense<0.000000e+00> : vector<2x512xf32>
    %565 = tpu.matmul %564, %1, %cst_160 {dimension_numbers = #tpu.dot_dimension_numbers<[1], [0], [0], [1], [0, 0, 1, 1], [], []>} : vector<2x128xbf16>, vector<128x512xbf16>, vector<2x512xf32> -> vector<2x512xf32>
    %566 = arith.addf %563, %565 : vector<2x512xf32>
    %567 = vector.broadcast %2 : vector<1x512xf32> to vector<2x512xf32>
    %568 = arith.addf %566, %567 : vector<2x512xf32>
    %569 = vector.extract_strided_slice %568 {offsets = [0, 0], sizes = [2, 128], strides = [1, 1]} : vector<2x512xf32> to vector<2x128xf32>
    %570 = arith.negf %569 : vector<2x128xf32>
    %571 = math.exp %570 : vector<2x128xf32>
    %cst_161 = arith.constant 1.000000e+00 : f32
    %572 = vector.broadcast %cst_161 : f32 to vector<2x128xf32>
    %573 = arith.addf %572, %571 : vector<2x128xf32>
    %574 = arith.divf %572, %573 : vector<2x128xf32>
    %575 = vector.extract_strided_slice %568 {offsets = [0, 128], sizes = [2, 128], strides = [1, 1]} : vector<2x512xf32> to vector<2x128xf32>
    %576 = arith.negf %575 : vector<2x128xf32>
    %577 = math.exp %576 : vector<2x128xf32>
    %cst_162 = arith.constant 1.000000e+00 : f32
    %578 = vector.broadcast %cst_162 : f32 to vector<2x128xf32>
    %579 = arith.addf %578, %577 : vector<2x128xf32>
    %580 = arith.divf %578, %579 : vector<2x128xf32>
    %581 = vector.extract_strided_slice %568 {offsets = [0, 256], sizes = [2, 128], strides = [1, 1]} : vector<2x512xf32> to vector<2x128xf32>
    %582 = math.tanh %581 : vector<2x128xf32>
    %583 = vector.extract_strided_slice %568 {offsets = [0, 384], sizes = [2, 128], strides = [1, 1]} : vector<2x512xf32> to vector<2x128xf32>
    %584 = arith.negf %583 : vector<2x128xf32>
    %585 = math.exp %584 : vector<2x128xf32>
    %cst_163 = arith.constant 1.000000e+00 : f32
    %586 = vector.broadcast %cst_163 : f32 to vector<2x128xf32>
    %587 = arith.addf %586, %585 : vector<2x128xf32>
    %588 = arith.divf %586, %587 : vector<2x128xf32>
    %589 = arith.mulf %580, %554 : vector<2x128xf32>
    %590 = arith.mulf %574, %582 : vector<2x128xf32>
    %591 = arith.addf %589, %590 : vector<2x128xf32>
    %592 = math.tanh %591 : vector<2x128xf32>
    %593 = arith.mulf %588, %592 : vector<2x128xf32>
    %c15_164 = arith.constant 15 : index
    %c0_165 = arith.constant 0 : index
    %c0_166 = arith.constant 0 : index
    %594 = vector.load %arg4[%c15_164, %c0_165, %c0_166] : memref<16x2x128xf32, #tpu.memory_space<vmem>>, vector<1x2x128xf32>
    %595 = vector.shape_cast %594 : vector<1x2x128xf32> to vector<2x128xf32>
    %596 = vector.shape_cast %593 : vector<2x128xf32> to vector<1x2x128xf32>
    tpu.vector_store %arg4[%c15_164, %c0_165, %c0_166], %596 {strides = array<i32>} : memref<16x2x128xf32, #tpu.memory_space<vmem>>, vector<1x2x128xf32>,
    return
  }
}

</mosaic_0001>

<llo_original>
// kernel: bigram_lm_forward.19
$region0: #{bigram_lm_forward.19}
  #allocation0 [shape = 'u32[]', space=smem, size = 0x4, offset = 0x4, fixed_abs, tag = 'smem constant byte address 0x4 - core index']
  #allocation1 [shape = 'u32[144,128]{1,0:T(1,128)}', space=vmem, size = 0x12000, scoped, tag = 'internal scratch']
  %s0 = inlined_call_operand.vmem [shape: f32[32,128], index: 0, kind: input, shape index: {}]
  %s1 = inlined_call_operand.vmem [shape: f32[1,128], index: 1, kind: input, shape index: {}]
  %s2 = inlined_call_operand.vmem [shape: f32[1,128], index: 2, kind: input, shape index: {}]
  %s3 = inlined_call_operand.vmem [shape: bf16[128,256], index: 3, kind: input, shape index: {}]
  %s4 = inlined_call_operand.vmem [shape: f32[1,256], index: 4, kind: input, shape index: {}]
  %s5 = inlined_call_operand.hbm [shape: f32[32,256], index: 5, kind: output, shape index: {}]
  %s6 = sld [smem:[#allocation0]]
  $region53: #{bigram_lm_forward.19} parent=0
    _
  %s8 = ssub.s32 1, %s6
  %s9 = scalar_select 0, %s8, %s6
  $region1: #{bigram_lm_forward.19} parent=0
    #allocation2 [shape = 'u8[32768]{0}', space=vmem, size = 0x8000, scoped, tag = 'output window, operand 0']
    #allocation3 [shape = 's32[2]{0}', space=sflag, size = 0x8, scoped, tag = 'scoped memory for bigram_lm_forward.19']
    %10 = vsyncpa [#allocation3], 0
    %s11 = scalar_lea.sflag [#allocation3], 1
    %12 = vsyncpa %s11, 0
    loop: start=0, step=1, limit=4
    $region2: #{bigram_lm_forward.19} parent=1 // loop_pre_header
      _
    $region3: #{bigram_lm_forward.19} parent=1 // loop_header
      %s14 = sphi 0, %s18
      %p15 = scmp.ge.s32.totalorder %s14, 4
      %s24 = sphi 0, %s26
      %s27 = sphi 0, %s24
      %s28 = sphi 0, %s27
      %s44 = sphi 0, %s28
      %s48 = sphi 0, %s48
      %s50 = sphi 0, %s48
      %s51 = sphi 0, %s50
      %s65 = sphi 0, %s51
      %s69 = sphi 0, %s69
      %s71 = sphi 0, %s69
      %s72 = sphi 0, %s71
      %s86 = sphi 0, %s72
      %s90 = sphi 0, %s90
      %s92 = sphi 0, %s90
      %s93 = sphi 0, %s92
      %s107 = sphi 0, %s93
      %s111 = sphi 0, %s111
      %s113 = sphi 0, %s111
      %s114 = sphi 0, %s113
      %s128 = sphi 0, %s114
      %s134 = sphi 0, %s136
      %s137 = sphi 0, %s134
      %s138 = sphi 0, %s137
      %s154 = sphi 0, %s138
    $region4: #{bigram_lm_forward.19} parent=1 // loop_header_branch
      %17 = sbr.rel (%p15) target = $region8
    $region5: #{bigram_lm_forward.19} parent=1 // loop_body
      %s19 = ssub.s32 %s14, 1
      %s20 = ssub.s32 %s14, 2
      %s21 = sadd.s32 %s14, 1
      %s22 = ssub.s32 %s14, %s21
      %p23 = scmp.eq.s32.totalorder %s22, 0
      %s25 = sadd.s32 %s24, 1
      %s26 = scalar_select %p23, %s24, %s25
      %p29 = pneg %p23
      %p30 = scmp.eq.s32.totalorder %s14, 1
      %p31 = por %p29, %p30
      %p32 = scmp.ne.s32.totalorder %s24, %s27
      %p33 = scmp.eq.s32.totalorder %s14, 0
      %p34 = por %p32, %p33
      %p35 = scmp.ne.s32.totalorder %s24, %s27
      %p36 = scmp.eq.s32.totalorder %s19, 1
      %p37 = por %p35, %p36
      %p38 = scmp.ne.s32.totalorder %s27, %s28
      %p39 = scmp.eq.s32.totalorder %s19, 0
      %p40 = por %p38, %p39
      %p41 = scmp.ne.s32.totalorder %s27, %s28
      %p42 = scmp.eq.s32.totalorder %s20, 1
      %p43 = por %p41, %p42
      %p45 = scmp.ne.s32.totalorder %s28, %s44
      %p46 = scmp.eq.s32.totalorder %s20, 0
      %p47 = por %p45, %p46
      %s49 = sadd.s32 %s48, 1
      %p52 = scmp.eq.s32.totalorder %s14, 1
      %p53 = scmp.ne.s32.totalorder %s48, %s50
      %p54 = scmp.eq.s32.totalorder %s14, 0
      %p55 = por %p53, %p54
      %p56 = scmp.ne.s32.totalorder %s48, %s50
      %p57 = scmp.eq.s32.totalorder %s19, 1
      %p58 = por %p56, %p57
      %p59 = scmp.ne.s32.totalorder %s50, %s51
      %p60 = scmp.eq.s32.totalorder %s19, 0
      %p61 = por %p59, %p60
      %p62 = scmp.ne.s32.totalorder %s50, %s51
      %p63 = scmp.eq.s32.totalorder %s20, 1
      %p64 = por %p62, %p63
      %p66 = scmp.ne.s32.totalorder %s51, %s65
      %p67 = scmp.eq.s32.totalorder %s20, 0
      %p68 = por %p66, %p67
      %s70 = sadd.s32 %s69, 1
      %p73 = scmp.eq.s32.totalorder %s14, 1
      %p74 = scmp.ne.s32.totalorder %s69, %s71
      %p75 = scmp.eq.s32.totalorder %s14, 0
      %p76 = por %p74, %p75
      %p77 = scmp.ne.s32.totalorder %s69, %s71
      %p78 = scmp.eq.s32.totalorder %s19, 1
      %p79 = por %p77, %p78
      %p80 = scmp.ne.s32.totalorder %s71, %s72
      %p81 = scmp.eq.s32.totalorder %s19, 0
      %p82 = por %p80, %p81
      %p83 = scmp.ne.s32.totalorder %s71, %s72
      %p84 = scmp.eq.s32.totalorder %s20, 1
      %p85 = por %p83, %p84
      %p87 = scmp.ne.s32.totalorder %s72, %s86
      %p88 = scmp.eq.s32.totalorder %s20, 0
      %p89 = por %p87, %p88
      %s91 = sadd.s32 %s90, 1
      %p94 = scmp.eq.s32.totalorder %s14, 1
      %p95 = scmp.ne.s32.totalorder %s90, %s92
      %p96 = scmp.eq.s32.totalorder %s14, 0
      %p97 = por %p95, %p96
      %p98 = scmp.ne.s32.totalorder %s90, %s92
      %p99 = scmp.eq.s32.totalorder %s19, 1
      %p100 = por %p98, %p99
      %p101 = scmp.ne.s32.totalorder %s92, %s93
      %p102 = scmp.eq.s32.totalorder %s19, 0
      %p103 = por %p101, %p102
      %p104 = scmp.ne.s32.totalorder %s92, %s93
      %p105 = scmp.eq.s32.totalorder %s20, 1
      %p106 = por %p104, %p105
      %p108 = scmp.ne.s32.totalorder %s93, %s107
      %p109 = scmp.eq.s32.totalorder %s20, 0
      %p110 = por %p108, %p109
      %s112 = sadd.s32 %s111, 1
      %p115 = scmp.eq.s32.totalorder %s14, 1
      %p116 = scmp.ne.s32.totalorder %s111, %s113
      %p117 = scmp.eq.s32.totalorder %s14, 0
      %p118 = por %p116, %p117
      %p119 = scmp.ne.s32.totalorder %s111, %s113
      %p120 = scmp.eq.s32.totalorder %s19, 1
      %p121 = por %p119, %p120
      %p122 = scmp.ne.s32.totalorder %s113, %s114
      %p123 = scmp.eq.s32.totalorder %s19, 0
      %p124 = por %p122, %p123
      %p125 = scmp.ne.s32.totalorder %s113, %s114
      %p126 = scmp.eq.s32.totalorder %s20, 1
      %p127 = por %p125, %p126
      %p129 = scmp.ne.s32.totalorder %s114, %s128
      %p130 = scmp.eq.s32.totalorder %s20, 0
      %p131 = por %p129, %p130
      %s132 = ssub.s32 %s14, %s21
      %p133 = scmp.eq.s32.totalorder %s132, 0
      %s135 = sadd.s32 %s134, 1
      %s136 = scalar_select %p133, %s134, %s135
      %p139 = pneg %p133
      %p140 = scmp.eq.s32.totalorder %s14, 1
      %p141 = por %p139, %p140
      %p142 = scmp.ne.s32.totalorder %s134, %s137
      %p143 = scmp.eq.s32.totalorder %s14, 0
      %p144 = por %p142, %p143
      %p145 = scmp.ne.s32.totalorder %s134, %s137
      %p146 = scmp.eq.s32.totalorder %s19, 1
      %p147 = por %p145, %p146
      %p148 = scmp.ne.s32.totalorder %s137, %s138
      %p149 = scmp.eq.s32.totalorder %s19, 0
      %p150 = por %p148, %p149
      %p151 = scmp.ne.s32.totalorder %s137, %s138
      %p152 = scmp.eq.s32.totalorder %s20, 1
      %p153 = por %p151, %p152
      %p155 = scmp.ne.s32.totalorder %s138, %s154
      %p156 = scmp.eq.s32.totalorder %s20, 0
      %p157 = por %p155, %p156
      %p158 = scmp.le.s32.totalorder 1, %s14
      %p159 = scmp.lt.s32.totalorder %s14, 3
      %p160 = pnand %p158, %p159
      %p161 = pneg %p160
      // Predicated region
      $region9: #{bigram_lm_forward.19} parent=5 // pred_check
        _
      $region10: #{bigram_lm_forward.19} parent=5 // pred_check_branch
        %163 = sbr.rel (%p160) target = $region12
      $region11: #{bigram_lm_forward.19} parent=5 // pred_region
        %s164 = ssub.s32 %s14, 1
        // Predicated region
        $region13: #{bigram_lm_forward.19} parent=11 // pred_check
          %p165 = pneg %p61
        $region14: #{bigram_lm_forward.19} parent=11 // pred_check_branch
          %167 = sbr.rel (%p165) target = $region16
        $region15: #{bigram_lm_forward.19} parent=11 // pred_region
          _
        $region16: #{bigram_lm_forward.19} parent=11 // pred_fallthru
          _
        // Predicated region
        $region17: #{bigram_lm_forward.19} parent=11 // pred_check
          %p168 = pneg %p82
        $region18: #{bigram_lm_forward.19} parent=11 // pred_check_branch
          %170 = sbr.rel (%p168) target = $region20
        $region19: #{bigram_lm_forward.19} parent=11 // pred_region
          _
        $region20: #{bigram_lm_forward.19} parent=11 // pred_fallthru
          _
        // Predicated region
        $region21: #{bigram_lm_forward.19} parent=11 // pred_check
          %p171 = pneg %p103
        $region22: #{bigram_lm_forward.19} parent=11 // pred_check_branch
          %173 = sbr.rel (%p171) target = $region24
        $region23: #{bigram_lm_forward.19} parent=11 // pred_region
          _
        $region24: #{bigram_lm_forward.19} parent=11 // pred_fallthru
          _
        // Predicated region
        $region25: #{bigram_lm_forward.19} parent=11 // pred_check
          %p174 = pneg %p124
        $region26: #{bigram_lm_forward.19} parent=11 // pred_check_branch
          %176 = sbr.rel (%p174) target = $region28
        $region27: #{bigram_lm_forward.19} parent=11 // pred_region
          _
        $region28: #{bigram_lm_forward.19} parent=11 // pred_fallthru
          _
      $region12: #{bigram_lm_forward.19} parent=5 // pred_fallthru
        _
      %p177 = scmp.lt.s32.totalorder %s14, 2
      // Predicated region
      $region29: #{bigram_lm_forward.19} parent=5 // pred_check
        %p178 = pneg %p177
      $region30: #{bigram_lm_forward.19} parent=5 // pred_check_branch
        %180 = sbr.rel (%p178) target = $region32
      $region31: #{bigram_lm_forward.19} parent=5 // pred_region
        // Predicated region
        $region33: #{bigram_lm_forward.19} parent=31 // pred_check
          %p181 = pneg %p34
        $region34: #{bigram_lm_forward.19} parent=31 // pred_check_branch
          %183 = sbr.rel (%p181) target = $region36
        $region35: #{bigram_lm_forward.19} parent=31 // pred_region
          %s184 = smul.u32 2, %s14
          %p185 = scmp.lt.s32.totalorder %s184, 3
          %s186 = scalar_select %p185, %s184, 3
          %s187 = smul.addr %s186, 8
          %s188 = scalar_lea.vmem %s0, %s187
          %s189 = smul.u32 2, %s14
        $region36: #{bigram_lm_forward.19} parent=31 // pred_fallthru
          _
      $region32: #{bigram_lm_forward.19} parent=5 // pred_fallthru
        _
      %p190 = scmp.le.s32.totalorder 1, %s14
      %p191 = scmp.lt.s32.totalorder %s14, 3
      %p192 = pnand %p190, %p191
      %p193 = pneg %p192
      // Predicated region
      $region37: #{bigram_lm_forward.19} parent=5 // pred_check
        _
      $region38: #{bigram_lm_forward.19} parent=5 // pred_check_branch
        %195 = sbr.rel (%p192) target = $region40
      $region39: #{bigram_lm_forward.19} parent=5 // pred_region
        %s196 = ssub.s32 %s14, 1
        %s197 = smul.u32 2, %s19
        %p198 = scmp.lt.s32.totalorder %s197, 3
        %s199 = scalar_select %p198, %s197, 3
        %s200 = smul.addr %s199, 8
        %s201 = scalar_lea.vmem %s0, %s200
        %p202 = pneg %p40
        %p203 = pneg %p37
        %p204 = pneg %p61
        %p205 = pneg %p58
        %p206 = pneg %p82
        %p207 = pneg %p79
        %p208 = pneg %p103
        %p209 = pneg %p100
        %p210 = pneg %p124
        %p211 = pneg %p121
        %p212 = pneg %p150
        %p213 = pneg %p147
        %s214 = sand.u32 %s137, 1
        %s215 = scalar_lea.sflag [#allocation3], %s214
        %s216 = sand.u32 %s137, 1
        %s217 = smul.addr %s216, 32
        %s218 = scalar_lea.vmem [#allocation2], %s217
        %s219 = smul.u32 2, %s19
        %p220 = scmp.lt.s32.totalorder %s219, 3
        %s221 = scalar_select %p220, %s219, 3
        %s222 = smul.addr %s221, 8
        %s223 = scalar_lea.vmem %s0, %s222
        %s224 = smul.u32 2, %s19
        %s225 = smul.u32 2, %s19
        %v227 = vld [vmem:[%s223] sm:$0xff]
        %v228 = vld [vmem:[%s223 + $0x8] sm:$0xff]
        %229 = vadd.xlane.f32.xlu0 %v227
        %v230 = vpop.xlane.xlu0 %229
        %231 = vadd.xlane.f32.xlu0 %v228
        %v232 = vpop.xlane.xlu0 %231
        %v233 = vrcp.pop 128.0
        %v234 = vmul.f32 %v230, %v233
        %v235 = vmul.f32 %v232, %v233
        %v236 = vsub.f32 %v227, %v234
        %v237 = vsub.f32 %v228, %v235
        %v238 = vmul.f32 %v236, %v236
        %v239 = vmul.f32 %v237, %v237
        %240 = vadd.xlane.f32.xlu0 %v238
        %v241 = vpop.xlane.xlu0 %240
        %242 = vadd.xlane.f32.xlu0 %v239
        %v243 = vpop.xlane.xlu0 %242
        %v244 = vmul.f32 %v241, %v233
        %v245 = vmul.f32 %v243, %v233
        %v246 = vadd.f32 %v244, 1e-05
        %v247 = vadd.f32 %v245, 1e-05
        %v248 = vrsqrt.pop %v246
        %v249 = vrsqrt.pop %v247
        %v250 = vmul.f32 %v236, %v248
        %v251 = vmul.f32 %v237, %v249
        %v252 = vld [vmem:[%s1] sm:$0x1]
        %v254 = vlaneseq
        %v255 = vshrl.u32 %v254, 7
        %v256 = vsub.s32 0, %v255
        %v257 = vrot.slane %v252, %v256
        %v259 = vmul.f32 %v250, %v257
        %v260 = vmul.f32 %v251, %v257
        %v261 = vld [vmem:[%s2] sm:$0x1]
        %v263 = vlaneseq
        %v264 = vshrl.u32 %v263, 7
        %v265 = vsub.s32 0, %v264
        %v266 = vrot.slane %v261, %v265
        %v268 = vadd.f32 %v259, %v266
        %v269 = vadd.f32 %v260, %v266
        %v270 = vpack.c.bf16 %v269, %v268
        %v271 = vld [vmem:[%s3] sm:$0xff]
        %v272 = vld [vmem:[%s3 + $0x8] sm:$0xff]
        %v273 = vld [vmem:[%s3 + $0x10] sm:$0xff]
        %v274 = vld [vmem:[%s3 + $0x18] sm:$0xff]
        %v275 = vld [vmem:[%s3 + $0x20] sm:$0xff]
        %v276 = vld [vmem:[%s3 + $0x28] sm:$0xff]
        %v277 = vld [vmem:[%s3 + $0x30] sm:$0xff]
        %v278 = vld [vmem:[%s3 + $0x38] sm:$0xff]
        %v279 = vld [vmem:[%s3 + $0x40] sm:$0xff]
        %v280 = vld [vmem:[%s3 + $0x48] sm:$0xff]
        %v281 = vld [vmem:[%s3 + $0x50] sm:$0xff]
        %v282 = vld [vmem:[%s3 + $0x58] sm:$0xff]
        %v283 = vld [vmem:[%s3 + $0x60] sm:$0xff]
        %v284 = vld [vmem:[%s3 + $0x68] sm:$0xff]
        %v285 = vld [vmem:[%s3 + $0x70] sm:$0xff]
        %v286 = vld [vmem:[%s3 + $0x78] sm:$0xff]
        %v287 = vld [vmem:[%s4] sm:$0x3]
        %v289 = vlaneseq
        %v290 = vshrl.u32 %v289, 7
        %v291 = vsub.s32 0, %v290
        %v292 = vrot.slane %v287, %v291
        %v293 = vlaneseq
        %v294 = vshrl.u32 %v293, 7
        %v295 = vsub.s32 1, %v294
        %v296 = vrot.slane %v287, %v295
        %v315 = vunpack.c.l.b16 %v271
        %v316 = vunpack.c.h.b16 %v271
        %v317 = vunpack.c.l.b16 %v272
        %v318 = vunpack.c.h.b16 %v272
        %v319 = vunpack.c.l.b16 %v273
        %v320 = vunpack.c.h.b16 %v273
        %v321 = vunpack.c.l.b16 %v274
        %v322 = vunpack.c.h.b16 %v274
        %v323 = vunpack.c.l.b16 %v275
        %v324 = vunpack.c.h.b16 %v275
        %v325 = vunpack.c.l.b16 %v276
        %v326 = vunpack.c.h.b16 %v276
        %v327 = vunpack.c.l.b16 %v277
        %v328 = vunpack.c.h.b16 %v277
        %v329 = vunpack.c.l.b16 %v278
        %v330 = vunpack.c.h.b16 %v278
        %v331 = vunpack.c.l.b16 %v279
        %v332 = vunpack.c.h.b16 %v279
        %v333 = vunpack.c.l.b16 %v280
        %v334 = vunpack.c.h.b16 %v280
        %v335 = vunpack.c.l.b16 %v281
        %v336 = vunpack.c.h.b16 %v281
        %v337 = vunpack.c.l.b16 %v282
        %v338 = vunpack.c.h.b16 %v282
        %v339 = vunpack.c.l.b16 %v283
        %v340 = vunpack.c.h.b16 %v283
        %v341 = vunpack.c.l.b16 %v284
        %v342 = vunpack.c.h.b16 %v284
        %v343 = vunpack.c.l.b16 %v285
        %v344 = vunpack.c.h.b16 %v285
        %v345 = vunpack.c.l.b16 %v286
        %v346 = vunpack.c.h.b16 %v286
        %v347 = vpack.c.b16 %v317, %v315
        %v348 = vpack.c.b16 %v318, %v316
        %v349 = vpack.c.b16 %v321, %v319
        %v350 = vpack.c.b16 %v322, %v320
        %v351 = vpack.c.b16 %v325, %v323
        %v352 = vpack.c.b16 %v326, %v324
        %v353 = vpack.c.b16 %v329, %v327
        %v354 = vpack.c.b16 %v330, %v328
        %v355 = vpack.c.b16 %v333, %v331
        %v356 = vpack.c.b16 %v334, %v332
        %v357 = vpack.c.b16 %v337, %v335
        %v358 = vpack.c.b16 %v338, %v336
        %v359 = vpack.c.b16 %v341, %v339
        %v360 = vpack.c.b16 %v342, %v340
        %v361 = vpack.c.b16 %v345, %v343
        %v362 = vpack.c.b16 %v346, %v344
        %379 = vmatprep.subr.bf16.mxu0 %v362
        %380 = vmatpush1.bf16.msra.mxu0 %v361
        %381 = vmatprep.subr.bf16.mxu0 %v360
        %382 = vmatpush1.bf16.msra.mxu0 %v359
        %383 = vmatprep.subr.bf16.mxu0 %v358
        %384 = vmatpush1.bf16.msra.mxu0 %v357
        %385 = vmatprep.subr.bf16.mxu0 %v356
        %386 = vmatpush1.bf16.msra.mxu0 %v355
        %387 = vmatprep.subr.bf16.mxu0 %v354
        %388 = vmatpush1.bf16.msra.mxu0 %v353
        %389 = vmatprep.subr.bf16.mxu0 %v352
        %390 = vmatpush1.bf16.msra.mxu0 %v351
        %391 = vmatprep.subr.bf16.mxu0 %v350
        %392 = vmatpush1.bf16.msra.mxu0 %v349
        %393 = vmatprep.subr.bf16.mxu0 %v348
        %394 = vmatpush1.bf16.msra.mxu0 %v347
        %395 = vmatprep.subr.bf16.mxu0 0
        %396 = vmatpush2.bf16.msra.mxu0 0
        %397 = vmatprep.subr.bf16.mxu0 0
        %398 = vmatpush2.bf16.msra.mxu0 0
        %399 = vmatprep.subr.bf16.mxu0 0
        %400 = vmatpush2.bf16.msra.mxu0 0
        %401 = vmatprep.subr.bf16.mxu0 0
        %402 = vmatpush2.bf16.msra.mxu0 0
        %403 = vmatprep.subr.bf16.mxu0 0
        %404 = vmatpush2.bf16.msra.mxu0 0
        %405 = vmatprep.subr.bf16.mxu0 0
        %406 = vmatpush2.bf16.msra.mxu0 0
        %407 = vmatprep.subr.bf16.mxu0 0
        %408 = vmatpush2.bf16.msra.mxu0 0
        %409 = vmatprep.subr.bf16.mxu0 0
        %410 = vmatpush2.bf16.msra.mxu0 0
        %411 = vmatprep.mubr.bf16.mxu0 0
        %412 = vmatmul.mubr.bf16.gmra.mxu0 %v270
        %v413 = vpop.f32.mrf.mxu0
        %v414 = vadd.f32 %v292, %v413
        %v415 = vpop.f32.mrf.mxu0
        %v416 = vadd.f32 %v296, %v415
        %v417 = vpop.f32.mrf.mxu0
        %v418 = vadd.f32 %v292, %v417
        %v419 = vpop.f32.mrf.mxu0
        %v420 = vadd.f32 %v296, %v419
        %421 = vdwg.mxu0
        %422 = vst [vmem:[%s218] sm:$0xff] %v414
        %423 = vst [vmem:[%s218 + $0x8] sm:$0xff] %v416
        %424 = vst [vmem:[%s218 + $0x10] sm:$0xff] %v418
        %425 = vst [vmem:[%s218 + $0x18] sm:$0xff] %v420
        %s426 = sand.u32 %s137, 1
        %s427 = scalar_lea.sflag [#allocation3], %s426
        %s428 = sand.u32 %s137, 1
        %s429 = smul.addr %s428, 32
        %s430 = scalar_lea.vmem [#allocation2], %s429
        // Predicated region
        $region41: #{bigram_lm_forward.19} parent=39 // pred_check
          %p431 = pneg %p147
        $region42: #{bigram_lm_forward.19} parent=39 // pred_check_branch
          %433 = sbr.rel (%p431) target = $region44
        $region43: #{bigram_lm_forward.19} parent=39 // pred_region
          %s434 = smul.u32 2, %s19
          %s436 = ssub.s32 512, 512
          %437 = vsyncadd %s427, %s436
          %s438 = smul.addr %s434, 2
          %s439 = smul.addr %s438, 128
          %s440 = scalar_lea.hbm %s5, %s439
          %s441 = sshll.u32 %s430, 4
          %s442 = int_to_ptr.vmem [resolvable:$true] %s441
          %447 = dma.vmem_to_hbm [thread:$0]  %s442, 512, %s440, %s427, 256, 256, 16
        $region44: #{bigram_lm_forward.19} parent=39 // pred_fallthru
          _
      $region40: #{bigram_lm_forward.19} parent=5 // pred_fallthru
        _
      %p448 = scmp.le.s32.totalorder 2, %s14
      // Predicated region
      $region45: #{bigram_lm_forward.19} parent=5 // pred_check
        %p449 = pneg %p448
      $region46: #{bigram_lm_forward.19} parent=5 // pred_check_branch
        %451 = sbr.rel (%p449) target = $region48
      $region47: #{bigram_lm_forward.19} parent=5 // pred_region
        %s452 = ssub.s32 %s14, 2
        // Predicated region
        $region49: #{bigram_lm_forward.19} parent=47 // pred_check
          %p453 = pneg %p153
        $region50: #{bigram_lm_forward.19} parent=47 // pred_check_branch
          %455 = sbr.rel (%p453) target = $region52
        $region51: #{bigram_lm_forward.19} parent=47 // pred_region
          %s456 = sand.u32 %s138, 1
          %s457 = scalar_lea.sflag [#allocation3], %s456
          %s458 = sand.u32 %s138, 1
          %s459 = smul.addr %s458, 32
          %s460 = scalar_lea.vmem [#allocation2], %s459
          %461 = dma.done %s457, 512
        $region52: #{bigram_lm_forward.19} parent=47 // pred_fallthru
          _
      $region48: #{bigram_lm_forward.19} parent=5 // pred_fallthru
        _
    $region6: #{bigram_lm_forward.19} parent=1 // loop_footer
      %s18 = sadd.s32 1, %s14
    $region7: #{bigram_lm_forward.19} parent=1 // loop_footer_branch
      %13 = sbr.rel target = $region3
    $region8: #{bigram_lm_forward.19} parent=1 // loop_exit
      _
    %462 = vsyncpa [#allocation3], 1
    %s463 = scalar_lea.sflag [#allocation3], 1
    %464 = vsyncpa %s463, 1

// kernel: bigram_lm_forward.11
$region0: #{bigram_lm_forward.11}
  #allocation0 [shape = 'u32[]', space=smem, size = 0x4, offset = 0x4, fixed_abs, tag = 'smem constant byte address 0x4 - core index']
  #allocation1 [shape = 'u32[144,128]{1,0:T(1,128)}', space=vmem, size = 0x12000, scoped, tag = 'internal scratch']
  %s0 = inlined_call_operand.vmem [shape: f32[32,128], index: 0, kind: input, shape index: {}]
  %s1 = inlined_call_operand.vmem [shape: bf16[128,512], index: 1, kind: input, shape index: {}]
  %s2 = inlined_call_operand.vmem [shape: f32[1,512], index: 2, kind: input, shape index: {}]
  %s3 = inlined_call_operand.vmem [shape: bf16[512,128], index: 3, kind: input, shape index: {}]
  %s4 = inlined_call_operand.vmem [shape: f32[1,128], index: 4, kind: input, shape index: {}]
  %s5 = inlined_call_operand.vmem [shape: f32[1,128], index: 5, kind: input, shape index: {}]
  %s6 = inlined_call_operand.vmem [shape: f32[1,128], index: 6, kind: input, shape index: {}]
  %s7 = inlined_call_operand.vmem [shape: f32[32,128], index: 7, kind: output, shape index: {}]
  %s8 = sld [smem:[#allocation0]]
  $region61: #{bigram_lm_forward.11} parent=0
    _
  %s10 = ssub.s32 1, %s8
  %s11 = scalar_select 0, %s10, %s8
  loop: start=0, step=1, limit=4
  $region2: #{bigram_lm_forward.11} parent=0 // loop_pre_header
    _
  $region3: #{bigram_lm_forward.11} parent=0 // loop_header
    %s13 = sphi 0, %s17
    %p14 = scmp.ge.s32.totalorder %s13, 4
    %s23 = sphi 0, %s25
    %s26 = sphi 0, %s23
    %s27 = sphi 0, %s26
    %s43 = sphi 0, %s27
    %s47 = sphi 0, %s47
    %s49 = sphi 0, %s47
    %s50 = sphi 0, %s49
    %s64 = sphi 0, %s50
    %s68 = sphi 0, %s68
    %s70 = sphi 0, %s68
    %s71 = sphi 0, %s70
    %s85 = sphi 0, %s71
    %s89 = sphi 0, %s89
    %s91 = sphi 0, %s89
    %s92 = sphi 0, %s91
    %s106 = sphi 0, %s92
    %s110 = sphi 0, %s110
    %s112 = sphi 0, %s110
    %s113 = sphi 0, %s112
    %s127 = sphi 0, %s113
    %s131 = sphi 0, %s131
    %s133 = sphi 0, %s131
    %s134 = sphi 0, %s133
    %s148 = sphi 0, %s134
    %s152 = sphi 0, %s152
    %s154 = sphi 0, %s152
    %s155 = sphi 0, %s154
    %s169 = sphi 0, %s155
    %s175 = sphi 0, %s177
    %s178 = sphi 0, %s175
    %s179 = sphi 0, %s178
    %s195 = sphi 0, %s179
  $region4: #{bigram_lm_forward.11} parent=0 // loop_header_branch
    %16 = sbr.rel (%p14) target = $region8
  $region5: #{bigram_lm_forward.11} parent=0 // loop_body
    %s18 = ssub.s32 %s13, 1
    %s19 = ssub.s32 %s13, 2
    %s20 = sadd.s32 %s13, 1
    %s21 = ssub.s32 %s13, %s20
    %p22 = scmp.eq.s32.totalorder %s21, 0
    %s24 = sadd.s32 %s23, 1
    %s25 = scalar_select %p22, %s23, %s24
    %p28 = pneg %p22
    %p29 = scmp.eq.s32.totalorder %s13, 1
    %p30 = por %p28, %p29
    %p31 = scmp.ne.s32.totalorder %s23, %s26
    %p32 = scmp.eq.s32.totalorder %s13, 0
    %p33 = por %p31, %p32
    %p34 = scmp.ne.s32.totalorder %s23, %s26
    %p35 = scmp.eq.s32.totalorder %s18, 1
    %p36 = por %p34, %p35
    %p37 = scmp.ne.s32.totalorder %s26, %s27
    %p38 = scmp.eq.s32.totalorder %s18, 0
    %p39 = por %p37, %p38
    %p40 = scmp.ne.s32.totalorder %s26, %s27
    %p41 = scmp.eq.s32.totalorder %s19, 1
    %p42 = por %p40, %p41
    %p44 = scmp.ne.s32.totalorder %s27, %s43
    %p45 = scmp.eq.s32.totalorder %s19, 0
    %p46 = por %p44, %p45
    %s48 = sadd.s32 %s47, 1
    %p51 = scmp.eq.s32.totalorder %s13, 1
    %p52 = scmp.ne.s32.totalorder %s47, %s49
    %p53 = scmp.eq.s32.totalorder %s13, 0
    %p54 = por %p52, %p53
    %p55 = scmp.ne.s32.totalorder %s47, %s49
    %p56 = scmp.eq.s32.totalorder %s18, 1
    %p57 = por %p55, %p56
    %p58 = scmp.ne.s32.totalorder %s49, %s50
    %p59 = scmp.eq.s32.totalorder %s18, 0
    %p60 = por %p58, %p59
    %p61 = scmp.ne.s32.totalorder %s49, %s50
    %p62 = scmp.eq.s32.totalorder %s19, 1
    %p63 = por %p61, %p62
    %p65 = scmp.ne.s32.totalorder %s50, %s64
    %p66 = scmp.eq.s32.totalorder %s19, 0
    %p67 = por %p65, %p66
    %s69 = sadd.s32 %s68, 1
    %p72 = scmp.eq.s32.totalorder %s13, 1
    %p73 = scmp.ne.s32.totalorder %s68, %s70
    %p74 = scmp.eq.s32.totalorder %s13, 0
    %p75 = por %p73, %p74
    %p76 = scmp.ne.s32.totalorder %s68, %s70
    %p77 = scmp.eq.s32.totalorder %s18, 1
    %p78 = por %p76, %p77
    %p79 = scmp.ne.s32.totalorder %s70, %s71
    %p80 = scmp.eq.s32.totalorder %s18, 0
    %p81 = por %p79, %p80
    %p82 = scmp.ne.s32.totalorder %s70, %s71
    %p83 = scmp.eq.s32.totalorder %s19, 1
    %p84 = por %p82, %p83
    %p86 = scmp.ne.s32.totalorder %s71, %s85
    %p87 = scmp.eq.s32.totalorder %s19, 0
    %p88 = por %p86, %p87
    %s90 = sadd.s32 %s89, 1
    %p93 = scmp.eq.s32.totalorder %s13, 1
    %p94 = scmp.ne.s32.totalorder %s89, %s91
    %p95 = scmp.eq.s32.totalorder %s13, 0
    %p96 = por %p94, %p95
    %p97 = scmp.ne.s32.totalorder %s89, %s91
    %p98 = scmp.eq.s32.totalorder %s18, 1
    %p99 = por %p97, %p98
    %p100 = scmp.ne.s32.totalorder %s91, %s92
    %p101 = scmp.eq.s32.totalorder %s18, 0
    %p102 = por %p100, %p101
    %p103 = scmp.ne.s32.totalorder %s91, %s92
    %p104 = scmp.eq.s32.totalorder %s19, 1
    %p105 = por %p103, %p104
    %p107 = scmp.ne.s32.totalorder %s92, %s106
    %p108 = scmp.eq.s32.totalorder %s19, 0
    %p109 = por %p107, %p108
    %s111 = sadd.s32 %s110, 1
    %p114 = scmp.eq.s32.totalorder %s13, 1
    %p115 = scmp.ne.s32.totalorder %s110, %s112
    %p116 = scmp.eq.s32.totalorder %s13, 0
    %p117 = por %p115, %p116
    %p118 = scmp.ne.s32.totalorder %s110, %s112
    %p119 = scmp.eq.s32.totalorder %s18, 1
    %p120 = por %p118, %p119
    %p121 = scmp.ne.s32.totalorder %s112, %s113
    %p122 = scmp.eq.s32.totalorder %s18, 0
    %p123 = por %p121, %p122
    %p124 = scmp.ne.s32.totalorder %s112, %s113
    %p125 = scmp.eq.s32.totalorder %s19, 1
    %p126 = por %p124, %p125
    %p128 = scmp.ne.s32.totalorder %s113, %s127
    %p129 = scmp.eq.s32.totalorder %s19, 0
    %p130 = por %p128, %p129
    %s132 = sadd.s32 %s131, 1
    %p135 = scmp.eq.s32.totalorder %s13, 1
    %p136 = scmp.ne.s32.totalorder %s131, %s133
    %p137 = scmp.eq.s32.totalorder %s13, 0
    %p138 = por %p136, %p137
    %p139 = scmp.ne.s32.totalorder %s131, %s133
    %p140 = scmp.eq.s32.totalorder %s18, 1
    %p141 = por %p139, %p140
    %p142 = scmp.ne.s32.totalorder %s133, %s134
    %p143 = scmp.eq.s32.totalorder %s18, 0
    %p144 = por %p142, %p143
    %p145 = scmp.ne.s32.totalorder %s133, %s134
    %p146 = scmp.eq.s32.totalorder %s19, 1
    %p147 = por %p145, %p146
    %p149 = scmp.ne.s32.totalorder %s134, %s148
    %p150 = scmp.eq.s32.totalorder %s19, 0
    %p151 = por %p149, %p150
    %s153 = sadd.s32 %s152, 1
    %p156 = scmp.eq.s32.totalorder %s13, 1
    %p157 = scmp.ne.s32.totalorder %s152, %s154
    %p158 = scmp.eq.s32.totalorder %s13, 0
    %p159 = por %p157, %p158
    %p160 = scmp.ne.s32.totalorder %s152, %s154
    %p161 = scmp.eq.s32.totalorder %s18, 1
    %p162 = por %p160, %p161
    %p163 = scmp.ne.s32.totalorder %s154, %s155
    %p164 = scmp.eq.s32.totalorder %s18, 0
    %p165 = por %p163, %p164
    %p166 = scmp.ne.s32.totalorder %s154, %s155
    %p167 = scmp.eq.s32.totalorder %s19, 1
    %p168 = por %p166, %p167
    %p170 = scmp.ne.s32.totalorder %s155, %s169
    %p171 = scmp.eq.s32.totalorder %s19, 0
    %p172 = por %p170, %p171
    %s173 = ssub.s32 %s13, %s20
    %p174 = scmp.eq.s32.totalorder %s173, 0
    %s176 = sadd.s32 %s175, 1
    %s177 = scalar_select %p174, %s175, %s176
    %p180 = pneg %p174
    %p181 = scmp.eq.s32.totalorder %s13, 1
    %p182 = por %p180, %p181
    %p183 = scmp.ne.s32.totalorder %s175, %s178
    %p184 = scmp.eq.s32.totalorder %s13, 0
    %p185 = por %p183, %p184
    %p186 = scmp.ne.s32.totalorder %s175, %s178
    %p187 = scmp.eq.s32.totalorder %s18, 1
    %p188 = por %p186, %p187
    %p189 = scmp.ne.s32.totalorder %s178, %s179
    %p190 = scmp.eq.s32.totalorder %s18, 0
    %p191 = por %p189, %p190
    %p192 = scmp.ne.s32.totalorder %s178, %s179
    %p193 = scmp.eq.s32.totalorder %s19, 1
    %p194 = por %p192, %p193
    %p196 = scmp.ne.s32.totalorder %s179, %s195
    %p197 = scmp.eq.s32.totalorder %s19, 0
    %p198 = por %p196, %p197
    %p199 = scmp.le.s32.totalorder 1, %s13
    %p200 = scmp.lt.s32.totalorder %s13, 3
    %p201 = pnand %p199, %p200
    %p202 = pneg %p201
    // Predicated region
    $region9: #{bigram_lm_forward.11} parent=5 // pred_check
      _
    $region10: #{bigram_lm_forward.11} parent=5 // pred_check_branch
      %204 = sbr.rel (%p201) target = $region12
    $region11: #{bigram_lm_forward.11} parent=5 // pred_region
      %s205 = ssub.s32 %s13, 1
      // Predicated region
      $region13: #{bigram_lm_forward.11} parent=11 // pred_check
        %p206 = pneg %p60
      $region14: #{bigram_lm_forward.11} parent=11 // pred_check_branch
        %208 = sbr.rel (%p206) target = $region16
      $region15: #{bigram_lm_forward.11} parent=11 // pred_region
        _
      $region16: #{bigram_lm_forward.11} parent=11 // pred_fallthru
        _
      // Predicated region
      $region17: #{bigram_lm_forward.11} parent=11 // pred_check
        %p209 = pneg %p81
      $region18: #{bigram_lm_forward.11} parent=11 // pred_check_branch
        %211 = sbr.rel (%p209) target = $region20
      $region19: #{bigram_lm_forward.11} parent=11 // pred_region
        _
      $region20: #{bigram_lm_forward.11} parent=11 // pred_fallthru
        _
      // Predicated region
      $region21: #{bigram_lm_forward.11} parent=11 // pred_check
        %p212 = pneg %p102
      $region22: #{bigram_lm_forward.11} parent=11 // pred_check_branch
        %214 = sbr.rel (%p212) target = $region24
      $region23: #{bigram_lm_forward.11} parent=11 // pred_region
        _
      $region24: #{bigram_lm_forward.11} parent=11 // pred_fallthru
        _
      // Predicated region
      $region25: #{bigram_lm_forward.11} parent=11 // pred_check
        %p215 = pneg %p123
      $region26: #{bigram_lm_forward.11} parent=11 // pred_check_branch
        %217 = sbr.rel (%p215) target = $region28
      $region27: #{bigram_lm_forward.11} parent=11 // pred_region
        _
      $region28: #{bigram_lm_forward.11} parent=11 // pred_fallthru
        _
      // Predicated region
      $region29: #{bigram_lm_forward.11} parent=11 // pred_check
        %p218 = pneg %p144
      $region30: #{bigram_lm_forward.11} parent=11 // pred_check_branch
        %220 = sbr.rel (%p218) target = $region32
      $region31: #{bigram_lm_forward.11} parent=11 // pred_region
        _
      $region32: #{bigram_lm_forward.11} parent=11 // pred_fallthru
        _
      // Predicated region
      $region33: #{bigram_lm_forward.11} parent=11 // pred_check
        %p221 = pneg %p165
      $region34: #{bigram_lm_forward.11} parent=11 // pred_check_branch
        %223 = sbr.rel (%p221) target = $region36
      $region35: #{bigram_lm_forward.11} parent=11 // pred_region
        _
      $region36: #{bigram_lm_forward.11} parent=11 // pred_fallthru
        _
    $region12: #{bigram_lm_forward.11} parent=5 // pred_fallthru
      _
    %p224 = scmp.lt.s32.totalorder %s13, 2
    // Predicated region
    $region37: #{bigram_lm_forward.11} parent=5 // pred_check
      %p225 = pneg %p224
    $region38: #{bigram_lm_forward.11} parent=5 // pred_check_branch
      %227 = sbr.rel (%p225) target = $region40
    $region39: #{bigram_lm_forward.11} parent=5 // pred_region
      // Predicated region
      $region41: #{bigram_lm_forward.11} parent=39 // pred_check
        %p228 = pneg %p33
      $region42: #{bigram_lm_forward.11} parent=39 // pred_check_branch
        %230 = sbr.rel (%p228) target = $region44
      $region43: #{bigram_lm_forward.11} parent=39 // pred_region
        %s231 = smul.u32 2, %s13
        %p232 = scmp.lt.s32.totalorder %s231, 3
        %s233 = scalar_select %p232, %s231, 3
        %s234 = smul.addr %s233, 8
        %s235 = scalar_lea.vmem %s0, %s234
        %s236 = smul.u32 2, %s13
      $region44: #{bigram_lm_forward.11} parent=39 // pred_fallthru
        _
    $region40: #{bigram_lm_forward.11} parent=5 // pred_fallthru
      _
    %p237 = scmp.le.s32.totalorder 1, %s13
    %p238 = scmp.lt.s32.totalorder %s13, 3
    %p239 = pnand %p237, %p238
    %p240 = pneg %p239
    // Predicated region
    $region45: #{bigram_lm_forward.11} parent=5 // pred_check
      _
    $region46: #{bigram_lm_forward.11} parent=5 // pred_check_branch
      %242 = sbr.rel (%p239) target = $region48
    $region47: #{bigram_lm_forward.11} parent=5 // pred_region
      %s243 = ssub.s32 %s13, 1
      %s244 = smul.u32 2, %s18
      %p245 = scmp.lt.s32.totalorder %s244, 3
      %s246 = scalar_select %p245, %s244, 3
      %s247 = smul.addr %s246, 8
      %s248 = scalar_lea.vmem %s0, %s247
      %p249 = pneg %p39
      %p250 = pneg %p36
      %p251 = pneg %p60
      %p252 = pneg %p57
      %p253 = pneg %p81
      %p254 = pneg %p78
      %p255 = pneg %p102
      %p256 = pneg %p99
      %p257 = pneg %p123
      %p258 = pneg %p120
      %p259 = pneg %p144
      %p260 = pneg %p141
      %p261 = pneg %p165
      %p262 = pneg %p162
      %p263 = pneg %p191
      %p264 = pneg %p188
      %s265 = smul.u32 2, %s18
      %p266 = scmp.lt.s32.totalorder %s265, 3
      %s267 = scalar_select %p266, %s265, 3
      %s268 = smul.addr %s267, 8
      %s269 = scalar_lea.vmem %s7, %s268
      %s270 = smul.u32 2, %s18
      %p271 = scmp.lt.s32.totalorder %s270, 3
      %s272 = scalar_select %p271, %s270, 3
      %s273 = smul.addr %s272, 8
      %s274 = scalar_lea.vmem %s0, %s273
      %s275 = smul.u32 2, %s18
      %s276 = smul.u32 2, %s18
      %p277 = scmp.lt.s32.totalorder %s276, 3
      %s278 = scalar_select %p277, %s276, 3
      %s279 = smul.addr %s278, 8
      %s280 = scalar_lea.vmem %s7, %s279
      %s281 = smul.u32 2, %s18
      %v283 = vld [vmem:[%s274] sm:$0xff]
      %v284 = vld [vmem:[%s274 + $0x8] sm:$0xff]
      %v285 = vpack.c.bf16 %v284, %v283
      %v286 = vld [vmem:[%s1] sm:$0xff]
      %v287 = vld [vmem:[%s1 + $0x8] sm:$0xff]
      %v288 = vld [vmem:[%s1 + $0x10] sm:$0xff]
      %v289 = vld [vmem:[%s1 + $0x18] sm:$0xff]
      %v290 = vld [vmem:[%s1 + $0x20] sm:$0xff]
      %v291 = vld [vmem:[%s1 + $0x28] sm:$0xff]
      %v292 = vld [vmem:[%s1 + $0x30] sm:$0xff]
      %v293 = vld [vmem:[%s1 + $0x38] sm:$0xff]
      %v294 = vld [vmem:[%s1 + $0x40] sm:$0xff]
      %v295 = vld [vmem:[%s1 + $0x48] sm:$0xff]
      %v296 = vld [vmem:[%s1 + $0x50] sm:$0xff]
      %v297 = vld [vmem:[%s1 + $0x58] sm:$0xff]
      %v298 = vld [vmem:[%s1 + $0x60] sm:$0xff]
      %v299 = vld [vmem:[%s1 + $0x68] sm:$0xff]
      %v300 = vld [vmem:[%s1 + $0x70] sm:$0xff]
      %v301 = vld [vmem:[%s1 + $0x78] sm:$0xff]
      %v302 = vld [vmem:[%s1 + $0x80] sm:$0xff]
      %v303 = vld [vmem:[%s1 + $0x88] sm:$0xff]
      %v304 = vld [vmem:[%s1 + $0x90] sm:$0xff]
      %v305 = vld [vmem:[%s1 + $0x98] sm:$0xff]
      %v306 = vld [vmem:[%s1 + $0xa0] sm:$0xff]
      %v307 = vld [vmem:[%s1 + $0xa8] sm:$0xff]
      %v308 = vld [vmem:[%s1 + $0xb0] sm:$0xff]
      %v309 = vld [vmem:[%s1 + $0xb8] sm:$0xff]
      %v310 = vld [vmem:[%s1 + $0xc0] sm:$0xff]
      %v311 = vld [vmem:[%s1 + $0xc8] sm:$0xff]
      %v312 = vld [vmem:[%s1 + $0xd0] sm:$0xff]
      %v313 = vld [vmem:[%s1 + $0xd8] sm:$0xff]
      %v314 = vld [vmem:[%s1 + $0xe0] sm:$0xff]
      %v315 = vld [vmem:[%s1 + $0xe8] sm:$0xff]
      %v316 = vld [vmem:[%s1 + $0xf0] sm:$0xff]
      %v317 = vld [vmem:[%s1 + $0xf8] sm:$0xff]
      %v318 = vld [vmem:[%s2] sm:$0xf]
      %v320 = vlaneseq
      %v321 = vshrl.u32 %v320, 7
      %v322 = vsub.s32 0, %v321
      %v323 = vrot.slane %v318, %v322
      %v324 = vlaneseq
      %v325 = vshrl.u32 %v324, 7
      %v326 = vsub.s32 1, %v325
      %v327 = vrot.slane %v318, %v326
      %v328 = vlaneseq
      %v329 = vshrl.u32 %v328, 7
      %v330 = vsub.s32 2, %v329
      %v331 = vrot.slane %v318, %v330
      %v332 = vlaneseq
      %v333 = vshrl.u32 %v332, 7
      %v334 = vsub.s32 3, %v333
      %v335 = vrot.slane %v318, %v334
      %v372 = vunpack.c.l.b16 %v286
      %v373 = vunpack.c.h.b16 %v286
      %v374 = vunpack.c.l.b16 %v287
      %v375 = vunpack.c.h.b16 %v287
      %v376 = vunpack.c.l.b16 %v288
      %v377 = vunpack.c.h.b16 %v288
      %v378 = vunpack.c.l.b16 %v289
      %v379 = vunpack.c.h.b16 %v289
      %v380 = vunpack.c.l.b16 %v290
      %v381 = vunpack.c.h.b16 %v290
      %v382 = vunpack.c.l.b16 %v291
      %v383 = vunpack.c.h.b16 %v291
      %v384 = vunpack.c.l.b16 %v292
      %v385 = vunpack.c.h.b16 %v292
      %v386 = vunpack.c.l.b16 %v293
      %v387 = vunpack.c.h.b16 %v293
      %v388 = vunpack.c.l.b16 %v294
      %v389 = vunpack.c.h.b16 %v294
      %v390 = vunpack.c.l.b16 %v295
      %v391 = vunpack.c.h.b16 %v295
      %v392 = vunpack.c.l.b16 %v296
      %v393 = vunpack.c.h.b16 %v296
      %v394 = vunpack.c.l.b16 %v297
      %v395 = vunpack.c.h.b16 %v297
      %v396 = vunpack.c.l.b16 %v298
      %v397 = vunpack.c.h.b16 %v298
      %v398 = vunpack.c.l.b16 %v299
      %v399 = vunpack.c.h.b16 %v299
      %v400 = vunpack.c.l.b16 %v300
      %v401 = vunpack.c.h.b16 %v300
      %v402 = vunpack.c.l.b16 %v301
      %v403 = vunpack.c.h.b16 %v301
      %v404 = vunpack.c.l.b16 %v302
      %v405 = vunpack.c.h.b16 %v302
      %v406 = vunpack.c.l.b16 %v303
      %v407 = vunpack.c.h.b16 %v303
      %v408 = vunpack.c.l.b16 %v304
      %v409 = vunpack.c.h.b16 %v304
      %v410 = vunpack.c.l.b16 %v305
      %v411 = vunpack.c.h.b16 %v305
      %v412 = vunpack.c.l.b16 %v306
      %v413 = vunpack.c.h.b16 %v306
      %v414 = vunpack.c.l.b16 %v307
      %v415 = vunpack.c.h.b16 %v307
      %v416 = vunpack.c.l.b16 %v308
      %v417 = vunpack.c.h.b16 %v308
      %v418 = vunpack.c.l.b16 %v309
      %v419 = vunpack.c.h.b16 %v309
      %v420 = vunpack.c.l.b16 %v310
      %v421 = vunpack.c.h.b16 %v310
      %v422 = vunpack.c.l.b16 %v311
      %v423 = vunpack.c.h.b16 %v311
      %v424 = vunpack.c.l.b16 %v312
      %v425 = vunpack.c.h.b16 %v312
      %v426 = vunpack.c.l.b16 %v313
      %v427 = vunpack.c.h.b16 %v313
      %v428 = vunpack.c.l.b16 %v314
      %v429 = vunpack.c.h.b16 %v314
      %v430 = vunpack.c.l.b16 %v315
      %v431 = vunpack.c.h.b16 %v315
      %v432 = vunpack.c.l.b16 %v316
      %v433 = vunpack.c.h.b16 %v316
      %v434 = vunpack.c.l.b16 %v317
      %v435 = vunpack.c.h.b16 %v317
      %v436 = vpack.c.b16 %v376, %v372
      %v437 = vpack.c.b16 %v377, %v373
      %v438 = vpack.c.b16 %v378, %v374
      %v439 = vpack.c.b16 %v379, %v375
      %v440 = vpack.c.b16 %v384, %v380
      %v441 = vpack.c.b16 %v385, %v381
      %v442 = vpack.c.b16 %v386, %v382
      %v443 = vpack.c.b16 %v387, %v383
      %v444 = vpack.c.b16 %v392, %v388
      %v445 = vpack.c.b16 %v393, %v389
      %v446 = vpack.c.b16 %v394, %v390
      %v447 = vpack.c.b16 %v395, %v391
      %v448 = vpack.c.b16 %v400, %v396
      %v449 = vpack.c.b16 %v401, %v397
      %v450 = vpack.c.b16 %v402, %v398
      %v451 = vpack.c.b16 %v403, %v399
      %v452 = vpack.c.b16 %v408, %v404
      %v453 = vpack.c.b16 %v409, %v405
      %v454 = vpack.c.b16 %v410, %v406
      %v455 = vpack.c.b16 %v411, %v407
      %v456 = vpack.c.b16 %v416, %v412
      %v457 = vpack.c.b16 %v417, %v413
      %v458 = vpack.c.b16 %v418, %v414
      %v459 = vpack.c.b16 %v419, %v415
      %v460 = vpack.c.b16 %v424, %v420
      %v461 = vpack.c.b16 %v425, %v421
      %v462 = vpack.c.b16 %v426, %v422
      %v463 = vpack.c.b16 %v427, %v423
      %v464 = vpack.c.b16 %v432, %v428
      %v465 = vpack.c.b16 %v433, %v429
      %v466 = vpack.c.b16 %v434, %v430
      %v467 = vpack.c.b16 %v435, %v431
      %500 = vmatprep.subr.bf16.mxu0 %v465
      %501 = vmatpush1.bf16.msra.mxu0 %v464
      %502 = vmatprep.subr.bf16.mxu0 %v461
      %503 = vmatpush1.bf16.msra.mxu0 %v460
      %504 = vmatprep.subr.bf16.mxu0 %v457
      %505 = vmatpush1.bf16.msra.mxu0 %v456
      %506 = vmatprep.subr.bf16.mxu0 %v453
      %507 = vmatpush1.bf16.msra.mxu0 %v452
      %508 = vmatprep.subr.bf16.mxu0 %v449
      %509 = vmatpush1.bf16.msra.mxu0 %v448
      %510 = vmatprep.subr.bf16.mxu0 %v445
      %511 = vmatpush1.bf16.msra.mxu0 %v444
      %512 = vmatprep.subr.bf16.mxu0 %v441
      %513 = vmatpush1.bf16.msra.mxu0 %v440
      %514 = vmatprep.subr.bf16.mxu0 %v437
      %515 = vmatpush1.bf16.msra.mxu0 %v436
      %516 = vmatprep.subr.bf16.mxu0 0
      %517 = vmatpush2.bf16.msra.mxu0 0
      %518 = vmatprep.subr.bf16.mxu0 0
      %519 = vmatpush2.bf16.msra.mxu0 0
      %520 = vmatprep.subr.bf16.mxu0 0
      %521 = vmatpush2.bf16.msra.mxu0 0
      %522 = vmatprep.subr.bf16.mxu0 0
      %523 = vmatpush2.bf16.msra.mxu0 0
      %524 = vmatprep.subr.bf16.mxu0 0
      %525 = vmatpush2.bf16.msra.mxu0 0
      %526 = vmatprep.subr.bf16.mxu0 0
      %527 = vmatpush2.bf16.msra.mxu0 0
      %528 = vmatprep.subr.bf16.mxu0 0
      %529 = vmatpush2.bf16.msra.mxu0 0
      %530 = vmatprep.subr.bf16.mxu0 0
      %531 = vmatpush2.bf16.msra.mxu0 0
      %532 = vmatprep.mubr.bf16.mxu0 0
      %533 = vmatmul.mubr.bf16.gmra.mxu0 %v285
      %v534 = vpop.f32.mrf.mxu0
      %v535 = vadd.f32 %v323, %v534
      %v536 = vpop.f32.mrf.mxu0
      %v537 = vadd.f32 %v327, %v536
      %v538 = vpop.f32.mrf.mxu0
      %v539 = vadd.f32 %v323, %v538
      %v540 = vpop.f32.mrf.mxu0
      %v541 = vadd.f32 %v327, %v540
      %542 = vdwg.mxu0
      %543 = vmatprep.subr.bf16.mxu0 %v467
      %544 = vmatpush1.bf16.msra.mxu0 %v466
      %545 = vmatprep.subr.bf16.mxu0 %v463
      %546 = vmatpush1.bf16.msra.mxu0 %v462
      %547 = vmatprep.subr.bf16.mxu0 %v459
      %548 = vmatpush1.bf16.msra.mxu0 %v458
      %549 = vmatprep.subr.bf16.mxu0 %v455
      %550 = vmatpush1.bf16.msra.mxu0 %v454
      %551 = vmatprep.subr.bf16.mxu0 %v451
      %552 = vmatpush1.bf16.msra.mxu0 %v450
      %553 = vmatprep.subr.bf16.mxu0 %v447
      %554 = vmatpush1.bf16.msra.mxu0 %v446
      %555 = vmatprep.subr.bf16.mxu0 %v443
      %556 = vmatpush1.bf16.msra.mxu0 %v442
      %557 = vmatprep.subr.bf16.mxu0 %v439
      %558 = vmatpush1.bf16.msra.mxu0 %v438
      %559 = vmatprep.subr.bf16.mxu0 0
      %560 = vmatpush2.bf16.msra.mxu0 0
      %561 = vmatprep.subr.bf16.mxu0 0
      %562 = vmatpush2.bf16.msra.mxu0 0
      %563 = vmatprep.subr.bf16.mxu0 0
      %564 = vmatpush2.bf16.msra.mxu0 0
      %565 = vmatprep.subr.bf16.mxu0 0
      %566 = vmatpush2.bf16.msra.mxu0 0
      %567 = vmatprep.subr.bf16.mxu0 0
      %568 = vmatpush2.bf16.msra.mxu0 0
      %569 = vmatprep.subr.bf16.mxu0 0
      %570 = vmatpush2.bf16.msra.mxu0 0
      %571 = vmatprep.subr.bf16.mxu0 0
      %572 = vmatpush2.bf16.msra.mxu0 0
      %573 = vmatprep.subr.bf16.mxu0 0
      %574 = vmatpush2.bf16.msra.mxu0 0
      %575 = vmatprep.mubr.bf16.mxu0 0
      %576 = vmatmul.mubr.bf16.gmra.mxu0 %v285
      %v577 = vpop.f32.mrf.mxu0
      %v578 = vadd.f32 %v331, %v577
      %v579 = vpop.f32.mrf.mxu0
      %v580 = vadd.f32 %v335, %v579
      %v581 = vpop.f32.mrf.mxu0
      %v582 = vadd.f32 %v331, %v581
      %v583 = vpop.f32.mrf.mxu0
      %v584 = vadd.f32 %v335, %v583
      %585 = vdwg.mxu0
      %v586 = vmax.f32 %v535, 0.0
      %v587 = vmax.f32 %v537, 0.0
      %v588 = vmax.f32 %v578, 0.0
      %v589 = vmax.f32 %v580, 0.0
      %v590 = vmax.f32 %v539, 0.0
      %v591 = vmax.f32 %v541, 0.0
      %v592 = vmax.f32 %v582, 0.0
      %v593 = vmax.f32 %v584, 0.0
      %v594 = vpack.c.bf16 %v590, %v586
      %v595 = vpack.c.bf16 %v591, %v587
      %v596 = vpack.c.bf16 %v592, %v588
      %v597 = vpack.c.bf16 %v593, %v589
      %v598 = vld [vmem:[%s3] sm:$0xf]
      %v599 = vld [vmem:[%s3 + $0x4] sm:$0xf]
      %v600 = vld [vmem:[%s3 + $0x8] sm:$0xf]
      %v601 = vld [vmem:[%s3 + $0xc] sm:$0xf]
      %v602 = vld [vmem:[%s3 + $0x10] sm:$0xf]
      %v603 = vld [vmem:[%s3 + $0x14] sm:$0xf]
      %v604 = vld [vmem:[%s3 + $0x18] sm:$0xf]
      %v605 = vld [vmem:[%s3 + $0x1c] sm:$0xf]
      %v606 = vld [vmem:[%s3 + $0x20] sm:$0xf]
      %v607 = vld [vmem:[%s3 + $0x24] sm:$0xf]
      %v608 = vld [vmem:[%s3 + $0x28] sm:$0xf]
      %v609 = vld [vmem:[%s3 + $0x2c] sm:$0xf]
      %v610 = vld [vmem:[%s3 + $0x30] sm:$0xf]
      %v611 = vld [vmem:[%s3 + $0x34] sm:$0xf]
      %v612 = vld [vmem:[%s3 + $0x38] sm:$0xf]
      %v613 = vld [vmem:[%s3 + $0x3c] sm:$0xf]
      %v614 = vld [vmem:[%s3 + $0x40] sm:$0xf]
      %v615 = vld [vmem:[%s3 + $0x44] sm:$0xf]
      %v616 = vld [vmem:[%s3 + $0x48] sm:$0xf]
      %v617 = vld [vmem:[%s3 + $0x4c] sm:$0xf]
      %v618 = vld [vmem:[%s3 + $0x50] sm:$0xf]
      %v619 = vld [vmem:[%s3 + $0x54] sm:$0xf]
      %v620 = vld [vmem:[%s3 + $0x58] sm:$0xf]
      %v621 = vld [vmem:[%s3 + $0x5c] sm:$0xf]
      %v622 = vld [vmem:[%s3 + $0x60] sm:$0xf]
      %v623 = vld [vmem:[%s3 + $0x64] sm:$0xf]
      %v624 = vld [vmem:[%s3 + $0x68] sm:$0xf]
      %v625 = vld [vmem:[%s3 + $0x6c] sm:$0xf]
      %v626 = vld [vmem:[%s3 + $0x70] sm:$0xf]
      %v627 = vld [vmem:[%s3 + $0x74] sm:$0xf]
      %v628 = vld [vmem:[%s3 + $0x78] sm:$0xf]
      %v629 = vld [vmem:[%s3 + $0x7c] sm:$0xf]
      %v630 = vld [vmem:[%s3 + $0x80] sm:$0xf]
      %v631 = vld [vmem:[%s3 + $0x84] sm:$0xf]
      %v632 = vld [vmem:[%s3 + $0x88] sm:$0xf]
      %v633 = vld [vmem:[%s3 + $0x8c] sm:$0xf]
      %v634 = vld [vmem:[%s3 + $0x90] sm:$0xf]
      %v635 = vld [vmem:[%s3 + $0x94] sm:$0xf]
      %v636 = vld [vmem:[%s3 + $0x98] sm:$0xf]
      %v637 = vld [vmem:[%s3 + $0x9c] sm:$0xf]
      %v638 = vld [vmem:[%s3 + $0xa0] sm:$0xf]
      %v639 = vld [vmem:[%s3 + $0xa4] sm:$0xf]
      %v640 = vld [vmem:[%s3 + $0xa8] sm:$0xf]
      %v641 = vld [vmem:[%s3 + $0xac] sm:$0xf]
      %v642 = vld [vmem:[%s3 + $0xb0] sm:$0xf]
      %v643 = vld [vmem:[%s3 + $0xb4] sm:$0xf]
      %v644 = vld [vmem:[%s3 + $0xb8] sm:$0xf]
      %v645 = vld [vmem:[%s3 + $0xbc] sm:$0xf]
      %v646 = vld [vmem:[%s3 + $0xc0] sm:$0xf]
      %v647 = vld [vmem:[%s3 + $0xc4] sm:$0xf]
      %v648 = vld [vmem:[%s3 + $0xc8] sm:$0xf]
      %v649 = vld [vmem:[%s3 + $0xcc] sm:$0xf]
      %v650 = vld [vmem:[%s3 + $0xd0] sm:$0xf]
      %v651 = vld [vmem:[%s3 + $0xd4] sm:$0xf]
      %v652 = vld [vmem:[%s3 + $0xd8] sm:$0xf]
      %v653 = vld [vmem:[%s3 + $0xdc] sm:$0xf]
      %v654 = vld [vmem:[%s3 + $0xe0] sm:$0xf]
      %v655 = vld [vmem:[%s3 + $0xe4] sm:$0xf]
      %v656 = vld [vmem:[%s3 + $0xe8] sm:$0xf]
      %v657 = vld [vmem:[%s3 + $0xec] sm:$0xf]
      %v658 = vld [vmem:[%s3 + $0xf0] sm:$0xf]
      %v659 = vld [vmem:[%s3 + $0xf4] sm:$0xf]
      %v660 = vld [vmem:[%s3 + $0xf8] sm:$0xf]
      %v661 = vld [vmem:[%s3 + $0xfc] sm:$0xf]
      %v662 = vld [vmem:[%s4] sm:$0x1]
      %v664 = vlaneseq
      %v665 = vshrl.u32 %v664, 7
      %v666 = vsub.s32 0, %v665
      %v667 = vrot.slane %v662, %v666
      %v733 = vunpack.c.l.b16 %v598
      %v734 = vunpack.c.l.b16 %v599
      %v735 = vunpack.c.l.b16 %v600
      %v736 = vunpack.c.l.b16 %v601
      %v737 = vunpack.c.l.b16 %v602
      %v738 = vunpack.c.l.b16 %v603
      %v739 = vunpack.c.l.b16 %v604
      %v740 = vunpack.c.l.b16 %v605
      %v741 = vunpack.c.l.b16 %v606
      %v742 = vunpack.c.l.b16 %v607
      %v743 = vunpack.c.l.b16 %v608
      %v744 = vunpack.c.l.b16 %v609
      %v745 = vunpack.c.l.b16 %v610
      %v746 = vunpack.c.l.b16 %v611
      %v747 = vunpack.c.l.b16 %v612
      %v748 = vunpack.c.l.b16 %v613
      %v749 = vunpack.c.l.b16 %v614
      %v750 = vunpack.c.l.b16 %v615
      %v751 = vunpack.c.l.b16 %v616
      %v752 = vunpack.c.l.b16 %v617
      %v753 = vunpack.c.l.b16 %v618
      %v754 = vunpack.c.l.b16 %v619
      %v755 = vunpack.c.l.b16 %v620
      %v756 = vunpack.c.l.b16 %v621
      %v757 = vunpack.c.l.b16 %v622
      %v758 = vunpack.c.l.b16 %v623
      %v759 = vunpack.c.l.b16 %v624
      %v760 = vunpack.c.l.b16 %v625
      %v761 = vunpack.c.l.b16 %v626
      %v762 = vunpack.c.l.b16 %v627
      %v763 = vunpack.c.l.b16 %v628
      %v764 = vunpack.c.l.b16 %v629
      %v765 = vunpack.c.l.b16 %v630
      %v766 = vunpack.c.l.b16 %v631
      %v767 = vunpack.c.l.b16 %v632
      %v768 = vunpack.c.l.b16 %v633
      %v769 = vunpack.c.l.b16 %v634
      %v770 = vunpack.c.l.b16 %v635
      %v771 = vunpack.c.l.b16 %v636
      %v772 = vunpack.c.l.b16 %v637
      %v773 = vunpack.c.l.b16 %v638
      %v774 = vunpack.c.l.b16 %v639
      %v775 = vunpack.c.l.b16 %v640
      %v776 = vunpack.c.l.b16 %v641
      %v777 = vunpack.c.l.b16 %v642
      %v778 = vunpack.c.l.b16 %v643
      %v779 = vunpack.c.l.b16 %v644
      %v780 = vunpack.c.l.b16 %v645
      %v781 = vunpack.c.l.b16 %v646
      %v782 = vunpack.c.l.b16 %v647
      %v783 = vunpack.c.l.b16 %v648
      %v784 = vunpack.c.l.b16 %v649
      %v785 = vunpack.c.l.b16 %v650
      %v786 = vunpack.c.l.b16 %v651
      %v787 = vunpack.c.l.b16 %v652
      %v788 = vunpack.c.l.b16 %v653
      %v789 = vunpack.c.l.b16 %v654
      %v790 = vunpack.c.l.b16 %v655
      %v791 = vunpack.c.l.b16 %v656
      %v792 = vunpack.c.l.b16 %v657
      %v793 = vunpack.c.l.b16 %v658
      %v794 = vunpack.c.l.b16 %v659
      %v795 = vunpack.c.l.b16 %v660
      %v796 = vunpack.c.l.b16 %v661
      %v797 = vpack.c.b16 %v734, %v733
      %v798 = vpack.c.b16 %v736, %v735
      %v799 = vpack.c.b16 %v738, %v737
      %v800 = vpack.c.b16 %v740, %v739
      %v801 = vpack.c.b16 %v742, %v741
      %v802 = vpack.c.b16 %v744, %v743
      %v803 = vpack.c.b16 %v746, %v745
      %v804 = vpack.c.b16 %v748, %v747
      %v805 = vpack.c.b16 %v750, %v749
      %v806 = vpack.c.b16 %v752, %v751
      %v807 = vpack.c.b16 %v754, %v753
      %v808 = vpack.c.b16 %v756, %v755
      %v809 = vpack.c.b16 %v758, %v757
      %v810 = vpack.c.b16 %v760, %v759
      %v811 = vpack.c.b16 %v762, %v761
      %v812 = vpack.c.b16 %v764, %v763
      %v813 = vpack.c.b16 %v766, %v765
      %v814 = vpack.c.b16 %v768, %v767
      %v815 = vpack.c.b16 %v770, %v769
      %v816 = vpack.c.b16 %v772, %v771
      %v817 = vpack.c.b16 %v774, %v773
      %v818 = vpack.c.b16 %v776, %v775
      %v819 = vpack.c.b16 %v778, %v777
      %v820 = vpack.c.b16 %v780, %v779
      %v821 = vpack.c.b16 %v782, %v781
      %v822 = vpack.c.b16 %v784, %v783
      %v823 = vpack.c.b16 %v786, %v785
      %v824 = vpack.c.b16 %v788, %v787
      %v825 = vpack.c.b16 %v790, %v789
      %v826 = vpack.c.b16 %v792, %v791
      %v827 = vpack.c.b16 %v794, %v793
      %v828 = vpack.c.b16 %v796, %v795
      %861 = vmatprep.subr.bf16.mxu0 0
      %862 = vmatpush1.bf16.msra.mxu0 %v804
      %863 = vmatprep.subr.bf16.mxu0 0
      %864 = vmatpush1.bf16.msra.mxu0 %v803
      %865 = vmatprep.subr.bf16.mxu0 0
      %866 = vmatpush1.bf16.msra.mxu0 %v802
      %867 = vmatprep.subr.bf16.mxu0 0
      %868 = vmatpush1.bf16.msra.mxu0 %v801
      %869 = vmatprep.subr.bf16.mxu0 0
      %870 = vmatpush1.bf16.msra.mxu0 %v800
      %871 = vmatprep.subr.bf16.mxu0 0
      %872 = vmatpush1.bf16.msra.mxu0 %v799
      %873 = vmatprep.subr.bf16.mxu0 0
      %874 = vmatpush1.bf16.msra.mxu0 %v798
      %875 = vmatprep.subr.bf16.mxu0 0
      %876 = vmatpush1.bf16.msra.mxu0 %v797
      %877 = vmatprep.subr.bf16.mxu0 0
      %878 = vmatpush2.bf16.msra.mxu0 %v812
      %879 = vmatprep.subr.bf16.mxu0 0
      %880 = vmatpush2.bf16.msra.mxu0 %v811
      %881 = vmatprep.subr.bf16.mxu0 0
      %882 = vmatpush2.bf16.msra.mxu0 %v810
      %883 = vmatprep.subr.bf16.mxu0 0
      %884 = vmatpush2.bf16.msra.mxu0 %v809
      %885 = vmatprep.subr.bf16.mxu0 0
      %886 = vmatpush2.bf16.msra.mxu0 %v808
      %887 = vmatprep.subr.bf16.mxu0 0
      %888 = vmatpush2.bf16.msra.mxu0 %v807
      %889 = vmatprep.subr.bf16.mxu0 0
      %890 = vmatpush2.bf16.msra.mxu0 %v806
      %891 = vmatprep.subr.bf16.mxu0 0
      %892 = vmatpush2.bf16.msra.mxu0 %v805
      %893 = vmatprep.mubr.bf16.mxu0 %v595
      %894 = vmatmul.mubr.bf16.gmra.mxu0 %v594
      %v895 = vpop.f32.mrf.mxu0
      %v896 = vadd.f32 %v667, %v895
      %v897 = vpop.f32.mrf.mxu0
      %v898 = vpop.f32.mrf.mxu0
      %v899 = vadd.f32 %v667, %v898
      %v900 = vpop.f32.mrf.mxu0
      %901 = vdwg.mxu0
      %902 = vmatprep.subr.bf16.mxu0 0
      %903 = vmatpush1.bf16.msra.mxu0 %v820
      %904 = vmatprep.subr.bf16.mxu0 0
      %905 = vmatpush1.bf16.msra.mxu0 %v819
      %906 = vmatprep.subr.bf16.mxu0 0
      %907 = vmatpush1.bf16.msra.mxu0 %v818
      %908 = vmatprep.subr.bf16.mxu0 0
      %909 = vmatpush1.bf16.msra.mxu0 %v817
      %910 = vmatprep.subr.bf16.mxu0 0
      %911 = vmatpush1.bf16.msra.mxu0 %v816
      %912 = vmatprep.subr.bf16.mxu0 0
      %913 = vmatpush1.bf16.msra.mxu0 %v815
      %914 = vmatprep.subr.bf16.mxu0 0
      %915 = vmatpush1.bf16.msra.mxu0 %v814
      %916 = vmatprep.subr.bf16.mxu0 0
      %917 = vmatpush1.bf16.msra.mxu0 %v813
      %918 = vmatprep.subr.bf16.mxu0 0
      %919 = vmatpush2.bf16.msra.mxu0 %v828
      %920 = vmatprep.subr.bf16.mxu0 0
      %921 = vmatpush2.bf16.msra.mxu0 %v827
      %922 = vmatprep.subr.bf16.mxu0 0
      %923 = vmatpush2.bf16.msra.mxu0 %v826
      %924 = vmatprep.subr.bf16.mxu0 0
      %925 = vmatpush2.bf16.msra.mxu0 %v825
      %926 = vmatprep.subr.bf16.mxu0 0
      %927 = vmatpush2.bf16.msra.mxu0 %v824
      %928 = vmatprep.subr.bf16.mxu0 0
      %929 = vmatpush2.bf16.msra.mxu0 %v823
      %930 = vmatprep.subr.bf16.mxu0 0
      %931 = vmatpush2.bf16.msra.mxu0 %v822
      %932 = vmatprep.subr.bf16.mxu0 0
      %933 = vmatpush2.bf16.msra.mxu0 %v821
      %934 = vmatprep.mubr.bf16.mxu0 %v597
      %935 = vmatmul.mubr.bf16.gmra.mxu0 %v596
      %v936 = vpop.f32.mrf.mxu0
      %v937 = vadd.f32 %v896, %v936
      %v938 = vpop.f32.mrf.mxu0
      %v939 = vpop.f32.mrf.mxu0
      %v940 = vadd.f32 %v899, %v939
      %v941 = vpop.f32.mrf.mxu0
      %942 = vdwg.mxu0
      %v943 = vadd.f32 %v283, %v937
      %v944 = vadd.f32 %v284, %v940
      %945 = vadd.xlane.f32.xlu0 %v943
      %v946 = vpop.xlane.xlu0 %945
      %947 = vadd.xlane.f32.xlu0 %v944
      %v948 = vpop.xlane.xlu0 %947
      %v949 = vrcp.pop 128.0
      %v950 = vmul.f32 %v946, %v949
      %v951 = vmul.f32 %v948, %v949
      %v952 = vsub.f32 %v943, %v950
      %v953 = vsub.f32 %v944, %v951
      %v954 = vmul.f32 %v952, %v952
      %v955 = vmul.f32 %v953, %v953
      %956 = vadd.xlane.f32.xlu0 %v954
      %v957 = vpop.xlane.xlu0 %956
      %958 = vadd.xlane.f32.xlu0 %v955
      %v959 = vpop.xlane.xlu0 %958
      %v960 = vmul.f32 %v957, %v949
      %v961 = vmul.f32 %v959, %v949
      %v962 = vadd.f32 %v960, 1e-05
      %v963 = vadd.f32 %v961, 1e-05
      %v964 = vrsqrt.pop %v962
      %v965 = vrsqrt.pop %v963
      %v966 = vmul.f32 %v952, %v964
      %v967 = vmul.f32 %v953, %v965
      %v968 = vld [vmem:[%s5] sm:$0x1]
      %v970 = vlaneseq
      %v971 = vshrl.u32 %v970, 7
      %v972 = vsub.s32 0, %v971
      %v973 = vrot.slane %v968, %v972
      %v975 = vmul.f32 %v966, %v973
      %v976 = vmul.f32 %v967, %v973
      %v977 = vld [vmem:[%s6] sm:$0x1]
      %v979 = vlaneseq
      %v980 = vshrl.u32 %v979, 7
      %v981 = vsub.s32 0, %v980
      %v982 = vrot.slane %v977, %v981
      %v984 = vadd.f32 %v975, %v982
      %v985 = vadd.f32 %v976, %v982
      %986 = vst [vmem:[%s280] sm:$0xff] %v984
      %987 = vst [vmem:[%s280 + $0x8] sm:$0xff] %v985
      %s988 = smul.u32 2, %s18
      %p989 = scmp.lt.s32.totalorder %s988, 3
      %s990 = scalar_select %p989, %s988, 3
      %s991 = smul.addr %s990, 8
      %s992 = scalar_lea.vmem %s7, %s991
      // Predicated region
      $region49: #{bigram_lm_forward.11} parent=47 // pred_check
        %p993 = pneg %p188
      $region50: #{bigram_lm_forward.11} parent=47 // pred_check_branch
        %995 = sbr.rel (%p993) target = $region52
      $region51: #{bigram_lm_forward.11} parent=47 // pred_region
        %s996 = smul.u32 2, %s18
      $region52: #{bigram_lm_forward.11} parent=47 // pred_fallthru
        _
    $region48: #{bigram_lm_forward.11} parent=5 // pred_fallthru
      _
    %p997 = scmp.le.s32.totalorder 2, %s13
    // Predicated region
    $region53: #{bigram_lm_forward.11} parent=5 // pred_check
      %p998 = pneg %p997
    $region54: #{bigram_lm_forward.11} parent=5 // pred_check_branch
      %1000 = sbr.rel (%p998) target = $region56
    $region55: #{bigram_lm_forward.11} parent=5 // pred_region
      %s1001 = ssub.s32 %s13, 2
      // Predicated region
      $region57: #{bigram_lm_forward.11} parent=55 // pred_check
        %p1002 = pneg %p194
      $region58: #{bigram_lm_forward.11} parent=55 // pred_check_branch
        %1004 = sbr.rel (%p1002) target = $region60
      $region59: #{bigram_lm_forward.11} parent=55 // pred_region
        %s1005 = smul.u32 2, %s19
        %p1006 = scmp.lt.s32.totalorder %s1005, 3
        %s1007 = scalar_select %p1006, %s1005, 3
        %s1008 = smul.addr %s1007, 8
        %s1009 = scalar_lea.vmem %s7, %s1008
      $region60: #{bigram_lm_forward.11} parent=55 // pred_fallthru
        _
    $region56: #{bigram_lm_forward.11} parent=5 // pred_fallthru
      _
  $region6: #{bigram_lm_forward.11} parent=0 // loop_footer
    %s17 = sadd.s32 1, %s13
  $region7: #{bigram_lm_forward.11} parent=0 // loop_footer_branch
    %12 = sbr.rel target = $region3
  $region8: #{bigram_lm_forward.11} parent=0 // loop_exit
    _

// kernel: bigram_lm_forward.10
$region0: #{bigram_lm_forward.10}
  #allocation0 [shape = 'u32[]', space=smem, size = 0x4, offset = 0x4, fixed_abs, tag = 'smem constant byte address 0x4 - core index']
  #allocation1 [shape = 'u32[144,128]{1,0:T(1,128)}', space=vmem, size = 0x12000, scoped, tag = 'internal scratch']
  %s0 = inlined_call_operand.vmem [shape: f32[2,16,128], index: 0, kind: input, shape index: {}]
  %s1 = inlined_call_operand.vmem [shape: bf16[128,384], index: 1, kind: input, shape index: {}]
  %s2 = inlined_call_operand.vmem [shape: bf16[128,128], index: 2, kind: input, shape index: {}]
  %s3 = inlined_call_operand.vmem [shape: f32[1,128], index: 3, kind: input, shape index: {}]
  %s4 = inlined_call_operand.vmem [shape: f32[1,128], index: 4, kind: input, shape index: {}]
  %s5 = inlined_call_operand.vmem [shape: f32[1,128], index: 5, kind: input, shape index: {}]
  %s6 = inlined_call_operand.vmem [shape: f32[2,16,128], index: 6, kind: output, shape index: {}]
  %s7 = sld [smem:[#allocation0]]
  $region57: #{bigram_lm_forward.10} parent=0
    _
  %s9 = ssub.s32 1, %s7
  %s10 = scalar_select 0, %s9, %s7
  loop: start=0, step=1, limit=4
  $region2: #{bigram_lm_forward.10} parent=0 // loop_pre_header
    _
  $region3: #{bigram_lm_forward.10} parent=0 // loop_header
    %s12 = sphi 0, %s16
    %p13 = scmp.ge.s32.totalorder %s12, 4
    %s22 = sphi 0, %s24
    %s25 = sphi 0, %s22
    %s26 = sphi 0, %s25
    %s42 = sphi 0, %s26
    %s46 = sphi 0, %s46
    %s48 = sphi 0, %s46
    %s49 = sphi 0, %s48
    %s63 = sphi 0, %s49
    %s67 = sphi 0, %s67
    %s69 = sphi 0, %s67
    %s70 = sphi 0, %s69
    %s84 = sphi 0, %s70
    %s88 = sphi 0, %s88
    %s90 = sphi 0, %s88
    %s91 = sphi 0, %s90
    %s105 = sphi 0, %s91
    %s109 = sphi 0, %s109
    %s111 = sphi 0, %s109
    %s112 = sphi 0, %s111
    %s126 = sphi 0, %s112
    %s130 = sphi 0, %s130
    %s132 = sphi 0, %s130
    %s133 = sphi 0, %s132
    %s147 = sphi 0, %s133
    %s153 = sphi 0, %s155
    %s156 = sphi 0, %s153
    %s157 = sphi 0, %s156
    %s173 = sphi 0, %s157
  $region4: #{bigram_lm_forward.10} parent=0 // loop_header_branch
    %15 = sbr.rel (%p13) target = $region8
  $region5: #{bigram_lm_forward.10} parent=0 // loop_body
    %s17 = ssub.s32 %s12, 1
    %s18 = ssub.s32 %s12, 2
    %s19 = sadd.s32 %s12, 1
    %s20 = ssub.s32 %s12, %s19
    %p21 = scmp.eq.s32.totalorder %s20, 0
    %s23 = sadd.s32 %s22, 1
    %s24 = scalar_select %p21, %s22, %s23
    %p27 = pneg %p21
    %p28 = scmp.eq.s32.totalorder %s12, 1
    %p29 = por %p27, %p28
    %p30 = scmp.ne.s32.totalorder %s22, %s25
    %p31 = scmp.eq.s32.totalorder %s12, 0
    %p32 = por %p30, %p31
    %p33 = scmp.ne.s32.totalorder %s22, %s25
    %p34 = scmp.eq.s32.totalorder %s17, 1
    %p35 = por %p33, %p34
    %p36 = scmp.ne.s32.totalorder %s25, %s26
    %p37 = scmp.eq.s32.totalorder %s17, 0
    %p38 = por %p36, %p37
    %p39 = scmp.ne.s32.totalorder %s25, %s26
    %p40 = scmp.eq.s32.totalorder %s18, 1
    %p41 = por %p39, %p40
    %p43 = scmp.ne.s32.totalorder %s26, %s42
    %p44 = scmp.eq.s32.totalorder %s18, 0
    %p45 = por %p43, %p44
    %s47 = sadd.s32 %s46, 1
    %p50 = scmp.eq.s32.totalorder %s12, 1
    %p51 = scmp.ne.s32.totalorder %s46, %s48
    %p52 = scmp.eq.s32.totalorder %s12, 0
    %p53 = por %p51, %p52
    %p54 = scmp.ne.s32.totalorder %s46, %s48
    %p55 = scmp.eq.s32.totalorder %s17, 1
    %p56 = por %p54, %p55
    %p57 = scmp.ne.s32.totalorder %s48, %s49
    %p58 = scmp.eq.s32.totalorder %s17, 0
    %p59 = por %p57, %p58
    %p60 = scmp.ne.s32.totalorder %s48, %s49
    %p61 = scmp.eq.s32.totalorder %s18, 1
    %p62 = por %p60, %p61
    %p64 = scmp.ne.s32.totalorder %s49, %s63
    %p65 = scmp.eq.s32.totalorder %s18, 0
    %p66 = por %p64, %p65
    %s68 = sadd.s32 %s67, 1
    %p71 = scmp.eq.s32.totalorder %s12, 1
    %p72 = scmp.ne.s32.totalorder %s67, %s69
    %p73 = scmp.eq.s32.totalorder %s12, 0
    %p74 = por %p72, %p73
    %p75 = scmp.ne.s32.totalorder %s67, %s69
    %p76 = scmp.eq.s32.totalorder %s17, 1
    %p77 = por %p75, %p76
    %p78 = scmp.ne.s32.totalorder %s69, %s70
    %p79 = scmp.eq.s32.totalorder %s17, 0
    %p80 = por %p78, %p79
    %p81 = scmp.ne.s32.totalorder %s69, %s70
    %p82 = scmp.eq.s32.totalorder %s18, 1
    %p83 = por %p81, %p82
    %p85 = scmp.ne.s32.totalorder %s70, %s84
    %p86 = scmp.eq.s32.totalorder %s18, 0
    %p87 = por %p85, %p86
    %s89 = sadd.s32 %s88, 1
    %p92 = scmp.eq.s32.totalorder %s12, 1
    %p93 = scmp.ne.s32.totalorder %s88, %s90
    %p94 = scmp.eq.s32.totalorder %s12, 0
    %p95 = por %p93, %p94
    %p96 = scmp.ne.s32.totalorder %s88, %s90
    %p97 = scmp.eq.s32.totalorder %s17, 1
    %p98 = por %p96, %p97
    %p99 = scmp.ne.s32.totalorder %s90, %s91
    %p100 = scmp.eq.s32.totalorder %s17, 0
    %p101 = por %p99, %p100
    %p102 = scmp.ne.s32.totalorder %s90, %s91
    %p103 = scmp.eq.s32.totalorder %s18, 1
    %p104 = por %p102, %p103
    %p106 = scmp.ne.s32.totalorder %s91, %s105
    %p107 = scmp.eq.s32.totalorder %s18, 0
    %p108 = por %p106, %p107
    %s110 = sadd.s32 %s109, 1
    %p113 = scmp.eq.s32.totalorder %s12, 1
    %p114 = scmp.ne.s32.totalorder %s109, %s111
    %p115 = scmp.eq.s32.totalorder %s12, 0
    %p116 = por %p114, %p115
    %p117 = scmp.ne.s32.totalorder %s109, %s111
    %p118 = scmp.eq.s32.totalorder %s17, 1
    %p119 = por %p117, %p118
    %p120 = scmp.ne.s32.totalorder %s111, %s112
    %p121 = scmp.eq.s32.totalorder %s17, 0
    %p122 = por %p120, %p121
    %p123 = scmp.ne.s32.totalorder %s111, %s112
    %p124 = scmp.eq.s32.totalorder %s18, 1
    %p125 = por %p123, %p124
    %p127 = scmp.ne.s32.totalorder %s112, %s126
    %p128 = scmp.eq.s32.totalorder %s18, 0
    %p129 = por %p127, %p128
    %s131 = sadd.s32 %s130, 1
    %p134 = scmp.eq.s32.totalorder %s12, 1
    %p135 = scmp.ne.s32.totalorder %s130, %s132
    %p136 = scmp.eq.s32.totalorder %s12, 0
    %p137 = por %p135, %p136
    %p138 = scmp.ne.s32.totalorder %s130, %s132
    %p139 = scmp.eq.s32.totalorder %s17, 1
    %p140 = por %p138, %p139
    %p141 = scmp.ne.s32.totalorder %s132, %s133
    %p142 = scmp.eq.s32.totalorder %s17, 0
    %p143 = por %p141, %p142
    %p144 = scmp.ne.s32.totalorder %s132, %s133
    %p145 = scmp.eq.s32.totalorder %s18, 1
    %p146 = por %p144, %p145
    %p148 = scmp.ne.s32.totalorder %s133, %s147
    %p149 = scmp.eq.s32.totalorder %s18, 0
    %p150 = por %p148, %p149
    %s151 = ssub.s32 %s12, %s19
    %p152 = scmp.eq.s32.totalorder %s151, 0
    %s154 = sadd.s32 %s153, 1
    %s155 = scalar_select %p152, %s153, %s154
    %p158 = pneg %p152
    %p159 = scmp.eq.s32.totalorder %s12, 1
    %p160 = por %p158, %p159
    %p161 = scmp.ne.s32.totalorder %s153, %s156
    %p162 = scmp.eq.s32.totalorder %s12, 0
    %p163 = por %p161, %p162
    %p164 = scmp.ne.s32.totalorder %s153, %s156
    %p165 = scmp.eq.s32.totalorder %s17, 1
    %p166 = por %p164, %p165
    %p167 = scmp.ne.s32.totalorder %s156, %s157
    %p168 = scmp.eq.s32.totalorder %s17, 0
    %p169 = por %p167, %p168
    %p170 = scmp.ne.s32.totalorder %s156, %s157
    %p171 = scmp.eq.s32.totalorder %s18, 1
    %p172 = por %p170, %p171
    %p174 = scmp.ne.s32.totalorder %s157, %s173
    %p175 = scmp.eq.s32.totalorder %s18, 0
    %p176 = por %p174, %p175
    %p177 = scmp.le.s32.totalorder 1, %s12
    %p178 = scmp.lt.s32.totalorder %s12, 3
    %p179 = pnand %p177, %p178
    %p180 = pneg %p179
    // Predicated region
    $region9: #{bigram_lm_forward.10} parent=5 // pred_check
      _
    $region10: #{bigram_lm_forward.10} parent=5 // pred_check_branch
      %182 = sbr.rel (%p179) target = $region12
    $region11: #{bigram_lm_forward.10} parent=5 // pred_region
      %s183 = ssub.s32 %s12, 1
      // Predicated region
      $region13: #{bigram_lm_forward.10} parent=11 // pred_check
        %p184 = pneg %p59
      $region14: #{bigram_lm_forward.10} parent=11 // pred_check_branch
        %186 = sbr.rel (%p184) target = $region16
      $region15: #{bigram_lm_forward.10} parent=11 // pred_region
        _
      $region16: #{bigram_lm_forward.10} parent=11 // pred_fallthru
        _
      // Predicated region
      $region17: #{bigram_lm_forward.10} parent=11 // pred_check
        %p187 = pneg %p80
      $region18: #{bigram_lm_forward.10} parent=11 // pred_check_branch
        %189 = sbr.rel (%p187) target = $region20
      $region19: #{bigram_lm_forward.10} parent=11 // pred_region
        _
      $region20: #{bigram_lm_forward.10} parent=11 // pred_fallthru
        _
      // Predicated region
      $region21: #{bigram_lm_forward.10} parent=11 // pred_check
        %p190 = pneg %p101
      $region22: #{bigram_lm_forward.10} parent=11 // pred_check_branch
        %192 = sbr.rel (%p190) target = $region24
      $region23: #{bigram_lm_forward.10} parent=11 // pred_region
        _
      $region24: #{bigram_lm_forward.10} parent=11 // pred_fallthru
        _
      // Predicated region
      $region25: #{bigram_lm_forward.10} parent=11 // pred_check
        %p193 = pneg %p122
      $region26: #{bigram_lm_forward.10} parent=11 // pred_check_branch
        %195 = sbr.rel (%p193) target = $region28
      $region27: #{bigram_lm_forward.10} parent=11 // pred_region
        _
      $region28: #{bigram_lm_forward.10} parent=11 // pred_fallthru
        _
      // Predicated region
      $region29: #{bigram_lm_forward.10} parent=11 // pred_check
        %p196 = pneg %p143
      $region30: #{bigram_lm_forward.10} parent=11 // pred_check_branch
        %198 = sbr.rel (%p196) target = $region32
      $region31: #{bigram_lm_forward.10} parent=11 // pred_region
        _
      $region32: #{bigram_lm_forward.10} parent=11 // pred_fallthru
        _
    $region12: #{bigram_lm_forward.10} parent=5 // pred_fallthru
      _
    %p199 = scmp.lt.s32.totalorder %s12, 2
    // Predicated region
    $region33: #{bigram_lm_forward.10} parent=5 // pred_check
      %p200 = pneg %p199
    $region34: #{bigram_lm_forward.10} parent=5 // pred_check_branch
      %202 = sbr.rel (%p200) target = $region36
    $region35: #{bigram_lm_forward.10} parent=5 // pred_region
      // Predicated region
      $region37: #{bigram_lm_forward.10} parent=35 // pred_check
        %p203 = pneg %p32
      $region38: #{bigram_lm_forward.10} parent=35 // pred_check_branch
        %205 = sbr.rel (%p203) target = $region40
      $region39: #{bigram_lm_forward.10} parent=35 // pred_region
        %p206 = scmp.lt.s32.totalorder %s12, 1
        %s207 = scalar_select %p206, %s12, 1
        %s208 = smul.addr %s207, 2
        %s209 = smul.addr %s208, 8
        %s210 = scalar_lea.vmem %s0, %s209
      $region40: #{bigram_lm_forward.10} parent=35 // pred_fallthru
        _
    $region36: #{bigram_lm_forward.10} parent=5 // pred_fallthru
      _
    %p211 = scmp.le.s32.totalorder 1, %s12
    %p212 = scmp.lt.s32.totalorder %s12, 3
    %p213 = pnand %p211, %p212
    %p214 = pneg %p213
    // Predicated region
    $region41: #{bigram_lm_forward.10} parent=5 // pred_check
      _
    $region42: #{bigram_lm_forward.10} parent=5 // pred_check_branch
      %216 = sbr.rel (%p213) target = $region44
    $region43: #{bigram_lm_forward.10} parent=5 // pred_region
      %s217 = ssub.s32 %s12, 1
      %p218 = scmp.lt.s32.totalorder %s17, 1
      %s219 = scalar_select %p218, %s17, 1
      %s220 = smul.addr %s219, 2
      %s221 = smul.addr %s220, 8
      %s222 = scalar_lea.vmem %s0, %s221
      %p223 = pneg %p38
      %p224 = pneg %p35
      %p225 = pneg %p59
      %p226 = pneg %p56
      %p227 = pneg %p80
      %p228 = pneg %p77
      %p229 = pneg %p101
      %p230 = pneg %p98
      %p231 = pneg %p122
      %p232 = pneg %p119
      %p233 = pneg %p143
      %p234 = pneg %p140
      %p235 = pneg %p169
      %p236 = pneg %p166
      %p237 = scmp.lt.s32.totalorder %s17, 1
      %s238 = scalar_select %p237, %s17, 1
      %s239 = smul.addr %s238, 2
      %s240 = smul.addr %s239, 8
      %s241 = scalar_lea.vmem %s6, %s240
      %p242 = scmp.lt.s32.totalorder %s17, 1
      %s243 = scalar_select %p242, %s17, 1
      %s244 = smul.addr %s243, 2
      %s245 = smul.addr %s244, 8
      %s246 = scalar_lea.vmem %s0, %s245
      %p247 = scmp.lt.s32.totalorder %s17, 1
      %s248 = scalar_select %p247, %s17, 1
      %s249 = smul.addr %s248, 2
      %s250 = smul.addr %s249, 8
      %s251 = scalar_lea.vmem %s6, %s250
      %v253 = vld [vmem:[%s246] sm:$0xff]
      %v254 = vld [vmem:[%s246 + $0x8] sm:$0xff]
      %v255 = vpack.c.bf16 %v254, %v253
      %v256 = vld [vmem:[%s1] sm:$0xff]
      %v257 = vld [vmem:[%s1 + $0x8] sm:$0xf]
      %v258 = vld [vmem:[%s1 + $0xc] sm:$0xff]
      %v259 = vld [vmem:[%s1 + $0x14] sm:$0xf]
      %v260 = vld [vmem:[%s1 + $0x18] sm:$0xff]
      %v261 = vld [vmem:[%s1 + $0x20] sm:$0xf]
      %v262 = vld [vmem:[%s1 + $0x24] sm:$0xff]
      %v263 = vld [vmem:[%s1 + $0x2c] sm:$0xf]
      %v264 = vld [vmem:[%s1 + $0x30] sm:$0xff]
      %v265 = vld [vmem:[%s1 + $0x38] sm:$0xf]
      %v266 = vld [vmem:[%s1 + $0x3c] sm:$0xff]
      %v267 = vld [vmem:[%s1 + $0x44] sm:$0xf]
      %v268 = vld [vmem:[%s1 + $0x48] sm:$0xff]
      %v269 = vld [vmem:[%s1 + $0x50] sm:$0xf]
      %v270 = vld [vmem:[%s1 + $0x54] sm:$0xff]
      %v271 = vld [vmem:[%s1 + $0x5c] sm:$0xf]
      %v272 = vld [vmem:[%s1 + $0x60] sm:$0xff]
      %v273 = vld [vmem:[%s1 + $0x68] sm:$0xf]
      %v274 = vld [vmem:[%s1 + $0x6c] sm:$0xff]
      %v275 = vld [vmem:[%s1 + $0x74] sm:$0xf]
      %v276 = vld [vmem:[%s1 + $0x78] sm:$0xff]
      %v277 = vld [vmem:[%s1 + $0x80] sm:$0xf]
      %v278 = vld [vmem:[%s1 + $0x84] sm:$0xff]
      %v279 = vld [vmem:[%s1 + $0x8c] sm:$0xf]
      %v280 = vld [vmem:[%s1 + $0x90] sm:$0xff]
      %v281 = vld [vmem:[%s1 + $0x98] sm:$0xf]
      %v282 = vld [vmem:[%s1 + $0x9c] sm:$0xff]
      %v283 = vld [vmem:[%s1 + $0xa4] sm:$0xf]
      %v284 = vld [vmem:[%s1 + $0xa8] sm:$0xff]
      %v285 = vld [vmem:[%s1 + $0xb0] sm:$0xf]
      %v286 = vld [vmem:[%s1 + $0xb4] sm:$0xff]
      %v287 = vld [vmem:[%s1 + $0xbc] sm:$0xf]
      %v320 = vunpack.c.l.b16 %v256
      %v321 = vunpack.c.h.b16 %v256
      %v322 = vunpack.c.l.b16 %v257
      %v323 = vunpack.c.l.b16 %v258
      %v324 = vunpack.c.h.b16 %v258
      %v325 = vunpack.c.l.b16 %v259
      %v326 = vunpack.c.l.b16 %v260
      %v327 = vunpack.c.h.b16 %v260
      %v328 = vunpack.c.l.b16 %v261
      %v329 = vunpack.c.l.b16 %v262
      %v330 = vunpack.c.h.b16 %v262
      %v331 = vunpack.c.l.b16 %v263
      %v332 = vunpack.c.l.b16 %v264
      %v333 = vunpack.c.h.b16 %v264
      %v334 = vunpack.c.l.b16 %v265
      %v335 = vunpack.c.l.b16 %v266
      %v336 = vunpack.c.h.b16 %v266
      %v337 = vunpack.c.l.b16 %v267
      %v338 = vunpack.c.l.b16 %v268
      %v339 = vunpack.c.h.b16 %v268
      %v340 = vunpack.c.l.b16 %v269
      %v341 = vunpack.c.l.b16 %v270
      %v342 = vunpack.c.h.b16 %v270
      %v343 = vunpack.c.l.b16 %v271
      %v344 = vunpack.c.l.b16 %v272
      %v345 = vunpack.c.h.b16 %v272
      %v346 = vunpack.c.l.b16 %v273
      %v347 = vunpack.c.l.b16 %v274
      %v348 = vunpack.c.h.b16 %v274
      %v349 = vunpack.c.l.b16 %v275
      %v350 = vunpack.c.l.b16 %v276
      %v351 = vunpack.c.h.b16 %v276
      %v352 = vunpack.c.l.b16 %v277
      %v353 = vunpack.c.l.b16 %v278
      %v354 = vunpack.c.h.b16 %v278
      %v355 = vunpack.c.l.b16 %v279
      %v356 = vunpack.c.l.b16 %v280
      %v357 = vunpack.c.h.b16 %v280
      %v358 = vunpack.c.l.b16 %v281
      %v359 = vunpack.c.l.b16 %v282
      %v360 = vunpack.c.h.b16 %v282
      %v361 = vunpack.c.l.b16 %v283
      %v362 = vunpack.c.l.b16 %v284
      %v363 = vunpack.c.h.b16 %v284
      %v364 = vunpack.c.l.b16 %v285
      %v365 = vunpack.c.l.b16 %v286
      %v366 = vunpack.c.h.b16 %v286
      %v367 = vunpack.c.l.b16 %v287
      %v368 = vpack.c.b16 %v323, %v320
      %v369 = vpack.c.b16 %v324, %v321
      %v370 = vpack.c.b16 %v325, %v322
      %v371 = vpack.c.b16 %v329, %v326
      %v372 = vpack.c.b16 %v330, %v327
      %v373 = vpack.c.b16 %v331, %v328
      %v374 = vpack.c.b16 %v335, %v332
      %v375 = vpack.c.b16 %v336, %v333
      %v376 = vpack.c.b16 %v337, %v334
      %v377 = vpack.c.b16 %v341, %v338
      %v378 = vpack.c.b16 %v342, %v339
      %v379 = vpack.c.b16 %v343, %v340
      %v380 = vpack.c.b16 %v347, %v344
      %v381 = vpack.c.b16 %v348, %v345
      %v382 = vpack.c.b16 %v349, %v346
      %v383 = vpack.c.b16 %v353, %v350
      %v384 = vpack.c.b16 %v354, %v351
      %v385 = vpack.c.b16 %v355, %v352
      %v386 = vpack.c.b16 %v359, %v356
      %v387 = vpack.c.b16 %v360, %v357
      %v388 = vpack.c.b16 %v361, %v358
      %v389 = vpack.c.b16 %v365, %v362
      %v390 = vpack.c.b16 %v366, %v363
      %v391 = vpack.c.b16 %v367, %v364
      %416 = vmatprep.subr.bf16.mxu0 %v390
      %417 = vmatpush1.bf16.msra.mxu0 %v389
      %418 = vmatprep.subr.bf16.mxu0 %v387
      %419 = vmatpush1.bf16.msra.mxu0 %v386
      %420 = vmatprep.subr.bf16.mxu0 %v384
      %421 = vmatpush1.bf16.msra.mxu0 %v383
      %422 = vmatprep.subr.bf16.mxu0 %v381
      %423 = vmatpush1.bf16.msra.mxu0 %v380
      %424 = vmatprep.subr.bf16.mxu0 %v378
      %425 = vmatpush1.bf16.msra.mxu0 %v377
      %426 = vmatprep.subr.bf16.mxu0 %v375
      %427 = vmatpush1.bf16.msra.mxu0 %v374
      %428 = vmatprep.subr.bf16.mxu0 %v372
      %429 = vmatpush1.bf16.msra.mxu0 %v371
      %430 = vmatprep.subr.bf16.mxu0 %v369
      %431 = vmatpush1.bf16.msra.mxu0 %v368
      %432 = vmatprep.subr.bf16.mxu0 0
      %433 = vmatpush2.bf16.msra.mxu0 0
      %434 = vmatprep.subr.bf16.mxu0 0
      %435 = vmatpush2.bf16.msra.mxu0 0
      %436 = vmatprep.subr.bf16.mxu0 0
      %437 = vmatpush2.bf16.msra.mxu0 0
      %438 = vmatprep.subr.bf16.mxu0 0
      %439 = vmatpush2.bf16.msra.mxu0 0
      %440 = vmatprep.subr.bf16.mxu0 0
      %441 = vmatpush2.bf16.msra.mxu0 0
      %442 = vmatprep.subr.bf16.mxu0 0
      %443 = vmatpush2.bf16.msra.mxu0 0
      %444 = vmatprep.subr.bf16.mxu0 0
      %445 = vmatpush2.bf16.msra.mxu0 0
      %446 = vmatprep.subr.bf16.mxu0 0
      %447 = vmatpush2.bf16.msra.mxu0 0
      %448 = vmatprep.mubr.bf16.mxu0 0
      %449 = vmatmul.mubr.bf16.gmra.mxu0 %v255
      %v450 = vpop.f32.mrf.mxu0
      %v451 = vadd.f32 0.0, %v450
      %v452 = vpop.f32.mrf.mxu0
      %v453 = vadd.f32 0.0, %v452
      %v454 = vpop.f32.mrf.mxu0
      %v455 = vadd.f32 0.0, %v454
      %v456 = vpop.f32.mrf.mxu0
      %v457 = vadd.f32 0.0, %v456
      %458 = vdwg.mxu0
      %459 = vmatprep.subr.bf16.mxu0 0
      %460 = vmatpush1.bf16.msra.mxu0 %v391
      %461 = vmatprep.subr.bf16.mxu0 0
      %462 = vmatpush1.bf16.msra.mxu0 %v388
      %463 = vmatprep.subr.bf16.mxu0 0
      %464 = vmatpush1.bf16.msra.mxu0 %v385
      %465 = vmatprep.subr.bf16.mxu0 0
      %466 = vmatpush1.bf16.msra.mxu0 %v382
      %467 = vmatprep.subr.bf16.mxu0 0
      %468 = vmatpush1.bf16.msra.mxu0 %v379
      %469 = vmatprep.subr.bf16.mxu0 0
      %470 = vmatpush1.bf16.msra.mxu0 %v376
      %471 = vmatprep.subr.bf16.mxu0 0
      %472 = vmatpush1.bf16.msra.mxu0 %v373
      %473 = vmatprep.subr.bf16.mxu0 0
      %474 = vmatpush1.bf16.msra.mxu0 %v370
      %475 = vmatprep.subr.bf16.mxu0 0
      %476 = vmatpush2.bf16.msra.mxu0 0
      %477 = vmatprep.subr.bf16.mxu0 0
      %478 = vmatpush2.bf16.msra.mxu0 0
      %479 = vmatprep.subr.bf16.mxu0 0
      %480 = vmatpush2.bf16.msra.mxu0 0
      %481 = vmatprep.subr.bf16.mxu0 0
      %482 = vmatpush2.bf16.msra.mxu0 0
      %483 = vmatprep.subr.bf16.mxu0 0
      %484 = vmatpush2.bf16.msra.mxu0 0
      %485 = vmatprep.subr.bf16.mxu0 0
      %486 = vmatpush2.bf16.msra.mxu0 0
      %487 = vmatprep.subr.bf16.mxu0 0
      %488 = vmatpush2.bf16.msra.mxu0 0
      %489 = vmatprep.subr.bf16.mxu0 0
      %490 = vmatpush2.bf16.msra.mxu0 0
      %491 = vmatprep.mubr.bf16.mxu0 0
      %492 = vmatmul.mubr.bf16.gmra.mxu0 %v255
      %v493 = vpop.f32.mrf.mxu0
      %v494 = vadd.f32 0.0, %v493
      %v495 = vpop.f32.mrf.mxu0
      %v496 = vpop.f32.mrf.mxu0
      %v497 = vadd.f32 0.0, %v496
      %v498 = vpop.f32.mrf.mxu0
      %499 = vdwg.mxu0
      %v500 = vlaneseq
      %v501 = vshrl.u32 %v500, 7
      %v502 = vadd.s32 %v501, 8
      %v503 = vlaneseq
      %v504 = vand.u32 %v503, 127
      %vm505 = vcmp.le.s32.totalorder %v504, %v501
      %vm506 = vcmp.le.s32.totalorder %v504, %v502
      %v507 = vld [vmem:[%s2] sm:$0xf]
      %v508 = vld [vmem:[%s2 + $0x4] sm:$0xf]
      %v509 = vld [vmem:[%s2 + $0x8] sm:$0xf]
      %v510 = vld [vmem:[%s2 + $0xc] sm:$0xf]
      %v511 = vld [vmem:[%s2 + $0x10] sm:$0xf]
      %v512 = vld [vmem:[%s2 + $0x14] sm:$0xf]
      %v513 = vld [vmem:[%s2 + $0x18] sm:$0xf]
      %v514 = vld [vmem:[%s2 + $0x1c] sm:$0xf]
      %v515 = vld [vmem:[%s2 + $0x20] sm:$0xf]
      %v516 = vld [vmem:[%s2 + $0x24] sm:$0xf]
      %v517 = vld [vmem:[%s2 + $0x28] sm:$0xf]
      %v518 = vld [vmem:[%s2 + $0x2c] sm:$0xf]
      %v519 = vld [vmem:[%s2 + $0x30] sm:$0xf]
      %v520 = vld [vmem:[%s2 + $0x34] sm:$0xf]
      %v521 = vld [vmem:[%s2 + $0x38] sm:$0xf]
      %v522 = vld [vmem:[%s2 + $0x3c] sm:$0xf]
      %v523 = vpack.c.bf16 %v455, %v451
      %v524 = vpack.c.bf16 %v457, %v453
      %vm525 = vcmask 130048
      %v527 = vsel %vm525, %v523, 0
      %v530 = vsel %vm525, %v524, 0
      %532 = vmatprep.subr.bf16.mxu0 0
      %533 = vmatpush1.bf16.xpose.msra.mxu0 0
      %534 = vmatprep.subr.bf16.mxu0 0
      %535 = vmatpush1.bf16.xpose.msra.mxu0 0
      %536 = vmatprep.subr.bf16.mxu0 0
      %537 = vmatpush1.bf16.xpose.msra.mxu0 0
      %538 = vmatprep.subr.bf16.mxu0 0
      %539 = vmatpush1.bf16.xpose.msra.mxu0 0
      %540 = vmatprep.subr.bf16.mxu0 0
      %541 = vmatpush1.bf16.xpose.msra.mxu0 0
      %542 = vmatprep.subr.bf16.mxu0 0
      %543 = vmatpush1.bf16.xpose.msra.mxu0 0
      %544 = vmatprep.subr.bf16.mxu0 0
      %545 = vmatpush1.bf16.xpose.msra.mxu0 0
      %546 = vmatprep.subr.bf16.mxu0 0
      %547 = vmatpush1.bf16.xpose.msra.mxu0 %v530
      %548 = vmatprep.subr.bf16.mxu0 0
      %549 = vmatpush2.bf16.xpose.msra.mxu0 0
      %550 = vmatprep.subr.bf16.mxu0 0
      %551 = vmatpush2.bf16.xpose.msra.mxu0 0
      %552 = vmatprep.subr.bf16.mxu0 0
      %553 = vmatpush2.bf16.xpose.msra.mxu0 0
      %554 = vmatprep.subr.bf16.mxu0 0
      %555 = vmatpush2.bf16.xpose.msra.mxu0 0
      %556 = vmatprep.subr.bf16.mxu0 0
      %557 = vmatpush2.bf16.xpose.msra.mxu0 0
      %558 = vmatprep.subr.bf16.mxu0 0
      %559 = vmatpush2.bf16.xpose.msra.mxu0 0
      %560 = vmatprep.subr.bf16.mxu0 0
      %561 = vmatpush2.bf16.xpose.msra.mxu0 0
      %562 = vmatprep.subr.bf16.mxu0 0
      %563 = vmatpush2.bf16.xpose.msra.mxu0 0
      %564 = vmatprep.mubr.bf16.mxu0 0
      %565 = vmatmul.mubr.bf16.gmra.mxu0 %v527
      %v566 = vpop.f32.mrf.mxu0
      %v567 = vadd.f32 0.0, %v566
      %v568 = vpop.f32.mrf.mxu0
      %v569 = vpop.f32.mrf.mxu0
      %v570 = vadd.f32 0.0, %v569
      %v571 = vpop.f32.mrf.mxu0
      %572 = vdwg.mxu0
      %v573 = vmul.f32 %v567, 0.25
      %v574 = vmul.f32 %v570, 0.25
      %v575 = vsel %vm505, %v573, -inf
      %v576 = vsel %vm506, %v574, -inf
      %v577 = vsel %vm525, %v575, -inf
      %578 = vmax.xlane.f32.xlu0 %v577
      %v579 = vpop.xlane.xlu0 %578
      %v580 = vsel %vm525, %v576, -inf
      %581 = vmax.xlane.f32.xlu0 %v580
      %v582 = vpop.xlane.xlu0 %581
      %v583 = vsub.f32 %v575, %v579
      %v584 = vsub.f32 %v576, %v582
      %v585 = vmul.f32 %v583, 1.442695
      %v586 = vpow.pop %v585
      %v587 = vmul.f32 %v584, 1.442695
      %v588 = vpow.pop %v587
      %v589 = vsel %vm525, %v586, 0.0
      %590 = vadd.xlane.f32.xlu0 %v589
      %v591 = vpop.xlane.xlu0 %590
      %v592 = vsel %vm525, %v588, 0.0
      %593 = vadd.xlane.f32.xlu0 %v592
      %v594 = vpop.xlane.xlu0 %593
      %v595 = vrcp.pop %v591
      %v596 = vrcp.pop %v594
      %v597 = vmul.f32 %v586, %v595
      %v598 = vmul.f32 %v588, %v596
      %v599 = vpack.c.bf16 %v598, %v597
      %v600 = vpack.c.bf16 %v497, %v494
      %v602 = vsel %vm525, %v599, 0
      %604 = vmatprep.subr.bf16.mxu0 0
      %605 = vmatpush1.bf16.msra.mxu0 0
      %606 = vmatprep.subr.bf16.mxu0 0
      %607 = vmatpush1.bf16.msra.mxu0 0
      %608 = vmatprep.subr.bf16.mxu0 0
      %609 = vmatpush1.bf16.msra.mxu0 0
      %610 = vmatprep.subr.bf16.mxu0 0
      %611 = vmatpush1.bf16.msra.mxu0 0
      %612 = vmatprep.subr.bf16.mxu0 0
      %613 = vmatpush1.bf16.msra.mxu0 0
      %614 = vmatprep.subr.bf16.mxu0 0
      %615 = vmatpush1.bf16.msra.mxu0 0
      %616 = vmatprep.subr.bf16.mxu0 0
      %617 = vmatpush1.bf16.msra.mxu0 0
      %618 = vmatprep.subr.bf16.mxu0 0
      %619 = vmatpush1.bf16.msra.mxu0 %v600
      %620 = vmatprep.subr.bf16.mxu0 0
      %621 = vmatpush2.bf16.msra.mxu0 0
      %622 = vmatprep.subr.bf16.mxu0 0
      %623 = vmatpush2.bf16.msra.mxu0 0
      %624 = vmatprep.subr.bf16.mxu0 0
      %625 = vmatpush2.bf16.msra.mxu0 0
      %626 = vmatprep.subr.bf16.mxu0 0
      %627 = vmatpush2.bf16.msra.mxu0 0
      %628 = vmatprep.subr.bf16.mxu0 0
      %629 = vmatpush2.bf16.msra.mxu0 0
      %630 = vmatprep.subr.bf16.mxu0 0
      %631 = vmatpush2.bf16.msra.mxu0 0
      %632 = vmatprep.subr.bf16.mxu0 0
      %633 = vmatpush2.bf16.msra.mxu0 0
      %634 = vmatprep.subr.bf16.mxu0 0
      %635 = vmatpush2.bf16.msra.mxu0 0
      %636 = vmatprep.mubr.bf16.mxu0 0
      %637 = vmatmul.mubr.bf16.gmra.mxu0 %v602
      %v638 = vpop.f32.mrf.mxu0
      %v639 = vadd.f32 0.0, %v638
      %v640 = vpop.f32.mrf.mxu0
      %v641 = vpop.f32.mrf.mxu0
      %v642 = vadd.f32 0.0, %v641
      %v643 = vpop.f32.mrf.mxu0
      %644 = vdwg.mxu0
      %v645 = vpack.c.bf16 %v642, %v639
      %647 = vrot.lane.b32.xlu0 %v523, 112
      %v648 = vpop.permute.xlu0 %647
      %650 = vrot.lane.b32.xlu0 %v524, 112
      %v651 = vpop.permute.xlu0 %650
      %v653 = vsel %vm525, %v648, 0
      %v656 = vsel %vm525, %v651, 0
      %658 = vmatprep.subr.bf16.mxu0 0
      %659 = vmatpush1.bf16.xpose.msra.mxu0 0
      %660 = vmatprep.subr.bf16.mxu0 0
      %661 = vmatpush1.bf16.xpose.msra.mxu0 0
      %662 = vmatprep.subr.bf16.mxu0 0
      %663 = vmatpush1.bf16.xpose.msra.mxu0 0
      %664 = vmatprep.subr.bf16.mxu0 0
      %665 = vmatpush1.bf16.xpose.msra.mxu0 0
      %666 = vmatprep.subr.bf16.mxu0 0
      %667 = vmatpush1.bf16.xpose.msra.mxu0 0
      %668 = vmatprep.subr.bf16.mxu0 0
      %669 = vmatpush1.bf16.xpose.msra.mxu0 0
      %670 = vmatprep.subr.bf16.mxu0 0
      %671 = vmatpush1.bf16.xpose.msra.mxu0 0
      %672 = vmatprep.subr.bf16.mxu0 0
      %673 = vmatpush1.bf16.xpose.msra.mxu0 %v656
      %674 = vmatprep.subr.bf16.mxu0 0
      %675 = vmatpush2.bf16.xpose.msra.mxu0 0
      %676 = vmatprep.subr.bf16.mxu0 0
      %677 = vmatpush2.bf16.xpose.msra.mxu0 0
      %678 = vmatprep.subr.bf16.mxu0 0
      %679 = vmatpush2.bf16.xpose.msra.mxu0 0
      %680 = vmatprep.subr.bf16.mxu0 0
      %681 = vmatpush2.bf16.xpose.msra.mxu0 0
      %682 = vmatprep.subr.bf16.mxu0 0
      %683 = vmatpush2.bf16.xpose.msra.mxu0 0
      %684 = vmatprep.subr.bf16.mxu0 0
      %685 = vmatpush2.bf16.xpose.msra.mxu0 0
      %686 = vmatprep.subr.bf16.mxu0 0
      %687 = vmatpush2.bf16.xpose.msra.mxu0 0
      %688 = vmatprep.subr.bf16.mxu0 0
      %689 = vmatpush2.bf16.xpose.msra.mxu0 0
      %690 = vmatprep.mubr.bf16.mxu0 0
      %691 = vmatmul.mubr.bf16.gmra.mxu0 %v653
      %v692 = vpop.f32.mrf.mxu0
      %v693 = vadd.f32 0.0, %v692
      %v694 = vpop.f32.mrf.mxu0
      %v695 = vpop.f32.mrf.mxu0
      %v696 = vadd.f32 0.0, %v695
      %v697 = vpop.f32.mrf.mxu0
      %698 = vdwg.mxu0
      %v699 = vmul.f32 %v693, 0.25
      %v700 = vmul.f32 %v696, 0.25
      %v701 = vsel %vm505, %v699, -inf
      %v702 = vsel %vm506, %v700, -inf
      %v703 = vsel %vm525, %v701, -inf
      %704 = vmax.xlane.f32.xlu0 %v703
      %v705 = vpop.xlane.xlu0 %704
      %v706 = vsel %vm525, %v702, -inf
      %707 = vmax.xlane.f32.xlu0 %v706
      %v708 = vpop.xlane.xlu0 %707
      %v709 = vsub.f32 %v701, %v705
      %v710 = vsub.f32 %v702, %v708
      %v711 = vmul.f32 %v709, 1.442695
      %v712 = vpow.pop %v711
      %v713 = vmul.f32 %v710, 1.442695
      %v714 = vpow.pop %v713
      %v715 = vsel %vm525, %v712, 0.0
      %716 = vadd.xlane.f32.xlu0 %v715
      %v717 = vpop.xlane.xlu0 %716
      %v718 = vsel %vm525, %v714, 0.0
      %719 = vadd.xlane.f32.xlu0 %v718
      %v720 = vpop.xlane.xlu0 %719
      %v721 = vrcp.pop %v717
      %v722 = vrcp.pop %v720
      %v723 = vmul.f32 %v712, %v721
      %v724 = vmul.f32 %v714, %v722
      %v725 = vpack.c.bf16 %v724, %v723
      %727 = vrot.lane.b32.xlu0 %v600, 112
      %v728 = vpop.permute.xlu0 %727
      %v731 = vsel %vm525, %v725, 0
      %733 = vmatprep.subr.bf16.mxu0 0
      %734 = vmatpush1.bf16.msra.mxu0 0
      %735 = vmatprep.subr.bf16.mxu0 0
      %736 = vmatpush1.bf16.msra.mxu0 0
      %737 = vmatprep.subr.bf16.mxu0 0
      %738 = vmatpush1.bf16.msra.mxu0 0
      %739 = vmatprep.subr.bf16.mxu0 0
      %740 = vmatpush1.bf16.msra.mxu0 0
      %741 = vmatprep.subr.bf16.mxu0 0
      %742 = vmatpush1.bf16.msra.mxu0 0
      %743 = vmatprep.subr.bf16.mxu0 0
      %744 = vmatpush1.bf16.msra.mxu0 0
      %745 = vmatprep.subr.bf16.mxu0 0
      %746 = vmatpush1.bf16.msra.mxu0 0
      %747 = vmatprep.subr.bf16.mxu0 0
      %748 = vmatpush1.bf16.msra.mxu0 %v728
      %749 = vmatprep.subr.bf16.mxu0 0
      %750 = vmatpush2.bf16.msra.mxu0 0
      %751 = vmatprep.subr.bf16.mxu0 0
      %752 = vmatpush2.bf16.msra.mxu0 0
      %753 = vmatprep.subr.bf16.mxu0 0
      %754 = vmatpush2.bf16.msra.mxu0 0
      %755 = vmatprep.subr.bf16.mxu0 0
      %756 = vmatpush2.bf16.msra.mxu0 0
      %757 = vmatprep.subr.bf16.mxu0 0
      %758 = vmatpush2.bf16.msra.mxu0 0
      %759 = vmatprep.subr.bf16.mxu0 0
      %760 = vmatpush2.bf16.msra.mxu0 0
      %761 = vmatprep.subr.bf16.mxu0 0
      %762 = vmatpush2.bf16.msra.mxu0 0
      %763 = vmatprep.subr.bf16.mxu0 0
      %764 = vmatpush2.bf16.msra.mxu0 0
      %765 = vmatprep.mubr.bf16.mxu0 0
      %766 = vmatmul.mubr.bf16.gmra.mxu0 %v731
      %v767 = vpop.f32.mrf.mxu0
      %v768 = vadd.f32 0.0, %v767
      %v769 = vpop.f32.mrf.mxu0
      %v770 = vpop.f32.mrf.mxu0
      %v771 = vadd.f32 0.0, %v770
      %v772 = vpop.f32.mrf.mxu0
      %773 = vdwg.mxu0
      %v774 = vpack.c.bf16 %v771, %v768
      %v777 = vunpack.c.l.b16 %v509
      %v778 = vunpack.c.l.b16 %v510
      %v779 = vpack.c.b16 %v778, %v777
      %v782 = vsel %vm525, %v774, 0
      %784 = vmatprep.subr.bf16.mxu0 0
      %785 = vmatpush1.bf16.msra.mxu0 0
      %786 = vmatprep.subr.bf16.mxu0 0
      %787 = vmatpush1.bf16.msra.mxu0 0
      %788 = vmatprep.subr.bf16.mxu0 0
      %789 = vmatpush1.bf16.msra.mxu0 0
      %790 = vmatprep.subr.bf16.mxu0 0
      %791 = vmatpush1.bf16.msra.mxu0 0
      %792 = vmatprep.subr.bf16.mxu0 0
      %793 = vmatpush1.bf16.msra.mxu0 0
      %794 = vmatprep.subr.bf16.mxu0 0
      %795 = vmatpush1.bf16.msra.mxu0 0
      %796 = vmatprep.subr.bf16.mxu0 0
      %797 = vmatpush1.bf16.msra.mxu0 0
      %798 = vmatprep.subr.bf16.mxu0 0
      %799 = vmatpush1.bf16.msra.mxu0 %v779
      %800 = vmatprep.subr.bf16.mxu0 0
      %801 = vmatpush2.bf16.msra.mxu0 0
      %802 = vmatprep.subr.bf16.mxu0 0
      %803 = vmatpush2.bf16.msra.mxu0 0
      %804 = vmatprep.subr.bf16.mxu0 0
      %805 = vmatpush2.bf16.msra.mxu0 0
      %806 = vmatprep.subr.bf16.mxu0 0
      %807 = vmatpush2.bf16.msra.mxu0 0
      %808 = vmatprep.subr.bf16.mxu0 0
      %809 = vmatpush2.bf16.msra.mxu0 0
      %810 = vmatprep.subr.bf16.mxu0 0
      %811 = vmatpush2.bf16.msra.mxu0 0
      %812 = vmatprep.subr.bf16.mxu0 0
      %813 = vmatpush2.bf16.msra.mxu0 0
      %814 = vmatprep.subr.bf16.mxu0 0
      %815 = vmatpush2.bf16.msra.mxu0 0
      %816 = vmatprep.mubr.bf16.mxu0 0
      %817 = vmatmul.mubr.bf16.gmra.mxu0 %v782
      %v818 = vpop.f32.mrf.mxu0
      %v819 = vadd.f32 0.0, %v818
      %v820 = vpop.f32.mrf.mxu0
      %v821 = vpop.f32.mrf.mxu0
      %v822 = vadd.f32 0.0, %v821
      %v823 = vpop.f32.mrf.mxu0
      %824 = vdwg.mxu0
      %v827 = vunpack.c.l.b16 %v507
      %v828 = vunpack.c.l.b16 %v508
      %v829 = vpack.c.b16 %v828, %v827
      %v832 = vsel %vm525, %v645, 0
      %834 = vmatprep.subr.bf16.mxu0 0
      %835 = vmatpush1.bf16.msra.mxu0 0
      %836 = vmatprep.subr.bf16.mxu0 0
      %837 = vmatpush1.bf16.msra.mxu0 0
      %838 = vmatprep.subr.bf16.mxu0 0
      %839 = vmatpush1.bf16.msra.mxu0 0
      %840 = vmatprep.subr.bf16.mxu0 0
      %841 = vmatpush1.bf16.msra.mxu0 0
      %842 = vmatprep.subr.bf16.mxu0 0
      %843 = vmatpush1.bf16.msra.mxu0 0
      %844 = vmatprep.subr.bf16.mxu0 0
      %845 = vmatpush1.bf16.msra.mxu0 0
      %846 = vmatprep.subr.bf16.mxu0 0
      %847 = vmatpush1.bf16.msra.mxu0 0
      %848 = vmatprep.subr.bf16.mxu0 0
      %849 = vmatpush1.bf16.msra.mxu0 %v829
      %850 = vmatprep.subr.bf16.mxu0 0
      %851 = vmatpush2.bf16.msra.mxu0 0
      %852 = vmatprep.subr.bf16.mxu0 0
      %853 = vmatpush2.bf16.msra.mxu0 0
      %854 = vmatprep.subr.bf16.mxu0 0
      %855 = vmatpush2.bf16.msra.mxu0 0
      %856 = vmatprep.subr.bf16.mxu0 0
      %857 = vmatpush2.bf16.msra.mxu0 0
      %858 = vmatprep.subr.bf16.mxu0 0
      %859 = vmatpush2.bf16.msra.mxu0 0
      %860 = vmatprep.subr.bf16.mxu0 0
      %861 = vmatpush2.bf16.msra.mxu0 0
      %862 = vmatprep.subr.bf16.mxu0 0
      %863 = vmatpush2.bf16.msra.mxu0 0
      %864 = vmatprep.subr.bf16.mxu0 0
      %865 = vmatpush2.bf16.msra.mxu0 0
      %866 = vmatprep.mubr.bf16.mxu0 0
      %867 = vmatmul.mubr.bf16.gmra.mxu0 %v832
      %v868 = vpop.f32.mrf.mxu0
      %v869 = vadd.f32 %v819, %v868
      %v870 = vpop.f32.mrf.mxu0
      %v871 = vpop.f32.mrf.mxu0
      %v872 = vadd.f32 %v822, %v871
      %v873 = vpop.f32.mrf.mxu0
      %874 = vdwg.mxu0
      %875 = vrot.lane.b32.xlu0 %v523, 96
      %v876 = vpop.permute.xlu0 %875
      %877 = vrot.lane.b32.xlu0 %v524, 96
      %v878 = vpop.permute.xlu0 %877
      %v880 = vsel %vm525, %v876, 0
      %v883 = vsel %vm525, %v878, 0
      %885 = vmatprep.subr.bf16.mxu0 0
      %886 = vmatpush1.bf16.xpose.msra.mxu0 0
      %887 = vmatprep.subr.bf16.mxu0 0
      %888 = vmatpush1.bf16.xpose.msra.mxu0 0
      %889 = vmatprep.subr.bf16.mxu0 0
      %890 = vmatpush1.bf16.xpose.msra.mxu0 0
      %891 = vmatprep.subr.bf16.mxu0 0
      %892 = vmatpush1.bf16.xpose.msra.mxu0 0
      %893 = vmatprep.subr.bf16.mxu0 0
      %894 = vmatpush1.bf16.xpose.msra.mxu0 0
      %895 = vmatprep.subr.bf16.mxu0 0
      %896 = vmatpush1.bf16.xpose.msra.mxu0 0
      %897 = vmatprep.subr.bf16.mxu0 0
      %898 = vmatpush1.bf16.xpose.msra.mxu0 0
      %899 = vmatprep.subr.bf16.mxu0 0
      %900 = vmatpush1.bf16.xpose.msra.mxu0 %v883
      %901 = vmatprep.subr.bf16.mxu0 0
      %902 = vmatpush2.bf16.xpose.msra.mxu0 0
      %903 = vmatprep.subr.bf16.mxu0 0
      %904 = vmatpush2.bf16.xpose.msra.mxu0 0
      %905 = vmatprep.subr.bf16.mxu0 0
      %906 = vmatpush2.bf16.xpose.msra.mxu0 0
      %907 = vmatprep.subr.bf16.mxu0 0
      %908 = vmatpush2.bf16.xpose.msra.mxu0 0
      %909 = vmatprep.subr.bf16.mxu0 0
      %910 = vmatpush2.bf16.xpose.msra.mxu0 0
      %911 = vmatprep.subr.bf16.mxu0 0
      %912 = vmatpush2.bf16.xpose.msra.mxu0 0
      %913 = vmatprep.subr.bf16.mxu0 0
      %914 = vmatpush2.bf16.xpose.msra.mxu0 0
      %915 = vmatprep.subr.bf16.mxu0 0
      %916 = vmatpush2.bf16.xpose.msra.mxu0 0
      %917 = vmatprep.mubr.bf16.mxu0 0
      %918 = vmatmul.mubr.bf16.gmra.mxu0 %v880
      %v919 = vpop.f32.mrf.mxu0
      %v920 = vadd.f32 0.0, %v919
      %v921 = vpop.f32.mrf.mxu0
      %v922 = vpop.f32.mrf.mxu0
      %v923 = vadd.f32 0.0, %v922
      %v924 = vpop.f32.mrf.mxu0
      %925 = vdwg.mxu0
      %v926 = vmul.f32 %v920, 0.25
      %v927 = vmul.f32 %v923, 0.25
      %v928 = vsel %vm505, %v926, -inf
      %v929 = vsel %vm506, %v927, -inf
      %v930 = vsel %vm525, %v928, -inf
      %931 = vmax.xlane.f32.xlu0 %v930
      %v932 = vpop.xlane.xlu0 %931
      %v933 = vsel %vm525, %v929, -inf
      %934 = vmax.xlane.f32.xlu0 %v933
      %v935 = vpop.xlane.xlu0 %934
      %v936 = vsub.f32 %v928, %v932
      %v937 = vsub.f32 %v929, %v935
      %v938 = vmul.f32 %v936, 1.442695
      %v939 = vpow.pop %v938
      %v940 = vmul.f32 %v937, 1.442695
      %v941 = vpow.pop %v940
      %v942 = vsel %vm525, %v939, 0.0
      %943 = vadd.xlane.f32.xlu0 %v942
      %v944 = vpop.xlane.xlu0 %943
      %v945 = vsel %vm525, %v941, 0.0
      %946 = vadd.xlane.f32.xlu0 %v945
      %v947 = vpop.xlane.xlu0 %946
      %v948 = vrcp.pop %v944
      %v949 = vrcp.pop %v947
      %v950 = vmul.f32 %v939, %v948
      %v951 = vmul.f32 %v941, %v949
      %v952 = vpack.c.bf16 %v951, %v950
      %953 = vrot.lane.b32.xlu0 %v600, 96
      %v954 = vpop.permute.xlu0 %953
      %v957 = vsel %vm525, %v952, 0
      %959 = vmatprep.subr.bf16.mxu0 0
      %960 = vmatpush1.bf16.msra.mxu0 0
      %961 = vmatprep.subr.bf16.mxu0 0
      %962 = vmatpush1.bf16.msra.mxu0 0
      %963 = vmatprep.subr.bf16.mxu0 0
      %964 = vmatpush1.bf16.msra.mxu0 0
      %965 = vmatprep.subr.bf16.mxu0 0
      %966 = vmatpush1.bf16.msra.mxu0 0
      %967 = vmatprep.subr.bf16.mxu0 0
      %968 = vmatpush1.bf16.msra.mxu0 0
      %969 = vmatprep.subr.bf16.mxu0 0
      %970 = vmatpush1.bf16.msra.mxu0 0
      %971 = vmatprep.subr.bf16.mxu0 0
      %972 = vmatpush1.bf16.msra.mxu0 0
      %973 = vmatprep.subr.bf16.mxu0 0
      %974 = vmatpush1.bf16.msra.mxu0 %v954
      %975 = vmatprep.subr.bf16.mxu0 0
      %976 = vmatpush2.bf16.msra.mxu0 0
      %977 = vmatprep.subr.bf16.mxu0 0
      %978 = vmatpush2.bf16.msra.mxu0 0
      %979 = vmatprep.subr.bf16.mxu0 0
      %980 = vmatpush2.bf16.msra.mxu0 0
      %981 = vmatprep.subr.bf16.mxu0 0
      %982 = vmatpush2.bf16.msra.mxu0 0
      %983 = vmatprep.subr.bf16.mxu0 0
      %984 = vmatpush2.bf16.msra.mxu0 0
      %985 = vmatprep.subr.bf16.mxu0 0
      %986 = vmatpush2.bf16.msra.mxu0 0
      %987 = vmatprep.subr.bf16.mxu0 0
      %988 = vmatpush2.bf16.msra.mxu0 0
      %989 = vmatprep.subr.bf16.mxu0 0
      %990 = vmatpush2.bf16.msra.mxu0 0
      %991 = vmatprep.mubr.bf16.mxu0 0
      %992 = vmatmul.mubr.bf16.gmra.mxu0 %v957
      %v993 = vpop.f32.mrf.mxu0
      %v994 = vadd.f32 0.0, %v993
      %v995 = vpop.f32.mrf.mxu0
      %v996 = vpop.f32.mrf.mxu0
      %v997 = vadd.f32 0.0, %v996
      %v998 = vpop.f32.mrf.mxu0
      %999 = vdwg.mxu0
      %v1000 = vpack.c.bf16 %v997, %v994
      %v1003 = vunpack.c.l.b16 %v511
      %v1004 = vunpack.c.l.b16 %v512
      %v1005 = vpack.c.b16 %v1004, %v1003
      %v1008 = vsel %vm525, %v1000, 0
      %1010 = vmatprep.subr.bf16.mxu0 0
      %1011 = vmatpush1.bf16.msra.mxu0 0
      %1012 = vmatprep.subr.bf16.mxu0 0
      %1013 = vmatpush1.bf16.msra.mxu0 0
      %1014 = vmatprep.subr.bf16.mxu0 0
      %1015 = vmatpush1.bf16.msra.mxu0 0
      %1016 = vmatprep.subr.bf16.mxu0 0
      %1017 = vmatpush1.bf16.msra.mxu0 0
      %1018 = vmatprep.subr.bf16.mxu0 0
      %1019 = vmatpush1.bf16.msra.mxu0 0
      %1020 = vmatprep.subr.bf16.mxu0 0
      %1021 = vmatpush1.bf16.msra.mxu0 0
      %1022 = vmatprep.subr.bf16.mxu0 0
      %1023 = vmatpush1.bf16.msra.mxu0 0
      %1024 = vmatprep.subr.bf16.mxu0 0
      %1025 = vmatpush1.bf16.msra.mxu0 %v1005
      %1026 = vmatprep.subr.bf16.mxu0 0
      %1027 = vmatpush2.bf16.msra.mxu0 0
      %1028 = vmatprep.subr.bf16.mxu0 0
      %1029 = vmatpush2.bf16.msra.mxu0 0
      %1030 = vmatprep.subr.bf16.mxu0 0
      %1031 = vmatpush2.bf16.msra.mxu0 0
      %1032 = vmatprep.subr.bf16.mxu0 0
      %1033 = vmatpush2.bf16.msra.mxu0 0
      %1034 = vmatprep.subr.bf16.mxu0 0
      %1035 = vmatpush2.bf16.msra.mxu0 0
      %1036 = vmatprep.subr.bf16.mxu0 0
      %1037 = vmatpush2.bf16.msra.mxu0 0
      %1038 = vmatprep.subr.bf16.mxu0 0
      %1039 = vmatpush2.bf16.msra.mxu0 0
      %1040 = vmatprep.subr.bf16.mxu0 0
      %1041 = vmatpush2.bf16.msra.mxu0 0
      %1042 = vmatprep.mubr.bf16.mxu0 0
      %1043 = vmatmul.mubr.bf16.gmra.mxu0 %v1008
      %v1044 = vpop.f32.mrf.mxu0
      %v1045 = vadd.f32 0.0, %v1044
      %v1046 = vpop.f32.mrf.mxu0
      %v1047 = vpop.f32.mrf.mxu0
      %v1048 = vadd.f32 0.0, %v1047
      %v1049 = vpop.f32.mrf.mxu0
      %1050 = vdwg.mxu0
      %v1051 = vadd.f32 %v869, %v1045
      %v1052 = vadd.f32 %v872, %v1048
      %1053 = vrot.lane.b32.xlu0 %v523, 80
      %v1054 = vpop.permute.xlu0 %1053
      %1055 = vrot.lane.b32.xlu0 %v524, 80
      %v1056 = vpop.permute.xlu0 %1055
      %v1058 = vsel %vm525, %v1054, 0
      %v1061 = vsel %vm525, %v1056, 0
      %1063 = vmatprep.subr.bf16.mxu0 0
      %1064 = vmatpush1.bf16.xpose.msra.mxu0 0
      %1065 = vmatprep.subr.bf16.mxu0 0
      %1066 = vmatpush1.bf16.xpose.msra.mxu0 0
      %1067 = vmatprep.subr.bf16.mxu0 0
      %1068 = vmatpush1.bf16.xpose.msra.mxu0 0
      %1069 = vmatprep.subr.bf16.mxu0 0
      %1070 = vmatpush1.bf16.xpose.msra.mxu0 0
      %1071 = vmatprep.subr.bf16.mxu0 0
      %1072 = vmatpush1.bf16.xpose.msra.mxu0 0
      %1073 = vmatprep.subr.bf16.mxu0 0
      %1074 = vmatpush1.bf16.xpose.msra.mxu0 0
      %1075 = vmatprep.subr.bf16.mxu0 0
      %1076 = vmatpush1.bf16.xpose.msra.mxu0 0
      %1077 = vmatprep.subr.bf16.mxu0 0
      %1078 = vmatpush1.bf16.xpose.msra.mxu0 %v1061
      %1079 = vmatprep.subr.bf16.mxu0 0
      %1080 = vmatpush2.bf16.xpose.msra.mxu0 0
      %1081 = vmatprep.subr.bf16.mxu0 0
      %1082 = vmatpush2.bf16.xpose.msra.mxu0 0
      %1083 = vmatprep.subr.bf16.mxu0 0
      %1084 = vmatpush2.bf16.xpose.msra.mxu0 0
      %1085 = vmatprep.subr.bf16.mxu0 0
      %1086 = vmatpush2.bf16.xpose.msra.mxu0 0
      %1087 = vmatprep.subr.bf16.mxu0 0
      %1088 = vmatpush2.bf16.xpose.msra.mxu0 0
      %1089 = vmatprep.subr.bf16.mxu0 0
      %1090 = vmatpush2.bf16.xpose.msra.mxu0 0
      %1091 = vmatprep.subr.bf16.mxu0 0
      %1092 = vmatpush2.bf16.xpose.msra.mxu0 0
      %1093 = vmatprep.subr.bf16.mxu0 0
      %1094 = vmatpush2.bf16.xpose.msra.mxu0 0
      %1095 = vmatprep.mubr.bf16.mxu0 0
      %1096 = vmatmul.mubr.bf16.gmra.mxu0 %v1058
      %v1097 = vpop.f32.mrf.mxu0
      %v1098 = vadd.f32 0.0, %v1097
      %v1099 = vpop.f32.mrf.mxu0
      %v1100 = vpop.f32.mrf.mxu0
      %v1101 = vadd.f32 0.0, %v1100
      %v1102 = vpop.f32.mrf.mxu0
      %1103 = vdwg.mxu0
      %v1104 = vmul.f32 %v1098, 0.25
      %v1105 = vmul.f32 %v1101, 0.25
      %v1106 = vsel %vm505, %v1104, -inf
      %v1107 = vsel %vm506, %v1105, -inf
      %v1108 = vsel %vm525, %v1106, -inf
      %1109 = vmax.xlane.f32.xlu0 %v1108
      %v1110 = vpop.xlane.xlu0 %1109
      %v1111 = vsel %vm525, %v1107, -inf
      %1112 = vmax.xlane.f32.xlu0 %v1111
      %v1113 = vpop.xlane.xlu0 %1112
      %v1114 = vsub.f32 %v1106, %v1110
      %v1115 = vsub.f32 %v1107, %v1113
      %v1116 = vmul.f32 %v1114, 1.442695
      %v1117 = vpow.pop %v1116
      %v1118 = vmul.f32 %v1115, 1.442695
      %v1119 = vpow.pop %v1118
      %v1120 = vsel %vm525, %v1117, 0.0
      %1121 = vadd.xlane.f32.xlu0 %v1120
      %v1122 = vpop.xlane.xlu0 %1121
      %v1123 = vsel %vm525, %v1119, 0.0
      %1124 = vadd.xlane.f32.xlu0 %v1123
      %v1125 = vpop.xlane.xlu0 %1124
      %v1126 = vrcp.pop %v1122
      %v1127 = vrcp.pop %v1125
      %v1128 = vmul.f32 %v1117, %v1126
      %v1129 = vmul.f32 %v1119, %v1127
      %v1130 = vpack.c.bf16 %v1129, %v1128
      %1131 = vrot.lane.b32.xlu0 %v600, 80
      %v1132 = vpop.permute.xlu0 %1131
      %v1135 = vsel %vm525, %v1130, 0
      %1137 = vmatprep.subr.bf16.mxu0 0
      %1138 = vmatpush1.bf16.msra.mxu0 0
      %1139 = vmatprep.subr.bf16.mxu0 0
      %1140 = vmatpush1.bf16.msra.mxu0 0
      %1141 = vmatprep.subr.bf16.mxu0 0
      %1142 = vmatpush1.bf16.msra.mxu0 0
      %1143 = vmatprep.subr.bf16.mxu0 0
      %1144 = vmatpush1.bf16.msra.mxu0 0
      %1145 = vmatprep.subr.bf16.mxu0 0
      %1146 = vmatpush1.bf16.msra.mxu0 0
      %1147 = vmatprep.subr.bf16.mxu0 0
      %1148 = vmatpush1.bf16.msra.mxu0 0
      %1149 = vmatprep.subr.bf16.mxu0 0
      %1150 = vmatpush1.bf16.msra.mxu0 0
      %1151 = vmatprep.subr.bf16.mxu0 0
      %1152 = vmatpush1.bf16.msra.mxu0 %v1132
      %1153 = vmatprep.subr.bf16.mxu0 0
      %1154 = vmatpush2.bf16.msra.mxu0 0
      %1155 = vmatprep.subr.bf16.mxu0 0
      %1156 = vmatpush2.bf16.msra.mxu0 0
      %1157 = vmatprep.subr.bf16.mxu0 0
      %1158 = vmatpush2.bf16.msra.mxu0 0
      %1159 = vmatprep.subr.bf16.mxu0 0
      %1160 = vmatpush2.bf16.msra.mxu0 0
      %1161 = vmatprep.subr.bf16.mxu0 0
      %1162 = vmatpush2.bf16.msra.mxu0 0
      %1163 = vmatprep.subr.bf16.mxu0 0
      %1164 = vmatpush2.bf16.msra.mxu0 0
      %1165 = vmatprep.subr.bf16.mxu0 0
      %1166 = vmatpush2.bf16.msra.mxu0 0
      %1167 = vmatprep.subr.bf16.mxu0 0
      %1168 = vmatpush2.bf16.msra.mxu0 0
      %1169 = vmatprep.mubr.bf16.mxu0 0
      %1170 = vmatmul.mubr.bf16.gmra.mxu0 %v1135
      %v1171 = vpop.f32.mrf.mxu0
      %v1172 = vadd.f32 0.0, %v1171
      %v1173 = vpop.f32.mrf.mxu0
      %v1174 = vpop.f32.mrf.mxu0
      %v1175 = vadd.f32 0.0, %v1174
      %v1176 = vpop.f32.mrf.mxu0
      %1177 = vdwg.mxu0
      %v1178 = vpack.c.bf16 %v1175, %v1172
      %v1181 = vunpack.c.l.b16 %v513
      %v1182 = vunpack.c.l.b16 %v514
      %v1183 = vpack.c.b16 %v1182, %v1181
      %v1186 = vsel %vm525, %v1178, 0
      %1188 = vmatprep.subr.bf16.mxu0 0
      %1189 = vmatpush1.bf16.msra.mxu0 0
      %1190 = vmatprep.subr.bf16.mxu0 0
      %1191 = vmatpush1.bf16.msra.mxu0 0
      %1192 = vmatprep.subr.bf16.mxu0 0
      %1193 = vmatpush1.bf16.msra.mxu0 0
      %1194 = vmatprep.subr.bf16.mxu0 0
      %1195 = vmatpush1.bf16.msra.mxu0 0
      %1196 = vmatprep.subr.bf16.mxu0 0
      %1197 = vmatpush1.bf16.msra.mxu0 0
      %1198 = vmatprep.subr.bf16.mxu0 0
      %1199 = vmatpush1.bf16.msra.mxu0 0
      %1200 = vmatprep.subr.bf16.mxu0 0
      %1201 = vmatpush1.bf16.msra.mxu0 0
      %1202 = vmatprep.subr.bf16.mxu0 0
      %1203 = vmatpush1.bf16.msra.mxu0 %v1183
      %1204 = vmatprep.subr.bf16.mxu0 0
      %1205 = vmatpush2.bf16.msra.mxu0 0
      %1206 = vmatprep.subr.bf16.mxu0 0
      %1207 = vmatpush2.bf16.msra.mxu0 0
      %1208 = vmatprep.subr.bf16.mxu0 0
      %1209 = vmatpush2.bf16.msra.mxu0 0
      %1210 = vmatprep.subr.bf16.mxu0 0
      %1211 = vmatpush2.bf16.msra.mxu0 0
      %1212 = vmatprep.subr.bf16.mxu0 0
      %1213 = vmatpush2.bf16.msra.mxu0 0
      %1214 = vmatprep.subr.bf16.mxu0 0
      %1215 = vmatpush2.bf16.msra.mxu0 0
      %1216 = vmatprep.subr.bf16.mxu0 0
      %1217 = vmatpush2.bf16.msra.mxu0 0
      %1218 = vmatprep.subr.bf16.mxu0 0
      %1219 = vmatpush2.bf16.msra.mxu0 0
      %1220 = vmatprep.mubr.bf16.mxu0 0
      %1221 = vmatmul.mubr.bf16.gmra.mxu0 %v1186
      %v1222 = vpop.f32.mrf.mxu0
      %v1223 = vadd.f32 0.0, %v1222
      %v1224 = vpop.f32.mrf.mxu0
      %v1225 = vpop.f32.mrf.mxu0
      %v1226 = vadd.f32 0.0, %v1225
      %v1227 = vpop.f32.mrf.mxu0
      %1228 = vdwg.mxu0
      %v1229 = vadd.f32 %v1051, %v1223
      %v1230 = vadd.f32 %v1052, %v1226
      %1231 = vrot.lane.b32.xlu0 %v523, 64
      %v1232 = vpop.permute.xlu0 %1231
      %1233 = vrot.lane.b32.xlu0 %v524, 64
      %v1234 = vpop.permute.xlu0 %1233
      %v1236 = vsel %vm525, %v1232, 0
      %v1239 = vsel %vm525, %v1234, 0
      %1241 = vmatprep.subr.bf16.mxu0 0
      %1242 = vmatpush1.bf16.xpose.msra.mxu0 0
      %1243 = vmatprep.subr.bf16.mxu0 0
      %1244 = vmatpush1.bf16.xpose.msra.mxu0 0
      %1245 = vmatprep.subr.bf16.mxu0 0
      %1246 = vmatpush1.bf16.xpose.msra.mxu0 0
      %1247 = vmatprep.subr.bf16.mxu0 0
      %1248 = vmatpush1.bf16.xpose.msra.mxu0 0
      %1249 = vmatprep.subr.bf16.mxu0 0
      %1250 = vmatpush1.bf16.xpose.msra.mxu0 0
      %1251 = vmatprep.subr.bf16.mxu0 0
      %1252 = vmatpush1.bf16.xpose.msra.mxu0 0
      %1253 = vmatprep.subr.bf16.mxu0 0
      %1254 = vmatpush1.bf16.xpose.msra.mxu0 0
      %1255 = vmatprep.subr.bf16.mxu0 0
      %1256 = vmatpush1.bf16.xpose.msra.mxu0 %v1239
      %1257 = vmatprep.subr.bf16.mxu0 0
      %1258 = vmatpush2.bf16.xpose.msra.mxu0 0
      %1259 = vmatprep.subr.bf16.mxu0 0
      %1260 = vmatpush2.bf16.xpose.msra.mxu0 0
      %1261 = vmatprep.subr.bf16.mxu0 0
      %1262 = vmatpush2.bf16.xpose.msra.mxu0 0
      %1263 = vmatprep.subr.bf16.mxu0 0
      %1264 = vmatpush2.bf16.xpose.msra.mxu0 0
      %1265 = vmatprep.subr.bf16.mxu0 0
      %1266 = vmatpush2.bf16.xpose.msra.mxu0 0
      %1267 = vmatprep.subr.bf16.mxu0 0
      %1268 = vmatpush2.bf16.xpose.msra.mxu0 0
      %1269 = vmatprep.subr.bf16.mxu0 0
      %1270 = vmatpush2.bf16.xpose.msra.mxu0 0
      %1271 = vmatprep.subr.bf16.mxu0 0
      %1272 = vmatpush2.bf16.xpose.msra.mxu0 0
      %1273 = vmatprep.mubr.bf16.mxu0 0
      %1274 = vmatmul.mubr.bf16.gmra.mxu0 %v1236
      %v1275 = vpop.f32.mrf.mxu0
      %v1276 = vadd.f32 0.0, %v1275
      %v1277 = vpop.f32.mrf.mxu0
      %v1278 = vpop.f32.mrf.mxu0
      %v1279 = vadd.f32 0.0, %v1278
      %v1280 = vpop.f32.mrf.mxu0
      %1281 = vdwg.mxu0
      %v1282 = vmul.f32 %v1276, 0.25
      %v1283 = vmul.f32 %v1279, 0.25
      %v1284 = vsel %vm505, %v1282, -inf
      %v1285 = vsel %vm506, %v1283, -inf
      %v1286 = vsel %vm525, %v1284, -inf
      %1287 = vmax.xlane.f32.xlu0 %v1286
      %v1288 = vpop.xlane.xlu0 %1287
      %v1289 = vsel %vm525, %v1285, -inf
      %1290 = vmax.xlane.f32.xlu0 %v1289
      %v1291 = vpop.xlane.xlu0 %1290
      %v1292 = vsub.f32 %v1284, %v1288
      %v1293 = vsub.f32 %v1285, %v1291
      %v1294 = vmul.f32 %v1292, 1.442695
      %v1295 = vpow.pop %v1294
      %v1296 = vmul.f32 %v1293, 1.442695
      %v1297 = vpow.pop %v1296
      %v1298 = vsel %vm525, %v1295, 0.0
      %1299 = vadd.xlane.f32.xlu0 %v1298
      %v1300 = vpop.xlane.xlu0 %1299
      %v1301 = vsel %vm525, %v1297, 0.0
      %1302 = vadd.xlane.f32.xlu0 %v1301
      %v1303 = vpop.xlane.xlu0 %1302
      %v1304 = vrcp.pop %v1300
      %v1305 = vrcp.pop %v1303
      %v1306 = vmul.f32 %v1295, %v1304
      %v1307 = vmul.f32 %v1297, %v1305
      %v1308 = vpack.c.bf16 %v1307, %v1306
      %1309 = vrot.lane.b32.xlu0 %v600, 64
      %v1310 = vpop.permute.xlu0 %1309
      %v1313 = vsel %vm525, %v1308, 0
      %1315 = vmatprep.subr.bf16.mxu0 0
      %1316 = vmatpush1.bf16.msra.mxu0 0
      %1317 = vmatprep.subr.bf16.mxu0 0
      %1318 = vmatpush1.bf16.msra.mxu0 0
      %1319 = vmatprep.subr.bf16.mxu0 0
      %1320 = vmatpush1.bf16.msra.mxu0 0
      %1321 = vmatprep.subr.bf16.mxu0 0
      %1322 = vmatpush1.bf16.msra.mxu0 0
      %1323 = vmatprep.subr.bf16.mxu0 0
      %1324 = vmatpush1.bf16.msra.mxu0 0
      %1325 = vmatprep.subr.bf16.mxu0 0
      %1326 = vmatpush1.bf16.msra.mxu0 0
      %1327 = vmatprep.subr.bf16.mxu0 0
      %1328 = vmatpush1.bf16.msra.mxu0 0
      %1329 = vmatprep.subr.bf16.mxu0 0
      %1330 = vmatpush1.bf16.msra.mxu0 %v1310
      %1331 = vmatprep.subr.bf16.mxu0 0
      %1332 = vmatpush2.bf16.msra.mxu0 0
      %1333 = vmatprep.subr.bf16.mxu0 0
      %1334 = vmatpush2.bf16.msra.mxu0 0
      %1335 = vmatprep.subr.bf16.mxu0 0
      %1336 = vmatpush2.bf16.msra.mxu0 0
      %1337 = vmatprep.subr.bf16.mxu0 0
      %1338 = vmatpush2.bf16.msra.mxu0 0
      %1339 = vmatprep.subr.bf16.mxu0 0
      %1340 = vmatpush2.bf16.msra.mxu0 0
      %1341 = vmatprep.subr.bf16.mxu0 0
      %1342 = vmatpush2.bf16.msra.mxu0 0
      %1343 = vmatprep.subr.bf16.mxu0 0
      %1344 = vmatpush2.bf16.msra.mxu0 0
      %1345 = vmatprep.subr.bf16.mxu0 0
      %1346 = vmatpush2.bf16.msra.mxu0 0
      %1347 = vmatprep.mubr.bf16.mxu0 0
      %1348 = vmatmul.mubr.bf16.gmra.mxu0 %v1313
      %v1349 = vpop.f32.mrf.mxu0
      %v1350 = vadd.f32 0.0, %v1349
      %v1351 = vpop.f32.mrf.mxu0
      %v1352 = vpop.f32.mrf.mxu0
      %v1353 = vadd.f32 0.0, %v1352
      %v1354 = vpop.f32.mrf.mxu0
      %1355 = vdwg.mxu0
      %v1356 = vpack.c.bf16 %v1353, %v1350
      %v1359 = vunpack.c.l.b16 %v515
      %v1360 = vunpack.c.l.b16 %v516
      %v1361 = vpack.c.b16 %v1360, %v1359
      %v1364 = vsel %vm525, %v1356, 0
      %1366 = vmatprep.subr.bf16.mxu0 0
      %1367 = vmatpush1.bf16.msra.mxu0 0
      %1368 = vmatprep.subr.bf16.mxu0 0
      %1369 = vmatpush1.bf16.msra.mxu0 0
      %1370 = vmatprep.subr.bf16.mxu0 0
      %1371 = vmatpush1.bf16.msra.mxu0 0
      %1372 = vmatprep.subr.bf16.mxu0 0
      %1373 = vmatpush1.bf16.msra.mxu0 0
      %1374 = vmatprep.subr.bf16.mxu0 0
      %1375 = vmatpush1.bf16.msra.mxu0 0
      %1376 = vmatprep.subr.bf16.mxu0 0
      %1377 = vmatpush1.bf16.msra.mxu0 0
      %1378 = vmatprep.subr.bf16.mxu0 0
      %1379 = vmatpush1.bf16.msra.mxu0 0
      %1380 = vmatprep.subr.bf16.mxu0 0
      %1381 = vmatpush1.bf16.msra.mxu0 %v1361
      %1382 = vmatprep.subr.bf16.mxu0 0
      %1383 = vmatpush2.bf16.msra.mxu0 0
      %1384 = vmatprep.subr.bf16.mxu0 0
      %1385 = vmatpush2.bf16.msra.mxu0 0
      %1386 = vmatprep.subr.bf16.mxu0 0
      %1387 = vmatpush2.bf16.msra.mxu0 0
      %1388 = vmatprep.subr.bf16.mxu0 0
      %1389 = vmatpush2.bf16.msra.mxu0 0
      %1390 = vmatprep.subr.bf16.mxu0 0
      %1391 = vmatpush2.bf16.msra.mxu0 0
      %1392 = vmatprep.subr.bf16.mxu0 0
      %1393 = vmatpush2.bf16.msra.mxu0 0
      %1394 = vmatprep.subr.bf16.mxu0 0
      %1395 = vmatpush2.bf16.msra.mxu0 0
      %1396 = vmatprep.subr.bf16.mxu0 0
      %1397 = vmatpush2.bf16.msra.mxu0 0
      %1398 = vmatprep.mubr.bf16.mxu0 0
      %1399 = vmatmul.mubr.bf16.gmra.mxu0 %v1364
      %v1400 = vpop.f32.mrf.mxu0
      %v1401 = vadd.f32 0.0, %v1400
      %v1402 = vpop.f32.mrf.mxu0
      %v1403 = vpop.f32.mrf.mxu0
      %v1404 = vadd.f32 0.0, %v1403
      %v1405 = vpop.f32.mrf.mxu0
      %1406 = vdwg.mxu0
      %v1407 = vadd.f32 %v1229, %v1401
      %v1408 = vadd.f32 %v1230, %v1404
      %1409 = vrot.lane.b32.xlu0 %v523, 48
      %v1410 = vpop.permute.xlu0 %1409
      %1411 = vrot.lane.b32.xlu0 %v524, 48
      %v1412 = vpop.permute.xlu0 %1411
      %v1414 = vsel %vm525, %v1410, 0
      %v1417 = vsel %vm525, %v1412, 0
      %1419 = vmatprep.subr.bf16.mxu0 0
      %1420 = vmatpush1.bf16.xpose.msra.mxu0 0
      %1421 = vmatprep.subr.bf16.mxu0 0
      %1422 = vmatpush1.bf16.xpose.msra.mxu0 0
      %1423 = vmatprep.subr.bf16.mxu0 0
      %1424 = vmatpush1.bf16.xpose.msra.mxu0 0
      %1425 = vmatprep.subr.bf16.mxu0 0
      %1426 = vmatpush1.bf16.xpose.msra.mxu0 0
      %1427 = vmatprep.subr.bf16.mxu0 0
      %1428 = vmatpush1.bf16.xpose.msra.mxu0 0
      %1429 = vmatprep.subr.bf16.mxu0 0
      %1430 = vmatpush1.bf16.xpose.msra.mxu0 0
      %1431 = vmatprep.subr.bf16.mxu0 0
      %1432 = vmatpush1.bf16.xpose.msra.mxu0 0
      %1433 = vmatprep.subr.bf16.mxu0 0
      %1434 = vmatpush1.bf16.xpose.msra.mxu0 %v1417
      %1435 = vmatprep.subr.bf16.mxu0 0
      %1436 = vmatpush2.bf16.xpose.msra.mxu0 0
      %1437 = vmatprep.subr.bf16.mxu0 0
      %1438 = vmatpush2.bf16.xpose.msra.mxu0 0
      %1439 = vmatprep.subr.bf16.mxu0 0
      %1440 = vmatpush2.bf16.xpose.msra.mxu0 0
      %1441 = vmatprep.subr.bf16.mxu0 0
      %1442 = vmatpush2.bf16.xpose.msra.mxu0 0
      %1443 = vmatprep.subr.bf16.mxu0 0
      %1444 = vmatpush2.bf16.xpose.msra.mxu0 0
      %1445 = vmatprep.subr.bf16.mxu0 0
      %1446 = vmatpush2.bf16.xpose.msra.mxu0 0
      %1447 = vmatprep.subr.bf16.mxu0 0
      %1448 = vmatpush2.bf16.xpose.msra.mxu0 0
      %1449 = vmatprep.subr.bf16.mxu0 0
      %1450 = vmatpush2.bf16.xpose.msra.mxu0 0
      %1451 = vmatprep.mubr.bf16.mxu0 0
      %1452 = vmatmul.mubr.bf16.gmra.mxu0 %v1414
      %v1453 = vpop.f32.mrf.mxu0
      %v1454 = vadd.f32 0.0, %v1453
      %v1455 = vpop.f32.mrf.mxu0
      %v1456 = vpop.f32.mrf.mxu0
      %v1457 = vadd.f32 0.0, %v1456
      %v1458 = vpop.f32.mrf.mxu0
      %1459 = vdwg.mxu0
      %v1460 = vmul.f32 %v1454, 0.25
      %v1461 = vmul.f32 %v1457, 0.25
      %v1462 = vsel %vm505, %v1460, -inf
      %v1463 = vsel %vm506, %v1461, -inf
      %v1464 = vsel %vm525, %v1462, -inf
      %1465 = vmax.xlane.f32.xlu0 %v1464
      %v1466 = vpop.xlane.xlu0 %1465
      %v1467 = vsel %vm525, %v1463, -inf
      %1468 = vmax.xlane.f32.xlu0 %v1467
      %v1469 = vpop.xlane.xlu0 %1468
      %v1470 = vsub.f32 %v1462, %v1466
      %v1471 = vsub.f32 %v1463, %v1469
      %v1472 = vmul.f32 %v1470, 1.442695
      %v1473 = vpow.pop %v1472
      %v1474 = vmul.f32 %v1471, 1.442695
      %v1475 = vpow.pop %v1474
      %v1476 = vsel %vm525, %v1473, 0.0
      %1477 = vadd.xlane.f32.xlu0 %v1476
      %v1478 = vpop.xlane.xlu0 %1477
      %v1479 = vsel %vm525, %v1475, 0.0
      %1480 = vadd.xlane.f32.xlu0 %v1479
      %v1481 = vpop.xlane.xlu0 %1480
      %v1482 = vrcp.pop %v1478
      %v1483 = vrcp.pop %v1481
      %v1484 = vmul.f32 %v1473, %v1482
      %v1485 = vmul.f32 %v1475, %v1483
      %v1486 = vpack.c.bf16 %v1485, %v1484
      %1487 = vrot.lane.b32.xlu0 %v600, 48
      %v1488 = vpop.permute.xlu0 %1487
      %v1491 = vsel %vm525, %v1486, 0
      %1493 = vmatprep.subr.bf16.mxu0 0
      %1494 = vmatpush1.bf16.msra.mxu0 0
      %1495 = vmatprep.subr.bf16.mxu0 0
      %1496 = vmatpush1.bf16.msra.mxu0 0
      %1497 = vmatprep.subr.bf16.mxu0 0
      %1498 = vmatpush1.bf16.msra.mxu0 0
      %1499 = vmatprep.subr.bf16.mxu0 0
      %1500 = vmatpush1.bf16.msra.mxu0 0
      %1501 = vmatprep.subr.bf16.mxu0 0
      %1502 = vmatpush1.bf16.msra.mxu0 0
      %1503 = vmatprep.subr.bf16.mxu0 0
      %1504 = vmatpush1.bf16.msra.mxu0 0
      %1505 = vmatprep.subr.bf16.mxu0 0
      %1506 = vmatpush1.bf16.msra.mxu0 0
      %1507 = vmatprep.subr.bf16.mxu0 0
      %1508 = vmatpush1.bf16.msra.mxu0 %v1488
      %1509 = vmatprep.subr.bf16.mxu0 0
      %1510 = vmatpush2.bf16.msra.mxu0 0
      %1511 = vmatprep.subr.bf16.mxu0 0
      %1512 = vmatpush2.bf16.msra.mxu0 0
      %1513 = vmatprep.subr.bf16.mxu0 0
      %1514 = vmatpush2.bf16.msra.mxu0 0
      %1515 = vmatprep.subr.bf16.mxu0 0
      %1516 = vmatpush2.bf16.msra.mxu0 0
      %1517 = vmatprep.subr.bf16.mxu0 0
      %1518 = vmatpush2.bf16.msra.mxu0 0
      %1519 = vmatprep.subr.bf16.mxu0 0
      %1520 = vmatpush2.bf16.msra.mxu0 0
      %1521 = vmatprep.subr.bf16.mxu0 0
      %1522 = vmatpush2.bf16.msra.mxu0 0
      %1523 = vmatprep.subr.bf16.mxu0 0
      %1524 = vmatpush2.bf16.msra.mxu0 0
      %1525 = vmatprep.mubr.bf16.mxu0 0
      %1526 = vmatmul.mubr.bf16.gmra.mxu0 %v1491
      %v1527 = vpop.f32.mrf.mxu0
      %v1528 = vadd.f32 0.0, %v1527
      %v1529 = vpop.f32.mrf.mxu0
      %v1530 = vpop.f32.mrf.mxu0
      %v1531 = vadd.f32 0.0, %v1530
      %v1532 = vpop.f32.mrf.mxu0
      %1533 = vdwg.mxu0
      %v1534 = vpack.c.bf16 %v1531, %v1528
      %v1537 = vunpack.c.l.b16 %v517
      %v1538 = vunpack.c.l.b16 %v518
      %v1539 = vpack.c.b16 %v1538, %v1537
      %v1542 = vsel %vm525, %v1534, 0
      %1544 = vmatprep.subr.bf16.mxu0 0
      %1545 = vmatpush1.bf16.msra.mxu0 0
      %1546 = vmatprep.subr.bf16.mxu0 0
      %1547 = vmatpush1.bf16.msra.mxu0 0
      %1548 = vmatprep.subr.bf16.mxu0 0
      %1549 = vmatpush1.bf16.msra.mxu0 0
      %1550 = vmatprep.subr.bf16.mxu0 0
      %1551 = vmatpush1.bf16.msra.mxu0 0
      %1552 = vmatprep.subr.bf16.mxu0 0
      %1553 = vmatpush1.bf16.msra.mxu0 0
      %1554 = vmatprep.subr.bf16.mxu0 0
      %1555 = vmatpush1.bf16.msra.mxu0 0
      %1556 = vmatprep.subr.bf16.mxu0 0
      %1557 = vmatpush1.bf16.msra.mxu0 0
      %1558 = vmatprep.subr.bf16.mxu0 0
      %1559 = vmatpush1.bf16.msra.mxu0 %v1539
      %1560 = vmatprep.subr.bf16.mxu0 0
      %1561 = vmatpush2.bf16.msra.mxu0 0
      %1562 = vmatprep.subr.bf16.mxu0 0
      %1563 = vmatpush2.bf16.msra.mxu0 0
      %1564 = vmatprep.subr.bf16.mxu0 0
      %1565 = vmatpush2.bf16.msra.mxu0 0
      %1566 = vmatprep.subr.bf16.mxu0 0
      %1567 = vmatpush2.bf16.msra.mxu0 0
      %1568 = vmatprep.subr.bf16.mxu0 0
      %1569 = vmatpush2.bf16.msra.mxu0 0
      %1570 = vmatprep.subr.bf16.mxu0 0
      %1571 = vmatpush2.bf16.msra.mxu0 0
      %1572 = vmatprep.subr.bf16.mxu0 0
      %1573 = vmatpush2.bf16.msra.mxu0 0
      %1574 = vmatprep.subr.bf16.mxu0 0
      %1575 = vmatpush2.bf16.msra.mxu0 0
      %1576 = vmatprep.mubr.bf16.mxu0 0
      %1577 = vmatmul.mubr.bf16.gmra.mxu0 %v1542
      %v1578 = vpop.f32.mrf.mxu0
      %v1579 = vadd.f32 0.0, %v1578
      %v1580 = vpop.f32.mrf.mxu0
      %v1581 = vpop.f32.mrf.mxu0
      %v1582 = vadd.f32 0.0, %v1581
      %v1583 = vpop.f32.mrf.mxu0
      %1584 = vdwg.mxu0
      %v1585 = vadd.f32 %v1407, %v1579
      %v1586 = vadd.f32 %v1408, %v1582
      %1587 = vrot.lane.b32.xlu0 %v523, 32
      %v1588 = vpop.permute.xlu0 %1587
      %1589 = vrot.lane.b32.xlu0 %v524, 32
      %v1590 = vpop.permute.xlu0 %1589
      %v1592 = vsel %vm525, %v1588, 0
      %v1595 = vsel %vm525, %v1590, 0
      %1597 = vmatprep.subr.bf16.mxu0 0
      %1598 = vmatpush1.bf16.xpose.msra.mxu0 0
      %1599 = vmatprep.subr.bf16.mxu0 0
      %1600 = vmatpush1.bf16.xpose.msra.mxu0 0
      %1601 = vmatprep.subr.bf16.mxu0 0
      %1602 = vmatpush1.bf16.xpose.msra.mxu0 0
      %1603 = vmatprep.subr.bf16.mxu0 0
      %1604 = vmatpush1.bf16.xpose.msra.mxu0 0
      %1605 = vmatprep.subr.bf16.mxu0 0
      %1606 = vmatpush1.bf16.xpose.msra.mxu0 0
      %1607 = vmatprep.subr.bf16.mxu0 0
      %1608 = vmatpush1.bf16.xpose.msra.mxu0 0
      %1609 = vmatprep.subr.bf16.mxu0 0
      %1610 = vmatpush1.bf16.xpose.msra.mxu0 0
      %1611 = vmatprep.subr.bf16.mxu0 0
      %1612 = vmatpush1.bf16.xpose.msra.mxu0 %v1595
      %1613 = vmatprep.subr.bf16.mxu0 0
      %1614 = vmatpush2.bf16.xpose.msra.mxu0 0
      %1615 = vmatprep.subr.bf16.mxu0 0
      %1616 = vmatpush2.bf16.xpose.msra.mxu0 0
      %1617 = vmatprep.subr.bf16.mxu0 0
      %1618 = vmatpush2.bf16.xpose.msra.mxu0 0
      %1619 = vmatprep.subr.bf16.mxu0 0
      %1620 = vmatpush2.bf16.xpose.msra.mxu0 0
      %1621 = vmatprep.subr.bf16.mxu0 0
      %1622 = vmatpush2.bf16.xpose.msra.mxu0 0
      %1623 = vmatprep.subr.bf16.mxu0 0
      %1624 = vmatpush2.bf16.xpose.msra.mxu0 0
      %1625 = vmatprep.subr.bf16.mxu0 0
      %1626 = vmatpush2.bf16.xpose.msra.mxu0 0
      %1627 = vmatprep.subr.bf16.mxu0 0
      %1628 = vmatpush2.bf16.xpose.msra.mxu0 0
      %1629 = vmatprep.mubr.bf16.mxu0 0
      %1630 = vmatmul.mubr.bf16.gmra.mxu0 %v1592
      %v1631 = vpop.f32.mrf.mxu0
      %v1632 = vadd.f32 0.0, %v1631
      %v1633 = vpop.f32.mrf.mxu0
      %v1634 = vpop.f32.mrf.mxu0
      %v1635 = vadd.f32 0.0, %v1634
      %v1636 = vpop.f32.mrf.mxu0
      %1637 = vdwg.mxu0
      %v1638 = vmul.f32 %v1632, 0.25
      %v1639 = vmul.f32 %v1635, 0.25
      %v1640 = vsel %vm505, %v1638, -inf
      %v1641 = vsel %vm506, %v1639, -inf
      %v1642 = vsel %vm525, %v1640, -inf
      %1643 = vmax.xlane.f32.xlu0 %v1642
      %v1644 = vpop.xlane.xlu0 %1643
      %v1645 = vsel %vm525, %v1641, -inf
      %1646 = vmax.xlane.f32.xlu0 %v1645
      %v1647 = vpop.xlane.xlu0 %1646
      %v1648 = vsub.f32 %v1640, %v1644
      %v1649 = vsub.f32 %v1641, %v1647
      %v1650 = vmul.f32 %v1648, 1.442695
      %v1651 = vpow.pop %v1650
      %v1652 = vmul.f32 %v1649, 1.442695
      %v1653 = vpow.pop %v1652
      %v1654 = vsel %vm525, %v1651, 0.0
      %1655 = vadd.xlane.f32.xlu0 %v1654
      %v1656 = vpop.xlane.xlu0 %1655
      %v1657 = vsel %vm525, %v1653, 0.0
      %1658 = vadd.xlane.f32.xlu0 %v1657
      %v1659 = vpop.xlane.xlu0 %1658
      %v1660 = vrcp.pop %v1656
      %v1661 = vrcp.pop %v1659
      %v1662 = vmul.f32 %v1651, %v1660
      %v1663 = vmul.f32 %v1653, %v1661
      %v1664 = vpack.c.bf16 %v1663, %v1662
      %1665 = vrot.lane.b32.xlu0 %v600, 32
      %v1666 = vpop.permute.xlu0 %1665
      %v1669 = vsel %vm525, %v1664, 0
      %1671 = vmatprep.subr.bf16.mxu0 0
      %1672 = vmatpush1.bf16.msra.mxu0 0
      %1673 = vmatprep.subr.bf16.mxu0 0
      %1674 = vmatpush1.bf16.msra.mxu0 0
      %1675 = vmatprep.subr.bf16.mxu0 0
      %1676 = vmatpush1.bf16.msra.mxu0 0
      %1677 = vmatprep.subr.bf16.mxu0 0
      %1678 = vmatpush1.bf16.msra.mxu0 0
      %1679 = vmatprep.subr.bf16.mxu0 0
      %1680 = vmatpush1.bf16.msra.mxu0 0
      %1681 = vmatprep.subr.bf16.mxu0 0
      %1682 = vmatpush1.bf16.msra.mxu0 0
      %1683 = vmatprep.subr.bf16.mxu0 0
      %1684 = vmatpush1.bf16.msra.mxu0 0
      %1685 = vmatprep.subr.bf16.mxu0 0
      %1686 = vmatpush1.bf16.msra.mxu0 %v1666
      %1687 = vmatprep.subr.bf16.mxu0 0
      %1688 = vmatpush2.bf16.msra.mxu0 0
      %1689 = vmatprep.subr.bf16.mxu0 0
      %1690 = vmatpush2.bf16.msra.mxu0 0
      %1691 = vmatprep.subr.bf16.mxu0 0
      %1692 = vmatpush2.bf16.msra.mxu0 0
      %1693 = vmatprep.subr.bf16.mxu0 0
      %1694 = vmatpush2.bf16.msra.mxu0 0
      %1695 = vmatprep.subr.bf16.mxu0 0
      %1696 = vmatpush2.bf16.msra.mxu0 0
      %1697 = vmatprep.subr.bf16.mxu0 0
      %1698 = vmatpush2.bf16.msra.mxu0 0
      %1699 = vmatprep.subr.bf16.mxu0 0
      %1700 = vmatpush2.bf16.msra.mxu0 0
      %1701 = vmatprep.subr.bf16.mxu0 0
      %1702 = vmatpush2.bf16.msra.mxu0 0
      %1703 = vmatprep.mubr.bf16.mxu0 0
      %1704 = vmatmul.mubr.bf16.gmra.mxu0 %v1669
      %v1705 = vpop.f32.mrf.mxu0
      %v1706 = vadd.f32 0.0, %v1705
      %v1707 = vpop.f32.mrf.mxu0
      %v1708 = vpop.f32.mrf.mxu0
      %v1709 = vadd.f32 0.0, %v1708
      %v1710 = vpop.f32.mrf.mxu0
      %1711 = vdwg.mxu0
      %v1712 = vpack.c.bf16 %v1709, %v1706
      %v1715 = vunpack.c.l.b16 %v519
      %v1716 = vunpack.c.l.b16 %v520
      %v1717 = vpack.c.b16 %v1716, %v1715
      %v1720 = vsel %vm525, %v1712, 0
      %1722 = vmatprep.subr.bf16.mxu0 0
      %1723 = vmatpush1.bf16.msra.mxu0 0
      %1724 = vmatprep.subr.bf16.mxu0 0
      %1725 = vmatpush1.bf16.msra.mxu0 0
      %1726 = vmatprep.subr.bf16.mxu0 0
      %1727 = vmatpush1.bf16.msra.mxu0 0
      %1728 = vmatprep.subr.bf16.mxu0 0
      %1729 = vmatpush1.bf16.msra.mxu0 0
      %1730 = vmatprep.subr.bf16.mxu0 0
      %1731 = vmatpush1.bf16.msra.mxu0 0
      %1732 = vmatprep.subr.bf16.mxu0 0
      %1733 = vmatpush1.bf16.msra.mxu0 0
      %1734 = vmatprep.subr.bf16.mxu0 0
      %1735 = vmatpush1.bf16.msra.mxu0 0
      %1736 = vmatprep.subr.bf16.mxu0 0
      %1737 = vmatpush1.bf16.msra.mxu0 %v1717
      %1738 = vmatprep.subr.bf16.mxu0 0
      %1739 = vmatpush2.bf16.msra.mxu0 0
      %1740 = vmatprep.subr.bf16.mxu0 0
      %1741 = vmatpush2.bf16.msra.mxu0 0
      %1742 = vmatprep.subr.bf16.mxu0 0
      %1743 = vmatpush2.bf16.msra.mxu0 0
      %1744 = vmatprep.subr.bf16.mxu0 0
      %1745 = vmatpush2.bf16.msra.mxu0 0
      %1746 = vmatprep.subr.bf16.mxu0 0
      %1747 = vmatpush2.bf16.msra.mxu0 0
      %1748 = vmatprep.subr.bf16.mxu0 0
      %1749 = vmatpush2.bf16.msra.mxu0 0
      %1750 = vmatprep.subr.bf16.mxu0 0
      %1751 = vmatpush2.bf16.msra.mxu0 0
      %1752 = vmatprep.subr.bf16.mxu0 0
      %1753 = vmatpush2.bf16.msra.mxu0 0
      %1754 = vmatprep.mubr.bf16.mxu0 0
      %1755 = vmatmul.mubr.bf16.gmra.mxu0 %v1720
      %v1756 = vpop.f32.mrf.mxu0
      %v1757 = vadd.f32 0.0, %v1756
      %v1758 = vpop.f32.mrf.mxu0
      %v1759 = vpop.f32.mrf.mxu0
      %v1760 = vadd.f32 0.0, %v1759
      %v1761 = vpop.f32.mrf.mxu0
      %1762 = vdwg.mxu0
      %v1763 = vadd.f32 %v1585, %v1757
      %v1764 = vadd.f32 %v1586, %v1760
      %1765 = vrot.lane.b32.xlu0 %v523, 16
      %v1766 = vpop.permute.xlu0 %1765
      %1767 = vrot.lane.b32.xlu0 %v524, 16
      %v1768 = vpop.permute.xlu0 %1767
      %v1770 = vsel %vm525, %v1766, 0
      %v1773 = vsel %vm525, %v1768, 0
      %1775 = vmatprep.subr.bf16.mxu0 0
      %1776 = vmatpush1.bf16.xpose.msra.mxu0 0
      %1777 = vmatprep.subr.bf16.mxu0 0
      %1778 = vmatpush1.bf16.xpose.msra.mxu0 0
      %1779 = vmatprep.subr.bf16.mxu0 0
      %1780 = vmatpush1.bf16.xpose.msra.mxu0 0
      %1781 = vmatprep.subr.bf16.mxu0 0
      %1782 = vmatpush1.bf16.xpose.msra.mxu0 0
      %1783 = vmatprep.subr.bf16.mxu0 0
      %1784 = vmatpush1.bf16.xpose.msra.mxu0 0
      %1785 = vmatprep.subr.bf16.mxu0 0
      %1786 = vmatpush1.bf16.xpose.msra.mxu0 0
      %1787 = vmatprep.subr.bf16.mxu0 0
      %1788 = vmatpush1.bf16.xpose.msra.mxu0 0
      %1789 = vmatprep.subr.bf16.mxu0 0
      %1790 = vmatpush1.bf16.xpose.msra.mxu0 %v1773
      %1791 = vmatprep.subr.bf16.mxu0 0
      %1792 = vmatpush2.bf16.xpose.msra.mxu0 0
      %1793 = vmatprep.subr.bf16.mxu0 0
      %1794 = vmatpush2.bf16.xpose.msra.mxu0 0
      %1795 = vmatprep.subr.bf16.mxu0 0
      %1796 = vmatpush2.bf16.xpose.msra.mxu0 0
      %1797 = vmatprep.subr.bf16.mxu0 0
      %1798 = vmatpush2.bf16.xpose.msra.mxu0 0
      %1799 = vmatprep.subr.bf16.mxu0 0
      %1800 = vmatpush2.bf16.xpose.msra.mxu0 0
      %1801 = vmatprep.subr.bf16.mxu0 0
      %1802 = vmatpush2.bf16.xpose.msra.mxu0 0
      %1803 = vmatprep.subr.bf16.mxu0 0
      %1804 = vmatpush2.bf16.xpose.msra.mxu0 0
      %1805 = vmatprep.subr.bf16.mxu0 0
      %1806 = vmatpush2.bf16.xpose.msra.mxu0 0
      %1807 = vmatprep.mubr.bf16.mxu0 0
      %1808 = vmatmul.mubr.bf16.gmra.mxu0 %v1770
      %v1809 = vpop.f32.mrf.mxu0
      %v1810 = vadd.f32 0.0, %v1809
      %v1811 = vpop.f32.mrf.mxu0
      %v1812 = vpop.f32.mrf.mxu0
      %v1813 = vadd.f32 0.0, %v1812
      %v1814 = vpop.f32.mrf.mxu0
      %1815 = vdwg.mxu0
      %v1816 = vmul.f32 %v1810, 0.25
      %v1817 = vmul.f32 %v1813, 0.25
      %v1818 = vsel %vm505, %v1816, -inf
      %v1819 = vsel %vm506, %v1817, -inf
      %v1820 = vsel %vm525, %v1818, -inf
      %1821 = vmax.xlane.f32.xlu0 %v1820
      %v1822 = vpop.xlane.xlu0 %1821
      %v1823 = vsel %vm525, %v1819, -inf
      %1824 = vmax.xlane.f32.xlu0 %v1823
      %v1825 = vpop.xlane.xlu0 %1824
      %v1826 = vsub.f32 %v1818, %v1822
      %v1827 = vsub.f32 %v1819, %v1825
      %v1828 = vmul.f32 %v1826, 1.442695
      %v1829 = vpow.pop %v1828
      %v1830 = vmul.f32 %v1827, 1.442695
      %v1831 = vpow.pop %v1830
      %v1832 = vsel %vm525, %v1829, 0.0
      %1833 = vadd.xlane.f32.xlu0 %v1832
      %v1834 = vpop.xlane.xlu0 %1833
      %v1835 = vsel %vm525, %v1831, 0.0
      %1836 = vadd.xlane.f32.xlu0 %v1835
      %v1837 = vpop.xlane.xlu0 %1836
      %v1838 = vrcp.pop %v1834
      %v1839 = vrcp.pop %v1837
      %v1840 = vmul.f32 %v1829, %v1838
      %v1841 = vmul.f32 %v1831, %v1839
      %v1842 = vpack.c.bf16 %v1841, %v1840
      %1843 = vrot.lane.b32.xlu0 %v600, 16
      %v1844 = vpop.permute.xlu0 %1843
      %v1847 = vsel %vm525, %v1842, 0
      %1849 = vmatprep.subr.bf16.mxu0 0
      %1850 = vmatpush1.bf16.msra.mxu0 0
      %1851 = vmatprep.subr.bf16.mxu0 0
      %1852 = vmatpush1.bf16.msra.mxu0 0
      %1853 = vmatprep.subr.bf16.mxu0 0
      %1854 = vmatpush1.bf16.msra.mxu0 0
      %1855 = vmatprep.subr.bf16.mxu0 0
      %1856 = vmatpush1.bf16.msra.mxu0 0
      %1857 = vmatprep.subr.bf16.mxu0 0
      %1858 = vmatpush1.bf16.msra.mxu0 0
      %1859 = vmatprep.subr.bf16.mxu0 0
      %1860 = vmatpush1.bf16.msra.mxu0 0
      %1861 = vmatprep.subr.bf16.mxu0 0
      %1862 = vmatpush1.bf16.msra.mxu0 0
      %1863 = vmatprep.subr.bf16.mxu0 0
      %1864 = vmatpush1.bf16.msra.mxu0 %v1844
      %1865 = vmatprep.subr.bf16.mxu0 0
      %1866 = vmatpush2.bf16.msra.mxu0 0
      %1867 = vmatprep.subr.bf16.mxu0 0
      %1868 = vmatpush2.bf16.msra.mxu0 0
      %1869 = vmatprep.subr.bf16.mxu0 0
      %1870 = vmatpush2.bf16.msra.mxu0 0
      %1871 = vmatprep.subr.bf16.mxu0 0
      %1872 = vmatpush2.bf16.msra.mxu0 0
      %1873 = vmatprep.subr.bf16.mxu0 0
      %1874 = vmatpush2.bf16.msra.mxu0 0
      %1875 = vmatprep.subr.bf16.mxu0 0
      %1876 = vmatpush2.bf16.msra.mxu0 0
      %1877 = vmatprep.subr.bf16.mxu0 0
      %1878 = vmatpush2.bf16.msra.mxu0 0
      %1879 = vmatprep.subr.bf16.mxu0 0
      %1880 = vmatpush2.bf16.msra.mxu0 0
      %1881 = vmatprep.mubr.bf16.mxu0 0
      %1882 = vmatmul.mubr.bf16.gmra.mxu0 %v1847
      %v1883 = vpop.f32.mrf.mxu0
      %v1884 = vadd.f32 0.0, %v1883
      %v1885 = vpop.f32.mrf.mxu0
      %v1886 = vpop.f32.mrf.mxu0
      %v1887 = vadd.f32 0.0, %v1886
      %v1888 = vpop.f32.mrf.mxu0
      %1889 = vdwg.mxu0
      %v1890 = vpack.c.bf16 %v1887, %v1884
      %v1893 = vunpack.c.l.b16 %v521
      %v1894 = vunpack.c.l.b16 %v522
      %v1895 = vpack.c.b16 %v1894, %v1893
      %v1898 = vsel %vm525, %v1890, 0
      %1900 = vmatprep.subr.bf16.mxu0 0
      %1901 = vmatpush1.bf16.msra.mxu0 0
      %1902 = vmatprep.subr.bf16.mxu0 0
      %1903 = vmatpush1.bf16.msra.mxu0 0
      %1904 = vmatprep.subr.bf16.mxu0 0
      %1905 = vmatpush1.bf16.msra.mxu0 0
      %1906 = vmatprep.subr.bf16.mxu0 0
      %1907 = vmatpush1.bf16.msra.mxu0 0
      %1908 = vmatprep.subr.bf16.mxu0 0
      %1909 = vmatpush1.bf16.msra.mxu0 0
      %1910 = vmatprep.subr.bf16.mxu0 0
      %1911 = vmatpush1.bf16.msra.mxu0 0
      %1912 = vmatprep.subr.bf16.mxu0 0
      %1913 = vmatpush1.bf16.msra.mxu0 0
      %1914 = vmatprep.subr.bf16.mxu0 0
      %1915 = vmatpush1.bf16.msra.mxu0 %v1895
      %1916 = vmatprep.subr.bf16.mxu0 0
      %1917 = vmatpush2.bf16.msra.mxu0 0
      %1918 = vmatprep.subr.bf16.mxu0 0
      %1919 = vmatpush2.bf16.msra.mxu0 0
      %1920 = vmatprep.subr.bf16.mxu0 0
      %1921 = vmatpush2.bf16.msra.mxu0 0
      %1922 = vmatprep.subr.bf16.mxu0 0
      %1923 = vmatpush2.bf16.msra.mxu0 0
      %1924 = vmatprep.subr.bf16.mxu0 0
      %1925 = vmatpush2.bf16.msra.mxu0 0
      %1926 = vmatprep.subr.bf16.mxu0 0
      %1927 = vmatpush2.bf16.msra.mxu0 0
      %1928 = vmatprep.subr.bf16.mxu0 0
      %1929 = vmatpush2.bf16.msra.mxu0 0
      %1930 = vmatprep.subr.bf16.mxu0 0
      %1931 = vmatpush2.bf16.msra.mxu0 0
      %1932 = vmatprep.mubr.bf16.mxu0 0
      %1933 = vmatmul.mubr.bf16.gmra.mxu0 %v1898
      %v1934 = vpop.f32.mrf.mxu0
      %v1935 = vadd.f32 0.0, %v1934
      %v1936 = vpop.f32.mrf.mxu0
      %v1937 = vpop.f32.mrf.mxu0
      %v1938 = vadd.f32 0.0, %v1937
      %v1939 = vpop.f32.mrf.mxu0
      %1940 = vdwg.mxu0
      %v1941 = vadd.f32 %v1763, %v1935
      %v1942 = vadd.f32 %v1764, %v1938
      %v1943 = vld [vmem:[%s3] sm:$0x1]
      %v1945 = vlaneseq
      %v1946 = vshrl.u32 %v1945, 7
      %v1947 = vsub.s32 0, %v1946
      %v1948 = vrot.slane %v1943, %v1947
      %v1950 = vadd.f32 %v1941, %v1948
      %v1951 = vadd.f32 %v1942, %v1948
      %v1952 = vadd.f32 %v253, %v1950
      %v1953 = vadd.f32 %v254, %v1951
      %1954 = vadd.xlane.f32.xlu0 %v1952
      %v1955 = vpop.xlane.xlu0 %1954
      %1956 = vadd.xlane.f32.xlu0 %v1953
      %v1957 = vpop.xlane.xlu0 %1956
      %v1958 = vrcp.pop 128.0
      %v1959 = vmul.f32 %v1955, %v1958
      %v1960 = vmul.f32 %v1957, %v1958
      %v1961 = vsub.f32 %v1952, %v1959
      %v1962 = vsub.f32 %v1953, %v1960
      %v1963 = vmul.f32 %v1961, %v1961
      %v1964 = vmul.f32 %v1962, %v1962
      %1965 = vadd.xlane.f32.xlu0 %v1963
      %v1966 = vpop.xlane.xlu0 %1965
      %1967 = vadd.xlane.f32.xlu0 %v1964
      %v1968 = vpop.xlane.xlu0 %1967
      %v1969 = vmul.f32 %v1966, %v1958
      %v1970 = vmul.f32 %v1968, %v1958
      %v1971 = vadd.f32 %v1969, 1e-05
      %v1972 = vadd.f32 %v1970, 1e-05
      %v1973 = vrsqrt.pop %v1971
      %v1974 = vrsqrt.pop %v1972
      %v1975 = vmul.f32 %v1961, %v1973
      %v1976 = vmul.f32 %v1962, %v1974
      %v1977 = vld [vmem:[%s4] sm:$0x1]
      %v1979 = vlaneseq
      %v1980 = vshrl.u32 %v1979, 7
      %v1981 = vsub.s32 0, %v1980
      %v1982 = vrot.slane %v1977, %v1981
      %v1984 = vmul.f32 %v1975, %v1982
      %v1985 = vmul.f32 %v1976, %v1982
      %v1986 = vld [vmem:[%s5] sm:$0x1]
      %v1988 = vlaneseq
      %v1989 = vshrl.u32 %v1988, 7
      %v1990 = vsub.s32 0, %v1989
      %v1991 = vrot.slane %v1986, %v1990
      %v1993 = vadd.f32 %v1984, %v1991
      %v1994 = vadd.f32 %v1985, %v1991
      %1995 = vst [vmem:[%s251] sm:$0xff] %v1993
      %1996 = vst [vmem:[%s251 + $0x8] sm:$0xff] %v1994
      %p1997 = scmp.lt.s32.totalorder %s17, 1
      %s1998 = scalar_select %p1997, %s17, 1
      %s1999 = smul.addr %s1998, 2
      %s2000 = smul.addr %s1999, 8
      %s2001 = scalar_lea.vmem %s6, %s2000
      // Predicated region
      $region45: #{bigram_lm_forward.10} parent=43 // pred_check
        %p2002 = pneg %p166
      $region46: #{bigram_lm_forward.10} parent=43 // pred_check_branch
        %2004 = sbr.rel (%p2002) target = $region48
      $region47: #{bigram_lm_forward.10} parent=43 // pred_region
        _
      $region48: #{bigram_lm_forward.10} parent=43 // pred_fallthru
        _
    $region44: #{bigram_lm_forward.10} parent=5 // pred_fallthru
      _
    %p2005 = scmp.le.s32.totalorder 2, %s12
    // Predicated region
    $region49: #{bigram_lm_forward.10} parent=5 // pred_check
      %p2006 = pneg %p2005
    $region50: #{bigram_lm_forward.10} parent=5 // pred_check_branch
      %2008 = sbr.rel (%p2006) target = $region52
    $region51: #{bigram_lm_forward.10} parent=5 // pred_region
      %s2009 = ssub.s32 %s12, 2
      // Predicated region
      $region53: #{bigram_lm_forward.10} parent=51 // pred_check
        %p2010 = pneg %p172
      $region54: #{bigram_lm_forward.10} parent=51 // pred_check_branch
        %2012 = sbr.rel (%p2010) target = $region56
      $region55: #{bigram_lm_forward.10} parent=51 // pred_region
        %p2013 = scmp.lt.s32.totalorder %s18, 1
        %s2014 = scalar_select %p2013, %s18, 1
        %s2015 = smul.addr %s2014, 2
        %s2016 = smul.addr %s2015, 8
        %s2017 = scalar_lea.vmem %s6, %s2016
      $region56: #{bigram_lm_forward.10} parent=51 // pred_fallthru
        _
    $region52: #{bigram_lm_forward.10} parent=5 // pred_fallthru
      _
  $region6: #{bigram_lm_forward.10} parent=0 // loop_footer
    %s16 = sadd.s32 1, %s12
  $region7: #{bigram_lm_forward.10} parent=0 // loop_footer_branch
    %11 = sbr.rel target = $region3
  $region8: #{bigram_lm_forward.10} parent=0 // loop_exit
    _

// kernel: bigram_lm_forward.14
$region0: #{bigram_lm_forward.14}
  #allocation0 [shape = 'u32[]', space=smem, size = 0x4, offset = 0x4, fixed_abs, tag = 'smem constant byte address 0x4 - core index']
  #allocation1 [shape = 'u32[144,128]{1,0:T(1,128)}', space=vmem, size = 0x12000, scoped, tag = 'internal scratch']
  %s0 = inlined_call_operand.vmem [shape: f32[16,2,128], index: 0, kind: input, shape index: {}]
  %s1 = inlined_call_operand.vmem [shape: bf16[128,512], index: 1, kind: input, shape index: {}]
  %s2 = inlined_call_operand.vmem [shape: bf16[128,512], index: 2, kind: input, shape index: {}]
  %s3 = inlined_call_operand.vmem [shape: f32[1,512], index: 3, kind: input, shape index: {}]
  %s4 = inlined_call_operand.vmem [shape: f32[16,2,128], index: 4, kind: output, shape index: {}]
  %s5 = sld [smem:[#allocation0]]
  $region26: #{bigram_lm_forward.14} parent=0
    _
  %s7 = ssub.s32 1, %s5
  %s8 = scalar_select 0, %s7, %s5
  // Predicated region
  $region2: #{bigram_lm_forward.14} parent=0 // pred_check
    _
  $region3: #{bigram_lm_forward.14} parent=0 // pred_check_branch
    %10 = sbr.rel (0) target = $region5
  $region4: #{bigram_lm_forward.14} parent=0 // pred_region
    _
  $region5: #{bigram_lm_forward.14} parent=0 // pred_fallthru
    _
  // Predicated region
  $region6: #{bigram_lm_forward.14} parent=0 // pred_check
    _
  $region7: #{bigram_lm_forward.14} parent=0 // pred_check_branch
    %12 = sbr.rel (0) target = $region9
  $region8: #{bigram_lm_forward.14} parent=0 // pred_region
    _
  $region9: #{bigram_lm_forward.14} parent=0 // pred_fallthru
    _
  // Predicated region
  $region10: #{bigram_lm_forward.14} parent=0 // pred_check
    _
  $region11: #{bigram_lm_forward.14} parent=0 // pred_check_branch
    %14 = sbr.rel (0) target = $region13
  $region12: #{bigram_lm_forward.14} parent=0 // pred_region
    _
  $region13: #{bigram_lm_forward.14} parent=0 // pred_fallthru
    _
  // Predicated region
  $region14: #{bigram_lm_forward.14} parent=0 // pred_check
    _
  $region15: #{bigram_lm_forward.14} parent=0 // pred_check_branch
    %16 = sbr.rel (0) target = $region17
  $region16: #{bigram_lm_forward.14} parent=0 // pred_region
    _
  $region17: #{bigram_lm_forward.14} parent=0 // pred_fallthru
    _
  %v18 = vld [vmem:[%s1] sm:$0xff]
  %v19 = vld [vmem:[%s1 + $0x8] sm:$0xff]
  %v20 = vld [vmem:[%s1 + $0x10] sm:$0xff]
  %v21 = vld [vmem:[%s1 + $0x18] sm:$0xff]
  %v22 = vld [vmem:[%s1 + $0x20] sm:$0xff]
  %v23 = vld [vmem:[%s1 + $0x28] sm:$0xff]
  %v24 = vld [vmem:[%s1 + $0x30] sm:$0xff]
  %v25 = vld [vmem:[%s1 + $0x38] sm:$0xff]
  %v26 = vld [vmem:[%s1 + $0x40] sm:$0xff]
  %v27 = vld [vmem:[%s1 + $0x48] sm:$0xff]
  %v28 = vld [vmem:[%s1 + $0x50] sm:$0xff]
  %v29 = vld [vmem:[%s1 + $0x58] sm:$0xff]
  %v30 = vld [vmem:[%s1 + $0x60] sm:$0xff]
  %v31 = vld [vmem:[%s1 + $0x68] sm:$0xff]
  %v32 = vld [vmem:[%s1 + $0x70] sm:$0xff]
  %v33 = vld [vmem:[%s1 + $0x78] sm:$0xff]
  %v34 = vld [vmem:[%s1 + $0x80] sm:$0xff]
  %v35 = vld [vmem:[%s1 + $0x88] sm:$0xff]
  %v36 = vld [vmem:[%s1 + $0x90] sm:$0xff]
  %v37 = vld [vmem:[%s1 + $0x98] sm:$0xff]
  %v38 = vld [vmem:[%s1 + $0xa0] sm:$0xff]
  %v39 = vld [vmem:[%s1 + $0xa8] sm:$0xff]
  %v40 = vld [vmem:[%s1 + $0xb0] sm:$0xff]
  %v41 = vld [vmem:[%s1 + $0xb8] sm:$0xff]
  %v42 = vld [vmem:[%s1 + $0xc0] sm:$0xff]
  %v43 = vld [vmem:[%s1 + $0xc8] sm:$0xff]
  %v44 = vld [vmem:[%s1 + $0xd0] sm:$0xff]
  %v45 = vld [vmem:[%s1 + $0xd8] sm:$0xff]
  %v46 = vld [vmem:[%s1 + $0xe0] sm:$0xff]
  %v47 = vld [vmem:[%s1 + $0xe8] sm:$0xff]
  %v48 = vld [vmem:[%s1 + $0xf0] sm:$0xff]
  %v49 = vld [vmem:[%s1 + $0xf8] sm:$0xff]
  %v50 = vld [vmem:[%s2] sm:$0xff]
  %v51 = vld [vmem:[%s2 + $0x8] sm:$0xff]
  %v52 = vld [vmem:[%s2 + $0x10] sm:$0xff]
  %v53 = vld [vmem:[%s2 + $0x18] sm:$0xff]
  %v54 = vld [vmem:[%s2 + $0x20] sm:$0xff]
  %v55 = vld [vmem:[%s2 + $0x28] sm:$0xff]
  %v56 = vld [vmem:[%s2 + $0x30] sm:$0xff]
  %v57 = vld [vmem:[%s2 + $0x38] sm:$0xff]
  %v58 = vld [vmem:[%s2 + $0x40] sm:$0xff]
  %v59 = vld [vmem:[%s2 + $0x48] sm:$0xff]
  %v60 = vld [vmem:[%s2 + $0x50] sm:$0xff]
  %v61 = vld [vmem:[%s2 + $0x58] sm:$0xff]
  %v62 = vld [vmem:[%s2 + $0x60] sm:$0xff]
  %v63 = vld [vmem:[%s2 + $0x68] sm:$0xff]
  %v64 = vld [vmem:[%s2 + $0x70] sm:$0xff]
  %v65 = vld [vmem:[%s2 + $0x78] sm:$0xff]
  %v66 = vld [vmem:[%s2 + $0x80] sm:$0xff]
  %v67 = vld [vmem:[%s2 + $0x88] sm:$0xff]
  %v68 = vld [vmem:[%s2 + $0x90] sm:$0xff]
  %v69 = vld [vmem:[%s2 + $0x98] sm:$0xff]
  %v70 = vld [vmem:[%s2 + $0xa0] sm:$0xff]
  %v71 = vld [vmem:[%s2 + $0xa8] sm:$0xff]
  %v72 = vld [vmem:[%s2 + $0xb0] sm:$0xff]
  %v73 = vld [vmem:[%s2 + $0xb8] sm:$0xff]
  %v74 = vld [vmem:[%s2 + $0xc0] sm:$0xff]
  %v75 = vld [vmem:[%s2 + $0xc8] sm:$0xff]
  %v76 = vld [vmem:[%s2 + $0xd0] sm:$0xff]
  %v77 = vld [vmem:[%s2 + $0xd8] sm:$0xff]
  %v78 = vld [vmem:[%s2 + $0xe0] sm:$0xff]
  %v79 = vld [vmem:[%s2 + $0xe8] sm:$0xff]
  %v80 = vld [vmem:[%s2 + $0xf0] sm:$0xff]
  %v81 = vld [vmem:[%s2 + $0xf8] sm:$0xff]
  %v82 = vld [vmem:[%s3] sm:$0xf]
  %v83 = vld [vmem:[%s0] sm:$0x3]
  %v84 = vpack.c.bf16 %v83, %v83
  %v117 = vunpack.c.l.b16 %v50
  %v118 = vunpack.c.h.b16 %v50
  %v119 = vunpack.c.l.b16 %v51
  %v120 = vunpack.c.h.b16 %v51
  %v121 = vunpack.c.l.b16 %v52
  %v122 = vunpack.c.h.b16 %v52
  %v123 = vunpack.c.l.b16 %v53
  %v124 = vunpack.c.h.b16 %v53
  %v125 = vunpack.c.l.b16 %v54
  %v126 = vunpack.c.h.b16 %v54
  %v127 = vunpack.c.l.b16 %v55
  %v128 = vunpack.c.h.b16 %v55
  %v129 = vunpack.c.l.b16 %v56
  %v130 = vunpack.c.h.b16 %v56
  %v131 = vunpack.c.l.b16 %v57
  %v132 = vunpack.c.h.b16 %v57
  %v133 = vunpack.c.l.b16 %v58
  %v134 = vunpack.c.h.b16 %v58
  %v135 = vunpack.c.l.b16 %v59
  %v136 = vunpack.c.h.b16 %v59
  %v137 = vunpack.c.l.b16 %v60
  %v138 = vunpack.c.h.b16 %v60
  %v139 = vunpack.c.l.b16 %v61
  %v140 = vunpack.c.h.b16 %v61
  %v141 = vunpack.c.l.b16 %v62
  %v142 = vunpack.c.h.b16 %v62
  %v143 = vunpack.c.l.b16 %v63
  %v144 = vunpack.c.h.b16 %v63
  %v145 = vunpack.c.l.b16 %v64
  %v146 = vunpack.c.h.b16 %v64
  %v147 = vunpack.c.l.b16 %v65
  %v148 = vunpack.c.h.b16 %v65
  %v149 = vunpack.c.l.b16 %v66
  %v150 = vunpack.c.h.b16 %v66
  %v151 = vunpack.c.l.b16 %v67
  %v152 = vunpack.c.h.b16 %v67
  %v153 = vunpack.c.l.b16 %v68
  %v154 = vunpack.c.h.b16 %v68
  %v155 = vunpack.c.l.b16 %v69
  %v156 = vunpack.c.h.b16 %v69
  %v157 = vunpack.c.l.b16 %v70
  %v158 = vunpack.c.h.b16 %v70
  %v159 = vunpack.c.l.b16 %v71
  %v160 = vunpack.c.h.b16 %v71
  %v161 = vunpack.c.l.b16 %v72
  %v162 = vunpack.c.h.b16 %v72
  %v163 = vunpack.c.l.b16 %v73
  %v164 = vunpack.c.h.b16 %v73
  %v165 = vunpack.c.l.b16 %v74
  %v166 = vunpack.c.h.b16 %v74
  %v167 = vunpack.c.l.b16 %v75
  %v168 = vunpack.c.h.b16 %v75
  %v169 = vunpack.c.l.b16 %v76
  %v170 = vunpack.c.h.b16 %v76
  %v171 = vunpack.c.l.b16 %v77
  %v172 = vunpack.c.h.b16 %v77
  %v173 = vunpack.c.l.b16 %v78
  %v174 = vunpack.c.h.b16 %v78
  %v175 = vunpack.c.l.b16 %v79
  %v176 = vunpack.c.h.b16 %v79
  %v177 = vunpack.c.l.b16 %v80
  %v178 = vunpack.c.h.b16 %v80
  %v179 = vunpack.c.l.b16 %v81
  %v180 = vunpack.c.h.b16 %v81
  %v181 = vpack.c.b16 %v121, %v117
  %v182 = vpack.c.b16 %v122, %v118
  %v183 = vpack.c.b16 %v123, %v119
  %v184 = vpack.c.b16 %v124, %v120
  %v185 = vpack.c.b16 %v129, %v125
  %v186 = vpack.c.b16 %v130, %v126
  %v187 = vpack.c.b16 %v131, %v127
  %v188 = vpack.c.b16 %v132, %v128
  %v189 = vpack.c.b16 %v137, %v133
  %v190 = vpack.c.b16 %v138, %v134
  %v191 = vpack.c.b16 %v139, %v135
  %v192 = vpack.c.b16 %v140, %v136
  %v193 = vpack.c.b16 %v145, %v141
  %v194 = vpack.c.b16 %v146, %v142
  %v195 = vpack.c.b16 %v147, %v143
  %v196 = vpack.c.b16 %v148, %v144
  %v197 = vpack.c.b16 %v153, %v149
  %v198 = vpack.c.b16 %v154, %v150
  %v199 = vpack.c.b16 %v155, %v151
  %v200 = vpack.c.b16 %v156, %v152
  %v201 = vpack.c.b16 %v161, %v157
  %v202 = vpack.c.b16 %v162, %v158
  %v203 = vpack.c.b16 %v163, %v159
  %v204 = vpack.c.b16 %v164, %v160
  %v205 = vpack.c.b16 %v169, %v165
  %v206 = vpack.c.b16 %v170, %v166
  %v207 = vpack.c.b16 %v171, %v167
  %v208 = vpack.c.b16 %v172, %v168
  %v209 = vpack.c.b16 %v177, %v173
  %v210 = vpack.c.b16 %v178, %v174
  %v211 = vpack.c.b16 %v179, %v175
  %v212 = vpack.c.b16 %v180, %v176
  %245 = vmatprep.subr.bf16.mxu0 %v210
  %246 = vmatpush1.bf16.msra.mxu0 %v209
  %247 = vmatprep.subr.bf16.mxu0 %v206
  %248 = vmatpush1.bf16.msra.mxu0 %v205
  %249 = vmatprep.subr.bf16.mxu0 %v202
  %250 = vmatpush1.bf16.msra.mxu0 %v201
  %251 = vmatprep.subr.bf16.mxu0 %v198
  %252 = vmatpush1.bf16.msra.mxu0 %v197
  %253 = vmatprep.subr.bf16.mxu0 %v194
  %254 = vmatpush1.bf16.msra.mxu0 %v193
  %255 = vmatprep.subr.bf16.mxu0 %v190
  %256 = vmatpush1.bf16.msra.mxu0 %v189
  %257 = vmatprep.subr.bf16.mxu0 %v186
  %258 = vmatpush1.bf16.msra.mxu0 %v185
  %259 = vmatprep.subr.bf16.mxu0 %v182
  %260 = vmatpush1.bf16.msra.mxu0 %v181
  %261 = vmatprep.subr.bf16.mxu0 0
  %262 = vmatpush2.bf16.msra.mxu0 0
  %263 = vmatprep.subr.bf16.mxu0 0
  %264 = vmatpush2.bf16.msra.mxu0 0
  %265 = vmatprep.subr.bf16.mxu0 0
  %266 = vmatpush2.bf16.msra.mxu0 0
  %267 = vmatprep.subr.bf16.mxu0 0
  %268 = vmatpush2.bf16.msra.mxu0 0
  %269 = vmatprep.subr.bf16.mxu0 0
  %270 = vmatpush2.bf16.msra.mxu0 0
  %271 = vmatprep.subr.bf16.mxu0 0
  %272 = vmatpush2.bf16.msra.mxu0 0
  %273 = vmatprep.subr.bf16.mxu0 0
  %274 = vmatpush2.bf16.msra.mxu0 0
  %275 = vmatprep.subr.bf16.mxu0 0
  %276 = vmatpush2.bf16.msra.mxu0 0
  %277 = vmatprep.mubr.bf16.mxu0 0
  %278 = vmatmul.mubr.bf16.gmra.mxu0 0
  %v279 = vpop.f32.mrf.mxu0
  %v280 = vadd.f32 0.0, %v279
  %v281 = vpop.f32.mrf.mxu0
  %v282 = vadd.f32 0.0, %v281
  %v283 = vpop.f32.mrf.mxu0
  %v284 = vpop.f32.mrf.mxu0
  %285 = vdwg.mxu0
  %286 = vmatprep.subr.bf16.mxu0 %v212
  %287 = vmatpush1.bf16.msra.mxu0 %v211
  %288 = vmatprep.subr.bf16.mxu0 %v208
  %289 = vmatpush1.bf16.msra.mxu0 %v207
  %290 = vmatprep.subr.bf16.mxu0 %v204
  %291 = vmatpush1.bf16.msra.mxu0 %v203
  %292 = vmatprep.subr.bf16.mxu0 %v200
  %293 = vmatpush1.bf16.msra.mxu0 %v199
  %294 = vmatprep.subr.bf16.mxu0 %v196
  %295 = vmatpush1.bf16.msra.mxu0 %v195
  %296 = vmatprep.subr.bf16.mxu0 %v192
  %297 = vmatpush1.bf16.msra.mxu0 %v191
  %298 = vmatprep.subr.bf16.mxu0 %v188
  %299 = vmatpush1.bf16.msra.mxu0 %v187
  %300 = vmatprep.subr.bf16.mxu0 %v184
  %301 = vmatpush1.bf16.msra.mxu0 %v183
  %302 = vmatprep.subr.bf16.mxu0 0
  %303 = vmatpush2.bf16.msra.mxu0 0
  %304 = vmatprep.subr.bf16.mxu0 0
  %305 = vmatpush2.bf16.msra.mxu0 0
  %306 = vmatprep.subr.bf16.mxu0 0
  %307 = vmatpush2.bf16.msra.mxu0 0
  %308 = vmatprep.subr.bf16.mxu0 0
  %309 = vmatpush2.bf16.msra.mxu0 0
  %310 = vmatprep.subr.bf16.mxu0 0
  %311 = vmatpush2.bf16.msra.mxu0 0
  %312 = vmatprep.subr.bf16.mxu0 0
  %313 = vmatpush2.bf16.msra.mxu0 0
  %314 = vmatprep.subr.bf16.mxu0 0
  %315 = vmatpush2.bf16.msra.mxu0 0
  %316 = vmatprep.subr.bf16.mxu0 0
  %317 = vmatpush2.bf16.msra.mxu0 0
  %318 = vmatprep.mubr.bf16.mxu0 0
  %319 = vmatmul.mubr.bf16.gmra.mxu0 0
  %v320 = vpop.f32.mrf.mxu0
  %v321 = vadd.f32 0.0, %v320
  %v322 = vpop.f32.mrf.mxu0
  %v323 = vadd.f32 0.0, %v322
  %v324 = vpop.f32.mrf.mxu0
  %v325 = vpop.f32.mrf.mxu0
  %326 = vdwg.mxu0
  %v359 = vunpack.c.l.b16 %v18
  %v360 = vunpack.c.h.b16 %v18
  %v361 = vunpack.c.l.b16 %v19
  %v362 = vunpack.c.h.b16 %v19
  %v363 = vunpack.c.l.b16 %v20
  %v364 = vunpack.c.h.b16 %v20
  %v365 = vunpack.c.l.b16 %v21
  %v366 = vunpack.c.h.b16 %v21
  %v367 = vunpack.c.l.b16 %v22
  %v368 = vunpack.c.h.b16 %v22
  %v369 = vunpack.c.l.b16 %v23
  %v370 = vunpack.c.h.b16 %v23
  %v371 = vunpack.c.l.b16 %v24
  %v372 = vunpack.c.h.b16 %v24
  %v373 = vunpack.c.l.b16 %v25
  %v374 = vunpack.c.h.b16 %v25
  %v375 = vunpack.c.l.b16 %v26
  %v376 = vunpack.c.h.b16 %v26
  %v377 = vunpack.c.l.b16 %v27
  %v378 = vunpack.c.h.b16 %v27
  %v379 = vunpack.c.l.b16 %v28
  %v380 = vunpack.c.h.b16 %v28
  %v381 = vunpack.c.l.b16 %v29
  %v382 = vunpack.c.h.b16 %v29
  %v383 = vunpack.c.l.b16 %v30
  %v384 = vunpack.c.h.b16 %v30
  %v385 = vunpack.c.l.b16 %v31
  %v386 = vunpack.c.h.b16 %v31
  %v387 = vunpack.c.l.b16 %v32
  %v388 = vunpack.c.h.b16 %v32
  %v389 = vunpack.c.l.b16 %v33
  %v390 = vunpack.c.h.b16 %v33
  %v391 = vunpack.c.l.b16 %v34
  %v392 = vunpack.c.h.b16 %v34
  %v393 = vunpack.c.l.b16 %v35
  %v394 = vunpack.c.h.b16 %v35
  %v395 = vunpack.c.l.b16 %v36
  %v396 = vunpack.c.h.b16 %v36
  %v397 = vunpack.c.l.b16 %v37
  %v398 = vunpack.c.h.b16 %v37
  %v399 = vunpack.c.l.b16 %v38
  %v400 = vunpack.c.h.b16 %v38
  %v401 = vunpack.c.l.b16 %v39
  %v402 = vunpack.c.h.b16 %v39
  %v403 = vunpack.c.l.b16 %v40
  %v404 = vunpack.c.h.b16 %v40
  %v405 = vunpack.c.l.b16 %v41
  %v406 = vunpack.c.h.b16 %v41
  %v407 = vunpack.c.l.b16 %v42
  %v408 = vunpack.c.h.b16 %v42
  %v409 = vunpack.c.l.b16 %v43
  %v410 = vunpack.c.h.b16 %v43
  %v411 = vunpack.c.l.b16 %v44
  %v412 = vunpack.c.h.b16 %v44
  %v413 = vunpack.c.l.b16 %v45
  %v414 = vunpack.c.h.b16 %v45
  %v415 = vunpack.c.l.b16 %v46
  %v416 = vunpack.c.h.b16 %v46
  %v417 = vunpack.c.l.b16 %v47
  %v418 = vunpack.c.h.b16 %v47
  %v419 = vunpack.c.l.b16 %v48
  %v420 = vunpack.c.h.b16 %v48
  %v421 = vunpack.c.l.b16 %v49
  %v422 = vunpack.c.h.b16 %v49
  %v423 = vpack.c.b16 %v363, %v359
  %v424 = vpack.c.b16 %v364, %v360
  %v425 = vpack.c.b16 %v365, %v361
  %v426 = vpack.c.b16 %v366, %v362
  %v427 = vpack.c.b16 %v371, %v367
  %v428 = vpack.c.b16 %v372, %v368
  %v429 = vpack.c.b16 %v373, %v369
  %v430 = vpack.c.b16 %v374, %v370
  %v431 = vpack.c.b16 %v379, %v375
  %v432 = vpack.c.b16 %v380, %v376
  %v433 = vpack.c.b16 %v381, %v377
  %v434 = vpack.c.b16 %v382, %v378
  %v435 = vpack.c.b16 %v387, %v383
  %v436 = vpack.c.b16 %v388, %v384
  %v437 = vpack.c.b16 %v389, %v385
  %v438 = vpack.c.b16 %v390, %v386
  %v439 = vpack.c.b16 %v395, %v391
  %v440 = vpack.c.b16 %v396, %v392
  %v441 = vpack.c.b16 %v397, %v393
  %v442 = vpack.c.b16 %v398, %v394
  %v443 = vpack.c.b16 %v403, %v399
  %v444 = vpack.c.b16 %v404, %v400
  %v445 = vpack.c.b16 %v405, %v401
  %v446 = vpack.c.b16 %v406, %v402
  %v447 = vpack.c.b16 %v411, %v407
  %v448 = vpack.c.b16 %v412, %v408
  %v449 = vpack.c.b16 %v413, %v409
  %v450 = vpack.c.b16 %v414, %v410
  %v451 = vpack.c.b16 %v419, %v415
  %v452 = vpack.c.b16 %v420, %v416
  %v453 = vpack.c.b16 %v421, %v417
  %v454 = vpack.c.b16 %v422, %v418
  %487 = vmatprep.subr.bf16.mxu0 %v452
  %488 = vmatpush1.bf16.msra.mxu0 %v451
  %489 = vmatprep.subr.bf16.mxu0 %v448
  %490 = vmatpush1.bf16.msra.mxu0 %v447
  %491 = vmatprep.subr.bf16.mxu0 %v444
  %492 = vmatpush1.bf16.msra.mxu0 %v443
  %493 = vmatprep.subr.bf16.mxu0 %v440
  %494 = vmatpush1.bf16.msra.mxu0 %v439
  %495 = vmatprep.subr.bf16.mxu0 %v436
  %496 = vmatpush1.bf16.msra.mxu0 %v435
  %497 = vmatprep.subr.bf16.mxu0 %v432
  %498 = vmatpush1.bf16.msra.mxu0 %v431
  %499 = vmatprep.subr.bf16.mxu0 %v428
  %500 = vmatpush1.bf16.msra.mxu0 %v427
  %501 = vmatprep.subr.bf16.mxu0 %v424
  %502 = vmatpush1.bf16.msra.mxu0 %v423
  %503 = vmatprep.subr.bf16.mxu0 0
  %504 = vmatpush2.bf16.msra.mxu0 0
  %505 = vmatprep.subr.bf16.mxu0 0
  %506 = vmatpush2.bf16.msra.mxu0 0
  %507 = vmatprep.subr.bf16.mxu0 0
  %508 = vmatpush2.bf16.msra.mxu0 0
  %509 = vmatprep.subr.bf16.mxu0 0
  %510 = vmatpush2.bf16.msra.mxu0 0
  %511 = vmatprep.subr.bf16.mxu0 0
  %512 = vmatpush2.bf16.msra.mxu0 0
  %513 = vmatprep.subr.bf16.mxu0 0
  %514 = vmatpush2.bf16.msra.mxu0 0
  %515 = vmatprep.subr.bf16.mxu0 0
  %516 = vmatpush2.bf16.msra.mxu0 0
  %517 = vmatprep.subr.bf16.mxu0 0
  %518 = vmatpush2.bf16.msra.mxu0 0
  %519 = vmatprep.mubr.bf16.mxu0 0
  %520 = vmatmul.mubr.bf16.gmra.mxu0 %v84
  %v521 = vpop.f32.mrf.mxu0
  %v522 = vadd.f32 %v280, %v521
  %v523 = vpop.f32.mrf.mxu0
  %v524 = vadd.f32 %v282, %v523
  %v525 = vpop.f32.mrf.mxu0
  %v526 = vpop.f32.mrf.mxu0
  %527 = vdwg.mxu0
  %528 = vmatprep.subr.bf16.mxu0 %v454
  %529 = vmatpush1.bf16.msra.mxu0 %v453
  %530 = vmatprep.subr.bf16.mxu0 %v450
  %531 = vmatpush1.bf16.msra.mxu0 %v449
  %532 = vmatprep.subr.bf16.mxu0 %v446
  %533 = vmatpush1.bf16.msra.mxu0 %v445
  %534 = vmatprep.subr.bf16.mxu0 %v442
  %535 = vmatpush1.bf16.msra.mxu0 %v441
  %536 = vmatprep.subr.bf16.mxu0 %v438
  %537 = vmatpush1.bf16.msra.mxu0 %v437
  %538 = vmatprep.subr.bf16.mxu0 %v434
  %539 = vmatpush1.bf16.msra.mxu0 %v433
  %540 = vmatprep.subr.bf16.mxu0 %v430
  %541 = vmatpush1.bf16.msra.mxu0 %v429
  %542 = vmatprep.subr.bf16.mxu0 %v426
  %543 = vmatpush1.bf16.msra.mxu0 %v425
  %544 = vmatprep.subr.bf16.mxu0 0
  %545 = vmatpush2.bf16.msra.mxu0 0
  %546 = vmatprep.subr.bf16.mxu0 0
  %547 = vmatpush2.bf16.msra.mxu0 0
  %548 = vmatprep.subr.bf16.mxu0 0
  %549 = vmatpush2.bf16.msra.mxu0 0
  %550 = vmatprep.subr.bf16.mxu0 0
  %551 = vmatpush2.bf16.msra.mxu0 0
  %552 = vmatprep.subr.bf16.mxu0 0
  %553 = vmatpush2.bf16.msra.mxu0 0
  %554 = vmatprep.subr.bf16.mxu0 0
  %555 = vmatpush2.bf16.msra.mxu0 0
  %556 = vmatprep.subr.bf16.mxu0 0
  %557 = vmatpush2.bf16.msra.mxu0 0
  %558 = vmatprep.subr.bf16.mxu0 0
  %559 = vmatpush2.bf16.msra.mxu0 0
  %560 = vmatprep.mubr.bf16.mxu0 0
  %561 = vmatmul.mubr.bf16.gmra.mxu0 %v84
  %v562 = vpop.f32.mrf.mxu0
  %v563 = vadd.f32 %v321, %v562
  %v564 = vpop.f32.mrf.mxu0
  %v565 = vadd.f32 %v323, %v564
  %v566 = vpop.f32.mrf.mxu0
  %v567 = vpop.f32.mrf.mxu0
  %568 = vdwg.mxu0
  %v570 = vlaneseq
  %v571 = vshrl.u32 %v570, 7
  %v572 = vsub.s32 0, %v571
  %v573 = vrot.slane %v82, %v572
  %v574 = vlaneseq
  %v575 = vshrl.u32 %v574, 7
  %v576 = vsub.s32 1, %v575
  %v577 = vrot.slane %v82, %v576
  %v578 = vlaneseq
  %v579 = vshrl.u32 %v578, 7
  %v580 = vsub.s32 2, %v579
  %v581 = vrot.slane %v82, %v580
  %v582 = vlaneseq
  %v583 = vshrl.u32 %v582, 7
  %v584 = vsub.s32 3, %v583
  %v585 = vrot.slane %v82, %v584
  %v590 = vadd.f32 %v522, %v573
  %v591 = vadd.f32 %v524, %v577
  %v592 = vadd.f32 %v563, %v581
  %v593 = vadd.f32 %v565, %v585
  %v594 = vxor.u32 %v590, 2147483648
  %v595 = vmul.f32 %v594, 1.442695
  %v596 = vpow.pop %v595
  %v597 = vadd.f32 %v596, 1.0
  %v598 = vrcp.pop %v597
  %v599 = vmul.f32 1.0, %v598
  %v600 = vxor.u32 %v591, 2147483648
  %v601 = vmul.f32 %v600, 1.442695
  %v602 = vpow.pop %v601
  %v603 = vadd.f32 %v602, 1.0
  %v604 = vrcp.pop %v603
  %v605 = vmul.f32 1.0, %v604
  %v606 = vtanh.pop %v592
  %v607 = vxor.u32 %v593, 2147483648
  %v608 = vmul.f32 %v607, 1.442695
  %v609 = vpow.pop %v608
  %v610 = vadd.f32 %v609, 1.0
  %v611 = vrcp.pop %v610
  %v612 = vmul.f32 1.0, %v611
  %v613 = vmul.f32 %v605, 0.0
  %v614 = vmul.f32 %v599, %v606
  %v615 = vadd.f32 %v613, %v614
  %v616 = vtanh.pop %v615
  %v617 = vmul.f32 %v612, %v616
  %618 = vst [vmem:[%s4] sm:$0x3] %v617
  %s619 = scalar_lea.vmem %s0, 2
  %v620 = vld [vmem:[%s619] sm:$0x3]
  %v621 = vpack.c.bf16 %v620, %v620
  %v622 = vpack.c.bf16 %v617, %v617
  %623 = vmatprep.subr.bf16.mxu0 %v210
  %624 = vmatpush1.bf16.msra.mxu0 %v209
  %625 = vmatprep.subr.bf16.mxu0 %v206
  %626 = vmatpush1.bf16.msra.mxu0 %v205
  %627 = vmatprep.subr.bf16.mxu0 %v202
  %628 = vmatpush1.bf16.msra.mxu0 %v201
  %629 = vmatprep.subr.bf16.mxu0 %v198
  %630 = vmatpush1.bf16.msra.mxu0 %v197
  %631 = vmatprep.subr.bf16.mxu0 %v194
  %632 = vmatpush1.bf16.msra.mxu0 %v193
  %633 = vmatprep.subr.bf16.mxu0 %v190
  %634 = vmatpush1.bf16.msra.mxu0 %v189
  %635 = vmatprep.subr.bf16.mxu0 %v186
  %636 = vmatpush1.bf16.msra.mxu0 %v185
  %637 = vmatprep.subr.bf16.mxu0 %v182
  %638 = vmatpush1.bf16.msra.mxu0 %v181
  %639 = vmatprep.subr.bf16.mxu0 0
  %640 = vmatpush2.bf16.msra.mxu0 0
  %641 = vmatprep.subr.bf16.mxu0 0
  %642 = vmatpush2.bf16.msra.mxu0 0
  %643 = vmatprep.subr.bf16.mxu0 0
  %644 = vmatpush2.bf16.msra.mxu0 0
  %645 = vmatprep.subr.bf16.mxu0 0
  %646 = vmatpush2.bf16.msra.mxu0 0
  %647 = vmatprep.subr.bf16.mxu0 0
  %648 = vmatpush2.bf16.msra.mxu0 0
  %649 = vmatprep.subr.bf16.mxu0 0
  %650 = vmatpush2.bf16.msra.mxu0 0
  %651 = vmatprep.subr.bf16.mxu0 0
  %652 = vmatpush2.bf16.msra.mxu0 0
  %653 = vmatprep.subr.bf16.mxu0 0
  %654 = vmatpush2.bf16.msra.mxu0 0
  %655 = vmatprep.mubr.bf16.mxu0 0
  %656 = vmatmul.mubr.bf16.gmra.mxu0 %v622
  %v657 = vpop.f32.mrf.mxu0
  %v658 = vadd.f32 0.0, %v657
  %v659 = vpop.f32.mrf.mxu0
  %v660 = vadd.f32 0.0, %v659
  %v661 = vpop.f32.mrf.mxu0
  %v662 = vpop.f32.mrf.mxu0
  %663 = vdwg.mxu0
  %664 = vmatprep.subr.bf16.mxu0 %v212
  %665 = vmatpush1.bf16.msra.mxu0 %v211
  %666 = vmatprep.subr.bf16.mxu0 %v208
  %667 = vmatpush1.bf16.msra.mxu0 %v207
  %668 = vmatprep.subr.bf16.mxu0 %v204
  %669 = vmatpush1.bf16.msra.mxu0 %v203
  %670 = vmatprep.subr.bf16.mxu0 %v200
  %671 = vmatpush1.bf16.msra.mxu0 %v199
  %672 = vmatprep.subr.bf16.mxu0 %v196
  %673 = vmatpush1.bf16.msra.mxu0 %v195
  %674 = vmatprep.subr.bf16.mxu0 %v192
  %675 = vmatpush1.bf16.msra.mxu0 %v191
  %676 = vmatprep.subr.bf16.mxu0 %v188
  %677 = vmatpush1.bf16.msra.mxu0 %v187
  %678 = vmatprep.subr.bf16.mxu0 %v184
  %679 = vmatpush1.bf16.msra.mxu0 %v183
  %680 = vmatprep.subr.bf16.mxu0 0
  %681 = vmatpush2.bf16.msra.mxu0 0
  %682 = vmatprep.subr.bf16.mxu0 0
  %683 = vmatpush2.bf16.msra.mxu0 0
  %684 = vmatprep.subr.bf16.mxu0 0
  %685 = vmatpush2.bf16.msra.mxu0 0
  %686 = vmatprep.subr.bf16.mxu0 0
  %687 = vmatpush2.bf16.msra.mxu0 0
  %688 = vmatprep.subr.bf16.mxu0 0
  %689 = vmatpush2.bf16.msra.mxu0 0
  %690 = vmatprep.subr.bf16.mxu0 0
  %691 = vmatpush2.bf16.msra.mxu0 0
  %692 = vmatprep.subr.bf16.mxu0 0
  %693 = vmatpush2.bf16.msra.mxu0 0
  %694 = vmatprep.subr.bf16.mxu0 0
  %695 = vmatpush2.bf16.msra.mxu0 0
  %696 = vmatprep.mubr.bf16.mxu0 0
  %697 = vmatmul.mubr.bf16.gmra.mxu0 %v622
  %v698 = vpop.f32.mrf.mxu0
  %v699 = vadd.f32 0.0, %v698
  %v700 = vpop.f32.mrf.mxu0
  %v701 = vadd.f32 0.0, %v700
  %v702 = vpop.f32.mrf.mxu0
  %v703 = vpop.f32.mrf.mxu0
  %704 = vdwg.mxu0
  %705 = vmatprep.subr.bf16.mxu0 %v452
  %706 = vmatpush1.bf16.msra.mxu0 %v451
  %707 = vmatprep.subr.bf16.mxu0 %v448
  %708 = vmatpush1.bf16.msra.mxu0 %v447
  %709 = vmatprep.subr.bf16.mxu0 %v444
  %710 = vmatpush1.bf16.msra.mxu0 %v443
  %711 = vmatprep.subr.bf16.mxu0 %v440
  %712 = vmatpush1.bf16.msra.mxu0 %v439
  %713 = vmatprep.subr.bf16.mxu0 %v436
  %714 = vmatpush1.bf16.msra.mxu0 %v435
  %715 = vmatprep.subr.bf16.mxu0 %v432
  %716 = vmatpush1.bf16.msra.mxu0 %v431
  %717 = vmatprep.subr.bf16.mxu0 %v428
  %718 = vmatpush1.bf16.msra.mxu0 %v427
  %719 = vmatprep.subr.bf16.mxu0 %v424
  %720 = vmatpush1.bf16.msra.mxu0 %v423
  %721 = vmatprep.subr.bf16.mxu0 0
  %722 = vmatpush2.bf16.msra.mxu0 0
  %723 = vmatprep.subr.bf16.mxu0 0
  %724 = vmatpush2.bf16.msra.mxu0 0
  %725 = vmatprep.subr.bf16.mxu0 0
  %726 = vmatpush2.bf16.msra.mxu0 0
  %727 = vmatprep.subr.bf16.mxu0 0
  %728 = vmatpush2.bf16.msra.mxu0 0
  %729 = vmatprep.subr.bf16.mxu0 0
  %730 = vmatpush2.bf16.msra.mxu0 0
  %731 = vmatprep.subr.bf16.mxu0 0
  %732 = vmatpush2.bf16.msra.mxu0 0
  %733 = vmatprep.subr.bf16.mxu0 0
  %734 = vmatpush2.bf16.msra.mxu0 0
  %735 = vmatprep.subr.bf16.mxu0 0
  %736 = vmatpush2.bf16.msra.mxu0 0
  %737 = vmatprep.mubr.bf16.mxu0 0
  %738 = vmatmul.mubr.bf16.gmra.mxu0 %v621
  %v739 = vpop.f32.mrf.mxu0
  %v740 = vadd.f32 %v658, %v739
  %v741 = vpop.f32.mrf.mxu0
  %v742 = vadd.f32 %v660, %v741
  %v743 = vpop.f32.mrf.mxu0
  %v744 = vpop.f32.mrf.mxu0
  %745 = vdwg.mxu0
  %746 = vmatprep.subr.bf16.mxu0 %v454
  %747 = vmatpush1.bf16.msra.mxu0 %v453
  %748 = vmatprep.subr.bf16.mxu0 %v450
  %749 = vmatpush1.bf16.msra.mxu0 %v449
  %750 = vmatprep.subr.bf16.mxu0 %v446
  %751 = vmatpush1.bf16.msra.mxu0 %v445
  %752 = vmatprep.subr.bf16.mxu0 %v442
  %753 = vmatpush1.bf16.msra.mxu0 %v441
  %754 = vmatprep.subr.bf16.mxu0 %v438
  %755 = vmatpush1.bf16.msra.mxu0 %v437
  %756 = vmatprep.subr.bf16.mxu0 %v434
  %757 = vmatpush1.bf16.msra.mxu0 %v433
  %758 = vmatprep.subr.bf16.mxu0 %v430
  %759 = vmatpush1.bf16.msra.mxu0 %v429
  %760 = vmatprep.subr.bf16.mxu0 %v426
  %761 = vmatpush1.bf16.msra.mxu0 %v425
  %762 = vmatprep.subr.bf16.mxu0 0
  %763 = vmatpush2.bf16.msra.mxu0 0
  %764 = vmatprep.subr.bf16.mxu0 0
  %765 = vmatpush2.bf16.msra.mxu0 0
  %766 = vmatprep.subr.bf16.mxu0 0
  %767 = vmatpush2.bf16.msra.mxu0 0
  %768 = vmatprep.subr.bf16.mxu0 0
  %769 = vmatpush2.bf16.msra.mxu0 0
  %770 = vmatprep.subr.bf16.mxu0 0
  %771 = vmatpush2.bf16.msra.mxu0 0
  %772 = vmatprep.subr.bf16.mxu0 0
  %773 = vmatpush2.bf16.msra.mxu0 0
  %774 = vmatprep.subr.bf16.mxu0 0
  %775 = vmatpush2.bf16.msra.mxu0 0
  %776 = vmatprep.subr.bf16.mxu0 0
  %777 = vmatpush2.bf16.msra.mxu0 0
  %778 = vmatprep.mubr.bf16.mxu0 0
  %779 = vmatmul.mubr.bf16.gmra.mxu0 %v621
  %v780 = vpop.f32.mrf.mxu0
  %v781 = vadd.f32 %v699, %v780
  %v782 = vpop.f32.mrf.mxu0
  %v783 = vadd.f32 %v701, %v782
  %v784 = vpop.f32.mrf.mxu0
  %v785 = vpop.f32.mrf.mxu0
  %786 = vdwg.mxu0
  %v787 = vadd.f32 %v740, %v573
  %v788 = vadd.f32 %v742, %v577
  %v789 = vadd.f32 %v781, %v581
  %v790 = vadd.f32 %v783, %v585
  %v791 = vxor.u32 %v787, 2147483648
  %v792 = vmul.f32 %v791, 1.442695
  %v793 = vpow.pop %v792
  %v794 = vadd.f32 %v793, 1.0
  %v795 = vrcp.pop %v794
  %v796 = vmul.f32 1.0, %v795
  %v797 = vxor.u32 %v788, 2147483648
  %v798 = vmul.f32 %v797, 1.442695
  %v799 = vpow.pop %v798
  %v800 = vadd.f32 %v799, 1.0
  %v801 = vrcp.pop %v800
  %v802 = vmul.f32 1.0, %v801
  %v803 = vtanh.pop %v789
  %v804 = vxor.u32 %v790, 2147483648
  %v805 = vmul.f32 %v804, 1.442695
  %v806 = vpow.pop %v805
  %v807 = vadd.f32 %v806, 1.0
  %v808 = vrcp.pop %v807
  %v809 = vmul.f32 1.0, %v808
  %v810 = vmul.f32 %v802, %v615
  %v811 = vmul.f32 %v796, %v803
  %v812 = vadd.f32 %v810, %v811
  %v813 = vtanh.pop %v812
  %v814 = vmul.f32 %v809, %v813
  %s815 = scalar_lea.vmem %s4, 2
  %816 = vst [vmem:[%s815] sm:$0x3] %v814
  %s817 = scalar_lea.vmem %s0, 4
  %v818 = vld [vmem:[%s817] sm:$0x3]
  %v819 = vpack.c.bf16 %v818, %v818
  %v820 = vpack.c.bf16 %v814, %v814
  %821 = vmatprep.subr.bf16.mxu0 %v210
  %822 = vmatpush1.bf16.msra.mxu0 %v209
  %823 = vmatprep.subr.bf16.mxu0 %v206
  %824 = vmatpush1.bf16.msra.mxu0 %v205
  %825 = vmatprep.subr.bf16.mxu0 %v202
  %826 = vmatpush1.bf16.msra.mxu0 %v201
  %827 = vmatprep.subr.bf16.mxu0 %v198
  %828 = vmatpush1.bf16.msra.mxu0 %v197
  %829 = vmatprep.subr.bf16.mxu0 %v194
  %830 = vmatpush1.bf16.msra.mxu0 %v193
  %831 = vmatprep.subr.bf16.mxu0 %v190
  %832 = vmatpush1.bf16.msra.mxu0 %v189
  %833 = vmatprep.subr.bf16.mxu0 %v186
  %834 = vmatpush1.bf16.msra.mxu0 %v185
  %835 = vmatprep.subr.bf16.mxu0 %v182
  %836 = vmatpush1.bf16.msra.mxu0 %v181
  %837 = vmatprep.subr.bf16.mxu0 0
  %838 = vmatpush2.bf16.msra.mxu0 0
  %839 = vmatprep.subr.bf16.mxu0 0
  %840 = vmatpush2.bf16.msra.mxu0 0
  %841 = vmatprep.subr.bf16.mxu0 0
  %842 = vmatpush2.bf16.msra.mxu0 0
  %843 = vmatprep.subr.bf16.mxu0 0
  %844 = vmatpush2.bf16.msra.mxu0 0
  %845 = vmatprep.subr.bf16.mxu0 0
  %846 = vmatpush2.bf16.msra.mxu0 0
  %847 = vmatprep.subr.bf16.mxu0 0
  %848 = vmatpush2.bf16.msra.mxu0 0
  %849 = vmatprep.subr.bf16.mxu0 0
  %850 = vmatpush2.bf16.msra.mxu0 0
  %851 = vmatprep.subr.bf16.mxu0 0
  %852 = vmatpush2.bf16.msra.mxu0 0
  %853 = vmatprep.mubr.bf16.mxu0 0
  %854 = vmatmul.mubr.bf16.gmra.mxu0 %v820
  %v855 = vpop.f32.mrf.mxu0
  %v856 = vadd.f32 0.0, %v855
  %v857 = vpop.f32.mrf.mxu0
  %v858 = vadd.f32 0.0, %v857
  %v859 = vpop.f32.mrf.mxu0
  %v860 = vpop.f32.mrf.mxu0
  %861 = vdwg.mxu0
  %862 = vmatprep.subr.bf16.mxu0 %v212
  %863 = vmatpush1.bf16.msra.mxu0 %v211
  %864 = vmatprep.subr.bf16.mxu0 %v208
  %865 = vmatpush1.bf16.msra.mxu0 %v207
  %866 = vmatprep.subr.bf16.mxu0 %v204
  %867 = vmatpush1.bf16.msra.mxu0 %v203
  %868 = vmatprep.subr.bf16.mxu0 %v200
  %869 = vmatpush1.bf16.msra.mxu0 %v199
  %870 = vmatprep.subr.bf16.mxu0 %v196
  %871 = vmatpush1.bf16.msra.mxu0 %v195
  %872 = vmatprep.subr.bf16.mxu0 %v192
  %873 = vmatpush1.bf16.msra.mxu0 %v191
  %874 = vmatprep.subr.bf16.mxu0 %v188
  %875 = vmatpush1.bf16.msra.mxu0 %v187
  %876 = vmatprep.subr.bf16.mxu0 %v184
  %877 = vmatpush1.bf16.msra.mxu0 %v183
  %878 = vmatprep.subr.bf16.mxu0 0
  %879 = vmatpush2.bf16.msra.mxu0 0
  %880 = vmatprep.subr.bf16.mxu0 0
  %881 = vmatpush2.bf16.msra.mxu0 0
  %882 = vmatprep.subr.bf16.mxu0 0
  %883 = vmatpush2.bf16.msra.mxu0 0
  %884 = vmatprep.subr.bf16.mxu0 0
  %885 = vmatpush2.bf16.msra.mxu0 0
  %886 = vmatprep.subr.bf16.mxu0 0
  %887 = vmatpush2.bf16.msra.mxu0 0
  %888 = vmatprep.subr.bf16.mxu0 0
  %889 = vmatpush2.bf16.msra.mxu0 0
  %890 = vmatprep.subr.bf16.mxu0 0
  %891 = vmatpush2.bf16.msra.mxu0 0
  %892 = vmatprep.subr.bf16.mxu0 0
  %893 = vmatpush2.bf16.msra.mxu0 0
  %894 = vmatprep.mubr.bf16.mxu0 0
  %895 = vmatmul.mubr.bf16.gmra.mxu0 %v820
  %v896 = vpop.f32.mrf.mxu0
  %v897 = vadd.f32 0.0, %v896
  %v898 = vpop.f32.mrf.mxu0
  %v899 = vadd.f32 0.0, %v898
  %v900 = vpop.f32.mrf.mxu0
  %v901 = vpop.f32.mrf.mxu0
  %902 = vdwg.mxu0
  %903 = vmatprep.subr.bf16.mxu0 %v452
  %904 = vmatpush1.bf16.msra.mxu0 %v451
  %905 = vmatprep.subr.bf16.mxu0 %v448
  %906 = vmatpush1.bf16.msra.mxu0 %v447
  %907 = vmatprep.subr.bf16.mxu0 %v444
  %908 = vmatpush1.bf16.msra.mxu0 %v443
  %909 = vmatprep.subr.bf16.mxu0 %v440
  %910 = vmatpush1.bf16.msra.mxu0 %v439
  %911 = vmatprep.subr.bf16.mxu0 %v436
  %912 = vmatpush1.bf16.msra.mxu0 %v435
  %913 = vmatprep.subr.bf16.mxu0 %v432
  %914 = vmatpush1.bf16.msra.mxu0 %v431
  %915 = vmatprep.subr.bf16.mxu0 %v428
  %916 = vmatpush1.bf16.msra.mxu0 %v427
  %917 = vmatprep.subr.bf16.mxu0 %v424
  %918 = vmatpush1.bf16.msra.mxu0 %v423
  %919 = vmatprep.subr.bf16.mxu0 0
  %920 = vmatpush2.bf16.msra.mxu0 0
  %921 = vmatprep.subr.bf16.mxu0 0
  %922 = vmatpush2.bf16.msra.mxu0 0
  %923 = vmatprep.subr.bf16.mxu0 0
  %924 = vmatpush2.bf16.msra.mxu0 0
  %925 = vmatprep.subr.bf16.mxu0 0
  %926 = vmatpush2.bf16.msra.mxu0 0
  %927 = vmatprep.subr.bf16.mxu0 0
  %928 = vmatpush2.bf16.msra.mxu0 0
  %929 = vmatprep.subr.bf16.mxu0 0
  %930 = vmatpush2.bf16.msra.mxu0 0
  %931 = vmatprep.subr.bf16.mxu0 0
  %932 = vmatpush2.bf16.msra.mxu0 0
  %933 = vmatprep.subr.bf16.mxu0 0
  %934 = vmatpush2.bf16.msra.mxu0 0
  %935 = vmatprep.mubr.bf16.mxu0 0
  %936 = vmatmul.mubr.bf16.gmra.mxu0 %v819
  %v937 = vpop.f32.mrf.mxu0
  %v938 = vadd.f32 %v856, %v937
  %v939 = vpop.f32.mrf.mxu0
  %v940 = vadd.f32 %v858, %v939
  %v941 = vpop.f32.mrf.mxu0
  %v942 = vpop.f32.mrf.mxu0
  %943 = vdwg.mxu0
  %944 = vmatprep.subr.bf16.mxu0 %v454
  %945 = vmatpush1.bf16.msra.mxu0 %v453
  %946 = vmatprep.subr.bf16.mxu0 %v450
  %947 = vmatpush1.bf16.msra.mxu0 %v449
  %948 = vmatprep.subr.bf16.mxu0 %v446
  %949 = vmatpush1.bf16.msra.mxu0 %v445
  %950 = vmatprep.subr.bf16.mxu0 %v442
  %951 = vmatpush1.bf16.msra.mxu0 %v441
  %952 = vmatprep.subr.bf16.mxu0 %v438
  %953 = vmatpush1.bf16.msra.mxu0 %v437
  %954 = vmatprep.subr.bf16.mxu0 %v434
  %955 = vmatpush1.bf16.msra.mxu0 %v433
  %956 = vmatprep.subr.bf16.mxu0 %v430
  %957 = vmatpush1.bf16.msra.mxu0 %v429
  %958 = vmatprep.subr.bf16.mxu0 %v426
  %959 = vmatpush1.bf16.msra.mxu0 %v425
  %960 = vmatprep.subr.bf16.mxu0 0
  %961 = vmatpush2.bf16.msra.mxu0 0
  %962 = vmatprep.subr.bf16.mxu0 0
  %963 = vmatpush2.bf16.msra.mxu0 0
  %964 = vmatprep.subr.bf16.mxu0 0
  %965 = vmatpush2.bf16.msra.mxu0 0
  %966 = vmatprep.subr.bf16.mxu0 0
  %967 = vmatpush2.bf16.msra.mxu0 0
  %968 = vmatprep.subr.bf16.mxu0 0
  %969 = vmatpush2.bf16.msra.mxu0 0
  %970 = vmatprep.subr.bf16.mxu0 0
  %971 = vmatpush2.bf16.msra.mxu0 0
  %972 = vmatprep.subr.bf16.mxu0 0
  %973 = vmatpush2.bf16.msra.mxu0 0
  %974 = vmatprep.subr.bf16.mxu0 0
  %975 = vmatpush2.bf16.msra.mxu0 0
  %976 = vmatprep.mubr.bf16.mxu0 0
  %977 = vmatmul.mubr.bf16.gmra.mxu0 %v819
  %v978 = vpop.f32.mrf.mxu0
  %v979 = vadd.f32 %v897, %v978
  %v980 = vpop.f32.mrf.mxu0
  %v981 = vadd.f32 %v899, %v980
  %v982 = vpop.f32.mrf.mxu0
  %v983 = vpop.f32.mrf.mxu0
  %984 = vdwg.mxu0
  %v985 = vadd.f32 %v938, %v573
  %v986 = vadd.f32 %v940, %v577
  %v987 = vadd.f32 %v979, %v581
  %v988 = vadd.f32 %v981, %v585
  %v989 = vxor.u32 %v985, 2147483648
  %v990 = vmul.f32 %v989, 1.442695
  %v991 = vpow.pop %v990
  %v992 = vadd.f32 %v991, 1.0
  %v993 = vrcp.pop %v992
  %v994 = vmul.f32 1.0, %v993
  %v995 = vxor.u32 %v986, 2147483648
  %v996 = vmul.f32 %v995, 1.442695
  %v997 = vpow.pop %v996
  %v998 = vadd.f32 %v997, 1.0
  %v999 = vrcp.pop %v998
  %v1000 = vmul.f32 1.0, %v999
  %v1001 = vtanh.pop %v987
  %v1002 = vxor.u32 %v988, 2147483648
  %v1003 = vmul.f32 %v1002, 1.442695
  %v1004 = vpow.pop %v1003
  %v1005 = vadd.f32 %v1004, 1.0
  %v1006 = vrcp.pop %v1005
  %v1007 = vmul.f32 1.0, %v1006
  %v1008 = vmul.f32 %v1000, %v812
  %v1009 = vmul.f32 %v994, %v1001
  %v1010 = vadd.f32 %v1008, %v1009
  %v1011 = vtanh.pop %v1010
  %v1012 = vmul.f32 %v1007, %v1011
  %s1013 = scalar_lea.vmem %s4, 4
  %1014 = vst [vmem:[%s1013] sm:$0x3] %v1012
  %s1015 = scalar_lea.vmem %s0, 6
  %v1016 = vld [vmem:[%s1015] sm:$0x3]
  %v1017 = vpack.c.bf16 %v1016, %v1016
  %v1018 = vpack.c.bf16 %v1012, %v1012
  %1019 = vmatprep.subr.bf16.mxu0 %v210
  %1020 = vmatpush1.bf16.msra.mxu0 %v209
  %1021 = vmatprep.subr.bf16.mxu0 %v206
  %1022 = vmatpush1.bf16.msra.mxu0 %v205
  %1023 = vmatprep.subr.bf16.mxu0 %v202
  %1024 = vmatpush1.bf16.msra.mxu0 %v201
  %1025 = vmatprep.subr.bf16.mxu0 %v198
  %1026 = vmatpush1.bf16.msra.mxu0 %v197
  %1027 = vmatprep.subr.bf16.mxu0 %v194
  %1028 = vmatpush1.bf16.msra.mxu0 %v193
  %1029 = vmatprep.subr.bf16.mxu0 %v190
  %1030 = vmatpush1.bf16.msra.mxu0 %v189
  %1031 = vmatprep.subr.bf16.mxu0 %v186
  %1032 = vmatpush1.bf16.msra.mxu0 %v185
  %1033 = vmatprep.subr.bf16.mxu0 %v182
  %1034 = vmatpush1.bf16.msra.mxu0 %v181
  %1035 = vmatprep.subr.bf16.mxu0 0
  %1036 = vmatpush2.bf16.msra.mxu0 0
  %1037 = vmatprep.subr.bf16.mxu0 0
  %1038 = vmatpush2.bf16.msra.mxu0 0
  %1039 = vmatprep.subr.bf16.mxu0 0
  %1040 = vmatpush2.bf16.msra.mxu0 0
  %1041 = vmatprep.subr.bf16.mxu0 0
  %1042 = vmatpush2.bf16.msra.mxu0 0
  %1043 = vmatprep.subr.bf16.mxu0 0
  %1044 = vmatpush2.bf16.msra.mxu0 0
  %1045 = vmatprep.subr.bf16.mxu0 0
  %1046 = vmatpush2.bf16.msra.mxu0 0
  %1047 = vmatprep.subr.bf16.mxu0 0
  %1048 = vmatpush2.bf16.msra.mxu0 0
  %1049 = vmatprep.subr.bf16.mxu0 0
  %1050 = vmatpush2.bf16.msra.mxu0 0
  %1051 = vmatprep.mubr.bf16.mxu0 0
  %1052 = vmatmul.mubr.bf16.gmra.mxu0 %v1018
  %v1053 = vpop.f32.mrf.mxu0
  %v1054 = vadd.f32 0.0, %v1053
  %v1055 = vpop.f32.mrf.mxu0
  %v1056 = vadd.f32 0.0, %v1055
  %v1057 = vpop.f32.mrf.mxu0
  %v1058 = vpop.f32.mrf.mxu0
  %1059 = vdwg.mxu0
  %1060 = vmatprep.subr.bf16.mxu0 %v212
  %1061 = vmatpush1.bf16.msra.mxu0 %v211
  %1062 = vmatprep.subr.bf16.mxu0 %v208
  %1063 = vmatpush1.bf16.msra.mxu0 %v207
  %1064 = vmatprep.subr.bf16.mxu0 %v204
  %1065 = vmatpush1.bf16.msra.mxu0 %v203
  %1066 = vmatprep.subr.bf16.mxu0 %v200
  %1067 = vmatpush1.bf16.msra.mxu0 %v199
  %1068 = vmatprep.subr.bf16.mxu0 %v196
  %1069 = vmatpush1.bf16.msra.mxu0 %v195
  %1070 = vmatprep.subr.bf16.mxu0 %v192
  %1071 = vmatpush1.bf16.msra.mxu0 %v191
  %1072 = vmatprep.subr.bf16.mxu0 %v188
  %1073 = vmatpush1.bf16.msra.mxu0 %v187
  %1074 = vmatprep.subr.bf16.mxu0 %v184
  %1075 = vmatpush1.bf16.msra.mxu0 %v183
  %1076 = vmatprep.subr.bf16.mxu0 0
  %1077 = vmatpush2.bf16.msra.mxu0 0
  %1078 = vmatprep.subr.bf16.mxu0 0
  %1079 = vmatpush2.bf16.msra.mxu0 0
  %1080 = vmatprep.subr.bf16.mxu0 0
  %1081 = vmatpush2.bf16.msra.mxu0 0
  %1082 = vmatprep.subr.bf16.mxu0 0
  %1083 = vmatpush2.bf16.msra.mxu0 0
  %1084 = vmatprep.subr.bf16.mxu0 0
  %1085 = vmatpush2.bf16.msra.mxu0 0
  %1086 = vmatprep.subr.bf16.mxu0 0
  %1087 = vmatpush2.bf16.msra.mxu0 0
  %1088 = vmatprep.subr.bf16.mxu0 0
  %1089 = vmatpush2.bf16.msra.mxu0 0
  %1090 = vmatprep.subr.bf16.mxu0 0
  %1091 = vmatpush2.bf16.msra.mxu0 0
  %1092 = vmatprep.mubr.bf16.mxu0 0
  %1093 = vmatmul.mubr.bf16.gmra.mxu0 %v1018
  %v1094 = vpop.f32.mrf.mxu0
  %v1095 = vadd.f32 0.0, %v1094
  %v1096 = vpop.f32.mrf.mxu0
  %v1097 = vadd.f32 0.0, %v1096
  %v1098 = vpop.f32.mrf.mxu0
  %v1099 = vpop.f32.mrf.mxu0
  %1100 = vdwg.mxu0
  %1101 = vmatprep.subr.bf16.mxu0 %v452
  %1102 = vmatpush1.bf16.msra.mxu0 %v451
  %1103 = vmatprep.subr.bf16.mxu0 %v448
  %1104 = vmatpush1.bf16.msra.mxu0 %v447
  %1105 = vmatprep.subr.bf16.mxu0 %v444
  %1106 = vmatpush1.bf16.msra.mxu0 %v443
  %1107 = vmatprep.subr.bf16.mxu0 %v440
  %1108 = vmatpush1.bf16.msra.mxu0 %v439
  %1109 = vmatprep.subr.bf16.mxu0 %v436
  %1110 = vmatpush1.bf16.msra.mxu0 %v435
  %1111 = vmatprep.subr.bf16.mxu0 %v432
  %1112 = vmatpush1.bf16.msra.mxu0 %v431
  %1113 = vmatprep.subr.bf16.mxu0 %v428
  %1114 = vmatpush1.bf16.msra.mxu0 %v427
  %1115 = vmatprep.subr.bf16.mxu0 %v424
  %1116 = vmatpush1.bf16.msra.mxu0 %v423
  %1117 = vmatprep.subr.bf16.mxu0 0
  %1118 = vmatpush2.bf16.msra.mxu0 0
  %1119 = vmatprep.subr.bf16.mxu0 0
  %1120 = vmatpush2.bf16.msra.mxu0 0
  %1121 = vmatprep.subr.bf16.mxu0 0
  %1122 = vmatpush2.bf16.msra.mxu0 0
  %1123 = vmatprep.subr.bf16.mxu0 0
  %1124 = vmatpush2.bf16.msra.mxu0 0
  %1125 = vmatprep.subr.bf16.mxu0 0
  %1126 = vmatpush2.bf16.msra.mxu0 0
  %1127 = vmatprep.subr.bf16.mxu0 0
  %1128 = vmatpush2.bf16.msra.mxu0 0
  %1129 = vmatprep.subr.bf16.mxu0 0
  %1130 = vmatpush2.bf16.msra.mxu0 0
  %1131 = vmatprep.subr.bf16.mxu0 0
  %1132 = vmatpush2.bf16.msra.mxu0 0
  %1133 = vmatprep.mubr.bf16.mxu0 0
  %1134 = vmatmul.mubr.bf16.gmra.mxu0 %v1017
  %v1135 = vpop.f32.mrf.mxu0
  %v1136 = vadd.f32 %v1054, %v1135
  %v1137 = vpop.f32.mrf.mxu0
  %v1138 = vadd.f32 %v1056, %v1137
  %v1139 = vpop.f32.mrf.mxu0
  %v1140 = vpop.f32.mrf.mxu0
  %1141 = vdwg.mxu0
  %1142 = vmatprep.subr.bf16.mxu0 %v454
  %1143 = vmatpush1.bf16.msra.mxu0 %v453
  %1144 = vmatprep.subr.bf16.mxu0 %v450
  %1145 = vmatpush1.bf16.msra.mxu0 %v449
  %1146 = vmatprep.subr.bf16.mxu0 %v446
  %1147 = vmatpush1.bf16.msra.mxu0 %v445
  %1148 = vmatprep.subr.bf16.mxu0 %v442
  %1149 = vmatpush1.bf16.msra.mxu0 %v441
  %1150 = vmatprep.subr.bf16.mxu0 %v438
  %1151 = vmatpush1.bf16.msra.mxu0 %v437
  %1152 = vmatprep.subr.bf16.mxu0 %v434
  %1153 = vmatpush1.bf16.msra.mxu0 %v433
  %1154 = vmatprep.subr.bf16.mxu0 %v430
  %1155 = vmatpush1.bf16.msra.mxu0 %v429
  %1156 = vmatprep.subr.bf16.mxu0 %v426
  %1157 = vmatpush1.bf16.msra.mxu0 %v425
  %1158 = vmatprep.subr.bf16.mxu0 0
  %1159 = vmatpush2.bf16.msra.mxu0 0
  %1160 = vmatprep.subr.bf16.mxu0 0
  %1161 = vmatpush2.bf16.msra.mxu0 0
  %1162 = vmatprep.subr.bf16.mxu0 0
  %1163 = vmatpush2.bf16.msra.mxu0 0
  %1164 = vmatprep.subr.bf16.mxu0 0
  %1165 = vmatpush2.bf16.msra.mxu0 0
  %1166 = vmatprep.subr.bf16.mxu0 0
  %1167 = vmatpush2.bf16.msra.mxu0 0
  %1168 = vmatprep.subr.bf16.mxu0 0
  %1169 = vmatpush2.bf16.msra.mxu0 0
  %1170 = vmatprep.subr.bf16.mxu0 0
  %1171 = vmatpush2.bf16.msra.mxu0 0
  %1172 = vmatprep.subr.bf16.mxu0 0
  %1173 = vmatpush2.bf16.msra.mxu0 0
  %1174 = vmatprep.mubr.bf16.mxu0 0
  %1175 = vmatmul.mubr.bf16.gmra.mxu0 %v1017
  %v1176 = vpop.f32.mrf.mxu0
  %v1177 = vadd.f32 %v1095, %v1176
  %v1178 = vpop.f32.mrf.mxu0
  %v1179 = vadd.f32 %v1097, %v1178
  %v1180 = vpop.f32.mrf.mxu0
  %v1181 = vpop.f32.mrf.mxu0
  %1182 = vdwg.mxu0
  %v1183 = vadd.f32 %v1136, %v573
  %v1184 = vadd.f32 %v1138, %v577
  %v1185 = vadd.f32 %v1177, %v581
  %v1186 = vadd.f32 %v1179, %v585
  %v1187 = vxor.u32 %v1183, 2147483648
  %v1188 = vmul.f32 %v1187, 1.442695
  %v1189 = vpow.pop %v1188
  %v1190 = vadd.f32 %v1189, 1.0
  %v1191 = vrcp.pop %v1190
  %v1192 = vmul.f32 1.0, %v1191
  %v1193 = vxor.u32 %v1184, 2147483648
  %v1194 = vmul.f32 %v1193, 1.442695
  %v1195 = vpow.pop %v1194
  %v1196 = vadd.f32 %v1195, 1.0
  %v1197 = vrcp.pop %v1196
  %v1198 = vmul.f32 1.0, %v1197
  %v1199 = vtanh.pop %v1185
  %v1200 = vxor.u32 %v1186, 2147483648
  %v1201 = vmul.f32 %v1200, 1.442695
  %v1202 = vpow.pop %v1201
  %v1203 = vadd.f32 %v1202, 1.0
  %v1204 = vrcp.pop %v1203
  %v1205 = vmul.f32 1.0, %v1204
  %v1206 = vmul.f32 %v1198, %v1010
  %v1207 = vmul.f32 %v1192, %v1199
  %v1208 = vadd.f32 %v1206, %v1207
  %v1209 = vtanh.pop %v1208
  %v1210 = vmul.f32 %v1205, %v1209
  %s1211 = scalar_lea.vmem %s4, 6
  %1212 = vst [vmem:[%s1211] sm:$0x3] %v1210
  %s1213 = scalar_lea.vmem %s0, 8
  %v1214 = vld [vmem:[%s1213] sm:$0x3]
  %v1215 = vpack.c.bf16 %v1214, %v1214
  %v1216 = vpack.c.bf16 %v1210, %v1210
  %1217 = vmatprep.subr.bf16.mxu0 %v210
  %1218 = vmatpush1.bf16.msra.mxu0 %v209
  %1219 = vmatprep.subr.bf16.mxu0 %v206
  %1220 = vmatpush1.bf16.msra.mxu0 %v205
  %1221 = vmatprep.subr.bf16.mxu0 %v202
  %1222 = vmatpush1.bf16.msra.mxu0 %v201
  %1223 = vmatprep.subr.bf16.mxu0 %v198
  %1224 = vmatpush1.bf16.msra.mxu0 %v197
  %1225 = vmatprep.subr.bf16.mxu0 %v194
  %1226 = vmatpush1.bf16.msra.mxu0 %v193
  %1227 = vmatprep.subr.bf16.mxu0 %v190
  %1228 = vmatpush1.bf16.msra.mxu0 %v189
  %1229 = vmatprep.subr.bf16.mxu0 %v186
  %1230 = vmatpush1.bf16.msra.mxu0 %v185
  %1231 = vmatprep.subr.bf16.mxu0 %v182
  %1232 = vmatpush1.bf16.msra.mxu0 %v181
  %1233 = vmatprep.subr.bf16.mxu0 0
  %1234 = vmatpush2.bf16.msra.mxu0 0
  %1235 = vmatprep.subr.bf16.mxu0 0
  %1236 = vmatpush2.bf16.msra.mxu0 0
  %1237 = vmatprep.subr.bf16.mxu0 0
  %1238 = vmatpush2.bf16.msra.mxu0 0
  %1239 = vmatprep.subr.bf16.mxu0 0
  %1240 = vmatpush2.bf16.msra.mxu0 0
  %1241 = vmatprep.subr.bf16.mxu0 0
  %1242 = vmatpush2.bf16.msra.mxu0 0
  %1243 = vmatprep.subr.bf16.mxu0 0
  %1244 = vmatpush2.bf16.msra.mxu0 0
  %1245 = vmatprep.subr.bf16.mxu0 0
  %1246 = vmatpush2.bf16.msra.mxu0 0
  %1247 = vmatprep.subr.bf16.mxu0 0
  %1248 = vmatpush2.bf16.msra.mxu0 0
  %1249 = vmatprep.mubr.bf16.mxu0 0
  %1250 = vmatmul.mubr.bf16.gmra.mxu0 %v1216
  %v1251 = vpop.f32.mrf.mxu0
  %v1252 = vadd.f32 0.0, %v1251
  %v1253 = vpop.f32.mrf.mxu0
  %v1254 = vadd.f32 0.0, %v1253
  %v1255 = vpop.f32.mrf.mxu0
  %v1256 = vpop.f32.mrf.mxu0
  %1257 = vdwg.mxu0
  %1258 = vmatprep.subr.bf16.mxu0 %v212
  %1259 = vmatpush1.bf16.msra.mxu0 %v211
  %1260 = vmatprep.subr.bf16.mxu0 %v208
  %1261 = vmatpush1.bf16.msra.mxu0 %v207
  %1262 = vmatprep.subr.bf16.mxu0 %v204
  %1263 = vmatpush1.bf16.msra.mxu0 %v203
  %1264 = vmatprep.subr.bf16.mxu0 %v200
  %1265 = vmatpush1.bf16.msra.mxu0 %v199
  %1266 = vmatprep.subr.bf16.mxu0 %v196
  %1267 = vmatpush1.bf16.msra.mxu0 %v195
  %1268 = vmatprep.subr.bf16.mxu0 %v192
  %1269 = vmatpush1.bf16.msra.mxu0 %v191
  %1270 = vmatprep.subr.bf16.mxu0 %v188
  %1271 = vmatpush1.bf16.msra.mxu0 %v187
  %1272 = vmatprep.subr.bf16.mxu0 %v184
  %1273 = vmatpush1.bf16.msra.mxu0 %v183
  %1274 = vmatprep.subr.bf16.mxu0 0
  %1275 = vmatpush2.bf16.msra.mxu0 0
  %1276 = vmatprep.subr.bf16.mxu0 0
  %1277 = vmatpush2.bf16.msra.mxu0 0
  %1278 = vmatprep.subr.bf16.mxu0 0
  %1279 = vmatpush2.bf16.msra.mxu0 0
  %1280 = vmatprep.subr.bf16.mxu0 0
  %1281 = vmatpush2.bf16.msra.mxu0 0
  %1282 = vmatprep.subr.bf16.mxu0 0
  %1283 = vmatpush2.bf16.msra.mxu0 0
  %1284 = vmatprep.subr.bf16.mxu0 0
  %1285 = vmatpush2.bf16.msra.mxu0 0
  %1286 = vmatprep.subr.bf16.mxu0 0
  %1287 = vmatpush2.bf16.msra.mxu0 0
  %1288 = vmatprep.subr.bf16.mxu0 0
  %1289 = vmatpush2.bf16.msra.mxu0 0
  %1290 = vmatprep.mubr.bf16.mxu0 0
  %1291 = vmatmul.mubr.bf16.gmra.mxu0 %v1216
  %v1292 = vpop.f32.mrf.mxu0
  %v1293 = vadd.f32 0.0, %v1292
  %v1294 = vpop.f32.mrf.mxu0
  %v1295 = vadd.f32 0.0, %v1294
  %v1296 = vpop.f32.mrf.mxu0
  %v1297 = vpop.f32.mrf.mxu0
  %1298 = vdwg.mxu0
  %1299 = vmatprep.subr.bf16.mxu0 %v452
  %1300 = vmatpush1.bf16.msra.mxu0 %v451
  %1301 = vmatprep.subr.bf16.mxu0 %v448
  %1302 = vmatpush1.bf16.msra.mxu0 %v447
  %1303 = vmatprep.subr.bf16.mxu0 %v444
  %1304 = vmatpush1.bf16.msra.mxu0 %v443
  %1305 = vmatprep.subr.bf16.mxu0 %v440
  %1306 = vmatpush1.bf16.msra.mxu0 %v439
  %1307 = vmatprep.subr.bf16.mxu0 %v436
  %1308 = vmatpush1.bf16.msra.mxu0 %v435
  %1309 = vmatprep.subr.bf16.mxu0 %v432
  %1310 = vmatpush1.bf16.msra.mxu0 %v431
  %1311 = vmatprep.subr.bf16.mxu0 %v428
  %1312 = vmatpush1.bf16.msra.mxu0 %v427
  %1313 = vmatprep.subr.bf16.mxu0 %v424
  %1314 = vmatpush1.bf16.msra.mxu0 %v423
  %1315 = vmatprep.subr.bf16.mxu0 0
  %1316 = vmatpush2.bf16.msra.mxu0 0
  %1317 = vmatprep.subr.bf16.mxu0 0
  %1318 = vmatpush2.bf16.msra.mxu0 0
  %1319 = vmatprep.subr.bf16.mxu0 0
  %1320 = vmatpush2.bf16.msra.mxu0 0
  %1321 = vmatprep.subr.bf16.mxu0 0
  %1322 = vmatpush2.bf16.msra.mxu0 0
  %1323 = vmatprep.subr.bf16.mxu0 0
  %1324 = vmatpush2.bf16.msra.mxu0 0
  %1325 = vmatprep.subr.bf16.mxu0 0
  %1326 = vmatpush2.bf16.msra.mxu0 0
  %1327 = vmatprep.subr.bf16.mxu0 0
  %1328 = vmatpush2.bf16.msra.mxu0 0
  %1329 = vmatprep.subr.bf16.mxu0 0
  %1330 = vmatpush2.bf16.msra.mxu0 0
  %1331 = vmatprep.mubr.bf16.mxu0 0
  %1332 = vmatmul.mubr.bf16.gmra.mxu0 %v1215
  %v1333 = vpop.f32.mrf.mxu0
  %v1334 = vadd.f32 %v1252, %v1333
  %v1335 = vpop.f32.mrf.mxu0
  %v1336 = vadd.f32 %v1254, %v1335
  %v1337 = vpop.f32.mrf.mxu0
  %v1338 = vpop.f32.mrf.mxu0
  %1339 = vdwg.mxu0
  %1340 = vmatprep.subr.bf16.mxu0 %v454
  %1341 = vmatpush1.bf16.msra.mxu0 %v453
  %1342 = vmatprep.subr.bf16.mxu0 %v450
  %1343 = vmatpush1.bf16.msra.mxu0 %v449
  %1344 = vmatprep.subr.bf16.mxu0 %v446
  %1345 = vmatpush1.bf16.msra.mxu0 %v445
  %1346 = vmatprep.subr.bf16.mxu0 %v442
  %1347 = vmatpush1.bf16.msra.mxu0 %v441
  %1348 = vmatprep.subr.bf16.mxu0 %v438
  %1349 = vmatpush1.bf16.msra.mxu0 %v437
  %1350 = vmatprep.subr.bf16.mxu0 %v434
  %1351 = vmatpush1.bf16.msra.mxu0 %v433
  %1352 = vmatprep.subr.bf16.mxu0 %v430
  %1353 = vmatpush1.bf16.msra.mxu0 %v429
  %1354 = vmatprep.subr.bf16.mxu0 %v426
  %1355 = vmatpush1.bf16.msra.mxu0 %v425
  %1356 = vmatprep.subr.bf16.mxu0 0
  %1357 = vmatpush2.bf16.msra.mxu0 0
  %1358 = vmatprep.subr.bf16.mxu0 0
  %1359 = vmatpush2.bf16.msra.mxu0 0
  %1360 = vmatprep.subr.bf16.mxu0 0
  %1361 = vmatpush2.bf16.msra.mxu0 0
  %1362 = vmatprep.subr.bf16.mxu0 0
  %1363 = vmatpush2.bf16.msra.mxu0 0
  %1364 = vmatprep.subr.bf16.mxu0 0
  %1365 = vmatpush2.bf16.msra.mxu0 0
  %1366 = vmatprep.subr.bf16.mxu0 0
  %1367 = vmatpush2.bf16.msra.mxu0 0
  %1368 = vmatprep.subr.bf16.mxu0 0
  %1369 = vmatpush2.bf16.msra.mxu0 0
  %1370 = vmatprep.subr.bf16.mxu0 0
  %1371 = vmatpush2.bf16.msra.mxu0 0
  %1372 = vmatprep.mubr.bf16.mxu0 0
  %1373 = vmatmul.mubr.bf16.gmra.mxu0 %v1215
  %v1374 = vpop.f32.mrf.mxu0
  %v1375 = vadd.f32 %v1293, %v1374
  %v1376 = vpop.f32.mrf.mxu0
  %v1377 = vadd.f32 %v1295, %v1376
  %v1378 = vpop.f32.mrf.mxu0
  %v1379 = vpop.f32.mrf.mxu0
  %1380 = vdwg.mxu0
  %v1381 = vadd.f32 %v1334, %v573
  %v1382 = vadd.f32 %v1336, %v577
  %v1383 = vadd.f32 %v1375, %v581
  %v1384 = vadd.f32 %v1377, %v585
  %v1385 = vxor.u32 %v1381, 2147483648
  %v1386 = vmul.f32 %v1385, 1.442695
  %v1387 = vpow.pop %v1386
  %v1388 = vadd.f32 %v1387, 1.0
  %v1389 = vrcp.pop %v1388
  %v1390 = vmul.f32 1.0, %v1389
  %v1391 = vxor.u32 %v1382, 2147483648
  %v1392 = vmul.f32 %v1391, 1.442695
  %v1393 = vpow.pop %v1392
  %v1394 = vadd.f32 %v1393, 1.0
  %v1395 = vrcp.pop %v1394
  %v1396 = vmul.f32 1.0, %v1395
  %v1397 = vtanh.pop %v1383
  %v1398 = vxor.u32 %v1384, 2147483648
  %v1399 = vmul.f32 %v1398, 1.442695
  %v1400 = vpow.pop %v1399
  %v1401 = vadd.f32 %v1400, 1.0
  %v1402 = vrcp.pop %v1401
  %v1403 = vmul.f32 1.0, %v1402
  %v1404 = vmul.f32 %v1396, %v1208
  %v1405 = vmul.f32 %v1390, %v1397
  %v1406 = vadd.f32 %v1404, %v1405
  %v1407 = vtanh.pop %v1406
  %v1408 = vmul.f32 %v1403, %v1407
  %s1409 = scalar_lea.vmem %s4, 8
  %1410 = vst [vmem:[%s1409] sm:$0x3] %v1408
  %s1411 = scalar_lea.vmem %s0, 10
  %v1412 = vld [vmem:[%s1411] sm:$0x3]
  %v1413 = vpack.c.bf16 %v1412, %v1412
  %v1414 = vpack.c.bf16 %v1408, %v1408
  %1415 = vmatprep.subr.bf16.mxu0 %v210
  %1416 = vmatpush1.bf16.msra.mxu0 %v209
  %1417 = vmatprep.subr.bf16.mxu0 %v206
  %1418 = vmatpush1.bf16.msra.mxu0 %v205
  %1419 = vmatprep.subr.bf16.mxu0 %v202
  %1420 = vmatpush1.bf16.msra.mxu0 %v201
  %1421 = vmatprep.subr.bf16.mxu0 %v198
  %1422 = vmatpush1.bf16.msra.mxu0 %v197
  %1423 = vmatprep.subr.bf16.mxu0 %v194
  %1424 = vmatpush1.bf16.msra.mxu0 %v193
  %1425 = vmatprep.subr.bf16.mxu0 %v190
  %1426 = vmatpush1.bf16.msra.mxu0 %v189
  %1427 = vmatprep.subr.bf16.mxu0 %v186
  %1428 = vmatpush1.bf16.msra.mxu0 %v185
  %1429 = vmatprep.subr.bf16.mxu0 %v182
  %1430 = vmatpush1.bf16.msra.mxu0 %v181
  %1431 = vmatprep.subr.bf16.mxu0 0
  %1432 = vmatpush2.bf16.msra.mxu0 0
  %1433 = vmatprep.subr.bf16.mxu0 0
  %1434 = vmatpush2.bf16.msra.mxu0 0
  %1435 = vmatprep.subr.bf16.mxu0 0
  %1436 = vmatpush2.bf16.msra.mxu0 0
  %1437 = vmatprep.subr.bf16.mxu0 0
  %1438 = vmatpush2.bf16.msra.mxu0 0
  %1439 = vmatprep.subr.bf16.mxu0 0
  %1440 = vmatpush2.bf16.msra.mxu0 0
  %1441 = vmatprep.subr.bf16.mxu0 0
  %1442 = vmatpush2.bf16.msra.mxu0 0
  %1443 = vmatprep.subr.bf16.mxu0 0
  %1444 = vmatpush2.bf16.msra.mxu0 0
  %1445 = vmatprep.subr.bf16.mxu0 0
  %1446 = vmatpush2.bf16.msra.mxu0 0
  %1447 = vmatprep.mubr.bf16.mxu0 0
  %1448 = vmatmul.mubr.bf16.gmra.mxu0 %v1414
  %v1449 = vpop.f32.mrf.mxu0
  %v1450 = vadd.f32 0.0, %v1449
  %v1451 = vpop.f32.mrf.mxu0
  %v1452 = vadd.f32 0.0, %v1451
  %v1453 = vpop.f32.mrf.mxu0
  %v1454 = vpop.f32.mrf.mxu0
  %1455 = vdwg.mxu0
  %1456 = vmatprep.subr.bf16.mxu0 %v212
  %1457 = vmatpush1.bf16.msra.mxu0 %v211
  %1458 = vmatprep.subr.bf16.mxu0 %v208
  %1459 = vmatpush1.bf16.msra.mxu0 %v207
  %1460 = vmatprep.subr.bf16.mxu0 %v204
  %1461 = vmatpush1.bf16.msra.mxu0 %v203
  %1462 = vmatprep.subr.bf16.mxu0 %v200
  %1463 = vmatpush1.bf16.msra.mxu0 %v199
  %1464 = vmatprep.subr.bf16.mxu0 %v196
  %1465 = vmatpush1.bf16.msra.mxu0 %v195
  %1466 = vmatprep.subr.bf16.mxu0 %v192
  %1467 = vmatpush1.bf16.msra.mxu0 %v191
  %1468 = vmatprep.subr.bf16.mxu0 %v188
  %1469 = vmatpush1.bf16.msra.mxu0 %v187
  %1470 = vmatprep.subr.bf16.mxu0 %v184
  %1471 = vmatpush1.bf16.msra.mxu0 %v183
  %1472 = vmatprep.subr.bf16.mxu0 0
  %1473 = vmatpush2.bf16.msra.mxu0 0
  %1474 = vmatprep.subr.bf16.mxu0 0
  %1475 = vmatpush2.bf16.msra.mxu0 0
  %1476 = vmatprep.subr.bf16.mxu0 0
  %1477 = vmatpush2.bf16.msra.mxu0 0
  %1478 = vmatprep.subr.bf16.mxu0 0
  %1479 = vmatpush2.bf16.msra.mxu0 0
  %1480 = vmatprep.subr.bf16.mxu0 0
  %1481 = vmatpush2.bf16.msra.mxu0 0
  %1482 = vmatprep.subr.bf16.mxu0 0
  %1483 = vmatpush2.bf16.msra.mxu0 0
  %1484 = vmatprep.subr.bf16.mxu0 0
  %1485 = vmatpush2.bf16.msra.mxu0 0
  %1486 = vmatprep.subr.bf16.mxu0 0
  %1487 = vmatpush2.bf16.msra.mxu0 0
  %1488 = vmatprep.mubr.bf16.mxu0 0
  %1489 = vmatmul.mubr.bf16.gmra.mxu0 %v1414
  %v1490 = vpop.f32.mrf.mxu0
  %v1491 = vadd.f32 0.0, %v1490
  %v1492 = vpop.f32.mrf.mxu0
  %v1493 = vadd.f32 0.0, %v1492
  %v1494 = vpop.f32.mrf.mxu0
  %v1495 = vpop.f32.mrf.mxu0
  %1496 = vdwg.mxu0
  %1497 = vmatprep.subr.bf16.mxu0 %v452
  %1498 = vmatpush1.bf16.msra.mxu0 %v451
  %1499 = vmatprep.subr.bf16.mxu0 %v448
  %1500 = vmatpush1.bf16.msra.mxu0 %v447
  %1501 = vmatprep.subr.bf16.mxu0 %v444
  %1502 = vmatpush1.bf16.msra.mxu0 %v443
  %1503 = vmatprep.subr.bf16.mxu0 %v440
  %1504 = vmatpush1.bf16.msra.mxu0 %v439
  %1505 = vmatprep.subr.bf16.mxu0 %v436
  %1506 = vmatpush1.bf16.msra.mxu0 %v435
  %1507 = vmatprep.subr.bf16.mxu0 %v432
  %1508 = vmatpush1.bf16.msra.mxu0 %v431
  %1509 = vmatprep.subr.bf16.mxu0 %v428
  %1510 = vmatpush1.bf16.msra.mxu0 %v427
  %1511 = vmatprep.subr.bf16.mxu0 %v424
  %1512 = vmatpush1.bf16.msra.mxu0 %v423
  %1513 = vmatprep.subr.bf16.mxu0 0
  %1514 = vmatpush2.bf16.msra.mxu0 0
  %1515 = vmatprep.subr.bf16.mxu0 0
  %1516 = vmatpush2.bf16.msra.mxu0 0
  %1517 = vmatprep.subr.bf16.mxu0 0
  %1518 = vmatpush2.bf16.msra.mxu0 0
  %1519 = vmatprep.subr.bf16.mxu0 0
  %1520 = vmatpush2.bf16.msra.mxu0 0
  %1521 = vmatprep.subr.bf16.mxu0 0
  %1522 = vmatpush2.bf16.msra.mxu0 0
  %1523 = vmatprep.subr.bf16.mxu0 0
  %1524 = vmatpush2.bf16.msra.mxu0 0
  %1525 = vmatprep.subr.bf16.mxu0 0
  %1526 = vmatpush2.bf16.msra.mxu0 0
  %1527 = vmatprep.subr.bf16.mxu0 0
  %1528 = vmatpush2.bf16.msra.mxu0 0
  %1529 = vmatprep.mubr.bf16.mxu0 0
  %1530 = vmatmul.mubr.bf16.gmra.mxu0 %v1413
  %v1531 = vpop.f32.mrf.mxu0
  %v1532 = vadd.f32 %v1450, %v1531
  %v1533 = vpop.f32.mrf.mxu0
  %v1534 = vadd.f32 %v1452, %v1533
  %v1535 = vpop.f32.mrf.mxu0
  %v1536 = vpop.f32.mrf.mxu0
  %1537 = vdwg.mxu0
  %1538 = vmatprep.subr.bf16.mxu0 %v454
  %1539 = vmatpush1.bf16.msra.mxu0 %v453
  %1540 = vmatprep.subr.bf16.mxu0 %v450
  %1541 = vmatpush1.bf16.msra.mxu0 %v449
  %1542 = vmatprep.subr.bf16.mxu0 %v446
  %1543 = vmatpush1.bf16.msra.mxu0 %v445
  %1544 = vmatprep.subr.bf16.mxu0 %v442
  %1545 = vmatpush1.bf16.msra.mxu0 %v441
  %1546 = vmatprep.subr.bf16.mxu0 %v438
  %1547 = vmatpush1.bf16.msra.mxu0 %v437
  %1548 = vmatprep.subr.bf16.mxu0 %v434
  %1549 = vmatpush1.bf16.msra.mxu0 %v433
  %1550 = vmatprep.subr.bf16.mxu0 %v430
  %1551 = vmatpush1.bf16.msra.mxu0 %v429
  %1552 = vmatprep.subr.bf16.mxu0 %v426
  %1553 = vmatpush1.bf16.msra.mxu0 %v425
  %1554 = vmatprep.subr.bf16.mxu0 0
  %1555 = vmatpush2.bf16.msra.mxu0 0
  %1556 = vmatprep.subr.bf16.mxu0 0
  %1557 = vmatpush2.bf16.msra.mxu0 0
  %1558 = vmatprep.subr.bf16.mxu0 0
  %1559 = vmatpush2.bf16.msra.mxu0 0
  %1560 = vmatprep.subr.bf16.mxu0 0
  %1561 = vmatpush2.bf16.msra.mxu0 0
  %1562 = vmatprep.subr.bf16.mxu0 0
  %1563 = vmatpush2.bf16.msra.mxu0 0
  %1564 = vmatprep.subr.bf16.mxu0 0
  %1565 = vmatpush2.bf16.msra.mxu0 0
  %1566 = vmatprep.subr.bf16.mxu0 0
  %1567 = vmatpush2.bf16.msra.mxu0 0
  %1568 = vmatprep.subr.bf16.mxu0 0
  %1569 = vmatpush2.bf16.msra.mxu0 0
  %1570 = vmatprep.mubr.bf16.mxu0 0
  %1571 = vmatmul.mubr.bf16.gmra.mxu0 %v1413
  %v1572 = vpop.f32.mrf.mxu0
  %v1573 = vadd.f32 %v1491, %v1572
  %v1574 = vpop.f32.mrf.mxu0
  %v1575 = vadd.f32 %v1493, %v1574
  %v1576 = vpop.f32.mrf.mxu0
  %v1577 = vpop.f32.mrf.mxu0
  %1578 = vdwg.mxu0
  %v1579 = vadd.f32 %v1532, %v573
  %v1580 = vadd.f32 %v1534, %v577
  %v1581 = vadd.f32 %v1573, %v581
  %v1582 = vadd.f32 %v1575, %v585
  %v1583 = vxor.u32 %v1579, 2147483648
  %v1584 = vmul.f32 %v1583, 1.442695
  %v1585 = vpow.pop %v1584
  %v1586 = vadd.f32 %v1585, 1.0
  %v1587 = vrcp.pop %v1586
  %v1588 = vmul.f32 1.0, %v1587
  %v1589 = vxor.u32 %v1580, 2147483648
  %v1590 = vmul.f32 %v1589, 1.442695
  %v1591 = vpow.pop %v1590
  %v1592 = vadd.f32 %v1591, 1.0
  %v1593 = vrcp.pop %v1592
  %v1594 = vmul.f32 1.0, %v1593
  %v1595 = vtanh.pop %v1581
  %v1596 = vxor.u32 %v1582, 2147483648
  %v1597 = vmul.f32 %v1596, 1.442695
  %v1598 = vpow.pop %v1597
  %v1599 = vadd.f32 %v1598, 1.0
  %v1600 = vrcp.pop %v1599
  %v1601 = vmul.f32 1.0, %v1600
  %v1602 = vmul.f32 %v1594, %v1406
  %v1603 = vmul.f32 %v1588, %v1595
  %v1604 = vadd.f32 %v1602, %v1603
  %v1605 = vtanh.pop %v1604
  %v1606 = vmul.f32 %v1601, %v1605
  %s1607 = scalar_lea.vmem %s4, 10
  %1608 = vst [vmem:[%s1607] sm:$0x3] %v1606
  %s1609 = scalar_lea.vmem %s0, 12
  %v1610 = vld [vmem:[%s1609] sm:$0x3]
  %v1611 = vpack.c.bf16 %v1610, %v1610
  %v1612 = vpack.c.bf16 %v1606, %v1606
  %1613 = vmatprep.subr.bf16.mxu0 %v210
  %1614 = vmatpush1.bf16.msra.mxu0 %v209
  %1615 = vmatprep.subr.bf16.mxu0 %v206
  %1616 = vmatpush1.bf16.msra.mxu0 %v205
  %1617 = vmatprep.subr.bf16.mxu0 %v202
  %1618 = vmatpush1.bf16.msra.mxu0 %v201
  %1619 = vmatprep.subr.bf16.mxu0 %v198
  %1620 = vmatpush1.bf16.msra.mxu0 %v197
  %1621 = vmatprep.subr.bf16.mxu0 %v194
  %1622 = vmatpush1.bf16.msra.mxu0 %v193
  %1623 = vmatprep.subr.bf16.mxu0 %v190
  %1624 = vmatpush1.bf16.msra.mxu0 %v189
  %1625 = vmatprep.subr.bf16.mxu0 %v186
  %1626 = vmatpush1.bf16.msra.mxu0 %v185
  %1627 = vmatprep.subr.bf16.mxu0 %v182
  %1628 = vmatpush1.bf16.msra.mxu0 %v181
  %1629 = vmatprep.subr.bf16.mxu0 0
  %1630 = vmatpush2.bf16.msra.mxu0 0
  %1631 = vmatprep.subr.bf16.mxu0 0
  %1632 = vmatpush2.bf16.msra.mxu0 0
  %1633 = vmatprep.subr.bf16.mxu0 0
  %1634 = vmatpush2.bf16.msra.mxu0 0
  %1635 = vmatprep.subr.bf16.mxu0 0
  %1636 = vmatpush2.bf16.msra.mxu0 0
  %1637 = vmatprep.subr.bf16.mxu0 0
  %1638 = vmatpush2.bf16.msra.mxu0 0
  %1639 = vmatprep.subr.bf16.mxu0 0
  %1640 = vmatpush2.bf16.msra.mxu0 0
  %1641 = vmatprep.subr.bf16.mxu0 0
  %1642 = vmatpush2.bf16.msra.mxu0 0
  %1643 = vmatprep.subr.bf16.mxu0 0
  %1644 = vmatpush2.bf16.msra.mxu0 0
  %1645 = vmatprep.mubr.bf16.mxu0 0
  %1646 = vmatmul.mubr.bf16.gmra.mxu0 %v1612
  %v1647 = vpop.f32.mrf.mxu0
  %v1648 = vadd.f32 0.0, %v1647
  %v1649 = vpop.f32.mrf.mxu0
  %v1650 = vadd.f32 0.0, %v1649
  %v1651 = vpop.f32.mrf.mxu0
  %v1652 = vpop.f32.mrf.mxu0
  %1653 = vdwg.mxu0
  %1654 = vmatprep.subr.bf16.mxu0 %v212
  %1655 = vmatpush1.bf16.msra.mxu0 %v211
  %1656 = vmatprep.subr.bf16.mxu0 %v208
  %1657 = vmatpush1.bf16.msra.mxu0 %v207
  %1658 = vmatprep.subr.bf16.mxu0 %v204
  %1659 = vmatpush1.bf16.msra.mxu0 %v203
  %1660 = vmatprep.subr.bf16.mxu0 %v200
  %1661 = vmatpush1.bf16.msra.mxu0 %v199
  %1662 = vmatprep.subr.bf16.mxu0 %v196
  %1663 = vmatpush1.bf16.msra.mxu0 %v195
  %1664 = vmatprep.subr.bf16.mxu0 %v192
  %1665 = vmatpush1.bf16.msra.mxu0 %v191
  %1666 = vmatprep.subr.bf16.mxu0 %v188
  %1667 = vmatpush1.bf16.msra.mxu0 %v187
  %1668 = vmatprep.subr.bf16.mxu0 %v184
  %1669 = vmatpush1.bf16.msra.mxu0 %v183
  %1670 = vmatprep.subr.bf16.mxu0 0
  %1671 = vmatpush2.bf16.msra.mxu0 0
  %1672 = vmatprep.subr.bf16.mxu0 0
  %1673 = vmatpush2.bf16.msra.mxu0 0
  %1674 = vmatprep.subr.bf16.mxu0 0
  %1675 = vmatpush2.bf16.msra.mxu0 0
  %1676 = vmatprep.subr.bf16.mxu0 0
  %1677 = vmatpush2.bf16.msra.mxu0 0
  %1678 = vmatprep.subr.bf16.mxu0 0
  %1679 = vmatpush2.bf16.msra.mxu0 0
  %1680 = vmatprep.subr.bf16.mxu0 0
  %1681 = vmatpush2.bf16.msra.mxu0 0
  %1682 = vmatprep.subr.bf16.mxu0 0
  %1683 = vmatpush2.bf16.msra.mxu0 0
  %1684 = vmatprep.subr.bf16.mxu0 0
  %1685 = vmatpush2.bf16.msra.mxu0 0
  %1686 = vmatprep.mubr.bf16.mxu0 0
  %1687 = vmatmul.mubr.bf16.gmra.mxu0 %v1612
  %v1688 = vpop.f32.mrf.mxu0
  %v1689 = vadd.f32 0.0, %v1688
  %v1690 = vpop.f32.mrf.mxu0
  %v1691 = vadd.f32 0.0, %v1690
  %v1692 = vpop.f32.mrf.mxu0
  %v1693 = vpop.f32.mrf.mxu0
  %1694 = vdwg.mxu0
  %1695 = vmatprep.subr.bf16.mxu0 %v452
  %1696 = vmatpush1.bf16.msra.mxu0 %v451
  %1697 = vmatprep.subr.bf16.mxu0 %v448
  %1698 = vmatpush1.bf16.msra.mxu0 %v447
  %1699 = vmatprep.subr.bf16.mxu0 %v444
  %1700 = vmatpush1.bf16.msra.mxu0 %v443
  %1701 = vmatprep.subr.bf16.mxu0 %v440
  %1702 = vmatpush1.bf16.msra.mxu0 %v439
  %1703 = vmatprep.subr.bf16.mxu0 %v436
  %1704 = vmatpush1.bf16.msra.mxu0 %v435
  %1705 = vmatprep.subr.bf16.mxu0 %v432
  %1706 = vmatpush1.bf16.msra.mxu0 %v431
  %1707 = vmatprep.subr.bf16.mxu0 %v428
  %1708 = vmatpush1.bf16.msra.mxu0 %v427
  %1709 = vmatprep.subr.bf16.mxu0 %v424
  %1710 = vmatpush1.bf16.msra.mxu0 %v423
  %1711 = vmatprep.subr.bf16.mxu0 0
  %1712 = vmatpush2.bf16.msra.mxu0 0
  %1713 = vmatprep.subr.bf16.mxu0 0
  %1714 = vmatpush2.bf16.msra.mxu0 0
  %1715 = vmatprep.subr.bf16.mxu0 0
  %1716 = vmatpush2.bf16.msra.mxu0 0
  %1717 = vmatprep.subr.bf16.mxu0 0
  %1718 = vmatpush2.bf16.msra.mxu0 0
  %1719 = vmatprep.subr.bf16.mxu0 0
  %1720 = vmatpush2.bf16.msra.mxu0 0
  %1721 = vmatprep.subr.bf16.mxu0 0
  %1722 = vmatpush2.bf16.msra.mxu0 0
  %1723 = vmatprep.subr.bf16.mxu0 0
  %1724 = vmatpush2.bf16.msra.mxu0 0
  %1725 = vmatprep.subr.bf16.mxu0 0
  %1726 = vmatpush2.bf16.msra.mxu0 0
  %1727 = vmatprep.mubr.bf16.mxu0 0
  %1728 = vmatmul.mubr.bf16.gmra.mxu0 %v1611
  %v1729 = vpop.f32.mrf.mxu0
  %v1730 = vadd.f32 %v1648, %v1729
  %v1731 = vpop.f32.mrf.mxu0
  %v1732 = vadd.f32 %v1650, %v1731
  %v1733 = vpop.f32.mrf.mxu0
  %v1734 = vpop.f32.mrf.mxu0
  %1735 = vdwg.mxu0
  %1736 = vmatprep.subr.bf16.mxu0 %v454
  %1737 = vmatpush1.bf16.msra.mxu0 %v453
  %1738 = vmatprep.subr.bf16.mxu0 %v450
  %1739 = vmatpush1.bf16.msra.mxu0 %v449
  %1740 = vmatprep.subr.bf16.mxu0 %v446
  %1741 = vmatpush1.bf16.msra.mxu0 %v445
  %1742 = vmatprep.subr.bf16.mxu0 %v442
  %1743 = vmatpush1.bf16.msra.mxu0 %v441
  %1744 = vmatprep.subr.bf16.mxu0 %v438
  %1745 = vmatpush1.bf16.msra.mxu0 %v437
  %1746 = vmatprep.subr.bf16.mxu0 %v434
  %1747 = vmatpush1.bf16.msra.mxu0 %v433
  %1748 = vmatprep.subr.bf16.mxu0 %v430
  %1749 = vmatpush1.bf16.msra.mxu0 %v429
  %1750 = vmatprep.subr.bf16.mxu0 %v426
  %1751 = vmatpush1.bf16.msra.mxu0 %v425
  %1752 = vmatprep.subr.bf16.mxu0 0
  %1753 = vmatpush2.bf16.msra.mxu0 0
  %1754 = vmatprep.subr.bf16.mxu0 0
  %1755 = vmatpush2.bf16.msra.mxu0 0
  %1756 = vmatprep.subr.bf16.mxu0 0
  %1757 = vmatpush2.bf16.msra.mxu0 0
  %1758 = vmatprep.subr.bf16.mxu0 0
  %1759 = vmatpush2.bf16.msra.mxu0 0
  %1760 = vmatprep.subr.bf16.mxu0 0
  %1761 = vmatpush2.bf16.msra.mxu0 0
  %1762 = vmatprep.subr.bf16.mxu0 0
  %1763 = vmatpush2.bf16.msra.mxu0 0
  %1764 = vmatprep.subr.bf16.mxu0 0
  %1765 = vmatpush2.bf16.msra.mxu0 0
  %1766 = vmatprep.subr.bf16.mxu0 0
  %1767 = vmatpush2.bf16.msra.mxu0 0
  %1768 = vmatprep.mubr.bf16.mxu0 0
  %1769 = vmatmul.mubr.bf16.gmra.mxu0 %v1611
  %v1770 = vpop.f32.mrf.mxu0
  %v1771 = vadd.f32 %v1689, %v1770
  %v1772 = vpop.f32.mrf.mxu0
  %v1773 = vadd.f32 %v1691, %v1772
  %v1774 = vpop.f32.mrf.mxu0
  %v1775 = vpop.f32.mrf.mxu0
  %1776 = vdwg.mxu0
  %v1777 = vadd.f32 %v1730, %v573
  %v1778 = vadd.f32 %v1732, %v577
  %v1779 = vadd.f32 %v1771, %v581
  %v1780 = vadd.f32 %v1773, %v585
  %v1781 = vxor.u32 %v1777, 2147483648
  %v1782 = vmul.f32 %v1781, 1.442695
  %v1783 = vpow.pop %v1782
  %v1784 = vadd.f32 %v1783, 1.0
  %v1785 = vrcp.pop %v1784
  %v1786 = vmul.f32 1.0, %v1785
  %v1787 = vxor.u32 %v1778, 2147483648
  %v1788 = vmul.f32 %v1787, 1.442695
  %v1789 = vpow.pop %v1788
  %v1790 = vadd.f32 %v1789, 1.0
  %v1791 = vrcp.pop %v1790
  %v1792 = vmul.f32 1.0, %v1791
  %v1793 = vtanh.pop %v1779
  %v1794 = vxor.u32 %v1780, 2147483648
  %v1795 = vmul.f32 %v1794, 1.442695
  %v1796 = vpow.pop %v1795
  %v1797 = vadd.f32 %v1796, 1.0
  %v1798 = vrcp.pop %v1797
  %v1799 = vmul.f32 1.0, %v1798
  %v1800 = vmul.f32 %v1792, %v1604
  %v1801 = vmul.f32 %v1786, %v1793
  %v1802 = vadd.f32 %v1800, %v1801
  %v1803 = vtanh.pop %v1802
  %v1804 = vmul.f32 %v1799, %v1803
  %s1805 = scalar_lea.vmem %s4, 12
  %1806 = vst [vmem:[%s1805] sm:$0x3] %v1804
  %s1807 = scalar_lea.vmem %s0, 14
  %v1808 = vld [vmem:[%s1807] sm:$0x3]
  %v1809 = vpack.c.bf16 %v1808, %v1808
  %v1810 = vpack.c.bf16 %v1804, %v1804
  %1811 = vmatprep.subr.bf16.mxu0 %v210
  %1812 = vmatpush1.bf16.msra.mxu0 %v209
  %1813 = vmatprep.subr.bf16.mxu0 %v206
  %1814 = vmatpush1.bf16.msra.mxu0 %v205
  %1815 = vmatprep.subr.bf16.mxu0 %v202
  %1816 = vmatpush1.bf16.msra.mxu0 %v201
  %1817 = vmatprep.subr.bf16.mxu0 %v198
  %1818 = vmatpush1.bf16.msra.mxu0 %v197
  %1819 = vmatprep.subr.bf16.mxu0 %v194
  %1820 = vmatpush1.bf16.msra.mxu0 %v193
  %1821 = vmatprep.subr.bf16.mxu0 %v190
  %1822 = vmatpush1.bf16.msra.mxu0 %v189
  %1823 = vmatprep.subr.bf16.mxu0 %v186
  %1824 = vmatpush1.bf16.msra.mxu0 %v185
  %1825 = vmatprep.subr.bf16.mxu0 %v182
  %1826 = vmatpush1.bf16.msra.mxu0 %v181
  %1827 = vmatprep.subr.bf16.mxu0 0
  %1828 = vmatpush2.bf16.msra.mxu0 0
  %1829 = vmatprep.subr.bf16.mxu0 0
  %1830 = vmatpush2.bf16.msra.mxu0 0
  %1831 = vmatprep.subr.bf16.mxu0 0
  %1832 = vmatpush2.bf16.msra.mxu0 0
  %1833 = vmatprep.subr.bf16.mxu0 0
  %1834 = vmatpush2.bf16.msra.mxu0 0
  %1835 = vmatprep.subr.bf16.mxu0 0
  %1836 = vmatpush2.bf16.msra.mxu0 0
  %1837 = vmatprep.subr.bf16.mxu0 0
  %1838 = vmatpush2.bf16.msra.mxu0 0
  %1839 = vmatprep.subr.bf16.mxu0 0
  %1840 = vmatpush2.bf16.msra.mxu0 0
  %1841 = vmatprep.subr.bf16.mxu0 0
  %1842 = vmatpush2.bf16.msra.mxu0 0
  %1843 = vmatprep.mubr.bf16.mxu0 0
  %1844 = vmatmul.mubr.bf16.gmra.mxu0 %v1810
  %v1845 = vpop.f32.mrf.mxu0
  %v1846 = vadd.f32 0.0, %v1845
  %v1847 = vpop.f32.mrf.mxu0
  %v1848 = vadd.f32 0.0, %v1847
  %v1849 = vpop.f32.mrf.mxu0
  %v1850 = vpop.f32.mrf.mxu0
  %1851 = vdwg.mxu0
  %1852 = vmatprep.subr.bf16.mxu0 %v212
  %1853 = vmatpush1.bf16.msra.mxu0 %v211
  %1854 = vmatprep.subr.bf16.mxu0 %v208
  %1855 = vmatpush1.bf16.msra.mxu0 %v207
  %1856 = vmatprep.subr.bf16.mxu0 %v204
  %1857 = vmatpush1.bf16.msra.mxu0 %v203
  %1858 = vmatprep.subr.bf16.mxu0 %v200
  %1859 = vmatpush1.bf16.msra.mxu0 %v199
  %1860 = vmatprep.subr.bf16.mxu0 %v196
  %1861 = vmatpush1.bf16.msra.mxu0 %v195
  %1862 = vmatprep.subr.bf16.mxu0 %v192
  %1863 = vmatpush1.bf16.msra.mxu0 %v191
  %1864 = vmatprep.subr.bf16.mxu0 %v188
  %1865 = vmatpush1.bf16.msra.mxu0 %v187
  %1866 = vmatprep.subr.bf16.mxu0 %v184
  %1867 = vmatpush1.bf16.msra.mxu0 %v183
  %1868 = vmatprep.subr.bf16.mxu0 0
  %1869 = vmatpush2.bf16.msra.mxu0 0
  %1870 = vmatprep.subr.bf16.mxu0 0
  %1871 = vmatpush2.bf16.msra.mxu0 0
  %1872 = vmatprep.subr.bf16.mxu0 0
  %1873 = vmatpush2.bf16.msra.mxu0 0
  %1874 = vmatprep.subr.bf16.mxu0 0
  %1875 = vmatpush2.bf16.msra.mxu0 0
  %1876 = vmatprep.subr.bf16.mxu0 0
  %1877 = vmatpush2.bf16.msra.mxu0 0
  %1878 = vmatprep.subr.bf16.mxu0 0
  %1879 = vmatpush2.bf16.msra.mxu0 0
  %1880 = vmatprep.subr.bf16.mxu0 0
  %1881 = vmatpush2.bf16.msra.mxu0 0
  %1882 = vmatprep.subr.bf16.mxu0 0
  %1883 = vmatpush2.bf16.msra.mxu0 0
  %1884 = vmatprep.mubr.bf16.mxu0 0
  %1885 = vmatmul.mubr.bf16.gmra.mxu0 %v1810
  %v1886 = vpop.f32.mrf.mxu0
  %v1887 = vadd.f32 0.0, %v1886
  %v1888 = vpop.f32.mrf.mxu0
  %v1889 = vadd.f32 0.0, %v1888
  %v1890 = vpop.f32.mrf.mxu0
  %v1891 = vpop.f32.mrf.mxu0
  %1892 = vdwg.mxu0
  %1893 = vmatprep.subr.bf16.mxu0 %v452
  %1894 = vmatpush1.bf16.msra.mxu0 %v451
  %1895 = vmatprep.subr.bf16.mxu0 %v448
  %1896 = vmatpush1.bf16.msra.mxu0 %v447
  %1897 = vmatprep.subr.bf16.mxu0 %v444
  %1898 = vmatpush1.bf16.msra.mxu0 %v443
  %1899 = vmatprep.subr.bf16.mxu0 %v440
  %1900 = vmatpush1.bf16.msra.mxu0 %v439
  %1901 = vmatprep.subr.bf16.mxu0 %v436
  %1902 = vmatpush1.bf16.msra.mxu0 %v435
  %1903 = vmatprep.subr.bf16.mxu0 %v432
  %1904 = vmatpush1.bf16.msra.mxu0 %v431
  %1905 = vmatprep.subr.bf16.mxu0 %v428
  %1906 = vmatpush1.bf16.msra.mxu0 %v427
  %1907 = vmatprep.subr.bf16.mxu0 %v424
  %1908 = vmatpush1.bf16.msra.mxu0 %v423
  %1909 = vmatprep.subr.bf16.mxu0 0
  %1910 = vmatpush2.bf16.msra.mxu0 0
  %1911 = vmatprep.subr.bf16.mxu0 0
  %1912 = vmatpush2.bf16.msra.mxu0 0
  %1913 = vmatprep.subr.bf16.mxu0 0
  %1914 = vmatpush2.bf16.msra.mxu0 0
  %1915 = vmatprep.subr.bf16.mxu0 0
  %1916 = vmatpush2.bf16.msra.mxu0 0
  %1917 = vmatprep.subr.bf16.mxu0 0
  %1918 = vmatpush2.bf16.msra.mxu0 0
  %1919 = vmatprep.subr.bf16.mxu0 0
  %1920 = vmatpush2.bf16.msra.mxu0 0
  %1921 = vmatprep.subr.bf16.mxu0 0
  %1922 = vmatpush2.bf16.msra.mxu0 0
  %1923 = vmatprep.subr.bf16.mxu0 0
  %1924 = vmatpush2.bf16.msra.mxu0 0
  %1925 = vmatprep.mubr.bf16.mxu0 0
  %1926 = vmatmul.mubr.bf16.gmra.mxu0 %v1809
  %v1927 = vpop.f32.mrf.mxu0
  %v1928 = vadd.f32 %v1846, %v1927
  %v1929 = vpop.f32.mrf.mxu0
  %v1930 = vadd.f32 %v1848, %v1929
  %v1931 = vpop.f32.mrf.mxu0
  %v1932 = vpop.f32.mrf.mxu0
  %1933 = vdwg.mxu0
  %1934 = vmatprep.subr.bf16.mxu0 %v454
  %1935 = vmatpush1.bf16.msra.mxu0 %v453
  %1936 = vmatprep.subr.bf16.mxu0 %v450
  %1937 = vmatpush1.bf16.msra.mxu0 %v449
  %1938 = vmatprep.subr.bf16.mxu0 %v446
  %1939 = vmatpush1.bf16.msra.mxu0 %v445
  %1940 = vmatprep.subr.bf16.mxu0 %v442
  %1941 = vmatpush1.bf16.msra.mxu0 %v441
  %1942 = vmatprep.subr.bf16.mxu0 %v438
  %1943 = vmatpush1.bf16.msra.mxu0 %v437
  %1944 = vmatprep.subr.bf16.mxu0 %v434
  %1945 = vmatpush1.bf16.msra.mxu0 %v433
  %1946 = vmatprep.subr.bf16.mxu0 %v430
  %1947 = vmatpush1.bf16.msra.mxu0 %v429
  %1948 = vmatprep.subr.bf16.mxu0 %v426
  %1949 = vmatpush1.bf16.msra.mxu0 %v425
  %1950 = vmatprep.subr.bf16.mxu0 0
  %1951 = vmatpush2.bf16.msra.mxu0 0
  %1952 = vmatprep.subr.bf16.mxu0 0
  %1953 = vmatpush2.bf16.msra.mxu0 0
  %1954 = vmatprep.subr.bf16.mxu0 0
  %1955 = vmatpush2.bf16.msra.mxu0 0
  %1956 = vmatprep.subr.bf16.mxu0 0
  %1957 = vmatpush2.bf16.msra.mxu0 0
  %1958 = vmatprep.subr.bf16.mxu0 0
  %1959 = vmatpush2.bf16.msra.mxu0 0
  %1960 = vmatprep.subr.bf16.mxu0 0
  %1961 = vmatpush2.bf16.msra.mxu0 0
  %1962 = vmatprep.subr.bf16.mxu0 0
  %1963 = vmatpush2.bf16.msra.mxu0 0
  %1964 = vmatprep.subr.bf16.mxu0 0
  %1965 = vmatpush2.bf16.msra.mxu0 0
  %1966 = vmatprep.mubr.bf16.mxu0 0
  %1967 = vmatmul.mubr.bf16.gmra.mxu0 %v1809
  %v1968 = vpop.f32.mrf.mxu0
  %v1969 = vadd.f32 %v1887, %v1968
  %v1970 = vpop.f32.mrf.mxu0
  %v1971 = vadd.f32 %v1889, %v1970
  %v1972 = vpop.f32.mrf.mxu0
  %v1973 = vpop.f32.mrf.mxu0
  %1974 = vdwg.mxu0
  %v1975 = vadd.f32 %v1928, %v573
  %v1976 = vadd.f32 %v1930, %v577
  %v1977 = vadd.f32 %v1969, %v581
  %v1978 = vadd.f32 %v1971, %v585
  %v1979 = vxor.u32 %v1975, 2147483648
  %v1980 = vmul.f32 %v1979, 1.442695
  %v1981 = vpow.pop %v1980
  %v1982 = vadd.f32 %v1981, 1.0
  %v1983 = vrcp.pop %v1982
  %v1984 = vmul.f32 1.0, %v1983
  %v1985 = vxor.u32 %v1976, 2147483648
  %v1986 = vmul.f32 %v1985, 1.442695
  %v1987 = vpow.pop %v1986
  %v1988 = vadd.f32 %v1987, 1.0
  %v1989 = vrcp.pop %v1988
  %v1990 = vmul.f32 1.0, %v1989
  %v1991 = vtanh.pop %v1977
  %v1992 = vxor.u32 %v1978, 2147483648
  %v1993 = vmul.f32 %v1992, 1.442695
  %v1994 = vpow.pop %v1993
  %v1995 = vadd.f32 %v1994, 1.0
  %v1996 = vrcp.pop %v1995
  %v1997 = vmul.f32 1.0, %v1996
  %v1998 = vmul.f32 %v1990, %v1802
  %v1999 = vmul.f32 %v1984, %v1991
  %v2000 = vadd.f32 %v1998, %v1999
  %v2001 = vtanh.pop %v2000
  %v2002 = vmul.f32 %v1997, %v2001
  %s2003 = scalar_lea.vmem %s4, 14
  %2004 = vst [vmem:[%s2003] sm:$0x3] %v2002
  %s2005 = scalar_lea.vmem %s0, 16
  %v2006 = vld [vmem:[%s2005] sm:$0x3]
  %v2007 = vpack.c.bf16 %v2006, %v2006
  %v2008 = vpack.c.bf16 %v2002, %v2002
  %2009 = vmatprep.subr.bf16.mxu0 %v210
  %2010 = vmatpush1.bf16.msra.mxu0 %v209
  %2011 = vmatprep.subr.bf16.mxu0 %v206
  %2012 = vmatpush1.bf16.msra.mxu0 %v205
  %2013 = vmatprep.subr.bf16.mxu0 %v202
  %2014 = vmatpush1.bf16.msra.mxu0 %v201
  %2015 = vmatprep.subr.bf16.mxu0 %v198
  %2016 = vmatpush1.bf16.msra.mxu0 %v197
  %2017 = vmatprep.subr.bf16.mxu0 %v194
  %2018 = vmatpush1.bf16.msra.mxu0 %v193
  %2019 = vmatprep.subr.bf16.mxu0 %v190
  %2020 = vmatpush1.bf16.msra.mxu0 %v189
  %2021 = vmatprep.subr.bf16.mxu0 %v186
  %2022 = vmatpush1.bf16.msra.mxu0 %v185
  %2023 = vmatprep.subr.bf16.mxu0 %v182
  %2024 = vmatpush1.bf16.msra.mxu0 %v181
  %2025 = vmatprep.subr.bf16.mxu0 0
  %2026 = vmatpush2.bf16.msra.mxu0 0
  %2027 = vmatprep.subr.bf16.mxu0 0
  %2028 = vmatpush2.bf16.msra.mxu0 0
  %2029 = vmatprep.subr.bf16.mxu0 0
  %2030 = vmatpush2.bf16.msra.mxu0 0
  %2031 = vmatprep.subr.bf16.mxu0 0
  %2032 = vmatpush2.bf16.msra.mxu0 0
  %2033 = vmatprep.subr.bf16.mxu0 0
  %2034 = vmatpush2.bf16.msra.mxu0 0
  %2035 = vmatprep.subr.bf16.mxu0 0
  %2036 = vmatpush2.bf16.msra.mxu0 0
  %2037 = vmatprep.subr.bf16.mxu0 0
  %2038 = vmatpush2.bf16.msra.mxu0 0
  %2039 = vmatprep.subr.bf16.mxu0 0
  %2040 = vmatpush2.bf16.msra.mxu0 0
  %2041 = vmatprep.mubr.bf16.mxu0 0
  %2042 = vmatmul.mubr.bf16.gmra.mxu0 %v2008
  %v2043 = vpop.f32.mrf.mxu0
  %v2044 = vadd.f32 0.0, %v2043
  %v2045 = vpop.f32.mrf.mxu0
  %v2046 = vadd.f32 0.0, %v2045
  %v2047 = vpop.f32.mrf.mxu0
  %v2048 = vpop.f32.mrf.mxu0
  %2049 = vdwg.mxu0
  %2050 = vmatprep.subr.bf16.mxu0 %v212
  %2051 = vmatpush1.bf16.msra.mxu0 %v211
  %2052 = vmatprep.subr.bf16.mxu0 %v208
  %2053 = vmatpush1.bf16.msra.mxu0 %v207
  %2054 = vmatprep.subr.bf16.mxu0 %v204
  %2055 = vmatpush1.bf16.msra.mxu0 %v203
  %2056 = vmatprep.subr.bf16.mxu0 %v200
  %2057 = vmatpush1.bf16.msra.mxu0 %v199
  %2058 = vmatprep.subr.bf16.mxu0 %v196
  %2059 = vmatpush1.bf16.msra.mxu0 %v195
  %2060 = vmatprep.subr.bf16.mxu0 %v192
  %2061 = vmatpush1.bf16.msra.mxu0 %v191
  %2062 = vmatprep.subr.bf16.mxu0 %v188
  %2063 = vmatpush1.bf16.msra.mxu0 %v187
  %2064 = vmatprep.subr.bf16.mxu0 %v184
  %2065 = vmatpush1.bf16.msra.mxu0 %v183
  %2066 = vmatprep.subr.bf16.mxu0 0
  %2067 = vmatpush2.bf16.msra.mxu0 0
  %2068 = vmatprep.subr.bf16.mxu0 0
  %2069 = vmatpush2.bf16.msra.mxu0 0
  %2070 = vmatprep.subr.bf16.mxu0 0
  %2071 = vmatpush2.bf16.msra.mxu0 0
  %2072 = vmatprep.subr.bf16.mxu0 0
  %2073 = vmatpush2.bf16.msra.mxu0 0
  %2074 = vmatprep.subr.bf16.mxu0 0
  %2075 = vmatpush2.bf16.msra.mxu0 0
  %2076 = vmatprep.subr.bf16.mxu0 0
  %2077 = vmatpush2.bf16.msra.mxu0 0
  %2078 = vmatprep.subr.bf16.mxu0 0
  %2079 = vmatpush2.bf16.msra.mxu0 0
  %2080 = vmatprep.subr.bf16.mxu0 0
  %2081 = vmatpush2.bf16.msra.mxu0 0
  %2082 = vmatprep.mubr.bf16.mxu0 0
  %2083 = vmatmul.mubr.bf16.gmra.mxu0 %v2008
  %v2084 = vpop.f32.mrf.mxu0
  %v2085 = vadd.f32 0.0, %v2084
  %v2086 = vpop.f32.mrf.mxu0
  %v2087 = vadd.f32 0.0, %v2086
  %v2088 = vpop.f32.mrf.mxu0
  %v2089 = vpop.f32.mrf.mxu0
  %2090 = vdwg.mxu0
  %2091 = vmatprep.subr.bf16.mxu0 %v452
  %2092 = vmatpush1.bf16.msra.mxu0 %v451
  %2093 = vmatprep.subr.bf16.mxu0 %v448
  %2094 = vmatpush1.bf16.msra.mxu0 %v447
  %2095 = vmatprep.subr.bf16.mxu0 %v444
  %2096 = vmatpush1.bf16.msra.mxu0 %v443
  %2097 = vmatprep.subr.bf16.mxu0 %v440
  %2098 = vmatpush1.bf16.msra.mxu0 %v439
  %2099 = vmatprep.subr.bf16.mxu0 %v436
  %2100 = vmatpush1.bf16.msra.mxu0 %v435
  %2101 = vmatprep.subr.bf16.mxu0 %v432
  %2102 = vmatpush1.bf16.msra.mxu0 %v431
  %2103 = vmatprep.subr.bf16.mxu0 %v428
  %2104 = vmatpush1.bf16.msra.mxu0 %v427
  %2105 = vmatprep.subr.bf16.mxu0 %v424
  %2106 = vmatpush1.bf16.msra.mxu0 %v423
  %2107 = vmatprep.subr.bf16.mxu0 0
  %2108 = vmatpush2.bf16.msra.mxu0 0
  %2109 = vmatprep.subr.bf16.mxu0 0
  %2110 = vmatpush2.bf16.msra.mxu0 0
  %2111 = vmatprep.subr.bf16.mxu0 0
  %2112 = vmatpush2.bf16.msra.mxu0 0
  %2113 = vmatprep.subr.bf16.mxu0 0
  %2114 = vmatpush2.bf16.msra.mxu0 0
  %2115 = vmatprep.subr.bf16.mxu0 0
  %2116 = vmatpush2.bf16.msra.mxu0 0
  %2117 = vmatprep.subr.bf16.mxu0 0
  %2118 = vmatpush2.bf16.msra.mxu0 0
  %2119 = vmatprep.subr.bf16.mxu0 0
  %2120 = vmatpush2.bf16.msra.mxu0 0
  %2121 = vmatprep.subr.bf16.mxu0 0
  %2122 = vmatpush2.bf16.msra.mxu0 0
  %2123 = vmatprep.mubr.bf16.mxu0 0
  %2124 = vmatmul.mubr.bf16.gmra.mxu0 %v2007
  %v2125 = vpop.f32.mrf.mxu0
  %v2126 = vadd.f32 %v2044, %v2125
  %v2127 = vpop.f32.mrf.mxu0
  %v2128 = vadd.f32 %v2046, %v2127
  %v2129 = vpop.f32.mrf.mxu0
  %v2130 = vpop.f32.mrf.mxu0
  %2131 = vdwg.mxu0
  %2132 = vmatprep.subr.bf16.mxu0 %v454
  %2133 = vmatpush1.bf16.msra.mxu0 %v453
  %2134 = vmatprep.subr.bf16.mxu0 %v450
  %2135 = vmatpush1.bf16.msra.mxu0 %v449
  %2136 = vmatprep.subr.bf16.mxu0 %v446
  %2137 = vmatpush1.bf16.msra.mxu0 %v445
  %2138 = vmatprep.subr.bf16.mxu0 %v442
  %2139 = vmatpush1.bf16.msra.mxu0 %v441
  %2140 = vmatprep.subr.bf16.mxu0 %v438
  %2141 = vmatpush1.bf16.msra.mxu0 %v437
  %2142 = vmatprep.subr.bf16.mxu0 %v434
  %2143 = vmatpush1.bf16.msra.mxu0 %v433
  %2144 = vmatprep.subr.bf16.mxu0 %v430
  %2145 = vmatpush1.bf16.msra.mxu0 %v429
  %2146 = vmatprep.subr.bf16.mxu0 %v426
  %2147 = vmatpush1.bf16.msra.mxu0 %v425
  %2148 = vmatprep.subr.bf16.mxu0 0
  %2149 = vmatpush2.bf16.msra.mxu0 0
  %2150 = vmatprep.subr.bf16.mxu0 0
  %2151 = vmatpush2.bf16.msra.mxu0 0
  %2152 = vmatprep.subr.bf16.mxu0 0
  %2153 = vmatpush2.bf16.msra.mxu0 0
  %2154 = vmatprep.subr.bf16.mxu0 0
  %2155 = vmatpush2.bf16.msra.mxu0 0
  %2156 = vmatprep.subr.bf16.mxu0 0
  %2157 = vmatpush2.bf16.msra.mxu0 0
  %2158 = vmatprep.subr.bf16.mxu0 0
  %2159 = vmatpush2.bf16.msra.mxu0 0
  %2160 = vmatprep.subr.bf16.mxu0 0
  %2161 = vmatpush2.bf16.msra.mxu0 0
  %2162 = vmatprep.subr.bf16.mxu0 0
  %2163 = vmatpush2.bf16.msra.mxu0 0
  %2164 = vmatprep.mubr.bf16.mxu0 0
  %2165 = vmatmul.mubr.bf16.gmra.mxu0 %v2007
  %v2166 = vpop.f32.mrf.mxu0
  %v2167 = vadd.f32 %v2085, %v2166
  %v2168 = vpop.f32.mrf.mxu0
  %v2169 = vadd.f32 %v2087, %v2168
  %v2170 = vpop.f32.mrf.mxu0
  %v2171 = vpop.f32.mrf.mxu0
  %2172 = vdwg.mxu0
  %v2173 = vadd.f32 %v2126, %v573
  %v2174 = vadd.f32 %v2128, %v577
  %v2175 = vadd.f32 %v2167, %v581
  %v2176 = vadd.f32 %v2169, %v585
  %v2177 = vxor.u32 %v2173, 2147483648
  %v2178 = vmul.f32 %v2177, 1.442695
  %v2179 = vpow.pop %v2178
  %v2180 = vadd.f32 %v2179, 1.0
  %v2181 = vrcp.pop %v2180
  %v2182 = vmul.f32 1.0, %v2181
  %v2183 = vxor.u32 %v2174, 2147483648
  %v2184 = vmul.f32 %v2183, 1.442695
  %v2185 = vpow.pop %v2184
  %v2186 = vadd.f32 %v2185, 1.0
  %v2187 = vrcp.pop %v2186
  %v2188 = vmul.f32 1.0, %v2187
  %v2189 = vtanh.pop %v2175
  %v2190 = vxor.u32 %v2176, 2147483648
  %v2191 = vmul.f32 %v2190, 1.442695
  %v2192 = vpow.pop %v2191
  %v2193 = vadd.f32 %v2192, 1.0
  %v2194 = vrcp.pop %v2193
  %v2195 = vmul.f32 1.0, %v2194
  %v2196 = vmul.f32 %v2188, %v2000
  %v2197 = vmul.f32 %v2182, %v2189
  %v2198 = vadd.f32 %v2196, %v2197
  %v2199 = vtanh.pop %v2198
  %v2200 = vmul.f32 %v2195, %v2199
  %s2201 = scalar_lea.vmem %s4, 16
  %2202 = vst [vmem:[%s2201] sm:$0x3] %v2200
  %s2203 = scalar_lea.vmem %s0, 18
  %v2204 = vld [vmem:[%s2203] sm:$0x3]
  %v2205 = vpack.c.bf16 %v2204, %v2204
  %v2206 = vpack.c.bf16 %v2200, %v2200
  %2207 = vmatprep.subr.bf16.mxu0 %v210
  %2208 = vmatpush1.bf16.msra.mxu0 %v209
  %2209 = vmatprep.subr.bf16.mxu0 %v206
  %2210 = vmatpush1.bf16.msra.mxu0 %v205
  %2211 = vmatprep.subr.bf16.mxu0 %v202
  %2212 = vmatpush1.bf16.msra.mxu0 %v201
  %2213 = vmatprep.subr.bf16.mxu0 %v198
  %2214 = vmatpush1.bf16.msra.mxu0 %v197
  %2215 = vmatprep.subr.bf16.mxu0 %v194
  %2216 = vmatpush1.bf16.msra.mxu0 %v193
  %2217 = vmatprep.subr.bf16.mxu0 %v190
  %2218 = vmatpush1.bf16.msra.mxu0 %v189
  %2219 = vmatprep.subr.bf16.mxu0 %v186
  %2220 = vmatpush1.bf16.msra.mxu0 %v185
  %2221 = vmatprep.subr.bf16.mxu0 %v182
  %2222 = vmatpush1.bf16.msra.mxu0 %v181
  %2223 = vmatprep.subr.bf16.mxu0 0
  %2224 = vmatpush2.bf16.msra.mxu0 0
  %2225 = vmatprep.subr.bf16.mxu0 0
  %2226 = vmatpush2.bf16.msra.mxu0 0
  %2227 = vmatprep.subr.bf16.mxu0 0
  %2228 = vmatpush2.bf16.msra.mxu0 0
  %2229 = vmatprep.subr.bf16.mxu0 0
  %2230 = vmatpush2.bf16.msra.mxu0 0
  %2231 = vmatprep.subr.bf16.mxu0 0
  %2232 = vmatpush2.bf16.msra.mxu0 0
  %2233 = vmatprep.subr.bf16.mxu0 0
  %2234 = vmatpush2.bf16.msra.mxu0 0
  %2235 = vmatprep.subr.bf16.mxu0 0
  %2236 = vmatpush2.bf16.msra.mxu0 0
  %2237 = vmatprep.subr.bf16.mxu0 0
  %2238 = vmatpush2.bf16.msra.mxu0 0
  %2239 = vmatprep.mubr.bf16.mxu0 0
  %2240 = vmatmul.mubr.bf16.gmra.mxu0 %v2206
  %v2241 = vpop.f32.mrf.mxu0
  %v2242 = vadd.f32 0.0, %v2241
  %v2243 = vpop.f32.mrf.mxu0
  %v2244 = vadd.f32 0.0, %v2243
  %v2245 = vpop.f32.mrf.mxu0
  %v2246 = vpop.f32.mrf.mxu0
  %2247 = vdwg.mxu0
  %2248 = vmatprep.subr.bf16.mxu0 %v212
  %2249 = vmatpush1.bf16.msra.mxu0 %v211
  %2250 = vmatprep.subr.bf16.mxu0 %v208
  %2251 = vmatpush1.bf16.msra.mxu0 %v207
  %2252 = vmatprep.subr.bf16.mxu0 %v204
  %2253 = vmatpush1.bf16.msra.mxu0 %v203
  %2254 = vmatprep.subr.bf16.mxu0 %v200
  %2255 = vmatpush1.bf16.msra.mxu0 %v199
  %2256 = vmatprep.subr.bf16.mxu0 %v196
  %2257 = vmatpush1.bf16.msra.mxu0 %v195
  %2258 = vmatprep.subr.bf16.mxu0 %v192
  %2259 = vmatpush1.bf16.msra.mxu0 %v191
  %2260 = vmatprep.subr.bf16.mxu0 %v188
  %2261 = vmatpush1.bf16.msra.mxu0 %v187
  %2262 = vmatprep.subr.bf16.mxu0 %v184
  %2263 = vmatpush1.bf16.msra.mxu0 %v183
  %2264 = vmatprep.subr.bf16.mxu0 0
  %2265 = vmatpush2.bf16.msra.mxu0 0
  %2266 = vmatprep.subr.bf16.mxu0 0
  %2267 = vmatpush2.bf16.msra.mxu0 0
  %2268 = vmatprep.subr.bf16.mxu0 0
  %2269 = vmatpush2.bf16.msra.mxu0 0
  %2270 = vmatprep.subr.bf16.mxu0 0
  %2271 = vmatpush2.bf16.msra.mxu0 0
  %2272 = vmatprep.subr.bf16.mxu0 0
  %2273 = vmatpush2.bf16.msra.mxu0 0
  %2274 = vmatprep.subr.bf16.mxu0 0
  %2275 = vmatpush2.bf16.msra.mxu0 0
  %2276 = vmatprep.subr.bf16.mxu0 0
  %2277 = vmatpush2.bf16.msra.mxu0 0
  %2278 = vmatprep.subr.bf16.mxu0 0
  %2279 = vmatpush2.bf16.msra.mxu0 0
  %2280 = vmatprep.mubr.bf16.mxu0 0
  %2281 = vmatmul.mubr.bf16.gmra.mxu0 %v2206
  %v2282 = vpop.f32.mrf.mxu0
  %v2283 = vadd.f32 0.0, %v2282
  %v2284 = vpop.f32.mrf.mxu0
  %v2285 = vadd.f32 0.0, %v2284
  %v2286 = vpop.f32.mrf.mxu0
  %v2287 = vpop.f32.mrf.mxu0
  %2288 = vdwg.mxu0
  %2289 = vmatprep.subr.bf16.mxu0 %v452
  %2290 = vmatpush1.bf16.msra.mxu0 %v451
  %2291 = vmatprep.subr.bf16.mxu0 %v448
  %2292 = vmatpush1.bf16.msra.mxu0 %v447
  %2293 = vmatprep.subr.bf16.mxu0 %v444
  %2294 = vmatpush1.bf16.msra.mxu0 %v443
  %2295 = vmatprep.subr.bf16.mxu0 %v440
  %2296 = vmatpush1.bf16.msra.mxu0 %v439
  %2297 = vmatprep.subr.bf16.mxu0 %v436
  %2298 = vmatpush1.bf16.msra.mxu0 %v435
  %2299 = vmatprep.subr.bf16.mxu0 %v432
  %2300 = vmatpush1.bf16.msra.mxu0 %v431
  %2301 = vmatprep.subr.bf16.mxu0 %v428
  %2302 = vmatpush1.bf16.msra.mxu0 %v427
  %2303 = vmatprep.subr.bf16.mxu0 %v424
  %2304 = vmatpush1.bf16.msra.mxu0 %v423
  %2305 = vmatprep.subr.bf16.mxu0 0
  %2306 = vmatpush2.bf16.msra.mxu0 0
  %2307 = vmatprep.subr.bf16.mxu0 0
  %2308 = vmatpush2.bf16.msra.mxu0 0
  %2309 = vmatprep.subr.bf16.mxu0 0
  %2310 = vmatpush2.bf16.msra.mxu0 0
  %2311 = vmatprep.subr.bf16.mxu0 0
  %2312 = vmatpush2.bf16.msra.mxu0 0
  %2313 = vmatprep.subr.bf16.mxu0 0
  %2314 = vmatpush2.bf16.msra.mxu0 0
  %2315 = vmatprep.subr.bf16.mxu0 0
  %2316 = vmatpush2.bf16.msra.mxu0 0
  %2317 = vmatprep.subr.bf16.mxu0 0
  %2318 = vmatpush2.bf16.msra.mxu0 0
  %2319 = vmatprep.subr.bf16.mxu0 0
  %2320 = vmatpush2.bf16.msra.mxu0 0
  %2321 = vmatprep.mubr.bf16.mxu0 0
  %2322 = vmatmul.mubr.bf16.gmra.mxu0 %v2205
  %v2323 = vpop.f32.mrf.mxu0
  %v2324 = vadd.f32 %v2242, %v2323
  %v2325 = vpop.f32.mrf.mxu0
  %v2326 = vadd.f32 %v2244, %v2325
  %v2327 = vpop.f32.mrf.mxu0
  %v2328 = vpop.f32.mrf.mxu0
  %2329 = vdwg.mxu0
  %2330 = vmatprep.subr.bf16.mxu0 %v454
  %2331 = vmatpush1.bf16.msra.mxu0 %v453
  %2332 = vmatprep.subr.bf16.mxu0 %v450
  %2333 = vmatpush1.bf16.msra.mxu0 %v449
  %2334 = vmatprep.subr.bf16.mxu0 %v446
  %2335 = vmatpush1.bf16.msra.mxu0 %v445
  %2336 = vmatprep.subr.bf16.mxu0 %v442
  %2337 = vmatpush1.bf16.msra.mxu0 %v441
  %2338 = vmatprep.subr.bf16.mxu0 %v438
  %2339 = vmatpush1.bf16.msra.mxu0 %v437
  %2340 = vmatprep.subr.bf16.mxu0 %v434
  %2341 = vmatpush1.bf16.msra.mxu0 %v433
  %2342 = vmatprep.subr.bf16.mxu0 %v430
  %2343 = vmatpush1.bf16.msra.mxu0 %v429
  %2344 = vmatprep.subr.bf16.mxu0 %v426
  %2345 = vmatpush1.bf16.msra.mxu0 %v425
  %2346 = vmatprep.subr.bf16.mxu0 0
  %2347 = vmatpush2.bf16.msra.mxu0 0
  %2348 = vmatprep.subr.bf16.mxu0 0
  %2349 = vmatpush2.bf16.msra.mxu0 0
  %2350 = vmatprep.subr.bf16.mxu0 0
  %2351 = vmatpush2.bf16.msra.mxu0 0
  %2352 = vmatprep.subr.bf16.mxu0 0
  %2353 = vmatpush2.bf16.msra.mxu0 0
  %2354 = vmatprep.subr.bf16.mxu0 0
  %2355 = vmatpush2.bf16.msra.mxu0 0
  %2356 = vmatprep.subr.bf16.mxu0 0
  %2357 = vmatpush2.bf16.msra.mxu0 0
  %2358 = vmatprep.subr.bf16.mxu0 0
  %2359 = vmatpush2.bf16.msra.mxu0 0
  %2360 = vmatprep.subr.bf16.mxu0 0
  %2361 = vmatpush2.bf16.msra.mxu0 0
  %2362 = vmatprep.mubr.bf16.mxu0 0
  %2363 = vmatmul.mubr.bf16.gmra.mxu0 %v2205
  %v2364 = vpop.f32.mrf.mxu0
  %v2365 = vadd.f32 %v2283, %v2364
  %v2366 = vpop.f32.mrf.mxu0
  %v2367 = vadd.f32 %v2285, %v2366
  %v2368 = vpop.f32.mrf.mxu0
  %v2369 = vpop.f32.mrf.mxu0
  %2370 = vdwg.mxu0
  %v2371 = vadd.f32 %v2324, %v573
  %v2372 = vadd.f32 %v2326, %v577
  %v2373 = vadd.f32 %v2365, %v581
  %v2374 = vadd.f32 %v2367, %v585
  %v2375 = vxor.u32 %v2371, 2147483648
  %v2376 = vmul.f32 %v2375, 1.442695
  %v2377 = vpow.pop %v2376
  %v2378 = vadd.f32 %v2377, 1.0
  %v2379 = vrcp.pop %v2378
  %v2380 = vmul.f32 1.0, %v2379
  %v2381 = vxor.u32 %v2372, 2147483648
  %v2382 = vmul.f32 %v2381, 1.442695
  %v2383 = vpow.pop %v2382
  %v2384 = vadd.f32 %v2383, 1.0
  %v2385 = vrcp.pop %v2384
  %v2386 = vmul.f32 1.0, %v2385
  %v2387 = vtanh.pop %v2373
  %v2388 = vxor.u32 %v2374, 2147483648
  %v2389 = vmul.f32 %v2388, 1.442695
  %v2390 = vpow.pop %v2389
  %v2391 = vadd.f32 %v2390, 1.0
  %v2392 = vrcp.pop %v2391
  %v2393 = vmul.f32 1.0, %v2392
  %v2394 = vmul.f32 %v2386, %v2198
  %v2395 = vmul.f32 %v2380, %v2387
  %v2396 = vadd.f32 %v2394, %v2395
  %v2397 = vtanh.pop %v2396
  %v2398 = vmul.f32 %v2393, %v2397
  %s2399 = scalar_lea.vmem %s4, 18
  %2400 = vst [vmem:[%s2399] sm:$0x3] %v2398
  %s2401 = scalar_lea.vmem %s0, 20
  %v2402 = vld [vmem:[%s2401] sm:$0x3]
  %v2403 = vpack.c.bf16 %v2402, %v2402
  %v2404 = vpack.c.bf16 %v2398, %v2398
  %2405 = vmatprep.subr.bf16.mxu0 %v210
  %2406 = vmatpush1.bf16.msra.mxu0 %v209
  %2407 = vmatprep.subr.bf16.mxu0 %v206
  %2408 = vmatpush1.bf16.msra.mxu0 %v205
  %2409 = vmatprep.subr.bf16.mxu0 %v202
  %2410 = vmatpush1.bf16.msra.mxu0 %v201
  %2411 = vmatprep.subr.bf16.mxu0 %v198
  %2412 = vmatpush1.bf16.msra.mxu0 %v197
  %2413 = vmatprep.subr.bf16.mxu0 %v194
  %2414 = vmatpush1.bf16.msra.mxu0 %v193
  %2415 = vmatprep.subr.bf16.mxu0 %v190
  %2416 = vmatpush1.bf16.msra.mxu0 %v189
  %2417 = vmatprep.subr.bf16.mxu0 %v186
  %2418 = vmatpush1.bf16.msra.mxu0 %v185
  %2419 = vmatprep.subr.bf16.mxu0 %v182
  %2420 = vmatpush1.bf16.msra.mxu0 %v181
  %2421 = vmatprep.subr.bf16.mxu0 0
  %2422 = vmatpush2.bf16.msra.mxu0 0
  %2423 = vmatprep.subr.bf16.mxu0 0
  %2424 = vmatpush2.bf16.msra.mxu0 0
  %2425 = vmatprep.subr.bf16.mxu0 0
  %2426 = vmatpush2.bf16.msra.mxu0 0
  %2427 = vmatprep.subr.bf16.mxu0 0
  %2428 = vmatpush2.bf16.msra.mxu0 0
  %2429 = vmatprep.subr.bf16.mxu0 0
  %2430 = vmatpush2.bf16.msra.mxu0 0
  %2431 = vmatprep.subr.bf16.mxu0 0
  %2432 = vmatpush2.bf16.msra.mxu0 0
  %2433 = vmatprep.subr.bf16.mxu0 0
  %2434 = vmatpush2.bf16.msra.mxu0 0
  %2435 = vmatprep.subr.bf16.mxu0 0
  %2436 = vmatpush2.bf16.msra.mxu0 0
  %2437 = vmatprep.mubr.bf16.mxu0 0
  %2438 = vmatmul.mubr.bf16.gmra.mxu0 %v2404
  %v2439 = vpop.f32.mrf.mxu0
  %v2440 = vadd.f32 0.0, %v2439
  %v2441 = vpop.f32.mrf.mxu0
  %v2442 = vadd.f32 0.0, %v2441
  %v2443 = vpop.f32.mrf.mxu0
  %v2444 = vpop.f32.mrf.mxu0
  %2445 = vdwg.mxu0
  %2446 = vmatprep.subr.bf16.mxu0 %v212
  %2447 = vmatpush1.bf16.msra.mxu0 %v211
  %2448 = vmatprep.subr.bf16.mxu0 %v208
  %2449 = vmatpush1.bf16.msra.mxu0 %v207
  %2450 = vmatprep.subr.bf16.mxu0 %v204
  %2451 = vmatpush1.bf16.msra.mxu0 %v203
  %2452 = vmatprep.subr.bf16.mxu0 %v200
  %2453 = vmatpush1.bf16.msra.mxu0 %v199
  %2454 = vmatprep.subr.bf16.mxu0 %v196
  %2455 = vmatpush1.bf16.msra.mxu0 %v195
  %2456 = vmatprep.subr.bf16.mxu0 %v192
  %2457 = vmatpush1.bf16.msra.mxu0 %v191
  %2458 = vmatprep.subr.bf16.mxu0 %v188
  %2459 = vmatpush1.bf16.msra.mxu0 %v187
  %2460 = vmatprep.subr.bf16.mxu0 %v184
  %2461 = vmatpush1.bf16.msra.mxu0 %v183
  %2462 = vmatprep.subr.bf16.mxu0 0
  %2463 = vmatpush2.bf16.msra.mxu0 0
  %2464 = vmatprep.subr.bf16.mxu0 0
  %2465 = vmatpush2.bf16.msra.mxu0 0
  %2466 = vmatprep.subr.bf16.mxu0 0
  %2467 = vmatpush2.bf16.msra.mxu0 0
  %2468 = vmatprep.subr.bf16.mxu0 0
  %2469 = vmatpush2.bf16.msra.mxu0 0
  %2470 = vmatprep.subr.bf16.mxu0 0
  %2471 = vmatpush2.bf16.msra.mxu0 0
  %2472 = vmatprep.subr.bf16.mxu0 0
  %2473 = vmatpush2.bf16.msra.mxu0 0
  %2474 = vmatprep.subr.bf16.mxu0 0
  %2475 = vmatpush2.bf16.msra.mxu0 0
  %2476 = vmatprep.subr.bf16.mxu0 0
  %2477 = vmatpush2.bf16.msra.mxu0 0
  %2478 = vmatprep.mubr.bf16.mxu0 0
  %2479 = vmatmul.mubr.bf16.gmra.mxu0 %v2404
  %v2480 = vpop.f32.mrf.mxu0
  %v2481 = vadd.f32 0.0, %v2480
  %v2482 = vpop.f32.mrf.mxu0
  %v2483 = vadd.f32 0.0, %v2482
  %v2484 = vpop.f32.mrf.mxu0
  %v2485 = vpop.f32.mrf.mxu0
  %2486 = vdwg.mxu0
  %2487 = vmatprep.subr.bf16.mxu0 %v452
  %2488 = vmatpush1.bf16.msra.mxu0 %v451
  %2489 = vmatprep.subr.bf16.mxu0 %v448
  %2490 = vmatpush1.bf16.msra.mxu0 %v447
  %2491 = vmatprep.subr.bf16.mxu0 %v444
  %2492 = vmatpush1.bf16.msra.mxu0 %v443
  %2493 = vmatprep.subr.bf16.mxu0 %v440
  %2494 = vmatpush1.bf16.msra.mxu0 %v439
  %2495 = vmatprep.subr.bf16.mxu0 %v436
  %2496 = vmatpush1.bf16.msra.mxu0 %v435
  %2497 = vmatprep.subr.bf16.mxu0 %v432
  %2498 = vmatpush1.bf16.msra.mxu0 %v431
  %2499 = vmatprep.subr.bf16.mxu0 %v428
  %2500 = vmatpush1.bf16.msra.mxu0 %v427
  %2501 = vmatprep.subr.bf16.mxu0 %v424
  %2502 = vmatpush1.bf16.msra.mxu0 %v423
  %2503 = vmatprep.subr.bf16.mxu0 0
  %2504 = vmatpush2.bf16.msra.mxu0 0
  %2505 = vmatprep.subr.bf16.mxu0 0
  %2506 = vmatpush2.bf16.msra.mxu0 0
  %2507 = vmatprep.subr.bf16.mxu0 0
  %2508 = vmatpush2.bf16.msra.mxu0 0
  %2509 = vmatprep.subr.bf16.mxu0 0
  %2510 = vmatpush2.bf16.msra.mxu0 0
  %2511 = vmatprep.subr.bf16.mxu0 0
  %2512 = vmatpush2.bf16.msra.mxu0 0
  %2513 = vmatprep.subr.bf16.mxu0 0
  %2514 = vmatpush2.bf16.msra.mxu0 0
  %2515 = vmatprep.subr.bf16.mxu0 0
  %2516 = vmatpush2.bf16.msra.mxu0 0
  %2517 = vmatprep.subr.bf16.mxu0 0
  %2518 = vmatpush2.bf16.msra.mxu0 0
  %2519 = vmatprep.mubr.bf16.mxu0 0
  %2520 = vmatmul.mubr.bf16.gmra.mxu0 %v2403
  %v2521 = vpop.f32.mrf.mxu0
  %v2522 = vadd.f32 %v2440, %v2521
  %v2523 = vpop.f32.mrf.mxu0
  %v2524 = vadd.f32 %v2442, %v2523
  %v2525 = vpop.f32.mrf.mxu0
  %v2526 = vpop.f32.mrf.mxu0
  %2527 = vdwg.mxu0
  %2528 = vmatprep.subr.bf16.mxu0 %v454
  %2529 = vmatpush1.bf16.msra.mxu0 %v453
  %2530 = vmatprep.subr.bf16.mxu0 %v450
  %2531 = vmatpush1.bf16.msra.mxu0 %v449
  %2532 = vmatprep.subr.bf16.mxu0 %v446
  %2533 = vmatpush1.bf16.msra.mxu0 %v445
  %2534 = vmatprep.subr.bf16.mxu0 %v442
  %2535 = vmatpush1.bf16.msra.mxu0 %v441
  %2536 = vmatprep.subr.bf16.mxu0 %v438
  %2537 = vmatpush1.bf16.msra.mxu0 %v437
  %2538 = vmatprep.subr.bf16.mxu0 %v434
  %2539 = vmatpush1.bf16.msra.mxu0 %v433
  %2540 = vmatprep.subr.bf16.mxu0 %v430
  %2541 = vmatpush1.bf16.msra.mxu0 %v429
  %2542 = vmatprep.subr.bf16.mxu0 %v426
  %2543 = vmatpush1.bf16.msra.mxu0 %v425
  %2544 = vmatprep.subr.bf16.mxu0 0
  %2545 = vmatpush2.bf16.msra.mxu0 0
  %2546 = vmatprep.subr.bf16.mxu0 0
  %2547 = vmatpush2.bf16.msra.mxu0 0
  %2548 = vmatprep.subr.bf16.mxu0 0
  %2549 = vmatpush2.bf16.msra.mxu0 0
  %2550 = vmatprep.subr.bf16.mxu0 0
  %2551 = vmatpush2.bf16.msra.mxu0 0
  %2552 = vmatprep.subr.bf16.mxu0 0
  %2553 = vmatpush2.bf16.msra.mxu0 0
  %2554 = vmatprep.subr.bf16.mxu0 0
  %2555 = vmatpush2.bf16.msra.mxu0 0
  %2556 = vmatprep.subr.bf16.mxu0 0
  %2557 = vmatpush2.bf16.msra.mxu0 0
  %2558 = vmatprep.subr.bf16.mxu0 0
  %2559 = vmatpush2.bf16.msra.mxu0 0
  %2560 = vmatprep.mubr.bf16.mxu0 0
  %2561 = vmatmul.mubr.bf16.gmra.mxu0 %v2403
  %v2562 = vpop.f32.mrf.mxu0
  %v2563 = vadd.f32 %v2481, %v2562
  %v2564 = vpop.f32.mrf.mxu0
  %v2565 = vadd.f32 %v2483, %v2564
  %v2566 = vpop.f32.mrf.mxu0
  %v2567 = vpop.f32.mrf.mxu0
  %2568 = vdwg.mxu0
  %v2569 = vadd.f32 %v2522, %v573
  %v2570 = vadd.f32 %v2524, %v577
  %v2571 = vadd.f32 %v2563, %v581
  %v2572 = vadd.f32 %v2565, %v585
  %v2573 = vxor.u32 %v2569, 2147483648
  %v2574 = vmul.f32 %v2573, 1.442695
  %v2575 = vpow.pop %v2574
  %v2576 = vadd.f32 %v2575, 1.0
  %v2577 = vrcp.pop %v2576
  %v2578 = vmul.f32 1.0, %v2577
  %v2579 = vxor.u32 %v2570, 2147483648
  %v2580 = vmul.f32 %v2579, 1.442695
  %v2581 = vpow.pop %v2580
  %v2582 = vadd.f32 %v2581, 1.0
  %v2583 = vrcp.pop %v2582
  %v2584 = vmul.f32 1.0, %v2583
  %v2585 = vtanh.pop %v2571
  %v2586 = vxor.u32 %v2572, 2147483648
  %v2587 = vmul.f32 %v2586, 1.442695
  %v2588 = vpow.pop %v2587
  %v2589 = vadd.f32 %v2588, 1.0
  %v2590 = vrcp.pop %v2589
  %v2591 = vmul.f32 1.0, %v2590
  %v2592 = vmul.f32 %v2584, %v2396
  %v2593 = vmul.f32 %v2578, %v2585
  %v2594 = vadd.f32 %v2592, %v2593
  %v2595 = vtanh.pop %v2594
  %v2596 = vmul.f32 %v2591, %v2595
  %s2597 = scalar_lea.vmem %s4, 20
  %2598 = vst [vmem:[%s2597] sm:$0x3] %v2596
  %s2599 = scalar_lea.vmem %s0, 22
  %v2600 = vld [vmem:[%s2599] sm:$0x3]
  %v2601 = vpack.c.bf16 %v2600, %v2600
  %v2602 = vpack.c.bf16 %v2596, %v2596
  %2603 = vmatprep.subr.bf16.mxu0 %v210
  %2604 = vmatpush1.bf16.msra.mxu0 %v209
  %2605 = vmatprep.subr.bf16.mxu0 %v206
  %2606 = vmatpush1.bf16.msra.mxu0 %v205
  %2607 = vmatprep.subr.bf16.mxu0 %v202
  %2608 = vmatpush1.bf16.msra.mxu0 %v201
  %2609 = vmatprep.subr.bf16.mxu0 %v198
  %2610 = vmatpush1.bf16.msra.mxu0 %v197
  %2611 = vmatprep.subr.bf16.mxu0 %v194
  %2612 = vmatpush1.bf16.msra.mxu0 %v193
  %2613 = vmatprep.subr.bf16.mxu0 %v190
  %2614 = vmatpush1.bf16.msra.mxu0 %v189
  %2615 = vmatprep.subr.bf16.mxu0 %v186
  %2616 = vmatpush1.bf16.msra.mxu0 %v185
  %2617 = vmatprep.subr.bf16.mxu0 %v182
  %2618 = vmatpush1.bf16.msra.mxu0 %v181
  %2619 = vmatprep.subr.bf16.mxu0 0
  %2620 = vmatpush2.bf16.msra.mxu0 0
  %2621 = vmatprep.subr.bf16.mxu0 0
  %2622 = vmatpush2.bf16.msra.mxu0 0
  %2623 = vmatprep.subr.bf16.mxu0 0
  %2624 = vmatpush2.bf16.msra.mxu0 0
  %2625 = vmatprep.subr.bf16.mxu0 0
  %2626 = vmatpush2.bf16.msra.mxu0 0
  %2627 = vmatprep.subr.bf16.mxu0 0
  %2628 = vmatpush2.bf16.msra.mxu0 0
  %2629 = vmatprep.subr.bf16.mxu0 0
  %2630 = vmatpush2.bf16.msra.mxu0 0
  %2631 = vmatprep.subr.bf16.mxu0 0
  %2632 = vmatpush2.bf16.msra.mxu0 0
  %2633 = vmatprep.subr.bf16.mxu0 0
  %2634 = vmatpush2.bf16.msra.mxu0 0
  %2635 = vmatprep.mubr.bf16.mxu0 0
  %2636 = vmatmul.mubr.bf16.gmra.mxu0 %v2602
  %v2637 = vpop.f32.mrf.mxu0
  %v2638 = vadd.f32 0.0, %v2637
  %v2639 = vpop.f32.mrf.mxu0
  %v2640 = vadd.f32 0.0, %v2639
  %v2641 = vpop.f32.mrf.mxu0
  %v2642 = vpop.f32.mrf.mxu0
  %2643 = vdwg.mxu0
  %2644 = vmatprep.subr.bf16.mxu0 %v212
  %2645 = vmatpush1.bf16.msra.mxu0 %v211
  %2646 = vmatprep.subr.bf16.mxu0 %v208
  %2647 = vmatpush1.bf16.msra.mxu0 %v207
  %2648 = vmatprep.subr.bf16.mxu0 %v204
  %2649 = vmatpush1.bf16.msra.mxu0 %v203
  %2650 = vmatprep.subr.bf16.mxu0 %v200
  %2651 = vmatpush1.bf16.msra.mxu0 %v199
  %2652 = vmatprep.subr.bf16.mxu0 %v196
  %2653 = vmatpush1.bf16.msra.mxu0 %v195
  %2654 = vmatprep.subr.bf16.mxu0 %v192
  %2655 = vmatpush1.bf16.msra.mxu0 %v191
  %2656 = vmatprep.subr.bf16.mxu0 %v188
  %2657 = vmatpush1.bf16.msra.mxu0 %v187
  %2658 = vmatprep.subr.bf16.mxu0 %v184
  %2659 = vmatpush1.bf16.msra.mxu0 %v183
  %2660 = vmatprep.subr.bf16.mxu0 0
  %2661 = vmatpush2.bf16.msra.mxu0 0
  %2662 = vmatprep.subr.bf16.mxu0 0
  %2663 = vmatpush2.bf16.msra.mxu0 0
  %2664 = vmatprep.subr.bf16.mxu0 0
  %2665 = vmatpush2.bf16.msra.mxu0 0
  %2666 = vmatprep.subr.bf16.mxu0 0
  %2667 = vmatpush2.bf16.msra.mxu0 0
  %2668 = vmatprep.subr.bf16.mxu0 0
  %2669 = vmatpush2.bf16.msra.mxu0 0
  %2670 = vmatprep.subr.bf16.mxu0 0
  %2671 = vmatpush2.bf16.msra.mxu0 0
  %2672 = vmatprep.subr.bf16.mxu0 0
  %2673 = vmatpush2.bf16.msra.mxu0 0
  %2674 = vmatprep.subr.bf16.mxu0 0
  %2675 = vmatpush2.bf16.msra.mxu0 0
  %2676 = vmatprep.mubr.bf16.mxu0 0
  %2677 = vmatmul.mubr.bf16.gmra.mxu0 %v2602
  %v2678 = vpop.f32.mrf.mxu0
  %v2679 = vadd.f32 0.0, %v2678
  %v2680 = vpop.f32.mrf.mxu0
  %v2681 = vadd.f32 0.0, %v2680
  %v2682 = vpop.f32.mrf.mxu0
  %v2683 = vpop.f32.mrf.mxu0
  %2684 = vdwg.mxu0
  %2685 = vmatprep.subr.bf16.mxu0 %v452
  %2686 = vmatpush1.bf16.msra.mxu0 %v451
  %2687 = vmatprep.subr.bf16.mxu0 %v448
  %2688 = vmatpush1.bf16.msra.mxu0 %v447
  %2689 = vmatprep.subr.bf16.mxu0 %v444
  %2690 = vmatpush1.bf16.msra.mxu0 %v443
  %2691 = vmatprep.subr.bf16.mxu0 %v440
  %2692 = vmatpush1.bf16.msra.mxu0 %v439
  %2693 = vmatprep.subr.bf16.mxu0 %v436
  %2694 = vmatpush1.bf16.msra.mxu0 %v435
  %2695 = vmatprep.subr.bf16.mxu0 %v432
  %2696 = vmatpush1.bf16.msra.mxu0 %v431
  %2697 = vmatprep.subr.bf16.mxu0 %v428
  %2698 = vmatpush1.bf16.msra.mxu0 %v427
  %2699 = vmatprep.subr.bf16.mxu0 %v424
  %2700 = vmatpush1.bf16.msra.mxu0 %v423
  %2701 = vmatprep.subr.bf16.mxu0 0
  %2702 = vmatpush2.bf16.msra.mxu0 0
  %2703 = vmatprep.subr.bf16.mxu0 0
  %2704 = vmatpush2.bf16.msra.mxu0 0
  %2705 = vmatprep.subr.bf16.mxu0 0
  %2706 = vmatpush2.bf16.msra.mxu0 0
  %2707 = vmatprep.subr.bf16.mxu0 0
  %2708 = vmatpush2.bf16.msra.mxu0 0
  %2709 = vmatprep.subr.bf16.mxu0 0
  %2710 = vmatpush2.bf16.msra.mxu0 0
  %2711 = vmatprep.subr.bf16.mxu0 0
  %2712 = vmatpush2.bf16.msra.mxu0 0
  %2713 = vmatprep.subr.bf16.mxu0 0
  %2714 = vmatpush2.bf16.msra.mxu0 0
  %2715 = vmatprep.subr.bf16.mxu0 0
  %2716 = vmatpush2.bf16.msra.mxu0 0
  %2717 = vmatprep.mubr.bf16.mxu0 0
  %2718 = vmatmul.mubr.bf16.gmra.mxu0 %v2601
  %v2719 = vpop.f32.mrf.mxu0
  %v2720 = vadd.f32 %v2638, %v2719
  %v2721 = vpop.f32.mrf.mxu0
  %v2722 = vadd.f32 %v2640, %v2721
  %v2723 = vpop.f32.mrf.mxu0
  %v2724 = vpop.f32.mrf.mxu0
  %2725 = vdwg.mxu0
  %2726 = vmatprep.subr.bf16.mxu0 %v454
  %2727 = vmatpush1.bf16.msra.mxu0 %v453
  %2728 = vmatprep.subr.bf16.mxu0 %v450
  %2729 = vmatpush1.bf16.msra.mxu0 %v449
  %2730 = vmatprep.subr.bf16.mxu0 %v446
  %2731 = vmatpush1.bf16.msra.mxu0 %v445
  %2732 = vmatprep.subr.bf16.mxu0 %v442
  %2733 = vmatpush1.bf16.msra.mxu0 %v441
  %2734 = vmatprep.subr.bf16.mxu0 %v438
  %2735 = vmatpush1.bf16.msra.mxu0 %v437
  %2736 = vmatprep.subr.bf16.mxu0 %v434
  %2737 = vmatpush1.bf16.msra.mxu0 %v433
  %2738 = vmatprep.subr.bf16.mxu0 %v430
  %2739 = vmatpush1.bf16.msra.mxu0 %v429
  %2740 = vmatprep.subr.bf16.mxu0 %v426
  %2741 = vmatpush1.bf16.msra.mxu0 %v425
  %2742 = vmatprep.subr.bf16.mxu0 0
  %2743 = vmatpush2.bf16.msra.mxu0 0
  %2744 = vmatprep.subr.bf16.mxu0 0
  %2745 = vmatpush2.bf16.msra.mxu0 0
  %2746 = vmatprep.subr.bf16.mxu0 0
  %2747 = vmatpush2.bf16.msra.mxu0 0
  %2748 = vmatprep.subr.bf16.mxu0 0
  %2749 = vmatpush2.bf16.msra.mxu0 0
  %2750 = vmatprep.subr.bf16.mxu0 0
  %2751 = vmatpush2.bf16.msra.mxu0 0
  %2752 = vmatprep.subr.bf16.mxu0 0
  %2753 = vmatpush2.bf16.msra.mxu0 0
  %2754 = vmatprep.subr.bf16.mxu0 0
  %2755 = vmatpush2.bf16.msra.mxu0 0
  %2756 = vmatprep.subr.bf16.mxu0 0
  %2757 = vmatpush2.bf16.msra.mxu0 0
  %2758 = vmatprep.mubr.bf16.mxu0 0
  %2759 = vmatmul.mubr.bf16.gmra.mxu0 %v2601
  %v2760 = vpop.f32.mrf.mxu0
  %v2761 = vadd.f32 %v2679, %v2760
  %v2762 = vpop.f32.mrf.mxu0
  %v2763 = vadd.f32 %v2681, %v2762
  %v2764 = vpop.f32.mrf.mxu0
  %v2765 = vpop.f32.mrf.mxu0
  %2766 = vdwg.mxu0
  %v2767 = vadd.f32 %v2720, %v573
  %v2768 = vadd.f32 %v2722, %v577
  %v2769 = vadd.f32 %v2761, %v581
  %v2770 = vadd.f32 %v2763, %v585
  %v2771 = vxor.u32 %v2767, 2147483648
  %v2772 = vmul.f32 %v2771, 1.442695
  %v2773 = vpow.pop %v2772
  %v2774 = vadd.f32 %v2773, 1.0
  %v2775 = vrcp.pop %v2774
  %v2776 = vmul.f32 1.0, %v2775
  %v2777 = vxor.u32 %v2768, 2147483648
  %v2778 = vmul.f32 %v2777, 1.442695
  %v2779 = vpow.pop %v2778
  %v2780 = vadd.f32 %v2779, 1.0
  %v2781 = vrcp.pop %v2780
  %v2782 = vmul.f32 1.0, %v2781
  %v2783 = vtanh.pop %v2769
  %v2784 = vxor.u32 %v2770, 2147483648
  %v2785 = vmul.f32 %v2784, 1.442695
  %v2786 = vpow.pop %v2785
  %v2787 = vadd.f32 %v2786, 1.0
  %v2788 = vrcp.pop %v2787
  %v2789 = vmul.f32 1.0, %v2788
  %v2790 = vmul.f32 %v2782, %v2594
  %v2791 = vmul.f32 %v2776, %v2783
  %v2792 = vadd.f32 %v2790, %v2791
  %v2793 = vtanh.pop %v2792
  %v2794 = vmul.f32 %v2789, %v2793
  %s2795 = scalar_lea.vmem %s4, 22
  %2796 = vst [vmem:[%s2795] sm:$0x3] %v2794
  %s2797 = scalar_lea.vmem %s0, 24
  %v2798 = vld [vmem:[%s2797] sm:$0x3]
  %v2799 = vpack.c.bf16 %v2798, %v2798
  %v2800 = vpack.c.bf16 %v2794, %v2794
  %2801 = vmatprep.subr.bf16.mxu0 %v210
  %2802 = vmatpush1.bf16.msra.mxu0 %v209
  %2803 = vmatprep.subr.bf16.mxu0 %v206
  %2804 = vmatpush1.bf16.msra.mxu0 %v205
  %2805 = vmatprep.subr.bf16.mxu0 %v202
  %2806 = vmatpush1.bf16.msra.mxu0 %v201
  %2807 = vmatprep.subr.bf16.mxu0 %v198
  %2808 = vmatpush1.bf16.msra.mxu0 %v197
  %2809 = vmatprep.subr.bf16.mxu0 %v194
  %2810 = vmatpush1.bf16.msra.mxu0 %v193
  %2811 = vmatprep.subr.bf16.mxu0 %v190
  %2812 = vmatpush1.bf16.msra.mxu0 %v189
  %2813 = vmatprep.subr.bf16.mxu0 %v186
  %2814 = vmatpush1.bf16.msra.mxu0 %v185
  %2815 = vmatprep.subr.bf16.mxu0 %v182
  %2816 = vmatpush1.bf16.msra.mxu0 %v181
  %2817 = vmatprep.subr.bf16.mxu0 0
  %2818 = vmatpush2.bf16.msra.mxu0 0
  %2819 = vmatprep.subr.bf16.mxu0 0
  %2820 = vmatpush2.bf16.msra.mxu0 0
  %2821 = vmatprep.subr.bf16.mxu0 0
  %2822 = vmatpush2.bf16.msra.mxu0 0
  %2823 = vmatprep.subr.bf16.mxu0 0
  %2824 = vmatpush2.bf16.msra.mxu0 0
  %2825 = vmatprep.subr.bf16.mxu0 0
  %2826 = vmatpush2.bf16.msra.mxu0 0
  %2827 = vmatprep.subr.bf16.mxu0 0
  %2828 = vmatpush2.bf16.msra.mxu0 0
  %2829 = vmatprep.subr.bf16.mxu0 0
  %2830 = vmatpush2.bf16.msra.mxu0 0
  %2831 = vmatprep.subr.bf16.mxu0 0
  %2832 = vmatpush2.bf16.msra.mxu0 0
  %2833 = vmatprep.mubr.bf16.mxu0 0
  %2834 = vmatmul.mubr.bf16.gmra.mxu0 %v2800
  %v2835 = vpop.f32.mrf.mxu0
  %v2836 = vadd.f32 0.0, %v2835
  %v2837 = vpop.f32.mrf.mxu0
  %v2838 = vadd.f32 0.0, %v2837
  %v2839 = vpop.f32.mrf.mxu0
  %v2840 = vpop.f32.mrf.mxu0
  %2841 = vdwg.mxu0
  %2842 = vmatprep.subr.bf16.mxu0 %v212
  %2843 = vmatpush1.bf16.msra.mxu0 %v211
  %2844 = vmatprep.subr.bf16.mxu0 %v208
  %2845 = vmatpush1.bf16.msra.mxu0 %v207
  %2846 = vmatprep.subr.bf16.mxu0 %v204
  %2847 = vmatpush1.bf16.msra.mxu0 %v203
  %2848 = vmatprep.subr.bf16.mxu0 %v200
  %2849 = vmatpush1.bf16.msra.mxu0 %v199
  %2850 = vmatprep.subr.bf16.mxu0 %v196
  %2851 = vmatpush1.bf16.msra.mxu0 %v195
  %2852 = vmatprep.subr.bf16.mxu0 %v192
  %2853 = vmatpush1.bf16.msra.mxu0 %v191
  %2854 = vmatprep.subr.bf16.mxu0 %v188
  %2855 = vmatpush1.bf16.msra.mxu0 %v187
  %2856 = vmatprep.subr.bf16.mxu0 %v184
  %2857 = vmatpush1.bf16.msra.mxu0 %v183
  %2858 = vmatprep.subr.bf16.mxu0 0
  %2859 = vmatpush2.bf16.msra.mxu0 0
  %2860 = vmatprep.subr.bf16.mxu0 0
  %2861 = vmatpush2.bf16.msra.mxu0 0
  %2862 = vmatprep.subr.bf16.mxu0 0
  %2863 = vmatpush2.bf16.msra.mxu0 0
  %2864 = vmatprep.subr.bf16.mxu0 0
  %2865 = vmatpush2.bf16.msra.mxu0 0
  %2866 = vmatprep.subr.bf16.mxu0 0
  %2867 = vmatpush2.bf16.msra.mxu0 0
  %2868 = vmatprep.subr.bf16.mxu0 0
  %2869 = vmatpush2.bf16.msra.mxu0 0
  %2870 = vmatprep.subr.bf16.mxu0 0
  %2871 = vmatpush2.bf16.msra.mxu0 0
  %2872 = vmatprep.subr.bf16.mxu0 0
  %2873 = vmatpush2.bf16.msra.mxu0 0
  %2874 = vmatprep.mubr.bf16.mxu0 0
  %2875 = vmatmul.mubr.bf16.gmra.mxu0 %v2800
  %v2876 = vpop.f32.mrf.mxu0
  %v2877 = vadd.f32 0.0, %v2876
  %v2878 = vpop.f32.mrf.mxu0
  %v2879 = vadd.f32 0.0, %v2878
  %v2880 = vpop.f32.mrf.mxu0
  %v2881 = vpop.f32.mrf.mxu0
  %2882 = vdwg.mxu0
  %2883 = vmatprep.subr.bf16.mxu0 %v452
  %2884 = vmatpush1.bf16.msra.mxu0 %v451
  %2885 = vmatprep.subr.bf16.mxu0 %v448
  %2886 = vmatpush1.bf16.msra.mxu0 %v447
  %2887 = vmatprep.subr.bf16.mxu0 %v444
  %2888 = vmatpush1.bf16.msra.mxu0 %v443
  %2889 = vmatprep.subr.bf16.mxu0 %v440
  %2890 = vmatpush1.bf16.msra.mxu0 %v439
  %2891 = vmatprep.subr.bf16.mxu0 %v436
  %2892 = vmatpush1.bf16.msra.mxu0 %v435
  %2893 = vmatprep.subr.bf16.mxu0 %v432
  %2894 = vmatpush1.bf16.msra.mxu0 %v431
  %2895 = vmatprep.subr.bf16.mxu0 %v428
  %2896 = vmatpush1.bf16.msra.mxu0 %v427
  %2897 = vmatprep.subr.bf16.mxu0 %v424
  %2898 = vmatpush1.bf16.msra.mxu0 %v423
  %2899 = vmatprep.subr.bf16.mxu0 0
  %2900 = vmatpush2.bf16.msra.mxu0 0
  %2901 = vmatprep.subr.bf16.mxu0 0
  %2902 = vmatpush2.bf16.msra.mxu0 0
  %2903 = vmatprep.subr.bf16.mxu0 0
  %2904 = vmatpush2.bf16.msra.mxu0 0
  %2905 = vmatprep.subr.bf16.mxu0 0
  %2906 = vmatpush2.bf16.msra.mxu0 0
  %2907 = vmatprep.subr.bf16.mxu0 0
  %2908 = vmatpush2.bf16.msra.mxu0 0
  %2909 = vmatprep.subr.bf16.mxu0 0
  %2910 = vmatpush2.bf16.msra.mxu0 0
  %2911 = vmatprep.subr.bf16.mxu0 0
  %2912 = vmatpush2.bf16.msra.mxu0 0
  %2913 = vmatprep.subr.bf16.mxu0 0
  %2914 = vmatpush2.bf16.msra.mxu0 0
  %2915 = vmatprep.mubr.bf16.mxu0 0
  %2916 = vmatmul.mubr.bf16.gmra.mxu0 %v2799
  %v2917 = vpop.f32.mrf.mxu0
  %v2918 = vadd.f32 %v2836, %v2917
  %v2919 = vpop.f32.mrf.mxu0
  %v2920 = vadd.f32 %v2838, %v2919
  %v2921 = vpop.f32.mrf.mxu0
  %v2922 = vpop.f32.mrf.mxu0
  %2923 = vdwg.mxu0
  %2924 = vmatprep.subr.bf16.mxu0 %v454
  %2925 = vmatpush1.bf16.msra.mxu0 %v453
  %2926 = vmatprep.subr.bf16.mxu0 %v450
  %2927 = vmatpush1.bf16.msra.mxu0 %v449
  %2928 = vmatprep.subr.bf16.mxu0 %v446
  %2929 = vmatpush1.bf16.msra.mxu0 %v445
  %2930 = vmatprep.subr.bf16.mxu0 %v442
  %2931 = vmatpush1.bf16.msra.mxu0 %v441
  %2932 = vmatprep.subr.bf16.mxu0 %v438
  %2933 = vmatpush1.bf16.msra.mxu0 %v437
  %2934 = vmatprep.subr.bf16.mxu0 %v434
  %2935 = vmatpush1.bf16.msra.mxu0 %v433
  %2936 = vmatprep.subr.bf16.mxu0 %v430
  %2937 = vmatpush1.bf16.msra.mxu0 %v429
  %2938 = vmatprep.subr.bf16.mxu0 %v426
  %2939 = vmatpush1.bf16.msra.mxu0 %v425
  %2940 = vmatprep.subr.bf16.mxu0 0
  %2941 = vmatpush2.bf16.msra.mxu0 0
  %2942 = vmatprep.subr.bf16.mxu0 0
  %2943 = vmatpush2.bf16.msra.mxu0 0
  %2944 = vmatprep.subr.bf16.mxu0 0
  %2945 = vmatpush2.bf16.msra.mxu0 0
  %2946 = vmatprep.subr.bf16.mxu0 0
  %2947 = vmatpush2.bf16.msra.mxu0 0
  %2948 = vmatprep.subr.bf16.mxu0 0
  %2949 = vmatpush2.bf16.msra.mxu0 0
  %2950 = vmatprep.subr.bf16.mxu0 0
  %2951 = vmatpush2.bf16.msra.mxu0 0
  %2952 = vmatprep.subr.bf16.mxu0 0
  %2953 = vmatpush2.bf16.msra.mxu0 0
  %2954 = vmatprep.subr.bf16.mxu0 0
  %2955 = vmatpush2.bf16.msra.mxu0 0
  %2956 = vmatprep.mubr.bf16.mxu0 0
  %2957 = vmatmul.mubr.bf16.gmra.mxu0 %v2799
  %v2958 = vpop.f32.mrf.mxu0
  %v2959 = vadd.f32 %v2877, %v2958
  %v2960 = vpop.f32.mrf.mxu0
  %v2961 = vadd.f32 %v2879, %v2960
  %v2962 = vpop.f32.mrf.mxu0
  %v2963 = vpop.f32.mrf.mxu0
  %2964 = vdwg.mxu0
  %v2965 = vadd.f32 %v2918, %v573
  %v2966 = vadd.f32 %v2920, %v577
  %v2967 = vadd.f32 %v2959, %v581
  %v2968 = vadd.f32 %v2961, %v585
  %v2969 = vxor.u32 %v2965, 2147483648
  %v2970 = vmul.f32 %v2969, 1.442695
  %v2971 = vpow.pop %v2970
  %v2972 = vadd.f32 %v2971, 1.0
  %v2973 = vrcp.pop %v2972
  %v2974 = vmul.f32 1.0, %v2973
  %v2975 = vxor.u32 %v2966, 2147483648
  %v2976 = vmul.f32 %v2975, 1.442695
  %v2977 = vpow.pop %v2976
  %v2978 = vadd.f32 %v2977, 1.0
  %v2979 = vrcp.pop %v2978
  %v2980 = vmul.f32 1.0, %v2979
  %v2981 = vtanh.pop %v2967
  %v2982 = vxor.u32 %v2968, 2147483648
  %v2983 = vmul.f32 %v2982, 1.442695
  %v2984 = vpow.pop %v2983
  %v2985 = vadd.f32 %v2984, 1.0
  %v2986 = vrcp.pop %v2985
  %v2987 = vmul.f32 1.0, %v2986
  %v2988 = vmul.f32 %v2980, %v2792
  %v2989 = vmul.f32 %v2974, %v2981
  %v2990 = vadd.f32 %v2988, %v2989
  %v2991 = vtanh.pop %v2990
  %v2992 = vmul.f32 %v2987, %v2991
  %s2993 = scalar_lea.vmem %s4, 24
  %2994 = vst [vmem:[%s2993] sm:$0x3] %v2992
  %s2995 = scalar_lea.vmem %s0, 26
  %v2996 = vld [vmem:[%s2995] sm:$0x3]
  %v2997 = vpack.c.bf16 %v2996, %v2996
  %v2998 = vpack.c.bf16 %v2992, %v2992
  %2999 = vmatprep.subr.bf16.mxu0 %v210
  %3000 = vmatpush1.bf16.msra.mxu0 %v209
  %3001 = vmatprep.subr.bf16.mxu0 %v206
  %3002 = vmatpush1.bf16.msra.mxu0 %v205
  %3003 = vmatprep.subr.bf16.mxu0 %v202
  %3004 = vmatpush1.bf16.msra.mxu0 %v201
  %3005 = vmatprep.subr.bf16.mxu0 %v198
  %3006 = vmatpush1.bf16.msra.mxu0 %v197
  %3007 = vmatprep.subr.bf16.mxu0 %v194
  %3008 = vmatpush1.bf16.msra.mxu0 %v193
  %3009 = vmatprep.subr.bf16.mxu0 %v190
  %3010 = vmatpush1.bf16.msra.mxu0 %v189
  %3011 = vmatprep.subr.bf16.mxu0 %v186
  %3012 = vmatpush1.bf16.msra.mxu0 %v185
  %3013 = vmatprep.subr.bf16.mxu0 %v182
  %3014 = vmatpush1.bf16.msra.mxu0 %v181
  %3015 = vmatprep.subr.bf16.mxu0 0
  %3016 = vmatpush2.bf16.msra.mxu0 0
  %3017 = vmatprep.subr.bf16.mxu0 0
  %3018 = vmatpush2.bf16.msra.mxu0 0
  %3019 = vmatprep.subr.bf16.mxu0 0
  %3020 = vmatpush2.bf16.msra.mxu0 0
  %3021 = vmatprep.subr.bf16.mxu0 0
  %3022 = vmatpush2.bf16.msra.mxu0 0
  %3023 = vmatprep.subr.bf16.mxu0 0
  %3024 = vmatpush2.bf16.msra.mxu0 0
  %3025 = vmatprep.subr.bf16.mxu0 0
  %3026 = vmatpush2.bf16.msra.mxu0 0
  %3027 = vmatprep.subr.bf16.mxu0 0
  %3028 = vmatpush2.bf16.msra.mxu0 0
  %3029 = vmatprep.subr.bf16.mxu0 0
  %3030 = vmatpush2.bf16.msra.mxu0 0
  %3031 = vmatprep.mubr.bf16.mxu0 0
  %3032 = vmatmul.mubr.bf16.gmra.mxu0 %v2998
  %v3033 = vpop.f32.mrf.mxu0
  %v3034 = vadd.f32 0.0, %v3033
  %v3035 = vpop.f32.mrf.mxu0
  %v3036 = vadd.f32 0.0, %v3035
  %v3037 = vpop.f32.mrf.mxu0
  %v3038 = vpop.f32.mrf.mxu0
  %3039 = vdwg.mxu0
  %3040 = vmatprep.subr.bf16.mxu0 %v212
  %3041 = vmatpush1.bf16.msra.mxu0 %v211
  %3042 = vmatprep.subr.bf16.mxu0 %v208
  %3043 = vmatpush1.bf16.msra.mxu0 %v207
  %3044 = vmatprep.subr.bf16.mxu0 %v204
  %3045 = vmatpush1.bf16.msra.mxu0 %v203
  %3046 = vmatprep.subr.bf16.mxu0 %v200
  %3047 = vmatpush1.bf16.msra.mxu0 %v199
  %3048 = vmatprep.subr.bf16.mxu0 %v196
  %3049 = vmatpush1.bf16.msra.mxu0 %v195
  %3050 = vmatprep.subr.bf16.mxu0 %v192
  %3051 = vmatpush1.bf16.msra.mxu0 %v191
  %3052 = vmatprep.subr.bf16.mxu0 %v188
  %3053 = vmatpush1.bf16.msra.mxu0 %v187
  %3054 = vmatprep.subr.bf16.mxu0 %v184
  %3055 = vmatpush1.bf16.msra.mxu0 %v183
  %3056 = vmatprep.subr.bf16.mxu0 0
  %3057 = vmatpush2.bf16.msra.mxu0 0
  %3058 = vmatprep.subr.bf16.mxu0 0
  %3059 = vmatpush2.bf16.msra.mxu0 0
  %3060 = vmatprep.subr.bf16.mxu0 0
  %3061 = vmatpush2.bf16.msra.mxu0 0
  %3062 = vmatprep.subr.bf16.mxu0 0
  %3063 = vmatpush2.bf16.msra.mxu0 0
  %3064 = vmatprep.subr.bf16.mxu0 0
  %3065 = vmatpush2.bf16.msra.mxu0 0
  %3066 = vmatprep.subr.bf16.mxu0 0
  %3067 = vmatpush2.bf16.msra.mxu0 0
  %3068 = vmatprep.subr.bf16.mxu0 0
  %3069 = vmatpush2.bf16.msra.mxu0 0
  %3070 = vmatprep.subr.bf16.mxu0 0
  %3071 = vmatpush2.bf16.msra.mxu0 0
  %3072 = vmatprep.mubr.bf16.mxu0 0
  %3073 = vmatmul.mubr.bf16.gmra.mxu0 %v2998
  %v3074 = vpop.f32.mrf.mxu0
  %v3075 = vadd.f32 0.0, %v3074
  %v3076 = vpop.f32.mrf.mxu0
  %v3077 = vadd.f32 0.0, %v3076
  %v3078 = vpop.f32.mrf.mxu0
  %v3079 = vpop.f32.mrf.mxu0
  %3080 = vdwg.mxu0
  %3081 = vmatprep.subr.bf16.mxu0 %v452
  %3082 = vmatpush1.bf16.msra.mxu0 %v451
  %3083 = vmatprep.subr.bf16.mxu0 %v448
  %3084 = vmatpush1.bf16.msra.mxu0 %v447
  %3085 = vmatprep.subr.bf16.mxu0 %v444
  %3086 = vmatpush1.bf16.msra.mxu0 %v443
  %3087 = vmatprep.subr.bf16.mxu0 %v440
  %3088 = vmatpush1.bf16.msra.mxu0 %v439
  %3089 = vmatprep.subr.bf16.mxu0 %v436
  %3090 = vmatpush1.bf16.msra.mxu0 %v435
  %3091 = vmatprep.subr.bf16.mxu0 %v432
  %3092 = vmatpush1.bf16.msra.mxu0 %v431
  %3093 = vmatprep.subr.bf16.mxu0 %v428
  %3094 = vmatpush1.bf16.msra.mxu0 %v427
  %3095 = vmatprep.subr.bf16.mxu0 %v424
  %3096 = vmatpush1.bf16.msra.mxu0 %v423
  %3097 = vmatprep.subr.bf16.mxu0 0
  %3098 = vmatpush2.bf16.msra.mxu0 0
  %3099 = vmatprep.subr.bf16.mxu0 0
  %3100 = vmatpush2.bf16.msra.mxu0 0
  %3101 = vmatprep.subr.bf16.mxu0 0
  %3102 = vmatpush2.bf16.msra.mxu0 0
  %3103 = vmatprep.subr.bf16.mxu0 0
  %3104 = vmatpush2.bf16.msra.mxu0 0
  %3105 = vmatprep.subr.bf16.mxu0 0
  %3106 = vmatpush2.bf16.msra.mxu0 0
  %3107 = vmatprep.subr.bf16.mxu0 0
  %3108 = vmatpush2.bf16.msra.mxu0 0
  %3109 = vmatprep.subr.bf16.mxu0 0
  %3110 = vmatpush2.bf16.msra.mxu0 0
  %3111 = vmatprep.subr.bf16.mxu0 0
  %3112 = vmatpush2.bf16.msra.mxu0 0
  %3113 = vmatprep.mubr.bf16.mxu0 0
  %3114 = vmatmul.mubr.bf16.gmra.mxu0 %v2997
  %v3115 = vpop.f32.mrf.mxu0
  %v3116 = vadd.f32 %v3034, %v3115
  %v3117 = vpop.f32.mrf.mxu0
  %v3118 = vadd.f32 %v3036, %v3117
  %v3119 = vpop.f32.mrf.mxu0
  %v3120 = vpop.f32.mrf.mxu0
  %3121 = vdwg.mxu0
  %3122 = vmatprep.subr.bf16.mxu0 %v454
  %3123 = vmatpush1.bf16.msra.mxu0 %v453
  %3124 = vmatprep.subr.bf16.mxu0 %v450
  %3125 = vmatpush1.bf16.msra.mxu0 %v449
  %3126 = vmatprep.subr.bf16.mxu0 %v446
  %3127 = vmatpush1.bf16.msra.mxu0 %v445
  %3128 = vmatprep.subr.bf16.mxu0 %v442
  %3129 = vmatpush1.bf16.msra.mxu0 %v441
  %3130 = vmatprep.subr.bf16.mxu0 %v438
  %3131 = vmatpush1.bf16.msra.mxu0 %v437
  %3132 = vmatprep.subr.bf16.mxu0 %v434
  %3133 = vmatpush1.bf16.msra.mxu0 %v433
  %3134 = vmatprep.subr.bf16.mxu0 %v430
  %3135 = vmatpush1.bf16.msra.mxu0 %v429
  %3136 = vmatprep.subr.bf16.mxu0 %v426
  %3137 = vmatpush1.bf16.msra.mxu0 %v425
  %3138 = vmatprep.subr.bf16.mxu0 0
  %3139 = vmatpush2.bf16.msra.mxu0 0
  %3140 = vmatprep.subr.bf16.mxu0 0
  %3141 = vmatpush2.bf16.msra.mxu0 0
  %3142 = vmatprep.subr.bf16.mxu0 0
  %3143 = vmatpush2.bf16.msra.mxu0 0
  %3144 = vmatprep.subr.bf16.mxu0 0
  %3145 = vmatpush2.bf16.msra.mxu0 0
  %3146 = vmatprep.subr.bf16.mxu0 0
  %3147 = vmatpush2.bf16.msra.mxu0 0
  %3148 = vmatprep.subr.bf16.mxu0 0
  %3149 = vmatpush2.bf16.msra.mxu0 0
  %3150 = vmatprep.subr.bf16.mxu0 0
  %3151 = vmatpush2.bf16.msra.mxu0 0
  %3152 = vmatprep.subr.bf16.mxu0 0
  %3153 = vmatpush2.bf16.msra.mxu0 0
  %3154 = vmatprep.mubr.bf16.mxu0 0
  %3155 = vmatmul.mubr.bf16.gmra.mxu0 %v2997
  %v3156 = vpop.f32.mrf.mxu0
  %v3157 = vadd.f32 %v3075, %v3156
  %v3158 = vpop.f32.mrf.mxu0
  %v3159 = vadd.f32 %v3077, %v3158
  %v3160 = vpop.f32.mrf.mxu0
  %v3161 = vpop.f32.mrf.mxu0
  %3162 = vdwg.mxu0
  %v3163 = vadd.f32 %v3116, %v573
  %v3164 = vadd.f32 %v3118, %v577
  %v3165 = vadd.f32 %v3157, %v581
  %v3166 = vadd.f32 %v3159, %v585
  %v3167 = vxor.u32 %v3163, 2147483648
  %v3168 = vmul.f32 %v3167, 1.442695
  %v3169 = vpow.pop %v3168
  %v3170 = vadd.f32 %v3169, 1.0
  %v3171 = vrcp.pop %v3170
  %v3172 = vmul.f32 1.0, %v3171
  %v3173 = vxor.u32 %v3164, 2147483648
  %v3174 = vmul.f32 %v3173, 1.442695
  %v3175 = vpow.pop %v3174
  %v3176 = vadd.f32 %v3175, 1.0
  %v3177 = vrcp.pop %v3176
  %v3178 = vmul.f32 1.0, %v3177
  %v3179 = vtanh.pop %v3165
  %v3180 = vxor.u32 %v3166, 2147483648
  %v3181 = vmul.f32 %v3180, 1.442695
  %v3182 = vpow.pop %v3181
  %v3183 = vadd.f32 %v3182, 1.0
  %v3184 = vrcp.pop %v3183
  %v3185 = vmul.f32 1.0, %v3184
  %v3186 = vmul.f32 %v3178, %v2990
  %v3187 = vmul.f32 %v3172, %v3179
  %v3188 = vadd.f32 %v3186, %v3187
  %v3189 = vtanh.pop %v3188
  %v3190 = vmul.f32 %v3185, %v3189
  %s3191 = scalar_lea.vmem %s4, 26
  %3192 = vst [vmem:[%s3191] sm:$0x3] %v3190
  %s3193 = scalar_lea.vmem %s0, 28
  %v3194 = vld [vmem:[%s3193] sm:$0x3]
  %v3195 = vpack.c.bf16 %v3194, %v3194
  %v3196 = vpack.c.bf16 %v3190, %v3190
  %3197 = vmatprep.subr.bf16.mxu0 %v210
  %3198 = vmatpush1.bf16.msra.mxu0 %v209
  %3199 = vmatprep.subr.bf16.mxu0 %v206
  %3200 = vmatpush1.bf16.msra.mxu0 %v205
  %3201 = vmatprep.subr.bf16.mxu0 %v202
  %3202 = vmatpush1.bf16.msra.mxu0 %v201
  %3203 = vmatprep.subr.bf16.mxu0 %v198
  %3204 = vmatpush1.bf16.msra.mxu0 %v197
  %3205 = vmatprep.subr.bf16.mxu0 %v194
  %3206 = vmatpush1.bf16.msra.mxu0 %v193
  %3207 = vmatprep.subr.bf16.mxu0 %v190
  %3208 = vmatpush1.bf16.msra.mxu0 %v189
  %3209 = vmatprep.subr.bf16.mxu0 %v186
  %3210 = vmatpush1.bf16.msra.mxu0 %v185
  %3211 = vmatprep.subr.bf16.mxu0 %v182
  %3212 = vmatpush1.bf16.msra.mxu0 %v181
  %3213 = vmatprep.subr.bf16.mxu0 0
  %3214 = vmatpush2.bf16.msra.mxu0 0
  %3215 = vmatprep.subr.bf16.mxu0 0
  %3216 = vmatpush2.bf16.msra.mxu0 0
  %3217 = vmatprep.subr.bf16.mxu0 0
  %3218 = vmatpush2.bf16.msra.mxu0 0
  %3219 = vmatprep.subr.bf16.mxu0 0
  %3220 = vmatpush2.bf16.msra.mxu0 0
  %3221 = vmatprep.subr.bf16.mxu0 0
  %3222 = vmatpush2.bf16.msra.mxu0 0
  %3223 = vmatprep.subr.bf16.mxu0 0
  %3224 = vmatpush2.bf16.msra.mxu0 0
  %3225 = vmatprep.subr.bf16.mxu0 0
  %3226 = vmatpush2.bf16.msra.mxu0 0
  %3227 = vmatprep.subr.bf16.mxu0 0
  %3228 = vmatpush2.bf16.msra.mxu0 0
  %3229 = vmatprep.mubr.bf16.mxu0 0
  %3230 = vmatmul.mubr.bf16.gmra.mxu0 %v3196
  %v3231 = vpop.f32.mrf.mxu0
  %v3232 = vadd.f32 0.0, %v3231
  %v3233 = vpop.f32.mrf.mxu0
  %v3234 = vadd.f32 0.0, %v3233
  %v3235 = vpop.f32.mrf.mxu0
  %v3236 = vpop.f32.mrf.mxu0
  %3237 = vdwg.mxu0
  %3238 = vmatprep.subr.bf16.mxu0 %v212
  %3239 = vmatpush1.bf16.msra.mxu0 %v211
  %3240 = vmatprep.subr.bf16.mxu0 %v208
  %3241 = vmatpush1.bf16.msra.mxu0 %v207
  %3242 = vmatprep.subr.bf16.mxu0 %v204
  %3243 = vmatpush1.bf16.msra.mxu0 %v203
  %3244 = vmatprep.subr.bf16.mxu0 %v200
  %3245 = vmatpush1.bf16.msra.mxu0 %v199
  %3246 = vmatprep.subr.bf16.mxu0 %v196
  %3247 = vmatpush1.bf16.msra.mxu0 %v195
  %3248 = vmatprep.subr.bf16.mxu0 %v192
  %3249 = vmatpush1.bf16.msra.mxu0 %v191
  %3250 = vmatprep.subr.bf16.mxu0 %v188
  %3251 = vmatpush1.bf16.msra.mxu0 %v187
  %3252 = vmatprep.subr.bf16.mxu0 %v184
  %3253 = vmatpush1.bf16.msra.mxu0 %v183
  %3254 = vmatprep.subr.bf16.mxu0 0
  %3255 = vmatpush2.bf16.msra.mxu0 0
  %3256 = vmatprep.subr.bf16.mxu0 0
  %3257 = vmatpush2.bf16.msra.mxu0 0
  %3258 = vmatprep.subr.bf16.mxu0 0
  %3259 = vmatpush2.bf16.msra.mxu0 0
  %3260 = vmatprep.subr.bf16.mxu0 0
  %3261 = vmatpush2.bf16.msra.mxu0 0
  %3262 = vmatprep.subr.bf16.mxu0 0
  %3263 = vmatpush2.bf16.msra.mxu0 0
  %3264 = vmatprep.subr.bf16.mxu0 0
  %3265 = vmatpush2.bf16.msra.mxu0 0
  %3266 = vmatprep.subr.bf16.mxu0 0
  %3267 = vmatpush2.bf16.msra.mxu0 0
  %3268 = vmatprep.subr.bf16.mxu0 0
  %3269 = vmatpush2.bf16.msra.mxu0 0
  %3270 = vmatprep.mubr.bf16.mxu0 0
  %3271 = vmatmul.mubr.bf16.gmra.mxu0 %v3196
  %v3272 = vpop.f32.mrf.mxu0
  %v3273 = vadd.f32 0.0, %v3272
  %v3274 = vpop.f32.mrf.mxu0
  %v3275 = vadd.f32 0.0, %v3274
  %v3276 = vpop.f32.mrf.mxu0
  %v3277 = vpop.f32.mrf.mxu0
  %3278 = vdwg.mxu0
  %3279 = vmatprep.subr.bf16.mxu0 %v452
  %3280 = vmatpush1.bf16.msra.mxu0 %v451
  %3281 = vmatprep.subr.bf16.mxu0 %v448
  %3282 = vmatpush1.bf16.msra.mxu0 %v447
  %3283 = vmatprep.subr.bf16.mxu0 %v444
  %3284 = vmatpush1.bf16.msra.mxu0 %v443
  %3285 = vmatprep.subr.bf16.mxu0 %v440
  %3286 = vmatpush1.bf16.msra.mxu0 %v439
  %3287 = vmatprep.subr.bf16.mxu0 %v436
  %3288 = vmatpush1.bf16.msra.mxu0 %v435
  %3289 = vmatprep.subr.bf16.mxu0 %v432
  %3290 = vmatpush1.bf16.msra.mxu0 %v431
  %3291 = vmatprep.subr.bf16.mxu0 %v428
  %3292 = vmatpush1.bf16.msra.mxu0 %v427
  %3293 = vmatprep.subr.bf16.mxu0 %v424
  %3294 = vmatpush1.bf16.msra.mxu0 %v423
  %3295 = vmatprep.subr.bf16.mxu0 0
  %3296 = vmatpush2.bf16.msra.mxu0 0
  %3297 = vmatprep.subr.bf16.mxu0 0
  %3298 = vmatpush2.bf16.msra.mxu0 0
  %3299 = vmatprep.subr.bf16.mxu0 0
  %3300 = vmatpush2.bf16.msra.mxu0 0
  %3301 = vmatprep.subr.bf16.mxu0 0
  %3302 = vmatpush2.bf16.msra.mxu0 0
  %3303 = vmatprep.subr.bf16.mxu0 0
  %3304 = vmatpush2.bf16.msra.mxu0 0
  %3305 = vmatprep.subr.bf16.mxu0 0
  %3306 = vmatpush2.bf16.msra.mxu0 0
  %3307 = vmatprep.subr.bf16.mxu0 0
  %3308 = vmatpush2.bf16.msra.mxu0 0
  %3309 = vmatprep.subr.bf16.mxu0 0
  %3310 = vmatpush2.bf16.msra.mxu0 0
  %3311 = vmatprep.mubr.bf16.mxu0 0
  %3312 = vmatmul.mubr.bf16.gmra.mxu0 %v3195
  %v3313 = vpop.f32.mrf.mxu0
  %v3314 = vadd.f32 %v3232, %v3313
  %v3315 = vpop.f32.mrf.mxu0
  %v3316 = vadd.f32 %v3234, %v3315
  %v3317 = vpop.f32.mrf.mxu0
  %v3318 = vpop.f32.mrf.mxu0
  %3319 = vdwg.mxu0
  %3320 = vmatprep.subr.bf16.mxu0 %v454
  %3321 = vmatpush1.bf16.msra.mxu0 %v453
  %3322 = vmatprep.subr.bf16.mxu0 %v450
  %3323 = vmatpush1.bf16.msra.mxu0 %v449
  %3324 = vmatprep.subr.bf16.mxu0 %v446
  %3325 = vmatpush1.bf16.msra.mxu0 %v445
  %3326 = vmatprep.subr.bf16.mxu0 %v442
  %3327 = vmatpush1.bf16.msra.mxu0 %v441
  %3328 = vmatprep.subr.bf16.mxu0 %v438
  %3329 = vmatpush1.bf16.msra.mxu0 %v437
  %3330 = vmatprep.subr.bf16.mxu0 %v434
  %3331 = vmatpush1.bf16.msra.mxu0 %v433
  %3332 = vmatprep.subr.bf16.mxu0 %v430
  %3333 = vmatpush1.bf16.msra.mxu0 %v429
  %3334 = vmatprep.subr.bf16.mxu0 %v426
  %3335 = vmatpush1.bf16.msra.mxu0 %v425
  %3336 = vmatprep.subr.bf16.mxu0 0
  %3337 = vmatpush2.bf16.msra.mxu0 0
  %3338 = vmatprep.subr.bf16.mxu0 0
  %3339 = vmatpush2.bf16.msra.mxu0 0
  %3340 = vmatprep.subr.bf16.mxu0 0
  %3341 = vmatpush2.bf16.msra.mxu0 0
  %3342 = vmatprep.subr.bf16.mxu0 0
  %3343 = vmatpush2.bf16.msra.mxu0 0
  %3344 = vmatprep.subr.bf16.mxu0 0
  %3345 = vmatpush2.bf16.msra.mxu0 0
  %3346 = vmatprep.subr.bf16.mxu0 0
  %3347 = vmatpush2.bf16.msra.mxu0 0
  %3348 = vmatprep.subr.bf16.mxu0 0
  %3349 = vmatpush2.bf16.msra.mxu0 0
  %3350 = vmatprep.subr.bf16.mxu0 0
  %3351 = vmatpush2.bf16.msra.mxu0 0
  %3352 = vmatprep.mubr.bf16.mxu0 0
  %3353 = vmatmul.mubr.bf16.gmra.mxu0 %v3195
  %v3354 = vpop.f32.mrf.mxu0
  %v3355 = vadd.f32 %v3273, %v3354
  %v3356 = vpop.f32.mrf.mxu0
  %v3357 = vadd.f32 %v3275, %v3356
  %v3358 = vpop.f32.mrf.mxu0
  %v3359 = vpop.f32.mrf.mxu0
  %3360 = vdwg.mxu0
  %v3361 = vadd.f32 %v3314, %v573
  %v3362 = vadd.f32 %v3316, %v577
  %v3363 = vadd.f32 %v3355, %v581
  %v3364 = vadd.f32 %v3357, %v585
  %v3365 = vxor.u32 %v3361, 2147483648
  %v3366 = vmul.f32 %v3365, 1.442695
  %v3367 = vpow.pop %v3366
  %v3368 = vadd.f32 %v3367, 1.0
  %v3369 = vrcp.pop %v3368
  %v3370 = vmul.f32 1.0, %v3369
  %v3371 = vxor.u32 %v3362, 2147483648
  %v3372 = vmul.f32 %v3371, 1.442695
  %v3373 = vpow.pop %v3372
  %v3374 = vadd.f32 %v3373, 1.0
  %v3375 = vrcp.pop %v3374
  %v3376 = vmul.f32 1.0, %v3375
  %v3377 = vtanh.pop %v3363
  %v3378 = vxor.u32 %v3364, 2147483648
  %v3379 = vmul.f32 %v3378, 1.442695
  %v3380 = vpow.pop %v3379
  %v3381 = vadd.f32 %v3380, 1.0
  %v3382 = vrcp.pop %v3381
  %v3383 = vmul.f32 1.0, %v3382
  %v3384 = vmul.f32 %v3376, %v3188
  %v3385 = vmul.f32 %v3370, %v3377
  %v3386 = vadd.f32 %v3384, %v3385
  %v3387 = vtanh.pop %v3386
  %v3388 = vmul.f32 %v3383, %v3387
  %s3389 = scalar_lea.vmem %s4, 28
  %3390 = vst [vmem:[%s3389] sm:$0x3] %v3388
  %s3391 = scalar_lea.vmem %s0, 30
  %v3392 = vld [vmem:[%s3391] sm:$0x3]
  %v3393 = vpack.c.bf16 %v3392, %v3392
  %v3394 = vpack.c.bf16 %v3388, %v3388
  %3395 = vmatprep.subr.bf16.mxu0 %v210
  %3396 = vmatpush1.bf16.msra.mxu0 %v209
  %3397 = vmatprep.subr.bf16.mxu0 %v206
  %3398 = vmatpush1.bf16.msra.mxu0 %v205
  %3399 = vmatprep.subr.bf16.mxu0 %v202
  %3400 = vmatpush1.bf16.msra.mxu0 %v201
  %3401 = vmatprep.subr.bf16.mxu0 %v198
  %3402 = vmatpush1.bf16.msra.mxu0 %v197
  %3403 = vmatprep.subr.bf16.mxu0 %v194
  %3404 = vmatpush1.bf16.msra.mxu0 %v193
  %3405 = vmatprep.subr.bf16.mxu0 %v190
  %3406 = vmatpush1.bf16.msra.mxu0 %v189
  %3407 = vmatprep.subr.bf16.mxu0 %v186
  %3408 = vmatpush1.bf16.msra.mxu0 %v185
  %3409 = vmatprep.subr.bf16.mxu0 %v182
  %3410 = vmatpush1.bf16.msra.mxu0 %v181
  %3411 = vmatprep.subr.bf16.mxu0 0
  %3412 = vmatpush2.bf16.msra.mxu0 0
  %3413 = vmatprep.subr.bf16.mxu0 0
  %3414 = vmatpush2.bf16.msra.mxu0 0
  %3415 = vmatprep.subr.bf16.mxu0 0
  %3416 = vmatpush2.bf16.msra.mxu0 0
  %3417 = vmatprep.subr.bf16.mxu0 0
  %3418 = vmatpush2.bf16.msra.mxu0 0
  %3419 = vmatprep.subr.bf16.mxu0 0
  %3420 = vmatpush2.bf16.msra.mxu0 0
  %3421 = vmatprep.subr.bf16.mxu0 0
  %3422 = vmatpush2.bf16.msra.mxu0 0
  %3423 = vmatprep.subr.bf16.mxu0 0
  %3424 = vmatpush2.bf16.msra.mxu0 0
  %3425 = vmatprep.subr.bf16.mxu0 0
  %3426 = vmatpush2.bf16.msra.mxu0 0
  %3427 = vmatprep.mubr.bf16.mxu0 0
  %3428 = vmatmul.mubr.bf16.gmra.mxu0 %v3394
  %v3429 = vpop.f32.mrf.mxu0
  %v3430 = vadd.f32 0.0, %v3429
  %v3431 = vpop.f32.mrf.mxu0
  %v3432 = vadd.f32 0.0, %v3431
  %v3433 = vpop.f32.mrf.mxu0
  %v3434 = vpop.f32.mrf.mxu0
  %3435 = vdwg.mxu0
  %3436 = vmatprep.subr.bf16.mxu0 %v212
  %3437 = vmatpush1.bf16.msra.mxu0 %v211
  %3438 = vmatprep.subr.bf16.mxu0 %v208
  %3439 = vmatpush1.bf16.msra.mxu0 %v207
  %3440 = vmatprep.subr.bf16.mxu0 %v204
  %3441 = vmatpush1.bf16.msra.mxu0 %v203
  %3442 = vmatprep.subr.bf16.mxu0 %v200
  %3443 = vmatpush1.bf16.msra.mxu0 %v199
  %3444 = vmatprep.subr.bf16.mxu0 %v196
  %3445 = vmatpush1.bf16.msra.mxu0 %v195
  %3446 = vmatprep.subr.bf16.mxu0 %v192
  %3447 = vmatpush1.bf16.msra.mxu0 %v191
  %3448 = vmatprep.subr.bf16.mxu0 %v188
  %3449 = vmatpush1.bf16.msra.mxu0 %v187
  %3450 = vmatprep.subr.bf16.mxu0 %v184
  %3451 = vmatpush1.bf16.msra.mxu0 %v183
  %3452 = vmatprep.subr.bf16.mxu0 0
  %3453 = vmatpush2.bf16.msra.mxu0 0
  %3454 = vmatprep.subr.bf16.mxu0 0
  %3455 = vmatpush2.bf16.msra.mxu0 0
  %3456 = vmatprep.subr.bf16.mxu0 0
  %3457 = vmatpush2.bf16.msra.mxu0 0
  %3458 = vmatprep.subr.bf16.mxu0 0
  %3459 = vmatpush2.bf16.msra.mxu0 0
  %3460 = vmatprep.subr.bf16.mxu0 0
  %3461 = vmatpush2.bf16.msra.mxu0 0
  %3462 = vmatprep.subr.bf16.mxu0 0
  %3463 = vmatpush2.bf16.msra.mxu0 0
  %3464 = vmatprep.subr.bf16.mxu0 0
  %3465 = vmatpush2.bf16.msra.mxu0 0
  %3466 = vmatprep.subr.bf16.mxu0 0
  %3467 = vmatpush2.bf16.msra.mxu0 0
  %3468 = vmatprep.mubr.bf16.mxu0 0
  %3469 = vmatmul.mubr.bf16.gmra.mxu0 %v3394
  %v3470 = vpop.f32.mrf.mxu0
  %v3471 = vadd.f32 0.0, %v3470
  %v3472 = vpop.f32.mrf.mxu0
  %v3473 = vadd.f32 0.0, %v3472
  %v3474 = vpop.f32.mrf.mxu0
  %v3475 = vpop.f32.mrf.mxu0
  %3476 = vdwg.mxu0
  %3477 = vmatprep.subr.bf16.mxu0 %v452
  %3478 = vmatpush1.bf16.msra.mxu0 %v451
  %3479 = vmatprep.subr.bf16.mxu0 %v448
  %3480 = vmatpush1.bf16.msra.mxu0 %v447
  %3481 = vmatprep.subr.bf16.mxu0 %v444
  %3482 = vmatpush1.bf16.msra.mxu0 %v443
  %3483 = vmatprep.subr.bf16.mxu0 %v440
  %3484 = vmatpush1.bf16.msra.mxu0 %v439
  %3485 = vmatprep.subr.bf16.mxu0 %v436
  %3486 = vmatpush1.bf16.msra.mxu0 %v435
  %3487 = vmatprep.subr.bf16.mxu0 %v432
  %3488 = vmatpush1.bf16.msra.mxu0 %v431
  %3489 = vmatprep.subr.bf16.mxu0 %v428
  %3490 = vmatpush1.bf16.msra.mxu0 %v427
  %3491 = vmatprep.subr.bf16.mxu0 %v424
  %3492 = vmatpush1.bf16.msra.mxu0 %v423
  %3493 = vmatprep.subr.bf16.mxu0 0
  %3494 = vmatpush2.bf16.msra.mxu0 0
  %3495 = vmatprep.subr.bf16.mxu0 0
  %3496 = vmatpush2.bf16.msra.mxu0 0
  %3497 = vmatprep.subr.bf16.mxu0 0
  %3498 = vmatpush2.bf16.msra.mxu0 0
  %3499 = vmatprep.subr.bf16.mxu0 0
  %3500 = vmatpush2.bf16.msra.mxu0 0
  %3501 = vmatprep.subr.bf16.mxu0 0
  %3502 = vmatpush2.bf16.msra.mxu0 0
  %3503 = vmatprep.subr.bf16.mxu0 0
  %3504 = vmatpush2.bf16.msra.mxu0 0
  %3505 = vmatprep.subr.bf16.mxu0 0
  %3506 = vmatpush2.bf16.msra.mxu0 0
  %3507 = vmatprep.subr.bf16.mxu0 0
  %3508 = vmatpush2.bf16.msra.mxu0 0
  %3509 = vmatprep.mubr.bf16.mxu0 0
  %3510 = vmatmul.mubr.bf16.gmra.mxu0 %v3393
  %v3511 = vpop.f32.mrf.mxu0
  %v3512 = vadd.f32 %v3430, %v3511
  %v3513 = vpop.f32.mrf.mxu0
  %v3514 = vadd.f32 %v3432, %v3513
  %v3515 = vpop.f32.mrf.mxu0
  %v3516 = vpop.f32.mrf.mxu0
  %3517 = vdwg.mxu0
  %3518 = vmatprep.subr.bf16.mxu0 %v454
  %3519 = vmatpush1.bf16.msra.mxu0 %v453
  %3520 = vmatprep.subr.bf16.mxu0 %v450
  %3521 = vmatpush1.bf16.msra.mxu0 %v449
  %3522 = vmatprep.subr.bf16.mxu0 %v446
  %3523 = vmatpush1.bf16.msra.mxu0 %v445
  %3524 = vmatprep.subr.bf16.mxu0 %v442
  %3525 = vmatpush1.bf16.msra.mxu0 %v441
  %3526 = vmatprep.subr.bf16.mxu0 %v438
  %3527 = vmatpush1.bf16.msra.mxu0 %v437
  %3528 = vmatprep.subr.bf16.mxu0 %v434
  %3529 = vmatpush1.bf16.msra.mxu0 %v433
  %3530 = vmatprep.subr.bf16.mxu0 %v430
  %3531 = vmatpush1.bf16.msra.mxu0 %v429
  %3532 = vmatprep.subr.bf16.mxu0 %v426
  %3533 = vmatpush1.bf16.msra.mxu0 %v425
  %3534 = vmatprep.subr.bf16.mxu0 0
  %3535 = vmatpush2.bf16.msra.mxu0 0
  %3536 = vmatprep.subr.bf16.mxu0 0
  %3537 = vmatpush2.bf16.msra.mxu0 0
  %3538 = vmatprep.subr.bf16.mxu0 0
  %3539 = vmatpush2.bf16.msra.mxu0 0
  %3540 = vmatprep.subr.bf16.mxu0 0
  %3541 = vmatpush2.bf16.msra.mxu0 0
  %3542 = vmatprep.subr.bf16.mxu0 0
  %3543 = vmatpush2.bf16.msra.mxu0 0
  %3544 = vmatprep.subr.bf16.mxu0 0
  %3545 = vmatpush2.bf16.msra.mxu0 0
  %3546 = vmatprep.subr.bf16.mxu0 0
  %3547 = vmatpush2.bf16.msra.mxu0 0
  %3548 = vmatprep.subr.bf16.mxu0 0
  %3549 = vmatpush2.bf16.msra.mxu0 0
  %3550 = vmatprep.mubr.bf16.mxu0 0
  %3551 = vmatmul.mubr.bf16.gmra.mxu0 %v3393
  %v3552 = vpop.f32.mrf.mxu0
  %v3553 = vadd.f32 %v3471, %v3552
  %v3554 = vpop.f32.mrf.mxu0
  %v3555 = vadd.f32 %v3473, %v3554
  %v3556 = vpop.f32.mrf.mxu0
  %v3557 = vpop.f32.mrf.mxu0
  %3558 = vdwg.mxu0
  %v3559 = vadd.f32 %v3512, %v573
  %v3560 = vadd.f32 %v3514, %v577
  %v3561 = vadd.f32 %v3553, %v581
  %v3562 = vadd.f32 %v3555, %v585
  %v3563 = vxor.u32 %v3559, 2147483648
  %v3564 = vmul.f32 %v3563, 1.442695
  %v3565 = vpow.pop %v3564
  %v3566 = vadd.f32 %v3565, 1.0
  %v3567 = vrcp.pop %v3566
  %v3568 = vmul.f32 1.0, %v3567
  %v3569 = vxor.u32 %v3560, 2147483648
  %v3570 = vmul.f32 %v3569, 1.442695
  %v3571 = vpow.pop %v3570
  %v3572 = vadd.f32 %v3571, 1.0
  %v3573 = vrcp.pop %v3572
  %v3574 = vmul.f32 1.0, %v3573
  %v3575 = vtanh.pop %v3561
  %v3576 = vxor.u32 %v3562, 2147483648
  %v3577 = vmul.f32 %v3576, 1.442695
  %v3578 = vpow.pop %v3577
  %v3579 = vadd.f32 %v3578, 1.0
  %v3580 = vrcp.pop %v3579
  %v3581 = vmul.f32 1.0, %v3580
  %v3582 = vmul.f32 %v3574, %v3386
  %v3583 = vmul.f32 %v3568, %v3575
  %v3584 = vadd.f32 %v3582, %v3583
  %v3585 = vtanh.pop %v3584
  %v3586 = vmul.f32 %v3581, %v3585
  %s3587 = scalar_lea.vmem %s4, 30
  %3588 = vst [vmem:[%s3587] sm:$0x3] %v3586
  // Predicated region
  $region18: #{bigram_lm_forward.14} parent=0 // pred_check
    _
  $region19: #{bigram_lm_forward.14} parent=0 // pred_check_branch
    %3590 = sbr.rel (0) target = $region21
  $region20: #{bigram_lm_forward.14} parent=0 // pred_region
    _
  $region21: #{bigram_lm_forward.14} parent=0 // pred_fallthru
    _
  // Predicated region
  $region22: #{bigram_lm_forward.14} parent=0 // pred_check
    _
  $region23: #{bigram_lm_forward.14} parent=0 // pred_check_branch
    %3592 = sbr.rel (0) target = $region25
  $region24: #{bigram_lm_forward.14} parent=0 // pred_region
    _
  $region25: #{bigram_lm_forward.14} parent=0 // pred_fallthru
    _

</llo_original>
